<compile_context>
chip_gen: v5e
topology: v5e:2x2
jax: 0.10.0
libtpu: 0.0.40
codegen_flags: <defaults>
</compile_context>

<pallas_src>
import functools

import jax
import jax.numpy as jnp
from jax.experimental import pallas as pl
from jax.experimental.pallas import tpu as pltpu

F32 = jnp.float32
BF16 = jnp.bfloat16


def _round_up(x, m):
    return (x + m - 1) // m * m


def _pick_tm(m, cap=512):
    if m <= cap:
        return m
    t = cap
    while m % t:
        t -= 8
    return max(t, 8)


# ----------------------------- fused layer kernel -----------------------------
#
#   out   = epilogue( prologue(lhs) @ rhs )          (bf16 MXU, f32 accumulate)
#   prologue(x) = leaky( x * scale_k + shift_k )     (previous layer's BN + act)
#   epilogue    = tanh (last layer only)
#   extra outputs: per-M-tile column sums / sums-of-squares of the f32
#   accumulator (this layer's BatchNorm statistics), reduced in JAX.

def _fused_layer_kernel(lhs_ref, rhs_ref, scale_ref, shift_ref, leak_ref,
                        out_ref, sum_ref, sq_ref, *, apply_tanh, valid_rows):
    a = lhs_ref[...].astype(F32)
    a = a * scale_ref[...] + shift_ref[...]
    a = jnp.where(a >= 0.0, a, leak_ref[...] * a)
    acc = jnp.dot(a.astype(BF16), rhs_ref[...], preferred_element_type=F32)
    if apply_tanh:
        acc = jnp.tanh(acc)
    out_ref[...] = acc.astype(out_ref.dtype)

    stats = acc
    if valid_rows is not None:
        # Row padding only happens for tiny-M layers (single M tile), so local
        # row ids are global row ids.
        rows = jax.lax.broadcasted_iota(jnp.int32, acc.shape, 0)
        stats = jnp.where(rows < valid_rows, acc, 0.0)
    sum_ref[...] = jnp.sum(stats, axis=0).reshape(1, 1, -1)
    sq_ref[...] = jnp.sum(stats * stats, axis=0).reshape(1, 1, -1)


def fused_layer(lhs, rhs, scale_k, shift_k, leak_k, *, out_dtype, apply_tanh):
    """(M, Kp) @ (Kp, Np) fused layer -> (out (M, Np), col_sums, col_sqs)."""
    m, kp = lhs.shape
    kp2, np_ = rhs.shape
    assert kp == kp2 and kp % 128 == 0 and np_ % 128 == 0
    mp = max(_round_up(m, 8), 8)
    valid_rows = m if mp != m else None
    if mp != m:
        lhs = jnp.concatenate([lhs, jnp.zeros((mp - m, kp), lhs.dtype)], axis=0)
    tm = _pick_tm(mp)
    nm = mp // tm
    assert valid_rows is None or nm == 1

    kernel = functools.partial(_fused_layer_kernel, apply_tanh=apply_tanh,
                               valid_rows=valid_rows)
    out, psum, psq = pl.pallas_call(
        kernel,
        out_shape=(jax.ShapeDtypeStruct((mp, np_), out_dtype),
                   jax.ShapeDtypeStruct((nm, 1, np_), F32),
                   jax.ShapeDtypeStruct((nm, 1, np_), F32)),
        grid_spec=pltpu.PrefetchScalarGridSpec(
            num_scalar_prefetch=0,
            grid=(nm,),
            in_specs=[pl.BlockSpec((tm, kp), lambda i: (i, 0)),
                      pl.BlockSpec((kp, np_), lambda i: (0, 0)),
                      pl.BlockSpec((1, kp), lambda i: (0, 0)),
                      pl.BlockSpec((1, kp), lambda i: (0, 0)),
                      pl.BlockSpec((1, kp), lambda i: (0, 0))],
            out_specs=(pl.BlockSpec((tm, np_), lambda i: (i, 0)),
                       pl.BlockSpec((1, 1, np_), lambda i: (i, 0, 0)),
                       pl.BlockSpec((1, 1, np_), lambda i: (i, 0, 0)))),
        compiler_params=pltpu.CompilerParams(
            dimension_semantics=("parallel",),
            vmem_limit_bytes=32 * 1024 * 1024),
    )(lhs, rhs, scale_k.reshape(1, kp), shift_k.reshape(1, kp),
      leak_k.reshape(1, kp))
    return out[:m], psum.sum(axis=(0, 1)), psq.sum(axis=(0, 1))


# ------------------------------ model glue (JAX) ------------------------------

def _bn_affine(col_sum, col_sq, count, gamma, beta, eps=1e-5):
    # PyTorch training-mode BatchNorm: batch mean, biased batch variance.
    mean = col_sum / count
    var = jnp.maximum(col_sq / count - mean * mean, 0.0)
    scale = gamma * jax.lax.rsqrt(var + eps)
    shift = beta - mean * scale
    return scale, shift


def _prologue_vectors(scale_c, shift_c, leak_c, reps, kp):
    k = scale_c.shape[0] * reps
    pad = kp - k
    scale_k = jnp.concatenate([jnp.tile(scale_c, reps), jnp.ones((pad,), F32)])
    shift_k = jnp.concatenate([jnp.tile(shift_c, reps), jnp.zeros((pad,), F32)])
    leak_k = jnp.concatenate([jnp.tile(leak_c, reps), jnp.ones((pad,), F32)])
    return scale_k, shift_k, leak_k


def _identity_prologue(kp):
    return (jnp.ones((kp,), F32), jnp.zeros((kp,), F32), jnp.ones((kp,), F32))


def _stride2_rhs(w, cout_p, kp):
    """Combined 4-phase weight matrix for ConvTranspose2d(k=4, stride=2, pad=1).

    Rows: (tap_r, tap_c, cin) over the 3x3 window taps of the 1-padded input.
    Cols: (phase = 2*dh + dw, cout) with cout padded to cout_p.
    Phase (dh, dw) at input block (a, c) equals output pixel (2a+dh, 2c+dw).
    """
    cin, cout = w.shape[0], w.shape[1]
    col_pad = ((0, 0), (0, cout_p - cout))
    rows = []
    for tr in range(3):
        for tc in range(3):
            cols = []
            for dh in range(2):
                for dw in range(2):
                    th, tw = tr - dh, tc - dw
                    if 0 <= th <= 1 and 0 <= tw <= 1:
                        blk = w[:, :, 3 - 2 * tr + dh, 3 - 2 * tc + dw]
                    else:
                        blk = jnp.zeros((cin, cout), w.dtype)
                    cols.append(jnp.pad(blk, col_pad))
            rows.append(jnp.concatenate(cols, axis=1))
    rhs = jnp.concatenate(rows, axis=0)               # (9*cin, 4*cout_p)
    rhs = jnp.pad(rhs, ((0, kp - 9 * cin), (0, 0)))
    return rhs.astype(BF16)


def _im2col_3x3(x, kp):
    """3x3-window patches of the spatially 1-padded input; K padded to kp."""
    b, h, w, cin = x.shape
    xpad = jnp.pad(x, ((0, 0), (1, 1), (1, 1), (0, 0)))
    taps = [xpad[:, tr:tr + h, tc:tc + w, :]
            for tr in range(3) for tc in range(3)]
    if kp > 9 * cin:
        taps.append(jnp.zeros((b, h, w, kp - 9 * cin), x.dtype))
    return jnp.concatenate(taps, axis=-1).reshape(b * h * w, kp)


def wgan_generator_forward(params, text_embed, noise, *, leak, eps=1e-5):
    b = text_embed.shape[0]
    caption_len = text_embed.shape[1]
    t_dim = params["lin_w"].shape[0]
    z_dim = noise.shape[1]

    # --- g_projector Linear (bias folded in via an all-ones column); the
    #     following BatchNorm1d + LeakyReLU is deferred into the next layer's
    #     prologue. ---
    k_lin = caption_len + 1
    kp_lin = _round_up(k_lin, 128)
    lhs = jnp.concatenate(
        [text_embed.astype(BF16),
         jnp.ones((b, 1), BF16),
         jnp.zeros((b, kp_lin - k_lin), BF16)], axis=1)
    np_lin = _round_up(t_dim, 128)
    rhs = jnp.zeros((kp_lin, np_lin), F32)
    rhs = rhs.at[:caption_len, :t_dim].set(params["lin_w"].T)
    rhs = rhs.at[caption_len, :t_dim].set(params["lin_b"])
    proj_raw, s, sq = fused_layer(lhs, rhs.astype(BF16),
                                  *_identity_prologue(kp_lin),
                                  out_dtype=BF16, apply_tanh=False)
    scale_p, shift_p = _bn_affine(s[:t_dim], sq[:t_dim], b,
                                  params["bn0_gamma"], params["bn0_beta"], eps)

    # --- layer 0: ConvTranspose2d(concat_dim -> 16*ngf, k=4, s=1, p=0) on a
    #     1x1 input == latent @ W reshaped to (4, 4, cout).  Prologue applies
    #     BN1d+LeakyReLU to the projected part, identity to the noise part. ---
    w0 = params["conv_ws"][0]
    cin0, cout0 = w0.shape[0], w0.shape[1]
    concat_dim = t_dim + z_dim
    assert cin0 == concat_dim
    kp0 = _round_up(concat_dim, 128)
    cout0_p = _round_up(cout0, 8)                     # 16*cout0_p % 128 == 0
    lhs = jnp.concatenate(
        [proj_raw[:, :t_dim],
         noise.reshape(b, z_dim).astype(BF16),
         jnp.zeros((b, kp0 - concat_dim), BF16)], axis=1)
    scale_c = jnp.concatenate([scale_p, jnp.ones((z_dim,), F32)])
    shift_c = jnp.concatenate([shift_p, jnp.zeros((z_dim,), F32)])
    leak_c = jnp.concatenate([jnp.full((t_dim,), leak, F32),
                              jnp.ones((z_dim,), F32)])
    pro = _prologue_vectors(scale_c, shift_c, leak_c, 1, kp0)
    rhs = jnp.pad(jnp.transpose(w0, (0, 2, 3, 1)),
                  ((0, kp0 - cin0), (0, 0), (0, 0), (0, cout0_p - cout0)))
    rhs = rhs.reshape(kp0, 16 * cout0_p).astype(BF16)
    out, s, sq = fused_layer(lhs, rhs, *pro, out_dtype=BF16, apply_tanh=False)
    sums = s.reshape(16, cout0_p)[:, :cout0].sum(axis=0)
    sqs = sq.reshape(16, cout0_p)[:, :cout0].sum(axis=0)
    count = b * 16
    x = out.reshape(b, 4, 4, cout0_p)[..., :cout0]    # raw (pre-BN) activation

    # --- layers 1..5: ConvTranspose2d(k=4, s=2, p=1) via sub-pixel matmul. ---
    num_layers = len(params["conv_ws"])
    for li in range(1, num_layers):
        w = params["conv_ws"][li]
        cin, cout = w.shape[0], w.shape[1]
        is_last = li == num_layers - 1
        _, h, wdt, _ = x.shape
        kp = _round_up(9 * cin, 128)
        cout_p = _round_up(cout, 32)                  # 4*cout_p % 128 == 0

        # previous layer's BN + LeakyReLU, fused as this matmul's prologue
        scale_c, shift_c = _bn_affine(sums, sqs, count,
                                      params["bn_gammas"][li - 1],
                                      params["bn_betas"][li - 1], eps)
        leak_c = jnp.full((cin,), leak, F32)
        pro = _prologue_vectors(scale_c, shift_c, leak_c, 9, kp)

        patches = _im2col_3x3(x, kp)                  # (b*h*w, kp) bf16
        rhs = _stride2_rhs(w, cout_p, kp)             # (kp, 4*cout_p) bf16
        out, s, sq = fused_layer(patches, rhs, *pro,
                                 out_dtype=F32 if is_last else BF16,
                                 apply_tanh=is_last)
        sums = s.reshape(4, cout_p)[:, :cout].sum(axis=0)
        sqs = sq.reshape(4, cout_p)[:, :cout].sum(axis=0)
        count = b * h * wdt * 4                       # = b * H_out * W_out

        # sub-pixel shuffle: (b, h, w, dh, dw, co) -> (b, 2h, 2w, co)
        out = out.reshape(b, h, wdt, 2, 2, cout_p)[..., :cout]
        x = jnp.transpose(out, (0, 1, 3, 2, 4, 5)).reshape(b, 2 * h, 2 * wdt, cout)

    return jnp.transpose(x, (0, 3, 1, 2))             # NCHW, float32


# ------------------------------------ main ------------------------------------

if __name__ == "__main__":
    options = dict(caption_vec_len=32, t_dim=16, z_dim=16, num_gf=8,
                   image_channels=3, leak=0.2)
    ngf = options["num_gf"]
    concat_dim = options["t_dim"] + options["z_dim"]
    chans = [concat_dim, ngf * 16, ngf * 8, ngf * 4, ngf * 2, ngf,
             options["image_channels"]]

    keys = iter(jax.random.split(jax.random.PRNGKey(0), 32))
    params = {
        "lin_w": 0.05 * jax.random.normal(
            next(keys), (options["t_dim"], options["caption_vec_len"]), F32),
        "lin_b": 0.05 * jax.random.normal(next(keys), (options["t_dim"],), F32),
        "bn0_gamma": 1.0 + 0.1 * jax.random.normal(
            next(keys), (options["t_dim"],), F32),
        "bn0_beta": 0.1 * jax.random.normal(next(keys), (options["t_dim"],), F32),
        "conv_ws": [],
        "bn_gammas": [],
        "bn_betas": [],
    }
    for li in range(6):
        cin, cout = chans[li], chans[li + 1]
        params["conv_ws"].append(
            0.05 * jax.random.normal(next(keys), (cin, cout, 4, 4), F32))
        if li < 5:
            params["bn_gammas"].append(
                1.0 + 0.1 * jax.random.normal(next(keys), (cout,), F32))
            params["bn_betas"].append(
                0.1 * jax.random.normal(next(keys), (cout,), F32))

    b = 2
    text_embed = jax.random.normal(
        next(keys), (b, options["caption_vec_len"]), F32)
    noise = jax.random.normal(next(keys), (b, options["z_dim"], 1, 1), F32)

    fwd = jax.jit(functools.partial(wgan_generator_forward,
                                    leak=options["leak"]))
    out = jax.block_until_ready(fwd(params, text_embed, noise))

    expected = (b, options["image_channels"], 128, 128)
    assert out.shape == expected, (out.shape, expected)
    assert out.dtype == jnp.float32
    assert bool(jnp.all(jnp.isfinite(out)))
    print("KERNEL_OK")
</pallas_src>

<mosaic_0001>
module attributes {stable_mosaic.version = 11 : i64} {
  func.func @_fused_layer_kernel(%arg0: i32, %arg1: memref<8x128xbf16, #tpu.memory_space<vmem>>, %arg2: memref<128x128xbf16, #tpu.memory_space<vmem>>, %arg3: memref<1x128xf32, #tpu.memory_space<vmem>>, %arg4: memref<1x128xf32, #tpu.memory_space<vmem>>, %arg5: memref<1x128xf32, #tpu.memory_space<vmem>>, %arg6: memref<8x128xbf16, #tpu.memory_space<vmem>>, %arg7: memref<1x1x128xf32, #tpu.memory_space<vmem>>, %arg8: memref<1x1x128xf32, #tpu.memory_space<vmem>>) attributes {dimension_semantics = [#tpu.dimension_semantics<parallel>], iteration_bounds = array<i64: 1>, scalar_prefetch = 0 : i64, scratch_operands = 0 : i64, tpu.core_type = #tpu.core_type<tc>, window_params = [{transform_indices = @transform_0, window_bounds = array<i64: 8, 128>}, {pipeline_mode = #tpu.pipeline_mode<synchronous>, transform_indices = @transform_1, window_bounds = array<i64: 128, 128>}, {pipeline_mode = #tpu.pipeline_mode<synchronous>, transform_indices = @transform_2, window_bounds = array<i64: 1, 128>}, {pipeline_mode = #tpu.pipeline_mode<synchronous>, transform_indices = @transform_3, window_bounds = array<i64: 1, 128>}, {pipeline_mode = #tpu.pipeline_mode<synchronous>, transform_indices = @transform_4, window_bounds = array<i64: 1, 128>}, {transform_indices = @transform_5, window_bounds = array<i64: 8, 128>}, {transform_indices = @transform_6, window_bounds = array<i64: 1, 1, 128>}, {transform_indices = @transform_7, window_bounds = array<i64: 1, 1, 128>}]} {
    %c0 = arith.constant 0 : index
    %c0_0 = arith.constant 0 : index
    %0 = vector.load %arg1[%c0, %c0_0] : memref<8x128xbf16, #tpu.memory_space<vmem>>, vector<8x128xbf16>
    %1 = arith.extf %0 : vector<8x128xbf16> to vector<8x128xf32>
    %c0_1 = arith.constant 0 : index
    %c0_2 = arith.constant 0 : index
    %2 = vector.load %arg3[%c0_1, %c0_2] : memref<1x128xf32, #tpu.memory_space<vmem>>, vector<1x128xf32>
    %3 = vector.broadcast %2 : vector<1x128xf32> to vector<8x128xf32>
    %4 = arith.mulf %1, %3 : vector<8x128xf32>
    %c0_3 = arith.constant 0 : index
    %c0_4 = arith.constant 0 : index
    %5 = vector.load %arg4[%c0_3, %c0_4] : memref<1x128xf32, #tpu.memory_space<vmem>>, vector<1x128xf32>
    %6 = vector.broadcast %5 : vector<1x128xf32> to vector<8x128xf32>
    %7 = arith.addf %4, %6 : vector<8x128xf32>
    %cst = arith.constant 0.000000e+00 : f32
    %8 = vector.broadcast %cst : f32 to vector<8x128xf32>
    %9 = arith.cmpf oge, %7, %8 : vector<8x128xf32>
    %c0_5 = arith.constant 0 : index
    %c0_6 = arith.constant 0 : index
    %10 = vector.load %arg5[%c0_5, %c0_6] : memref<1x128xf32, #tpu.memory_space<vmem>>, vector<1x128xf32>
    %11 = vector.broadcast %10 : vector<1x128xf32> to vector<8x128xf32>
    %12 = arith.mulf %11, %7 : vector<8x128xf32>
    %13 = arith.select %9, %7, %12 : vector<8x128xi1>, vector<8x128xf32>
    %14 = arith.truncf %13 : vector<8x128xf32> to vector<8x128xbf16>
    %c0_7 = arith.constant 0 : index
    %c0_8 = arith.constant 0 : index
    %15 = vector.load %arg2[%c0_7, %c0_8] : memref<128x128xbf16, #tpu.memory_space<vmem>>, vector<128x128xbf16>
    %cst_9 = arith.constant dense<0.000000e+00> : vector<8x128xf32>
    %16 = tpu.matmul %14, %15, %cst_9 {dimension_numbers = #tpu.dot_dimension_numbers<[1], [0], [0], [1], [0, 0, 1, 1], [], []>} : vector<8x128xbf16>, vector<128x128xbf16>, vector<8x128xf32> -> vector<8x128xf32>
    %17 = arith.truncf %16 : vector<8x128xf32> to vector<8x128xbf16>
    %c0_10 = arith.constant 0 : index
    %c0_11 = arith.constant 0 : index
    %18 = vector.load %arg6[%c0_10, %c0_11] : memref<8x128xbf16, #tpu.memory_space<vmem>>, vector<8x128xbf16>
    tpu.vector_store %arg6[%c0_10, %c0_11], %17 {strides = array<i32>} : memref<8x128xbf16, #tpu.memory_space<vmem>>, vector<8x128xbf16>,
    %19 = tpu.iota {dimensions = array<i32: 0>} : vector<8x128xi32>
    %c2_i32 = arith.constant 2 : i32
    %20 = vector.broadcast %c2_i32 : i32 to vector<8x128xi32>
    %21 = arith.cmpi slt, %19, %20 : vector<8x128xi32>
    %cst_12 = arith.constant 0.000000e+00 : f32
    %22 = vector.broadcast %cst_12 : f32 to vector<8x128xf32>
    %23 = arith.select %21, %16, %22 : vector<8x128xi1>, vector<8x128xf32>
    %cst_13 = arith.constant dense<0.000000e+00> : vector<128xf32>
    %24 = vector.multi_reduction <add>, %23, %cst_13 [0] : vector<8x128xf32> to vector<128xf32>
    %25 = vector.shape_cast %24 : vector<128xf32> to vector<1x1x128xf32>
    %c0_14 = arith.constant 0 : index
    %c0_15 = arith.constant 0 : index
    %c0_16 = arith.constant 0 : index
    %26 = vector.load %arg7[%c0_14, %c0_15, %c0_16] : memref<1x1x128xf32, #tpu.memory_space<vmem>>, vector<1x1x128xf32>
    tpu.vector_store %arg7[%c0_14, %c0_15, %c0_16], %25 {strides = array<i32>} : memref<1x1x128xf32, #tpu.memory_space<vmem>>, vector<1x1x128xf32>,
    %27 = arith.mulf %23, %23 : vector<8x128xf32>
    %cst_17 = arith.constant dense<0.000000e+00> : vector<128xf32>
    %28 = vector.multi_reduction <add>, %27, %cst_17 [0] : vector<8x128xf32> to vector<128xf32>
    %29 = vector.shape_cast %28 : vector<128xf32> to vector<1x1x128xf32>
    %c0_18 = arith.constant 0 : index
    %c0_19 = arith.constant 0 : index
    %c0_20 = arith.constant 0 : index
    %30 = vector.load %arg8[%c0_18, %c0_19, %c0_20] : memref<1x1x128xf32, #tpu.memory_space<vmem>>, vector<1x1x128xf32>
    tpu.vector_store %arg8[%c0_18, %c0_19, %c0_20], %29 {strides = array<i32>} : memref<1x1x128xf32, #tpu.memory_space<vmem>>, vector<1x1x128xf32>,
    return
  }
  func.func @transform_0(%arg0: i32) -> (i32, i32) {
    %c0_i32 = arith.constant 0 : i32
    %c0_i32_0 = arith.constant 0 : i32
    return %arg0, %c0_i32 : i32, i32
  }
  func.func @transform_1(%arg0: i32) -> (i32, i32) {
    %c0_i32 = arith.constant 0 : i32
    %c0_i32_0 = arith.constant 0 : i32
    %c0_i32_1 = arith.constant 0 : i32
    return %c0_i32, %c0_i32_0 : i32, i32
  }
  func.func @transform_2(%arg0: i32) -> (i32, i32) {
    %c0_i32 = arith.constant 0 : i32
    %c0_i32_0 = arith.constant 0 : i32
    %c0_i32_1 = arith.constant 0 : i32
    return %c0_i32, %c0_i32_0 : i32, i32
  }
  func.func @transform_3(%arg0: i32) -> (i32, i32) {
    %c0_i32 = arith.constant 0 : i32
    %c0_i32_0 = arith.constant 0 : i32
    %c0_i32_1 = arith.constant 0 : i32
    return %c0_i32, %c0_i32_0 : i32, i32
  }
  func.func @transform_4(%arg0: i32) -> (i32, i32) {
    %c0_i32 = arith.constant 0 : i32
    %c0_i32_0 = arith.constant 0 : i32
    %c0_i32_1 = arith.constant 0 : i32
    return %c0_i32, %c0_i32_0 : i32, i32
  }
  func.func @transform_5(%arg0: i32) -> (i32, i32) {
    %c0_i32 = arith.constant 0 : i32
    %c0_i32_0 = arith.constant 0 : i32
    return %arg0, %c0_i32 : i32, i32
  }
  func.func @transform_6(%arg0: i32) -> (i32, i32, i32) {
    %c0_i32 = arith.constant 0 : i32
    %c0_i32_0 = arith.constant 0 : i32
    %c0_i32_1 = arith.constant 0 : i32
    return %arg0, %c0_i32, %c0_i32_0 : i32, i32, i32
  }
  func.func @transform_7(%arg0: i32) -> (i32, i32, i32) {
    %c0_i32 = arith.constant 0 : i32
    %c0_i32_0 = arith.constant 0 : i32
    %c0_i32_1 = arith.constant 0 : i32
    return %arg0, %c0_i32, %c0_i32_0 : i32, i32, i32
  }
}

module attributes {stable_mosaic.version = 11 : i64} {
  func.func @_fused_layer_kernel(%arg0: i32, %arg1: memref<8x128xbf16, #tpu.memory_space<vmem>>, %arg2: memref<128x2048xbf16, #tpu.memory_space<vmem>>, %arg3: memref<1x128xf32, #tpu.memory_space<vmem>>, %arg4: memref<1x128xf32, #tpu.memory_space<vmem>>, %arg5: memref<1x128xf32, #tpu.memory_space<vmem>>, %arg6: memref<8x2048xbf16, #tpu.memory_space<vmem>>, %arg7: memref<1x1x2048xf32, #tpu.memory_space<vmem>>, %arg8: memref<1x1x2048xf32, #tpu.memory_space<vmem>>) attributes {dimension_semantics = [#tpu.dimension_semantics<parallel>], iteration_bounds = array<i64: 1>, scalar_prefetch = 0 : i64, scratch_operands = 0 : i64, tpu.core_type = #tpu.core_type<tc>, window_params = [{transform_indices = @transform_0, window_bounds = array<i64: 8, 128>}, {pipeline_mode = #tpu.pipeline_mode<synchronous>, transform_indices = @transform_1, window_bounds = array<i64: 128, 2048>}, {pipeline_mode = #tpu.pipeline_mode<synchronous>, transform_indices = @transform_2, window_bounds = array<i64: 1, 128>}, {pipeline_mode = #tpu.pipeline_mode<synchronous>, transform_indices = @transform_3, window_bounds = array<i64: 1, 128>}, {pipeline_mode = #tpu.pipeline_mode<synchronous>, transform_indices = @transform_4, window_bounds = array<i64: 1, 128>}, {transform_indices = @transform_5, window_bounds = array<i64: 8, 2048>}, {transform_indices = @transform_6, window_bounds = array<i64: 1, 1, 2048>}, {transform_indices = @transform_7, window_bounds = array<i64: 1, 1, 2048>}]} {
    %c0 = arith.constant 0 : index
    %c0_0 = arith.constant 0 : index
    %0 = vector.load %arg1[%c0, %c0_0] : memref<8x128xbf16, #tpu.memory_space<vmem>>, vector<8x128xbf16>
    %1 = arith.extf %0 : vector<8x128xbf16> to vector<8x128xf32>
    %c0_1 = arith.constant 0 : index
    %c0_2 = arith.constant 0 : index
    %2 = vector.load %arg3[%c0_1, %c0_2] : memref<1x128xf32, #tpu.memory_space<vmem>>, vector<1x128xf32>
    %3 = vector.broadcast %2 : vector<1x128xf32> to vector<8x128xf32>
    %4 = arith.mulf %1, %3 : vector<8x128xf32>
    %c0_3 = arith.constant 0 : index
    %c0_4 = arith.constant 0 : index
    %5 = vector.load %arg4[%c0_3, %c0_4] : memref<1x128xf32, #tpu.memory_space<vmem>>, vector<1x128xf32>
    %6 = vector.broadcast %5 : vector<1x128xf32> to vector<8x128xf32>
    %7 = arith.addf %4, %6 : vector<8x128xf32>
    %cst = arith.constant 0.000000e+00 : f32
    %8 = vector.broadcast %cst : f32 to vector<8x128xf32>
    %9 = arith.cmpf oge, %7, %8 : vector<8x128xf32>
    %c0_5 = arith.constant 0 : index
    %c0_6 = arith.constant 0 : index
    %10 = vector.load %arg5[%c0_5, %c0_6] : memref<1x128xf32, #tpu.memory_space<vmem>>, vector<1x128xf32>
    %11 = vector.broadcast %10 : vector<1x128xf32> to vector<8x128xf32>
    %12 = arith.mulf %11, %7 : vector<8x128xf32>
    %13 = arith.select %9, %7, %12 : vector<8x128xi1>, vector<8x128xf32>
    %14 = arith.truncf %13 : vector<8x128xf32> to vector<8x128xbf16>
    %c0_7 = arith.constant 0 : index
    %c0_8 = arith.constant 0 : index
    %15 = vector.load %arg2[%c0_7, %c0_8] : memref<128x2048xbf16, #tpu.memory_space<vmem>>, vector<128x2048xbf16>
    %cst_9 = arith.constant dense<0.000000e+00> : vector<8x2048xf32>
    %16 = tpu.matmul %14, %15, %cst_9 {dimension_numbers = #tpu.dot_dimension_numbers<[1], [0], [0], [1], [0, 0, 1, 1], [], []>} : vector<8x128xbf16>, vector<128x2048xbf16>, vector<8x2048xf32> -> vector<8x2048xf32>
    %17 = arith.truncf %16 : vector<8x2048xf32> to vector<8x2048xbf16>
    %c0_10 = arith.constant 0 : index
    %c0_11 = arith.constant 0 : index
    %18 = vector.load %arg6[%c0_10, %c0_11] : memref<8x2048xbf16, #tpu.memory_space<vmem>>, vector<8x2048xbf16>
    tpu.vector_store %arg6[%c0_10, %c0_11], %17 {strides = array<i32>} : memref<8x2048xbf16, #tpu.memory_space<vmem>>, vector<8x2048xbf16>,
    %19 = tpu.iota {dimensions = array<i32: 0>} : vector<8x2048xi32>
    %c2_i32 = arith.constant 2 : i32
    %20 = vector.broadcast %c2_i32 : i32 to vector<8x2048xi32>
    %21 = arith.cmpi slt, %19, %20 : vector<8x2048xi32>
    %cst_12 = arith.constant 0.000000e+00 : f32
    %22 = vector.broadcast %cst_12 : f32 to vector<8x2048xf32>
    %23 = arith.select %21, %16, %22 : vector<8x2048xi1>, vector<8x2048xf32>
    %cst_13 = arith.constant dense<0.000000e+00> : vector<2048xf32>
    %24 = vector.multi_reduction <add>, %23, %cst_13 [0] : vector<8x2048xf32> to vector<2048xf32>
    %25 = vector.shape_cast %24 : vector<2048xf32> to vector<1x1x2048xf32>
    %c0_14 = arith.constant 0 : index
    %c0_15 = arith.constant 0 : index
    %c0_16 = arith.constant 0 : index
    %26 = vector.load %arg7[%c0_14, %c0_15, %c0_16] : memref<1x1x2048xf32, #tpu.memory_space<vmem>>, vector<1x1x2048xf32>
    tpu.vector_store %arg7[%c0_14, %c0_15, %c0_16], %25 {strides = array<i32>} : memref<1x1x2048xf32, #tpu.memory_space<vmem>>, vector<1x1x2048xf32>,
    %27 = arith.mulf %23, %23 : vector<8x2048xf32>
    %cst_17 = arith.constant dense<0.000000e+00> : vector<2048xf32>
    %28 = vector.multi_reduction <add>, %27, %cst_17 [0] : vector<8x2048xf32> to vector<2048xf32>
    %29 = vector.shape_cast %28 : vector<2048xf32> to vector<1x1x2048xf32>
    %c0_18 = arith.constant 0 : index
    %c0_19 = arith.constant 0 : index
    %c0_20 = arith.constant 0 : index
    %30 = vector.load %arg8[%c0_18, %c0_19, %c0_20] : memref<1x1x2048xf32, #tpu.memory_space<vmem>>, vector<1x1x2048xf32>
    tpu.vector_store %arg8[%c0_18, %c0_19, %c0_20], %29 {strides = array<i32>} : memref<1x1x2048xf32, #tpu.memory_space<vmem>>, vector<1x1x2048xf32>,
    return
  }
  func.func @transform_0(%arg0: i32) -> (i32, i32) {
    %c0_i32 = arith.constant 0 : i32
    %c0_i32_0 = arith.constant 0 : i32
    return %arg0, %c0_i32 : i32, i32
  }
  func.func @transform_1(%arg0: i32) -> (i32, i32) {
    %c0_i32 = arith.constant 0 : i32
    %c0_i32_0 = arith.constant 0 : i32
    %c0_i32_1 = arith.constant 0 : i32
    return %c0_i32, %c0_i32_0 : i32, i32
  }
  func.func @transform_2(%arg0: i32) -> (i32, i32) {
    %c0_i32 = arith.constant 0 : i32
    %c0_i32_0 = arith.constant 0 : i32
    %c0_i32_1 = arith.constant 0 : i32
    return %c0_i32, %c0_i32_0 : i32, i32
  }
  func.func @transform_3(%arg0: i32) -> (i32, i32) {
    %c0_i32 = arith.constant 0 : i32
    %c0_i32_0 = arith.constant 0 : i32
    %c0_i32_1 = arith.constant 0 : i32
    return %c0_i32, %c0_i32_0 : i32, i32
  }
  func.func @transform_4(%arg0: i32) -> (i32, i32) {
    %c0_i32 = arith.constant 0 : i32
    %c0_i32_0 = arith.constant 0 : i32
    %c0_i32_1 = arith.constant 0 : i32
    return %c0_i32, %c0_i32_0 : i32, i32
  }
  func.func @transform_5(%arg0: i32) -> (i32, i32) {
    %c0_i32 = arith.constant 0 : i32
    %c0_i32_0 = arith.constant 0 : i32
    return %arg0, %c0_i32 : i32, i32
  }
  func.func @transform_6(%arg0: i32) -> (i32, i32, i32) {
    %c0_i32 = arith.constant 0 : i32
    %c0_i32_0 = arith.constant 0 : i32
    %c0_i32_1 = arith.constant 0 : i32
    return %arg0, %c0_i32, %c0_i32_0 : i32, i32, i32
  }
  func.func @transform_7(%arg0: i32) -> (i32, i32, i32) {
    %c0_i32 = arith.constant 0 : i32
    %c0_i32_0 = arith.constant 0 : i32
    %c0_i32_1 = arith.constant 0 : i32
    return %arg0, %c0_i32, %c0_i32_0 : i32, i32, i32
  }
}

module attributes {stable_mosaic.version = 11 : i64} {
  func.func @_fused_layer_kernel(%arg0: i32, %arg1: memref<32x1152xbf16, #tpu.memory_space<vmem>>, %arg2: memref<1152x256xbf16, #tpu.memory_space<vmem>>, %arg3: memref<1x1152xf32, #tpu.memory_space<vmem>>, %arg4: memref<1x1152xf32, #tpu.memory_space<vmem>>, %arg5: memref<1x1152xf32, #tpu.memory_space<vmem>>, %arg6: memref<32x256xbf16, #tpu.memory_space<vmem>>, %arg7: memref<1x1x256xf32, #tpu.memory_space<vmem>>, %arg8: memref<1x1x256xf32, #tpu.memory_space<vmem>>) attributes {dimension_semantics = [#tpu.dimension_semantics<parallel>], iteration_bounds = array<i64: 1>, scalar_prefetch = 0 : i64, scratch_operands = 0 : i64, tpu.core_type = #tpu.core_type<tc>, window_params = [{transform_indices = @transform_0, window_bounds = array<i64: 32, 1152>}, {pipeline_mode = #tpu.pipeline_mode<synchronous>, transform_indices = @transform_1, window_bounds = array<i64: 1152, 256>}, {pipeline_mode = #tpu.pipeline_mode<synchronous>, transform_indices = @transform_2, window_bounds = array<i64: 1, 1152>}, {pipeline_mode = #tpu.pipeline_mode<synchronous>, transform_indices = @transform_3, window_bounds = array<i64: 1, 1152>}, {pipeline_mode = #tpu.pipeline_mode<synchronous>, transform_indices = @transform_4, window_bounds = array<i64: 1, 1152>}, {transform_indices = @transform_5, window_bounds = array<i64: 32, 256>}, {transform_indices = @transform_6, window_bounds = array<i64: 1, 1, 256>}, {transform_indices = @transform_7, window_bounds = array<i64: 1, 1, 256>}]} {
    %c0 = arith.constant 0 : index
    %c0_0 = arith.constant 0 : index
    %0 = vector.load %arg1[%c0, %c0_0] : memref<32x1152xbf16, #tpu.memory_space<vmem>>, vector<32x1152xbf16>
    %1 = arith.extf %0 : vector<32x1152xbf16> to vector<32x1152xf32>
    %c0_1 = arith.constant 0 : index
    %c0_2 = arith.constant 0 : index
    %2 = vector.load %arg3[%c0_1, %c0_2] : memref<1x1152xf32, #tpu.memory_space<vmem>>, vector<1x1152xf32>
    %3 = vector.broadcast %2 : vector<1x1152xf32> to vector<32x1152xf32>
    %4 = arith.mulf %1, %3 : vector<32x1152xf32>
    %c0_3 = arith.constant 0 : index
    %c0_4 = arith.constant 0 : index
    %5 = vector.load %arg4[%c0_3, %c0_4] : memref<1x1152xf32, #tpu.memory_space<vmem>>, vector<1x1152xf32>
    %6 = vector.broadcast %5 : vector<1x1152xf32> to vector<32x1152xf32>
    %7 = arith.addf %4, %6 : vector<32x1152xf32>
    %cst = arith.constant 0.000000e+00 : f32
    %8 = vector.broadcast %cst : f32 to vector<32x1152xf32>
    %9 = arith.cmpf oge, %7, %8 : vector<32x1152xf32>
    %c0_5 = arith.constant 0 : index
    %c0_6 = arith.constant 0 : index
    %10 = vector.load %arg5[%c0_5, %c0_6] : memref<1x1152xf32, #tpu.memory_space<vmem>>, vector<1x1152xf32>
    %11 = vector.broadcast %10 : vector<1x1152xf32> to vector<32x1152xf32>
    %12 = arith.mulf %11, %7 : vector<32x1152xf32>
    %13 = arith.select %9, %7, %12 : vector<32x1152xi1>, vector<32x1152xf32>
    %14 = arith.truncf %13 : vector<32x1152xf32> to vector<32x1152xbf16>
    %c0_7 = arith.constant 0 : index
    %c0_8 = arith.constant 0 : index
    %15 = vector.load %arg2[%c0_7, %c0_8] : memref<1152x256xbf16, #tpu.memory_space<vmem>>, vector<1152x256xbf16>
    %cst_9 = arith.constant dense<0.000000e+00> : vector<32x256xf32>
    %16 = tpu.matmul %14, %15, %cst_9 {dimension_numbers = #tpu.dot_dimension_numbers<[1], [0], [0], [1], [0, 0, 1, 1], [], []>} : vector<32x1152xbf16>, vector<1152x256xbf16>, vector<32x256xf32> -> vector<32x256xf32>
    %17 = arith.truncf %16 : vector<32x256xf32> to vector<32x256xbf16>
    %c0_10 = arith.constant 0 : index
    %c0_11 = arith.constant 0 : index
    %18 = vector.load %arg6[%c0_10, %c0_11] : memref<32x256xbf16, #tpu.memory_space<vmem>>, vector<32x256xbf16>
    tpu.vector_store %arg6[%c0_10, %c0_11], %17 {strides = array<i32>} : memref<32x256xbf16, #tpu.memory_space<vmem>>, vector<32x256xbf16>,
    %cst_12 = arith.constant dense<0.000000e+00> : vector<256xf32>
    %19 = vector.multi_reduction <add>, %16, %cst_12 [0] : vector<32x256xf32> to vector<256xf32>
    %20 = vector.shape_cast %19 : vector<256xf32> to vector<1x1x256xf32>
    %c0_13 = arith.constant 0 : index
    %c0_14 = arith.constant 0 : index
    %c0_15 = arith.constant 0 : index
    %21 = vector.load %arg7[%c0_13, %c0_14, %c0_15] : memref<1x1x256xf32, #tpu.memory_space<vmem>>, vector<1x1x256xf32>
    tpu.vector_store %arg7[%c0_13, %c0_14, %c0_15], %20 {strides = array<i32>} : memref<1x1x256xf32, #tpu.memory_space<vmem>>, vector<1x1x256xf32>,
    %22 = arith.mulf %16, %16 : vector<32x256xf32>
    %cst_16 = arith.constant dense<0.000000e+00> : vector<256xf32>
    %23 = vector.multi_reduction <add>, %22, %cst_16 [0] : vector<32x256xf32> to vector<256xf32>
    %24 = vector.shape_cast %23 : vector<256xf32> to vector<1x1x256xf32>
    %c0_17 = arith.constant 0 : index
    %c0_18 = arith.constant 0 : index
    %c0_19 = arith.constant 0 : index
    %25 = vector.load %arg8[%c0_17, %c0_18, %c0_19] : memref<1x1x256xf32, #tpu.memory_space<vmem>>, vector<1x1x256xf32>
    tpu.vector_store %arg8[%c0_17, %c0_18, %c0_19], %24 {strides = array<i32>} : memref<1x1x256xf32, #tpu.memory_space<vmem>>, vector<1x1x256xf32>,
    return
  }
  func.func @transform_0(%arg0: i32) -> (i32, i32) {
    %c0_i32 = arith.constant 0 : i32
    %c0_i32_0 = arith.constant 0 : i32
    return %arg0, %c0_i32 : i32, i32
  }
  func.func @transform_1(%arg0: i32) -> (i32, i32) {
    %c0_i32 = arith.constant 0 : i32
    %c0_i32_0 = arith.constant 0 : i32
    %c0_i32_1 = arith.constant 0 : i32
    return %c0_i32, %c0_i32_0 : i32, i32
  }
  func.func @transform_2(%arg0: i32) -> (i32, i32) {
    %c0_i32 = arith.constant 0 : i32
    %c0_i32_0 = arith.constant 0 : i32
    %c0_i32_1 = arith.constant 0 : i32
    return %c0_i32, %c0_i32_0 : i32, i32
  }
  func.func @transform_3(%arg0: i32) -> (i32, i32) {
    %c0_i32 = arith.constant 0 : i32
    %c0_i32_0 = arith.constant 0 : i32
    %c0_i32_1 = arith.constant 0 : i32
    return %c0_i32, %c0_i32_0 : i32, i32
  }
  func.func @transform_4(%arg0: i32) -> (i32, i32) {
    %c0_i32 = arith.constant 0 : i32
    %c0_i32_0 = arith.constant 0 : i32
    %c0_i32_1 = arith.constant 0 : i32
    return %c0_i32, %c0_i32_0 : i32, i32
  }
  func.func @transform_5(%arg0: i32) -> (i32, i32) {
    %c0_i32 = arith.constant 0 : i32
    %c0_i32_0 = arith.constant 0 : i32
    return %arg0, %c0_i32 : i32, i32
  }
  func.func @transform_6(%arg0: i32) -> (i32, i32, i32) {
    %c0_i32 = arith.constant 0 : i32
    %c0_i32_0 = arith.constant 0 : i32
    %c0_i32_1 = arith.constant 0 : i32
    return %arg0, %c0_i32, %c0_i32_0 : i32, i32, i32
  }
  func.func @transform_7(%arg0: i32) -> (i32, i32, i32) {
    %c0_i32 = arith.constant 0 : i32
    %c0_i32_0 = arith.constant 0 : i32
    %c0_i32_1 = arith.constant 0 : i32
    return %arg0, %c0_i32, %c0_i32_0 : i32, i32, i32
  }
}

module attributes {stable_mosaic.version = 11 : i64} {
  func.func @_fused_layer_kernel(%arg0: i32, %arg1: memref<128x640xbf16, #tpu.memory_space<vmem>>, %arg2: memref<640x128xbf16, #tpu.memory_space<vmem>>, %arg3: memref<1x640xf32, #tpu.memory_space<vmem>>, %arg4: memref<1x640xf32, #tpu.memory_space<vmem>>, %arg5: memref<1x640xf32, #tpu.memory_space<vmem>>, %arg6: memref<128x128xbf16, #tpu.memory_space<vmem>>, %arg7: memref<1x1x128xf32, #tpu.memory_space<vmem>>, %arg8: memref<1x1x128xf32, #tpu.memory_space<vmem>>) attributes {dimension_semantics = [#tpu.dimension_semantics<parallel>], iteration_bounds = array<i64: 1>, scalar_prefetch = 0 : i64, scratch_operands = 0 : i64, tpu.core_type = #tpu.core_type<tc>, window_params = [{transform_indices = @transform_0, window_bounds = array<i64: 128, 640>}, {pipeline_mode = #tpu.pipeline_mode<synchronous>, transform_indices = @transform_1, window_bounds = array<i64: 640, 128>}, {pipeline_mode = #tpu.pipeline_mode<synchronous>, transform_indices = @transform_2, window_bounds = array<i64: 1, 640>}, {pipeline_mode = #tpu.pipeline_mode<synchronous>, transform_indices = @transform_3, window_bounds = array<i64: 1, 640>}, {pipeline_mode = #tpu.pipeline_mode<synchronous>, transform_indices = @transform_4, window_bounds = array<i64: 1, 640>}, {transform_indices = @transform_5, window_bounds = array<i64: 128, 128>}, {transform_indices = @transform_6, window_bounds = array<i64: 1, 1, 128>}, {transform_indices = @transform_7, window_bounds = array<i64: 1, 1, 128>}]} {
    %c0 = arith.constant 0 : index
    %c0_0 = arith.constant 0 : index
    %0 = vector.load %arg1[%c0, %c0_0] : memref<128x640xbf16, #tpu.memory_space<vmem>>, vector<128x640xbf16>
    %1 = arith.extf %0 : vector<128x640xbf16> to vector<128x640xf32>
    %c0_1 = arith.constant 0 : index
    %c0_2 = arith.constant 0 : index
    %2 = vector.load %arg3[%c0_1, %c0_2] : memref<1x640xf32, #tpu.memory_space<vmem>>, vector<1x640xf32>
    %3 = vector.broadcast %2 : vector<1x640xf32> to vector<128x640xf32>
    %4 = arith.mulf %1, %3 : vector<128x640xf32>
    %c0_3 = arith.constant 0 : index
    %c0_4 = arith.constant 0 : index
    %5 = vector.load %arg4[%c0_3, %c0_4] : memref<1x640xf32, #tpu.memory_space<vmem>>, vector<1x640xf32>
    %6 = vector.broadcast %5 : vector<1x640xf32> to vector<128x640xf32>
    %7 = arith.addf %4, %6 : vector<128x640xf32>
    %cst = arith.constant 0.000000e+00 : f32
    %8 = vector.broadcast %cst : f32 to vector<128x640xf32>
    %9 = arith.cmpf oge, %7, %8 : vector<128x640xf32>
    %c0_5 = arith.constant 0 : index
    %c0_6 = arith.constant 0 : index
    %10 = vector.load %arg5[%c0_5, %c0_6] : memref<1x640xf32, #tpu.memory_space<vmem>>, vector<1x640xf32>
    %11 = vector.broadcast %10 : vector<1x640xf32> to vector<128x640xf32>
    %12 = arith.mulf %11, %7 : vector<128x640xf32>
    %13 = arith.select %9, %7, %12 : vector<128x640xi1>, vector<128x640xf32>
    %14 = arith.truncf %13 : vector<128x640xf32> to vector<128x640xbf16>
    %c0_7 = arith.constant 0 : index
    %c0_8 = arith.constant 0 : index
    %15 = vector.load %arg2[%c0_7, %c0_8] : memref<640x128xbf16, #tpu.memory_space<vmem>>, vector<640x128xbf16>
    %cst_9 = arith.constant dense<0.000000e+00> : vector<128x128xf32>
    %16 = tpu.matmul %14, %15, %cst_9 {dimension_numbers = #tpu.dot_dimension_numbers<[1], [0], [0], [1], [0, 0, 1, 1], [], []>} : vector<128x640xbf16>, vector<640x128xbf16>, vector<128x128xf32> -> vector<128x128xf32>
    %17 = arith.truncf %16 : vector<128x128xf32> to vector<128x128xbf16>
    %c0_10 = arith.constant 0 : index
    %c0_11 = arith.constant 0 : index
    %18 = vector.load %arg6[%c0_10, %c0_11] : memref<128x128xbf16, #tpu.memory_space<vmem>>, vector<128x128xbf16>
    tpu.vector_store %arg6[%c0_10, %c0_11], %17 {strides = array<i32>} : memref<128x128xbf16, #tpu.memory_space<vmem>>, vector<128x128xbf16>,
    %cst_12 = arith.constant dense<0.000000e+00> : vector<128xf32>
    %19 = vector.multi_reduction <add>, %16, %cst_12 [0] : vector<128x128xf32> to vector<128xf32>
    %20 = vector.shape_cast %19 : vector<128xf32> to vector<1x1x128xf32>
    %c0_13 = arith.constant 0 : index
    %c0_14 = arith.constant 0 : index
    %c0_15 = arith.constant 0 : index
    %21 = vector.load %arg7[%c0_13, %c0_14, %c0_15] : memref<1x1x128xf32, #tpu.memory_space<vmem>>, vector<1x1x128xf32>
    tpu.vector_store %arg7[%c0_13, %c0_14, %c0_15], %20 {strides = array<i32>} : memref<1x1x128xf32, #tpu.memory_space<vmem>>, vector<1x1x128xf32>,
    %22 = arith.mulf %16, %16 : vector<128x128xf32>
    %cst_16 = arith.constant dense<0.000000e+00> : vector<128xf32>
    %23 = vector.multi_reduction <add>, %22, %cst_16 [0] : vector<128x128xf32> to vector<128xf32>
    %24 = vector.shape_cast %23 : vector<128xf32> to vector<1x1x128xf32>
    %c0_17 = arith.constant 0 : index
    %c0_18 = arith.constant 0 : index
    %c0_19 = arith.constant 0 : index
    %25 = vector.load %arg8[%c0_17, %c0_18, %c0_19] : memref<1x1x128xf32, #tpu.memory_space<vmem>>, vector<1x1x128xf32>
    tpu.vector_store %arg8[%c0_17, %c0_18, %c0_19], %24 {strides = array<i32>} : memref<1x1x128xf32, #tpu.memory_space<vmem>>, vector<1x1x128xf32>,
    return
  }
  func.func @transform_0(%arg0: i32) -> (i32, i32) {
    %c0_i32 = arith.constant 0 : i32
    %c0_i32_0 = arith.constant 0 : i32
    return %arg0, %c0_i32 : i32, i32
  }
  func.func @transform_1(%arg0: i32) -> (i32, i32) {
    %c0_i32 = arith.constant 0 : i32
    %c0_i32_0 = arith.constant 0 : i32
    %c0_i32_1 = arith.constant 0 : i32
    return %c0_i32, %c0_i32_0 : i32, i32
  }
  func.func @transform_2(%arg0: i32) -> (i32, i32) {
    %c0_i32 = arith.constant 0 : i32
    %c0_i32_0 = arith.constant 0 : i32
    %c0_i32_1 = arith.constant 0 : i32
    return %c0_i32, %c0_i32_0 : i32, i32
  }
  func.func @transform_3(%arg0: i32) -> (i32, i32) {
    %c0_i32 = arith.constant 0 : i32
    %c0_i32_0 = arith.constant 0 : i32
    %c0_i32_1 = arith.constant 0 : i32
    return %c0_i32, %c0_i32_0 : i32, i32
  }
  func.func @transform_4(%arg0: i32) -> (i32, i32) {
    %c0_i32 = arith.constant 0 : i32
    %c0_i32_0 = arith.constant 0 : i32
    %c0_i32_1 = arith.constant 0 : i32
    return %c0_i32, %c0_i32_0 : i32, i32
  }
  func.func @transform_5(%arg0: i32) -> (i32, i32) {
    %c0_i32 = arith.constant 0 : i32
    %c0_i32_0 = arith.constant 0 : i32
    return %arg0, %c0_i32 : i32, i32
  }
  func.func @transform_6(%arg0: i32) -> (i32, i32, i32) {
    %c0_i32 = arith.constant 0 : i32
    %c0_i32_0 = arith.constant 0 : i32
    %c0_i32_1 = arith.constant 0 : i32
    return %arg0, %c0_i32, %c0_i32_0 : i32, i32, i32
  }
  func.func @transform_7(%arg0: i32) -> (i32, i32, i32) {
    %c0_i32 = arith.constant 0 : i32
    %c0_i32_0 = arith.constant 0 : i32
    %c0_i32_1 = arith.constant 0 : i32
    return %arg0, %c0_i32, %c0_i32_0 : i32, i32, i32
  }
}

module attributes {stable_mosaic.version = 11 : i64} {
  func.func @_fused_layer_kernel(%arg0: i32, %arg1: memref<512x384xbf16, #tpu.memory_space<vmem>>, %arg2: memref<384x128xbf16, #tpu.memory_space<vmem>>, %arg3: memref<1x384xf32, #tpu.memory_space<vmem>>, %arg4: memref<1x384xf32, #tpu.memory_space<vmem>>, %arg5: memref<1x384xf32, #tpu.memory_space<vmem>>, %arg6: memref<512x128xbf16, #tpu.memory_space<vmem>>, %arg7: memref<1x1x128xf32, #tpu.memory_space<vmem>>, %arg8: memref<1x1x128xf32, #tpu.memory_space<vmem>>) attributes {dimension_semantics = [#tpu.dimension_semantics<parallel>], iteration_bounds = array<i64: 1>, scalar_prefetch = 0 : i64, scratch_operands = 0 : i64, tpu.core_type = #tpu.core_type<tc>, window_params = [{transform_indices = @transform_0, window_bounds = array<i64: 512, 384>}, {pipeline_mode = #tpu.pipeline_mode<synchronous>, transform_indices = @transform_1, window_bounds = array<i64: 384, 128>}, {pipeline_mode = #tpu.pipeline_mode<synchronous>, transform_indices = @transform_2, window_bounds = array<i64: 1, 384>}, {pipeline_mode = #tpu.pipeline_mode<synchronous>, transform_indices = @transform_3, window_bounds = array<i64: 1, 384>}, {pipeline_mode = #tpu.pipeline_mode<synchronous>, transform_indices = @transform_4, window_bounds = array<i64: 1, 384>}, {transform_indices = @transform_5, window_bounds = array<i64: 512, 128>}, {transform_indices = @transform_6, window_bounds = array<i64: 1, 1, 128>}, {transform_indices = @transform_7, window_bounds = array<i64: 1, 1, 128>}]} {
    %c0 = arith.constant 0 : index
    %c0_0 = arith.constant 0 : index
    %0 = vector.load %arg1[%c0, %c0_0] : memref<512x384xbf16, #tpu.memory_space<vmem>>, vector<512x384xbf16>
    %1 = arith.extf %0 : vector<512x384xbf16> to vector<512x384xf32>
    %c0_1 = arith.constant 0 : index
    %c0_2 = arith.constant 0 : index
    %2 = vector.load %arg3[%c0_1, %c0_2] : memref<1x384xf32, #tpu.memory_space<vmem>>, vector<1x384xf32>
    %3 = vector.broadcast %2 : vector<1x384xf32> to vector<512x384xf32>
    %4 = arith.mulf %1, %3 : vector<512x384xf32>
    %c0_3 = arith.constant 0 : index
    %c0_4 = arith.constant 0 : index
    %5 = vector.load %arg4[%c0_3, %c0_4] : memref<1x384xf32, #tpu.memory_space<vmem>>, vector<1x384xf32>
    %6 = vector.broadcast %5 : vector<1x384xf32> to vector<512x384xf32>
    %7 = arith.addf %4, %6 : vector<512x384xf32>
    %cst = arith.constant 0.000000e+00 : f32
    %8 = vector.broadcast %cst : f32 to vector<512x384xf32>
    %9 = arith.cmpf oge, %7, %8 : vector<512x384xf32>
    %c0_5 = arith.constant 0 : index
    %c0_6 = arith.constant 0 : index
    %10 = vector.load %arg5[%c0_5, %c0_6] : memref<1x384xf32, #tpu.memory_space<vmem>>, vector<1x384xf32>
    %11 = vector.broadcast %10 : vector<1x384xf32> to vector<512x384xf32>
    %12 = arith.mulf %11, %7 : vector<512x384xf32>
    %13 = arith.select %9, %7, %12 : vector<512x384xi1>, vector<512x384xf32>
    %14 = arith.truncf %13 : vector<512x384xf32> to vector<512x384xbf16>
    %c0_7 = arith.constant 0 : index
    %c0_8 = arith.constant 0 : index
    %15 = vector.load %arg2[%c0_7, %c0_8] : memref<384x128xbf16, #tpu.memory_space<vmem>>, vector<384x128xbf16>
    %cst_9 = arith.constant dense<0.000000e+00> : vector<512x128xf32>
    %16 = tpu.matmul %14, %15, %cst_9 {dimension_numbers = #tpu.dot_dimension_numbers<[1], [0], [0], [1], [0, 0, 1, 1], [], []>} : vector<512x384xbf16>, vector<384x128xbf16>, vector<512x128xf32> -> vector<512x128xf32>
    %17 = arith.truncf %16 : vector<512x128xf32> to vector<512x128xbf16>
    %c0_10 = arith.constant 0 : index
    %c0_11 = arith.constant 0 : index
    %18 = vector.load %arg6[%c0_10, %c0_11] : memref<512x128xbf16, #tpu.memory_space<vmem>>, vector<512x128xbf16>
    tpu.vector_store %arg6[%c0_10, %c0_11], %17 {strides = array<i32>} : memref<512x128xbf16, #tpu.memory_space<vmem>>, vector<512x128xbf16>,
    %cst_12 = arith.constant dense<0.000000e+00> : vector<128xf32>
    %19 = vector.multi_reduction <add>, %16, %cst_12 [0] : vector<512x128xf32> to vector<128xf32>
    %20 = vector.shape_cast %19 : vector<128xf32> to vector<1x1x128xf32>
    %c0_13 = arith.constant 0 : index
    %c0_14 = arith.constant 0 : index
    %c0_15 = arith.constant 0 : index
    %21 = vector.load %arg7[%c0_13, %c0_14, %c0_15] : memref<1x1x128xf32, #tpu.memory_space<vmem>>, vector<1x1x128xf32>
    tpu.vector_store %arg7[%c0_13, %c0_14, %c0_15], %20 {strides = array<i32>} : memref<1x1x128xf32, #tpu.memory_space<vmem>>, vector<1x1x128xf32>,
    %22 = arith.mulf %16, %16 : vector<512x128xf32>
    %cst_16 = arith.constant dense<0.000000e+00> : vector<128xf32>
    %23 = vector.multi_reduction <add>, %22, %cst_16 [0] : vector<512x128xf32> to vector<128xf32>
    %24 = vector.shape_cast %23 : vector<128xf32> to vector<1x1x128xf32>
    %c0_17 = arith.constant 0 : index
    %c0_18 = arith.constant 0 : index
    %c0_19 = arith.constant 0 : index
    %25 = vector.load %arg8[%c0_17, %c0_18, %c0_19] : memref<1x1x128xf32, #tpu.memory_space<vmem>>, vector<1x1x128xf32>
    tpu.vector_store %arg8[%c0_17, %c0_18, %c0_19], %24 {strides = array<i32>} : memref<1x1x128xf32, #tpu.memory_space<vmem>>, vector<1x1x128xf32>,
    return
  }
  func.func @transform_0(%arg0: i32) -> (i32, i32) {
    %c0_i32 = arith.constant 0 : i32
    %c0_i32_0 = arith.constant 0 : i32
    return %arg0, %c0_i32 : i32, i32
  }
  func.func @transform_1(%arg0: i32) -> (i32, i32) {
    %c0_i32 = arith.constant 0 : i32
    %c0_i32_0 = arith.constant 0 : i32
    %c0_i32_1 = arith.constant 0 : i32
    return %c0_i32, %c0_i32_0 : i32, i32
  }
  func.func @transform_2(%arg0: i32) -> (i32, i32) {
    %c0_i32 = arith.constant 0 : i32
    %c0_i32_0 = arith.constant 0 : i32
    %c0_i32_1 = arith.constant 0 : i32
    return %c0_i32, %c0_i32_0 : i32, i32
  }
  func.func @transform_3(%arg0: i32) -> (i32, i32) {
    %c0_i32 = arith.constant 0 : i32
    %c0_i32_0 = arith.constant 0 : i32
    %c0_i32_1 = arith.constant 0 : i32
    return %c0_i32, %c0_i32_0 : i32, i32
  }
  func.func @transform_4(%arg0: i32) -> (i32, i32) {
    %c0_i32 = arith.constant 0 : i32
    %c0_i32_0 = arith.constant 0 : i32
    %c0_i32_1 = arith.constant 0 : i32
    return %c0_i32, %c0_i32_0 : i32, i32
  }
  func.func @transform_5(%arg0: i32) -> (i32, i32) {
    %c0_i32 = arith.constant 0 : i32
    %c0_i32_0 = arith.constant 0 : i32
    return %arg0, %c0_i32 : i32, i32
  }
  func.func @transform_6(%arg0: i32) -> (i32, i32, i32) {
    %c0_i32 = arith.constant 0 : i32
    %c0_i32_0 = arith.constant 0 : i32
    %c0_i32_1 = arith.constant 0 : i32
    return %arg0, %c0_i32, %c0_i32_0 : i32, i32, i32
  }
  func.func @transform_7(%arg0: i32) -> (i32, i32, i32) {
    %c0_i32 = arith.constant 0 : i32
    %c0_i32_0 = arith.constant 0 : i32
    %c0_i32_1 = arith.constant 0 : i32
    return %arg0, %c0_i32, %c0_i32_0 : i32, i32, i32
  }
}

module attributes {stable_mosaic.version = 11 : i64} {
  func.func @_fused_layer_kernel(%arg0: i32, %arg1: memref<512x256xbf16, #tpu.memory_space<vmem>>, %arg2: memref<256x128xbf16, #tpu.memory_space<vmem>>, %arg3: memref<1x256xf32, #tpu.memory_space<vmem>>, %arg4: memref<1x256xf32, #tpu.memory_space<vmem>>, %arg5: memref<1x256xf32, #tpu.memory_space<vmem>>, %arg6: memref<512x128xbf16, #tpu.memory_space<vmem>>, %arg7: memref<1x1x128xf32, #tpu.memory_space<vmem>>, %arg8: memref<1x1x128xf32, #tpu.memory_space<vmem>>) attributes {dimension_semantics = [#tpu.dimension_semantics<parallel>], iteration_bounds = array<i64: 4>, scalar_prefetch = 0 : i64, scratch_operands = 0 : i64, tpu.core_type = #tpu.core_type<tc>, window_params = [{transform_indices = @transform_0, window_bounds = array<i64: 512, 256>}, {pipeline_mode = #tpu.pipeline_mode<synchronous>, transform_indices = @transform_1, window_bounds = array<i64: 256, 128>}, {pipeline_mode = #tpu.pipeline_mode<synchronous>, transform_indices = @transform_2, window_bounds = array<i64: 1, 256>}, {pipeline_mode = #tpu.pipeline_mode<synchronous>, transform_indices = @transform_3, window_bounds = array<i64: 1, 256>}, {pipeline_mode = #tpu.pipeline_mode<synchronous>, transform_indices = @transform_4, window_bounds = array<i64: 1, 256>}, {transform_indices = @transform_5, window_bounds = array<i64: 512, 128>}, {transform_indices = @transform_6, window_bounds = array<i64: 1, 1, 128>}, {transform_indices = @transform_7, window_bounds = array<i64: 1, 1, 128>}]} {
    %c0 = arith.constant 0 : index
    %c0_0 = arith.constant 0 : index
    %0 = vector.load %arg1[%c0, %c0_0] : memref<512x256xbf16, #tpu.memory_space<vmem>>, vector<512x256xbf16>
    %1 = arith.extf %0 : vector<512x256xbf16> to vector<512x256xf32>
    %c0_1 = arith.constant 0 : index
    %c0_2 = arith.constant 0 : index
    %2 = vector.load %arg3[%c0_1, %c0_2] : memref<1x256xf32, #tpu.memory_space<vmem>>, vector<1x256xf32>
    %3 = vector.broadcast %2 : vector<1x256xf32> to vector<512x256xf32>
    %4 = arith.mulf %1, %3 : vector<512x256xf32>
    %c0_3 = arith.constant 0 : index
    %c0_4 = arith.constant 0 : index
    %5 = vector.load %arg4[%c0_3, %c0_4] : memref<1x256xf32, #tpu.memory_space<vmem>>, vector<1x256xf32>
    %6 = vector.broadcast %5 : vector<1x256xf32> to vector<512x256xf32>
    %7 = arith.addf %4, %6 : vector<512x256xf32>
    %cst = arith.constant 0.000000e+00 : f32
    %8 = vector.broadcast %cst : f32 to vector<512x256xf32>
    %9 = arith.cmpf oge, %7, %8 : vector<512x256xf32>
    %c0_5 = arith.constant 0 : index
    %c0_6 = arith.constant 0 : index
    %10 = vector.load %arg5[%c0_5, %c0_6] : memref<1x256xf32, #tpu.memory_space<vmem>>, vector<1x256xf32>
    %11 = vector.broadcast %10 : vector<1x256xf32> to vector<512x256xf32>
    %12 = arith.mulf %11, %7 : vector<512x256xf32>
    %13 = arith.select %9, %7, %12 : vector<512x256xi1>, vector<512x256xf32>
    %14 = arith.truncf %13 : vector<512x256xf32> to vector<512x256xbf16>
    %c0_7 = arith.constant 0 : index
    %c0_8 = arith.constant 0 : index
    %15 = vector.load %arg2[%c0_7, %c0_8] : memref<256x128xbf16, #tpu.memory_space<vmem>>, vector<256x128xbf16>
    %cst_9 = arith.constant dense<0.000000e+00> : vector<512x128xf32>
    %16 = tpu.matmul %14, %15, %cst_9 {dimension_numbers = #tpu.dot_dimension_numbers<[1], [0], [0], [1], [0, 0, 1, 1], [], []>} : vector<512x256xbf16>, vector<256x128xbf16>, vector<512x128xf32> -> vector<512x128xf32>
    %17 = arith.truncf %16 : vector<512x128xf32> to vector<512x128xbf16>
    %c0_10 = arith.constant 0 : index
    %c0_11 = arith.constant 0 : index
    %18 = vector.load %arg6[%c0_10, %c0_11] : memref<512x128xbf16, #tpu.memory_space<vmem>>, vector<512x128xbf16>
    tpu.vector_store %arg6[%c0_10, %c0_11], %17 {strides = array<i32>} : memref<512x128xbf16, #tpu.memory_space<vmem>>, vector<512x128xbf16>,
    %cst_12 = arith.constant dense<0.000000e+00> : vector<128xf32>
    %19 = vector.multi_reduction <add>, %16, %cst_12 [0] : vector<512x128xf32> to vector<128xf32>
    %20 = vector.shape_cast %19 : vector<128xf32> to vector<1x1x128xf32>
    %c0_13 = arith.constant 0 : index
    %c0_14 = arith.constant 0 : index
    %c0_15 = arith.constant 0 : index
    %21 = vector.load %arg7[%c0_13, %c0_14, %c0_15] : memref<1x1x128xf32, #tpu.memory_space<vmem>>, vector<1x1x128xf32>
    tpu.vector_store %arg7[%c0_13, %c0_14, %c0_15], %20 {strides = array<i32>} : memref<1x1x128xf32, #tpu.memory_space<vmem>>, vector<1x1x128xf32>,
    %22 = arith.mulf %16, %16 : vector<512x128xf32>
    %cst_16 = arith.constant dense<0.000000e+00> : vector<128xf32>
    %23 = vector.multi_reduction <add>, %22, %cst_16 [0] : vector<512x128xf32> to vector<128xf32>
    %24 = vector.shape_cast %23 : vector<128xf32> to vector<1x1x128xf32>
    %c0_17 = arith.constant 0 : index
    %c0_18 = arith.constant 0 : index
    %c0_19 = arith.constant 0 : index
    %25 = vector.load %arg8[%c0_17, %c0_18, %c0_19] : memref<1x1x128xf32, #tpu.memory_space<vmem>>, vector<1x1x128xf32>
    tpu.vector_store %arg8[%c0_17, %c0_18, %c0_19], %24 {strides = array<i32>} : memref<1x1x128xf32, #tpu.memory_space<vmem>>, vector<1x1x128xf32>,
    return
  }
  func.func @transform_0(%arg0: i32) -> (i32, i32) {
    %c0_i32 = arith.constant 0 : i32
    %c0_i32_0 = arith.constant 0 : i32
    return %arg0, %c0_i32 : i32, i32
  }
  func.func @transform_1(%arg0: i32) -> (i32, i32) {
    %c0_i32 = arith.constant 0 : i32
    %c0_i32_0 = arith.constant 0 : i32
    %c0_i32_1 = arith.constant 0 : i32
    return %c0_i32, %c0_i32_0 : i32, i32
  }
  func.func @transform_2(%arg0: i32) -> (i32, i32) {
    %c0_i32 = arith.constant 0 : i32
    %c0_i32_0 = arith.constant 0 : i32
    %c0_i32_1 = arith.constant 0 : i32
    return %c0_i32, %c0_i32_0 : i32, i32
  }
  func.func @transform_3(%arg0: i32) -> (i32, i32) {
    %c0_i32 = arith.constant 0 : i32
    %c0_i32_0 = arith.constant 0 : i32
    %c0_i32_1 = arith.constant 0 : i32
    return %c0_i32, %c0_i32_0 : i32, i32
  }
  func.func @transform_4(%arg0: i32) -> (i32, i32) {
    %c0_i32 = arith.constant 0 : i32
    %c0_i32_0 = arith.constant 0 : i32
    %c0_i32_1 = arith.constant 0 : i32
    return %c0_i32, %c0_i32_0 : i32, i32
  }
  func.func @transform_5(%arg0: i32) -> (i32, i32) {
    %c0_i32 = arith.constant 0 : i32
    %c0_i32_0 = arith.constant 0 : i32
    return %arg0, %c0_i32 : i32, i32
  }
  func.func @transform_6(%arg0: i32) -> (i32, i32, i32) {
    %c0_i32 = arith.constant 0 : i32
    %c0_i32_0 = arith.constant 0 : i32
    %c0_i32_1 = arith.constant 0 : i32
    return %arg0, %c0_i32, %c0_i32_0 : i32, i32, i32
  }
  func.func @transform_7(%arg0: i32) -> (i32, i32, i32) {
    %c0_i32 = arith.constant 0 : i32
    %c0_i32_0 = arith.constant 0 : i32
    %c0_i32_1 = arith.constant 0 : i32
    return %arg0, %c0_i32, %c0_i32_0 : i32, i32, i32
  }
}

module attributes {stable_mosaic.version = 11 : i64} {
  func.func @_fused_layer_kernel(%arg0: i32, %arg1: memref<512x128xbf16, #tpu.memory_space<vmem>>, %arg2: memref<128x128xbf16, #tpu.memory_space<vmem>>, %arg3: memref<1x128xf32, #tpu.memory_space<vmem>>, %arg4: memref<1x128xf32, #tpu.memory_space<vmem>>, %arg5: memref<1x128xf32, #tpu.memory_space<vmem>>, %arg6: memref<512x128xf32, #tpu.memory_space<vmem>>, %arg7: memref<1x1x128xf32, #tpu.memory_space<vmem>>, %arg8: memref<1x1x128xf32, #tpu.memory_space<vmem>>) attributes {dimension_semantics = [#tpu.dimension_semantics<parallel>], iteration_bounds = array<i64: 16>, scalar_prefetch = 0 : i64, scratch_operands = 0 : i64, tpu.core_type = #tpu.core_type<tc>, window_params = [{transform_indices = @transform_0, window_bounds = array<i64: 512, 128>}, {pipeline_mode = #tpu.pipeline_mode<synchronous>, transform_indices = @transform_1, window_bounds = array<i64: 128, 128>}, {pipeline_mode = #tpu.pipeline_mode<synchronous>, transform_indices = @transform_2, window_bounds = array<i64: 1, 128>}, {pipeline_mode = #tpu.pipeline_mode<synchronous>, transform_indices = @transform_3, window_bounds = array<i64: 1, 128>}, {pipeline_mode = #tpu.pipeline_mode<synchronous>, transform_indices = @transform_4, window_bounds = array<i64: 1, 128>}, {transform_indices = @transform_5, window_bounds = array<i64: 512, 128>}, {transform_indices = @transform_6, window_bounds = array<i64: 1, 1, 128>}, {transform_indices = @transform_7, window_bounds = array<i64: 1, 1, 128>}]} {
    %c0 = arith.constant 0 : index
    %c0_0 = arith.constant 0 : index
    %0 = vector.load %arg1[%c0, %c0_0] : memref<512x128xbf16, #tpu.memory_space<vmem>>, vector<512x128xbf16>
    %1 = arith.extf %0 : vector<512x128xbf16> to vector<512x128xf32>
    %c0_1 = arith.constant 0 : index
    %c0_2 = arith.constant 0 : index
    %2 = vector.load %arg3[%c0_1, %c0_2] : memref<1x128xf32, #tpu.memory_space<vmem>>, vector<1x128xf32>
    %3 = vector.broadcast %2 : vector<1x128xf32> to vector<512x128xf32>
    %4 = arith.mulf %1, %3 : vector<512x128xf32>
    %c0_3 = arith.constant 0 : index
    %c0_4 = arith.constant 0 : index
    %5 = vector.load %arg4[%c0_3, %c0_4] : memref<1x128xf32, #tpu.memory_space<vmem>>, vector<1x128xf32>
    %6 = vector.broadcast %5 : vector<1x128xf32> to vector<512x128xf32>
    %7 = arith.addf %4, %6 : vector<512x128xf32>
    %cst = arith.constant 0.000000e+00 : f32
    %8 = vector.broadcast %cst : f32 to vector<512x128xf32>
    %9 = arith.cmpf oge, %7, %8 : vector<512x128xf32>
    %c0_5 = arith.constant 0 : index
    %c0_6 = arith.constant 0 : index
    %10 = vector.load %arg5[%c0_5, %c0_6] : memref<1x128xf32, #tpu.memory_space<vmem>>, vector<1x128xf32>
    %11 = vector.broadcast %10 : vector<1x128xf32> to vector<512x128xf32>
    %12 = arith.mulf %11, %7 : vector<512x128xf32>
    %13 = arith.select %9, %7, %12 : vector<512x128xi1>, vector<512x128xf32>
    %14 = arith.truncf %13 : vector<512x128xf32> to vector<512x128xbf16>
    %c0_7 = arith.constant 0 : index
    %c0_8 = arith.constant 0 : index
    %15 = vector.load %arg2[%c0_7, %c0_8] : memref<128x128xbf16, #tpu.memory_space<vmem>>, vector<128x128xbf16>
    %cst_9 = arith.constant dense<0.000000e+00> : vector<512x128xf32>
    %16 = tpu.matmul %14, %15, %cst_9 {dimension_numbers = #tpu.dot_dimension_numbers<[1], [0], [0], [1], [0, 0, 1, 1], [], []>} : vector<512x128xbf16>, vector<128x128xbf16>, vector<512x128xf32> -> vector<512x128xf32>
    %17 = math.tanh %16 : vector<512x128xf32>
    %c0_10 = arith.constant 0 : index
    %c0_11 = arith.constant 0 : index
    %18 = vector.load %arg6[%c0_10, %c0_11] : memref<512x128xf32, #tpu.memory_space<vmem>>, vector<512x128xf32>
    tpu.vector_store %arg6[%c0_10, %c0_11], %17 {strides = array<i32>} : memref<512x128xf32, #tpu.memory_space<vmem>>, vector<512x128xf32>,
    %cst_12 = arith.constant dense<0.000000e+00> : vector<128xf32>
    %19 = vector.multi_reduction <add>, %17, %cst_12 [0] : vector<512x128xf32> to vector<128xf32>
    %20 = vector.shape_cast %19 : vector<128xf32> to vector<1x1x128xf32>
    %c0_13 = arith.constant 0 : index
    %c0_14 = arith.constant 0 : index
    %c0_15 = arith.constant 0 : index
    %21 = vector.load %arg7[%c0_13, %c0_14, %c0_15] : memref<1x1x128xf32, #tpu.memory_space<vmem>>, vector<1x1x128xf32>
    tpu.vector_store %arg7[%c0_13, %c0_14, %c0_15], %20 {strides = array<i32>} : memref<1x1x128xf32, #tpu.memory_space<vmem>>, vector<1x1x128xf32>,
    %22 = arith.mulf %17, %17 : vector<512x128xf32>
    %cst_16 = arith.constant dense<0.000000e+00> : vector<128xf32>
    %23 = vector.multi_reduction <add>, %22, %cst_16 [0] : vector<512x128xf32> to vector<128xf32>
    %24 = vector.shape_cast %23 : vector<128xf32> to vector<1x1x128xf32>
    %c0_17 = arith.constant 0 : index
    %c0_18 = arith.constant 0 : index
    %c0_19 = arith.constant 0 : index
    %25 = vector.load %arg8[%c0_17, %c0_18, %c0_19] : memref<1x1x128xf32, #tpu.memory_space<vmem>>, vector<1x1x128xf32>
    tpu.vector_store %arg8[%c0_17, %c0_18, %c0_19], %24 {strides = array<i32>} : memref<1x1x128xf32, #tpu.memory_space<vmem>>, vector<1x1x128xf32>,
    return
  }
  func.func @transform_0(%arg0: i32) -> (i32, i32) {
    %c0_i32 = arith.constant 0 : i32
    %c0_i32_0 = arith.constant 0 : i32
    return %arg0, %c0_i32 : i32, i32
  }
  func.func @transform_1(%arg0: i32) -> (i32, i32) {
    %c0_i32 = arith.constant 0 : i32
    %c0_i32_0 = arith.constant 0 : i32
    %c0_i32_1 = arith.constant 0 : i32
    return %c0_i32, %c0_i32_0 : i32, i32
  }
  func.func @transform_2(%arg0: i32) -> (i32, i32) {
    %c0_i32 = arith.constant 0 : i32
    %c0_i32_0 = arith.constant 0 : i32
    %c0_i32_1 = arith.constant 0 : i32
    return %c0_i32, %c0_i32_0 : i32, i32
  }
  func.func @transform_3(%arg0: i32) -> (i32, i32) {
    %c0_i32 = arith.constant 0 : i32
    %c0_i32_0 = arith.constant 0 : i32
    %c0_i32_1 = arith.constant 0 : i32
    return %c0_i32, %c0_i32_0 : i32, i32
  }
  func.func @transform_4(%arg0: i32) -> (i32, i32) {
    %c0_i32 = arith.constant 0 : i32
    %c0_i32_0 = arith.constant 0 : i32
    %c0_i32_1 = arith.constant 0 : i32
    return %c0_i32, %c0_i32_0 : i32, i32
  }
  func.func @transform_5(%arg0: i32) -> (i32, i32) {
    %c0_i32 = arith.constant 0 : i32
    %c0_i32_0 = arith.constant 0 : i32
    return %arg0, %c0_i32 : i32, i32
  }
  func.func @transform_6(%arg0: i32) -> (i32, i32, i32) {
    %c0_i32 = arith.constant 0 : i32
    %c0_i32_0 = arith.constant 0 : i32
    %c0_i32_1 = arith.constant 0 : i32
    return %arg0, %c0_i32, %c0_i32_0 : i32, i32, i32
  }
  func.func @transform_7(%arg0: i32) -> (i32, i32, i32) {
    %c0_i32 = arith.constant 0 : i32
    %c0_i32_0 = arith.constant 0 : i32
    %c0_i32_1 = arith.constant 0 : i32
    return %arg0, %c0_i32, %c0_i32_0 : i32, i32, i32
  }
}

</mosaic_0001>

<llo_original>
// kernel: wgan_generator_forward.7
$region0: #{wgan_generator_forward.7}
  #allocation0 [shape = 'u32[]', space=smem, size = 0x4, offset = 0x4, fixed_abs, tag = 'smem constant byte address 0x4 - core index']
  #allocation1 [shape = 'u32[72,128]{1,0:T(1,128)}', space=vmem, size = 0x9000, scoped, tag = 'internal scratch']
  %s0 = inlined_call_operand.vmem [shape: bf16[8,128], index: 0, kind: input, shape index: {}]
  %s1 = inlined_call_operand.vmem [shape: bf16[128,128], index: 1, kind: input, shape index: {}]
  %s2 = inlined_call_operand.vmem [shape: f32[1,128], index: 2, kind: input, shape index: {}, may-alias: {2,4}]
  %s3 = inlined_call_operand.vmem [shape: f32[1,128], index: 3, kind: input, shape index: {}]
  %s4 = inlined_call_operand.vmem [shape: f32[1,128], index: 4, kind: input, shape index: {}, may-alias: {2,4}]
  %s5 = inlined_call_operand.vmem [shape: bf16[8,128], index: 5, kind: output, shape index: {0}]
  %s6 = inlined_call_operand.vmem [shape: f32[1,1,128], index: 6, kind: output, shape index: {1}]
  %s7 = inlined_call_operand.vmem [shape: f32[1,1,128], index: 7, kind: output, shape index: {2}]
  %8 = xla_tuple %s5, %s6, %s7
  %s9 = sld [smem:[#allocation0]]
  $region46: #{wgan_generator_forward.7} parent=0
    _
  %s11 = ssub.s32 1, %s9
  %s12 = scalar_select 0, %s11, %s9
  // Predicated region
  $region2: #{wgan_generator_forward.7} parent=0 // pred_check
    _
  $region3: #{wgan_generator_forward.7} parent=0 // pred_check_branch
    %14 = sbr.rel (0) target = $region5
  $region4: #{wgan_generator_forward.7} parent=0 // pred_region
    _
  $region5: #{wgan_generator_forward.7} parent=0 // pred_fallthru
    _
  // Predicated region
  $region6: #{wgan_generator_forward.7} parent=0 // pred_check
    _
  $region7: #{wgan_generator_forward.7} parent=0 // pred_check_branch
    %16 = sbr.rel (0) target = $region9
  $region8: #{wgan_generator_forward.7} parent=0 // pred_region
    _
  $region9: #{wgan_generator_forward.7} parent=0 // pred_fallthru
    _
  // Predicated region
  $region10: #{wgan_generator_forward.7} parent=0 // pred_check
    _
  $region11: #{wgan_generator_forward.7} parent=0 // pred_check_branch
    %18 = sbr.rel (0) target = $region13
  $region12: #{wgan_generator_forward.7} parent=0 // pred_region
    _
  $region13: #{wgan_generator_forward.7} parent=0 // pred_fallthru
    _
  // Predicated region
  $region14: #{wgan_generator_forward.7} parent=0 // pred_check
    _
  $region15: #{wgan_generator_forward.7} parent=0 // pred_check_branch
    %20 = sbr.rel (0) target = $region17
  $region16: #{wgan_generator_forward.7} parent=0 // pred_region
    _
  $region17: #{wgan_generator_forward.7} parent=0 // pred_fallthru
    _
  // Predicated region
  $region18: #{wgan_generator_forward.7} parent=0 // pred_check
    _
  $region19: #{wgan_generator_forward.7} parent=0 // pred_check_branch
    %22 = sbr.rel (0) target = $region21
  $region20: #{wgan_generator_forward.7} parent=0 // pred_region
    _
  $region21: #{wgan_generator_forward.7} parent=0 // pred_fallthru
    _
  %v23 = vld [vmem:[%s0] sm:$0xf]
  %v24 = vunpack.c.l.bf16 %v23
  %v25 = vld [vmem:[%s2] sm:$0x1]
  %v27 = vperm.slane %v25, 0
  %v29 = vmul.f32 %v24, %v27
  %v30 = vld [vmem:[%s3] sm:$0x1]
  %v32 = vperm.slane %v30, 0
  %v34 = vadd.f32 %v29, %v32
  %vm35 = vcmp.ge.f32.partialorder %v34, 0.0
  %v36 = vld [vmem:[%s4] sm:$0x1]
  %v38 = vperm.slane %v36, 0
  %v40 = vmul.f32 %v38, %v34
  %v41 = vsel %vm35, %v34, %v40
  %v42 = vpack.c.bf16 %v41, %v41
  %v43 = vld [vmem:[%s1] sm:$0xf]
  %v44 = vld [vmem:[%s1 + $0x4] sm:$0xf]
  %v45 = vld [vmem:[%s1 + $0x8] sm:$0xf]
  %v46 = vld [vmem:[%s1 + $0xc] sm:$0xf]
  %v47 = vld [vmem:[%s1 + $0x10] sm:$0xf]
  %v48 = vld [vmem:[%s1 + $0x14] sm:$0xf]
  %v49 = vld [vmem:[%s1 + $0x18] sm:$0xf]
  %v50 = vld [vmem:[%s1 + $0x1c] sm:$0xf]
  %v51 = vld [vmem:[%s1 + $0x20] sm:$0xf]
  %v52 = vld [vmem:[%s1 + $0x24] sm:$0xf]
  %v53 = vld [vmem:[%s1 + $0x28] sm:$0xf]
  %v54 = vld [vmem:[%s1 + $0x2c] sm:$0xf]
  %v55 = vld [vmem:[%s1 + $0x30] sm:$0xf]
  %v56 = vld [vmem:[%s1 + $0x34] sm:$0xf]
  %v57 = vld [vmem:[%s1 + $0x38] sm:$0xf]
  %v58 = vld [vmem:[%s1 + $0x3c] sm:$0xf]
  %v75 = vunpack.c.l.b16 %v43
  %v76 = vunpack.c.l.b16 %v44
  %v77 = vunpack.c.l.b16 %v45
  %v78 = vunpack.c.l.b16 %v46
  %v79 = vunpack.c.l.b16 %v47
  %v80 = vunpack.c.l.b16 %v48
  %v81 = vunpack.c.l.b16 %v49
  %v82 = vunpack.c.l.b16 %v50
  %v83 = vunpack.c.l.b16 %v51
  %v84 = vunpack.c.l.b16 %v52
  %v85 = vunpack.c.l.b16 %v53
  %v86 = vunpack.c.l.b16 %v54
  %v87 = vunpack.c.l.b16 %v55
  %v88 = vunpack.c.l.b16 %v56
  %v89 = vunpack.c.l.b16 %v57
  %v90 = vunpack.c.l.b16 %v58
  %v91 = vpack.c.b16 %v76, %v75
  %v92 = vpack.c.b16 %v78, %v77
  %v93 = vpack.c.b16 %v80, %v79
  %v94 = vpack.c.b16 %v82, %v81
  %v95 = vpack.c.b16 %v84, %v83
  %v96 = vpack.c.b16 %v86, %v85
  %v97 = vpack.c.b16 %v88, %v87
  %v98 = vpack.c.b16 %v90, %v89
  %107 = vmatpush.bf16.msra.mxu0 %v98
  %108 = vmatpush.bf16.msra.mxu0 %v97
  %109 = vmatpush.bf16.msra.mxu0 %v96
  %110 = vmatpush.bf16.msra.mxu0 %v95
  %111 = vmatpush.bf16.msra.mxu0 %v94
  %112 = vmatpush.bf16.msra.mxu0 %v93
  %113 = vmatpush.bf16.msra.mxu0 %v92
  %114 = vmatpush.bf16.msra.mxu0 %v91
  %115 = vmatmul.bf16.gmra.mxu0 %v42
  %v116 = vpop.f32.mrf.mxu0
  %v117 = vadd.f32 0.0, %v116
  %v118 = vpop.f32.mrf.mxu0
  %119 = vdwg.mxu0
  %v120 = vpack.c.bf16 %v117, %v117
  %121 = vst [vmem:[%s5] sm:$0xf] %v120
  %v122 = vlaneseq
  %v123 = vshrl.u32 %v122, 7
  %vm124 = vcmp.lt.s32.totalorder %v123, 2
  %v125 = vsel %vm124, %v117, 0.0
  %v126 = vrot.slane %v125, 4
  %v127 = vadd.f32 %v125, %v126
  %v128 = vrot.slane %v127, 2
  %v129 = vadd.f32 %v127, %v128
  %v130 = vrot.slane %v129, 1
  %v131 = vadd.f32 %v129, %v130
  %132 = vst [vmem:[%s6] sm:$0x1] %v131
  %v133 = vmul.f32 %v125, %v125
  %v134 = vrot.slane %v133, 4
  %v135 = vadd.f32 %v133, %v134
  %v136 = vrot.slane %v135, 2
  %v137 = vadd.f32 %v135, %v136
  %v138 = vrot.slane %v137, 1
  %v139 = vadd.f32 %v137, %v138
  %140 = vst [vmem:[%s7] sm:$0x1] %v139
  // Predicated region
  $region22: #{wgan_generator_forward.7} parent=0 // pred_check
    _
  $region23: #{wgan_generator_forward.7} parent=0 // pred_check_branch
    %142 = sbr.rel (0) target = $region25
  $region24: #{wgan_generator_forward.7} parent=0 // pred_region
    _
  $region25: #{wgan_generator_forward.7} parent=0 // pred_fallthru
    _
  // Predicated region
  $region26: #{wgan_generator_forward.7} parent=0 // pred_check
    _
  $region27: #{wgan_generator_forward.7} parent=0 // pred_check_branch
    %144 = sbr.rel (0) target = $region29
  $region28: #{wgan_generator_forward.7} parent=0 // pred_region
    _
  $region29: #{wgan_generator_forward.7} parent=0 // pred_fallthru
    _
  // Predicated region
  $region30: #{wgan_generator_forward.7} parent=0 // pred_check
    _
  $region31: #{wgan_generator_forward.7} parent=0 // pred_check_branch
    %146 = sbr.rel (0) target = $region33
  $region32: #{wgan_generator_forward.7} parent=0 // pred_region
    _
  $region33: #{wgan_generator_forward.7} parent=0 // pred_fallthru
    _
  // Predicated region
  $region34: #{wgan_generator_forward.7} parent=0 // pred_check
    _
  $region35: #{wgan_generator_forward.7} parent=0 // pred_check_branch
    %148 = sbr.rel (0) target = $region37
  $region36: #{wgan_generator_forward.7} parent=0 // pred_region
    _
  $region37: #{wgan_generator_forward.7} parent=0 // pred_fallthru
    _
  // Predicated region
  $region38: #{wgan_generator_forward.7} parent=0 // pred_check
    _
  $region39: #{wgan_generator_forward.7} parent=0 // pred_check_branch
    %150 = sbr.rel (0) target = $region41
  $region40: #{wgan_generator_forward.7} parent=0 // pred_region
    _
  $region41: #{wgan_generator_forward.7} parent=0 // pred_fallthru
    _
  // Predicated region
  $region42: #{wgan_generator_forward.7} parent=0 // pred_check
    _
  $region43: #{wgan_generator_forward.7} parent=0 // pred_check_branch
    %152 = sbr.rel (0) target = $region45
  $region44: #{wgan_generator_forward.7} parent=0 // pred_region
    _
  $region45: #{wgan_generator_forward.7} parent=0 // pred_fallthru
    _

// kernel: wgan_generator_forward.8
$region0: #{wgan_generator_forward.8}
  #allocation0 [shape = 'u32[]', space=smem, size = 0x4, offset = 0x4, fixed_abs, tag = 'smem constant byte address 0x4 - core index']
  #allocation1 [shape = 'u32[72,128]{1,0:T(1,128)}', space=vmem, size = 0x9000, scoped, tag = 'internal scratch']
  %s0 = inlined_call_operand.vmem [shape: bf16[8,128], index: 0, kind: input, shape index: {}]
  %s1 = inlined_call_operand.vmem [shape: bf16[128,2048], index: 1, kind: input, shape index: {}]
  %s2 = inlined_call_operand.vmem [shape: f32[1,128], index: 2, kind: input, shape index: {}]
  %s3 = inlined_call_operand.vmem [shape: f32[1,128], index: 3, kind: input, shape index: {}]
  %s4 = inlined_call_operand.vmem [shape: f32[1,128], index: 4, kind: input, shape index: {}]
  %s5 = inlined_call_operand.vmem [shape: bf16[8,2048], index: 5, kind: output, shape index: {0}]
  %s6 = inlined_call_operand.vmem [shape: f32[1,1,2048], index: 6, kind: output, shape index: {1}]
  %s7 = inlined_call_operand.vmem [shape: f32[1,1,2048], index: 7, kind: output, shape index: {2}]
  %8 = xla_tuple %s5, %s6, %s7
  %s9 = sld [smem:[#allocation0]]
  $region46: #{wgan_generator_forward.8} parent=0
    _
  %s11 = ssub.s32 1, %s9
  %s12 = scalar_select 0, %s11, %s9
  // Predicated region
  $region2: #{wgan_generator_forward.8} parent=0 // pred_check
    _
  $region3: #{wgan_generator_forward.8} parent=0 // pred_check_branch
    %14 = sbr.rel (0) target = $region5
  $region4: #{wgan_generator_forward.8} parent=0 // pred_region
    _
  $region5: #{wgan_generator_forward.8} parent=0 // pred_fallthru
    _
  // Predicated region
  $region6: #{wgan_generator_forward.8} parent=0 // pred_check
    _
  $region7: #{wgan_generator_forward.8} parent=0 // pred_check_branch
    %16 = sbr.rel (0) target = $region9
  $region8: #{wgan_generator_forward.8} parent=0 // pred_region
    _
  $region9: #{wgan_generator_forward.8} parent=0 // pred_fallthru
    _
  // Predicated region
  $region10: #{wgan_generator_forward.8} parent=0 // pred_check
    _
  $region11: #{wgan_generator_forward.8} parent=0 // pred_check_branch
    %18 = sbr.rel (0) target = $region13
  $region12: #{wgan_generator_forward.8} parent=0 // pred_region
    _
  $region13: #{wgan_generator_forward.8} parent=0 // pred_fallthru
    _
  // Predicated region
  $region14: #{wgan_generator_forward.8} parent=0 // pred_check
    _
  $region15: #{wgan_generator_forward.8} parent=0 // pred_check_branch
    %20 = sbr.rel (0) target = $region17
  $region16: #{wgan_generator_forward.8} parent=0 // pred_region
    _
  $region17: #{wgan_generator_forward.8} parent=0 // pred_fallthru
    _
  // Predicated region
  $region18: #{wgan_generator_forward.8} parent=0 // pred_check
    _
  $region19: #{wgan_generator_forward.8} parent=0 // pred_check_branch
    %22 = sbr.rel (0) target = $region21
  $region20: #{wgan_generator_forward.8} parent=0 // pred_region
    _
  $region21: #{wgan_generator_forward.8} parent=0 // pred_fallthru
    _
  %v23 = vld [vmem:[%s0] sm:$0xf]
  %v24 = vunpack.c.l.bf16 %v23
  %v25 = vld [vmem:[%s2] sm:$0x1]
  %v27 = vperm.slane %v25, 0
  %v29 = vmul.f32 %v24, %v27
  %v30 = vld [vmem:[%s3] sm:$0x1]
  %v32 = vperm.slane %v30, 0
  %v34 = vadd.f32 %v29, %v32
  %vm35 = vcmp.ge.f32.partialorder %v34, 0.0
  %v36 = vld [vmem:[%s4] sm:$0x1]
  %v38 = vperm.slane %v36, 0
  %v40 = vmul.f32 %v38, %v34
  %v41 = vsel %vm35, %v34, %v40
  %v42 = vpack.c.bf16 %v41, %v41
  %v43 = vld [vmem:[%s1] sm:$0xff]
  %v44 = vld [vmem:[%s1 + $0x8] sm:$0xff]
  %v45 = vld [vmem:[%s1 + $0x10] sm:$0xff]
  %v46 = vld [vmem:[%s1 + $0x18] sm:$0xff]
  %v47 = vld [vmem:[%s1 + $0x20] sm:$0xff]
  %v48 = vld [vmem:[%s1 + $0x28] sm:$0xff]
  %v49 = vld [vmem:[%s1 + $0x30] sm:$0xff]
  %v50 = vld [vmem:[%s1 + $0x38] sm:$0xff]
  %v51 = vld [vmem:[%s1 + $0x40] sm:$0xff]
  %v52 = vld [vmem:[%s1 + $0x48] sm:$0xff]
  %v53 = vld [vmem:[%s1 + $0x50] sm:$0xff]
  %v54 = vld [vmem:[%s1 + $0x58] sm:$0xff]
  %v55 = vld [vmem:[%s1 + $0x60] sm:$0xff]
  %v56 = vld [vmem:[%s1 + $0x68] sm:$0xff]
  %v57 = vld [vmem:[%s1 + $0x70] sm:$0xff]
  %v58 = vld [vmem:[%s1 + $0x78] sm:$0xff]
  %v59 = vld [vmem:[%s1 + $0x80] sm:$0xff]
  %v60 = vld [vmem:[%s1 + $0x88] sm:$0xff]
  %v61 = vld [vmem:[%s1 + $0x90] sm:$0xff]
  %v62 = vld [vmem:[%s1 + $0x98] sm:$0xff]
  %v63 = vld [vmem:[%s1 + $0xa0] sm:$0xff]
  %v64 = vld [vmem:[%s1 + $0xa8] sm:$0xff]
  %v65 = vld [vmem:[%s1 + $0xb0] sm:$0xff]
  %v66 = vld [vmem:[%s1 + $0xb8] sm:$0xff]
  %v67 = vld [vmem:[%s1 + $0xc0] sm:$0xff]
  %v68 = vld [vmem:[%s1 + $0xc8] sm:$0xff]
  %v69 = vld [vmem:[%s1 + $0xd0] sm:$0xff]
  %v70 = vld [vmem:[%s1 + $0xd8] sm:$0xff]
  %v71 = vld [vmem:[%s1 + $0xe0] sm:$0xff]
  %v72 = vld [vmem:[%s1 + $0xe8] sm:$0xff]
  %v73 = vld [vmem:[%s1 + $0xf0] sm:$0xff]
  %v74 = vld [vmem:[%s1 + $0xf8] sm:$0xff]
  %v75 = vld [vmem:[%s1 + $0x100] sm:$0xff]
  %v76 = vld [vmem:[%s1 + $0x108] sm:$0xff]
  %v77 = vld [vmem:[%s1 + $0x110] sm:$0xff]
  %v78 = vld [vmem:[%s1 + $0x118] sm:$0xff]
  %v79 = vld [vmem:[%s1 + $0x120] sm:$0xff]
  %v80 = vld [vmem:[%s1 + $0x128] sm:$0xff]
  %v81 = vld [vmem:[%s1 + $0x130] sm:$0xff]
  %v82 = vld [vmem:[%s1 + $0x138] sm:$0xff]
  %v83 = vld [vmem:[%s1 + $0x140] sm:$0xff]
  %v84 = vld [vmem:[%s1 + $0x148] sm:$0xff]
  %v85 = vld [vmem:[%s1 + $0x150] sm:$0xff]
  %v86 = vld [vmem:[%s1 + $0x158] sm:$0xff]
  %v87 = vld [vmem:[%s1 + $0x160] sm:$0xff]
  %v88 = vld [vmem:[%s1 + $0x168] sm:$0xff]
  %v89 = vld [vmem:[%s1 + $0x170] sm:$0xff]
  %v90 = vld [vmem:[%s1 + $0x178] sm:$0xff]
  %v91 = vld [vmem:[%s1 + $0x180] sm:$0xff]
  %v92 = vld [vmem:[%s1 + $0x188] sm:$0xff]
  %v93 = vld [vmem:[%s1 + $0x190] sm:$0xff]
  %v94 = vld [vmem:[%s1 + $0x198] sm:$0xff]
  %v95 = vld [vmem:[%s1 + $0x1a0] sm:$0xff]
  %v96 = vld [vmem:[%s1 + $0x1a8] sm:$0xff]
  %v97 = vld [vmem:[%s1 + $0x1b0] sm:$0xff]
  %v98 = vld [vmem:[%s1 + $0x1b8] sm:$0xff]
  %v99 = vld [vmem:[%s1 + $0x1c0] sm:$0xff]
  %v100 = vld [vmem:[%s1 + $0x1c8] sm:$0xff]
  %v101 = vld [vmem:[%s1 + $0x1d0] sm:$0xff]
  %v102 = vld [vmem:[%s1 + $0x1d8] sm:$0xff]
  %v103 = vld [vmem:[%s1 + $0x1e0] sm:$0xff]
  %v104 = vld [vmem:[%s1 + $0x1e8] sm:$0xff]
  %v105 = vld [vmem:[%s1 + $0x1f0] sm:$0xff]
  %v106 = vld [vmem:[%s1 + $0x1f8] sm:$0xff]
  %v107 = vld [vmem:[%s1 + $0x200] sm:$0xff]
  %v108 = vld [vmem:[%s1 + $0x208] sm:$0xff]
  %v109 = vld [vmem:[%s1 + $0x210] sm:$0xff]
  %v110 = vld [vmem:[%s1 + $0x218] sm:$0xff]
  %v111 = vld [vmem:[%s1 + $0x220] sm:$0xff]
  %v112 = vld [vmem:[%s1 + $0x228] sm:$0xff]
  %v113 = vld [vmem:[%s1 + $0x230] sm:$0xff]
  %v114 = vld [vmem:[%s1 + $0x238] sm:$0xff]
  %v115 = vld [vmem:[%s1 + $0x240] sm:$0xff]
  %v116 = vld [vmem:[%s1 + $0x248] sm:$0xff]
  %v117 = vld [vmem:[%s1 + $0x250] sm:$0xff]
  %v118 = vld [vmem:[%s1 + $0x258] sm:$0xff]
  %v119 = vld [vmem:[%s1 + $0x260] sm:$0xff]
  %v120 = vld [vmem:[%s1 + $0x268] sm:$0xff]
  %v121 = vld [vmem:[%s1 + $0x270] sm:$0xff]
  %v122 = vld [vmem:[%s1 + $0x278] sm:$0xff]
  %v123 = vld [vmem:[%s1 + $0x280] sm:$0xff]
  %v124 = vld [vmem:[%s1 + $0x288] sm:$0xff]
  %v125 = vld [vmem:[%s1 + $0x290] sm:$0xff]
  %v126 = vld [vmem:[%s1 + $0x298] sm:$0xff]
  %v127 = vld [vmem:[%s1 + $0x2a0] sm:$0xff]
  %v128 = vld [vmem:[%s1 + $0x2a8] sm:$0xff]
  %v129 = vld [vmem:[%s1 + $0x2b0] sm:$0xff]
  %v130 = vld [vmem:[%s1 + $0x2b8] sm:$0xff]
  %v131 = vld [vmem:[%s1 + $0x2c0] sm:$0xff]
  %v132 = vld [vmem:[%s1 + $0x2c8] sm:$0xff]
  %v133 = vld [vmem:[%s1 + $0x2d0] sm:$0xff]
  %v134 = vld [vmem:[%s1 + $0x2d8] sm:$0xff]
  %v135 = vld [vmem:[%s1 + $0x2e0] sm:$0xff]
  %v136 = vld [vmem:[%s1 + $0x2e8] sm:$0xff]
  %v137 = vld [vmem:[%s1 + $0x2f0] sm:$0xff]
  %v138 = vld [vmem:[%s1 + $0x2f8] sm:$0xff]
  %v139 = vld [vmem:[%s1 + $0x300] sm:$0xff]
  %v140 = vld [vmem:[%s1 + $0x308] sm:$0xff]
  %v141 = vld [vmem:[%s1 + $0x310] sm:$0xff]
  %v142 = vld [vmem:[%s1 + $0x318] sm:$0xff]
  %v143 = vld [vmem:[%s1 + $0x320] sm:$0xff]
  %v144 = vld [vmem:[%s1 + $0x328] sm:$0xff]
  %v145 = vld [vmem:[%s1 + $0x330] sm:$0xff]
  %v146 = vld [vmem:[%s1 + $0x338] sm:$0xff]
  %v147 = vld [vmem:[%s1 + $0x340] sm:$0xff]
  %v148 = vld [vmem:[%s1 + $0x348] sm:$0xff]
  %v149 = vld [vmem:[%s1 + $0x350] sm:$0xff]
  %v150 = vld [vmem:[%s1 + $0x358] sm:$0xff]
  %v151 = vld [vmem:[%s1 + $0x360] sm:$0xff]
  %v152 = vld [vmem:[%s1 + $0x368] sm:$0xff]
  %v153 = vld [vmem:[%s1 + $0x370] sm:$0xff]
  %v154 = vld [vmem:[%s1 + $0x378] sm:$0xff]
  %v155 = vld [vmem:[%s1 + $0x380] sm:$0xff]
  %v156 = vld [vmem:[%s1 + $0x388] sm:$0xff]
  %v157 = vld [vmem:[%s1 + $0x390] sm:$0xff]
  %v158 = vld [vmem:[%s1 + $0x398] sm:$0xff]
  %v159 = vld [vmem:[%s1 + $0x3a0] sm:$0xff]
  %v160 = vld [vmem:[%s1 + $0x3a8] sm:$0xff]
  %v161 = vld [vmem:[%s1 + $0x3b0] sm:$0xff]
  %v162 = vld [vmem:[%s1 + $0x3b8] sm:$0xff]
  %v163 = vld [vmem:[%s1 + $0x3c0] sm:$0xff]
  %v164 = vld [vmem:[%s1 + $0x3c8] sm:$0xff]
  %v165 = vld [vmem:[%s1 + $0x3d0] sm:$0xff]
  %v166 = vld [vmem:[%s1 + $0x3d8] sm:$0xff]
  %v167 = vld [vmem:[%s1 + $0x3e0] sm:$0xff]
  %v168 = vld [vmem:[%s1 + $0x3e8] sm:$0xff]
  %v169 = vld [vmem:[%s1 + $0x3f0] sm:$0xff]
  %v170 = vld [vmem:[%s1 + $0x3f8] sm:$0xff]
  %v299 = vunpack.c.l.b16 %v43
  %v300 = vunpack.c.h.b16 %v43
  %v301 = vunpack.c.l.b16 %v44
  %v302 = vunpack.c.h.b16 %v44
  %v303 = vunpack.c.l.b16 %v45
  %v304 = vunpack.c.h.b16 %v45
  %v305 = vunpack.c.l.b16 %v46
  %v306 = vunpack.c.h.b16 %v46
  %v307 = vunpack.c.l.b16 %v47
  %v308 = vunpack.c.h.b16 %v47
  %v309 = vunpack.c.l.b16 %v48
  %v310 = vunpack.c.h.b16 %v48
  %v311 = vunpack.c.l.b16 %v49
  %v312 = vunpack.c.h.b16 %v49
  %v313 = vunpack.c.l.b16 %v50
  %v314 = vunpack.c.h.b16 %v50
  %v315 = vunpack.c.l.b16 %v51
  %v316 = vunpack.c.h.b16 %v51
  %v317 = vunpack.c.l.b16 %v52
  %v318 = vunpack.c.h.b16 %v52
  %v319 = vunpack.c.l.b16 %v53
  %v320 = vunpack.c.h.b16 %v53
  %v321 = vunpack.c.l.b16 %v54
  %v322 = vunpack.c.h.b16 %v54
  %v323 = vunpack.c.l.b16 %v55
  %v324 = vunpack.c.h.b16 %v55
  %v325 = vunpack.c.l.b16 %v56
  %v326 = vunpack.c.h.b16 %v56
  %v327 = vunpack.c.l.b16 %v57
  %v328 = vunpack.c.h.b16 %v57
  %v329 = vunpack.c.l.b16 %v58
  %v330 = vunpack.c.h.b16 %v58
  %v331 = vunpack.c.l.b16 %v59
  %v332 = vunpack.c.h.b16 %v59
  %v333 = vunpack.c.l.b16 %v60
  %v334 = vunpack.c.h.b16 %v60
  %v335 = vunpack.c.l.b16 %v61
  %v336 = vunpack.c.h.b16 %v61
  %v337 = vunpack.c.l.b16 %v62
  %v338 = vunpack.c.h.b16 %v62
  %v339 = vunpack.c.l.b16 %v63
  %v340 = vunpack.c.h.b16 %v63
  %v341 = vunpack.c.l.b16 %v64
  %v342 = vunpack.c.h.b16 %v64
  %v343 = vunpack.c.l.b16 %v65
  %v344 = vunpack.c.h.b16 %v65
  %v345 = vunpack.c.l.b16 %v66
  %v346 = vunpack.c.h.b16 %v66
  %v347 = vunpack.c.l.b16 %v67
  %v348 = vunpack.c.h.b16 %v67
  %v349 = vunpack.c.l.b16 %v68
  %v350 = vunpack.c.h.b16 %v68
  %v351 = vunpack.c.l.b16 %v69
  %v352 = vunpack.c.h.b16 %v69
  %v353 = vunpack.c.l.b16 %v70
  %v354 = vunpack.c.h.b16 %v70
  %v355 = vunpack.c.l.b16 %v71
  %v356 = vunpack.c.h.b16 %v71
  %v357 = vunpack.c.l.b16 %v72
  %v358 = vunpack.c.h.b16 %v72
  %v359 = vunpack.c.l.b16 %v73
  %v360 = vunpack.c.h.b16 %v73
  %v361 = vunpack.c.l.b16 %v74
  %v362 = vunpack.c.h.b16 %v74
  %v363 = vunpack.c.l.b16 %v75
  %v364 = vunpack.c.h.b16 %v75
  %v365 = vunpack.c.l.b16 %v76
  %v366 = vunpack.c.h.b16 %v76
  %v367 = vunpack.c.l.b16 %v77
  %v368 = vunpack.c.h.b16 %v77
  %v369 = vunpack.c.l.b16 %v78
  %v370 = vunpack.c.h.b16 %v78
  %v371 = vunpack.c.l.b16 %v79
  %v372 = vunpack.c.h.b16 %v79
  %v373 = vunpack.c.l.b16 %v80
  %v374 = vunpack.c.h.b16 %v80
  %v375 = vunpack.c.l.b16 %v81
  %v376 = vunpack.c.h.b16 %v81
  %v377 = vunpack.c.l.b16 %v82
  %v378 = vunpack.c.h.b16 %v82
  %v379 = vunpack.c.l.b16 %v83
  %v380 = vunpack.c.h.b16 %v83
  %v381 = vunpack.c.l.b16 %v84
  %v382 = vunpack.c.h.b16 %v84
  %v383 = vunpack.c.l.b16 %v85
  %v384 = vunpack.c.h.b16 %v85
  %v385 = vunpack.c.l.b16 %v86
  %v386 = vunpack.c.h.b16 %v86
  %v387 = vunpack.c.l.b16 %v87
  %v388 = vunpack.c.h.b16 %v87
  %v389 = vunpack.c.l.b16 %v88
  %v390 = vunpack.c.h.b16 %v88
  %v391 = vunpack.c.l.b16 %v89
  %v392 = vunpack.c.h.b16 %v89
  %v393 = vunpack.c.l.b16 %v90
  %v394 = vunpack.c.h.b16 %v90
  %v395 = vunpack.c.l.b16 %v91
  %v396 = vunpack.c.h.b16 %v91
  %v397 = vunpack.c.l.b16 %v92
  %v398 = vunpack.c.h.b16 %v92
  %v399 = vunpack.c.l.b16 %v93
  %v400 = vunpack.c.h.b16 %v93
  %v401 = vunpack.c.l.b16 %v94
  %v402 = vunpack.c.h.b16 %v94
  %v403 = vunpack.c.l.b16 %v95
  %v404 = vunpack.c.h.b16 %v95
  %v405 = vunpack.c.l.b16 %v96
  %v406 = vunpack.c.h.b16 %v96
  %v407 = vunpack.c.l.b16 %v97
  %v408 = vunpack.c.h.b16 %v97
  %v409 = vunpack.c.l.b16 %v98
  %v410 = vunpack.c.h.b16 %v98
  %v411 = vunpack.c.l.b16 %v99
  %v412 = vunpack.c.h.b16 %v99
  %v413 = vunpack.c.l.b16 %v100
  %v414 = vunpack.c.h.b16 %v100
  %v415 = vunpack.c.l.b16 %v101
  %v416 = vunpack.c.h.b16 %v101
  %v417 = vunpack.c.l.b16 %v102
  %v418 = vunpack.c.h.b16 %v102
  %v419 = vunpack.c.l.b16 %v103
  %v420 = vunpack.c.h.b16 %v103
  %v421 = vunpack.c.l.b16 %v104
  %v422 = vunpack.c.h.b16 %v104
  %v423 = vunpack.c.l.b16 %v105
  %v424 = vunpack.c.h.b16 %v105
  %v425 = vunpack.c.l.b16 %v106
  %v426 = vunpack.c.h.b16 %v106
  %v427 = vunpack.c.l.b16 %v107
  %v428 = vunpack.c.h.b16 %v107
  %v429 = vunpack.c.l.b16 %v108
  %v430 = vunpack.c.h.b16 %v108
  %v431 = vunpack.c.l.b16 %v109
  %v432 = vunpack.c.h.b16 %v109
  %v433 = vunpack.c.l.b16 %v110
  %v434 = vunpack.c.h.b16 %v110
  %v435 = vunpack.c.l.b16 %v111
  %v436 = vunpack.c.h.b16 %v111
  %v437 = vunpack.c.l.b16 %v112
  %v438 = vunpack.c.h.b16 %v112
  %v439 = vunpack.c.l.b16 %v113
  %v440 = vunpack.c.h.b16 %v113
  %v441 = vunpack.c.l.b16 %v114
  %v442 = vunpack.c.h.b16 %v114
  %v443 = vunpack.c.l.b16 %v115
  %v444 = vunpack.c.h.b16 %v115
  %v445 = vunpack.c.l.b16 %v116
  %v446 = vunpack.c.h.b16 %v116
  %v447 = vunpack.c.l.b16 %v117
  %v448 = vunpack.c.h.b16 %v117
  %v449 = vunpack.c.l.b16 %v118
  %v450 = vunpack.c.h.b16 %v118
  %v451 = vunpack.c.l.b16 %v119
  %v452 = vunpack.c.h.b16 %v119
  %v453 = vunpack.c.l.b16 %v120
  %v454 = vunpack.c.h.b16 %v120
  %v455 = vunpack.c.l.b16 %v121
  %v456 = vunpack.c.h.b16 %v121
  %v457 = vunpack.c.l.b16 %v122
  %v458 = vunpack.c.h.b16 %v122
  %v459 = vunpack.c.l.b16 %v123
  %v460 = vunpack.c.h.b16 %v123
  %v461 = vunpack.c.l.b16 %v124
  %v462 = vunpack.c.h.b16 %v124
  %v463 = vunpack.c.l.b16 %v125
  %v464 = vunpack.c.h.b16 %v125
  %v465 = vunpack.c.l.b16 %v126
  %v466 = vunpack.c.h.b16 %v126
  %v467 = vunpack.c.l.b16 %v127
  %v468 = vunpack.c.h.b16 %v127
  %v469 = vunpack.c.l.b16 %v128
  %v470 = vunpack.c.h.b16 %v128
  %v471 = vunpack.c.l.b16 %v129
  %v472 = vunpack.c.h.b16 %v129
  %v473 = vunpack.c.l.b16 %v130
  %v474 = vunpack.c.h.b16 %v130
  %v475 = vunpack.c.l.b16 %v131
  %v476 = vunpack.c.h.b16 %v131
  %v477 = vunpack.c.l.b16 %v132
  %v478 = vunpack.c.h.b16 %v132
  %v479 = vunpack.c.l.b16 %v133
  %v480 = vunpack.c.h.b16 %v133
  %v481 = vunpack.c.l.b16 %v134
  %v482 = vunpack.c.h.b16 %v134
  %v483 = vunpack.c.l.b16 %v135
  %v484 = vunpack.c.h.b16 %v135
  %v485 = vunpack.c.l.b16 %v136
  %v486 = vunpack.c.h.b16 %v136
  %v487 = vunpack.c.l.b16 %v137
  %v488 = vunpack.c.h.b16 %v137
  %v489 = vunpack.c.l.b16 %v138
  %v490 = vunpack.c.h.b16 %v138
  %v491 = vunpack.c.l.b16 %v139
  %v492 = vunpack.c.h.b16 %v139
  %v493 = vunpack.c.l.b16 %v140
  %v494 = vunpack.c.h.b16 %v140
  %v495 = vunpack.c.l.b16 %v141
  %v496 = vunpack.c.h.b16 %v141
  %v497 = vunpack.c.l.b16 %v142
  %v498 = vunpack.c.h.b16 %v142
  %v499 = vunpack.c.l.b16 %v143
  %v500 = vunpack.c.h.b16 %v143
  %v501 = vunpack.c.l.b16 %v144
  %v502 = vunpack.c.h.b16 %v144
  %v503 = vunpack.c.l.b16 %v145
  %v504 = vunpack.c.h.b16 %v145
  %v505 = vunpack.c.l.b16 %v146
  %v506 = vunpack.c.h.b16 %v146
  %v507 = vunpack.c.l.b16 %v147
  %v508 = vunpack.c.h.b16 %v147
  %v509 = vunpack.c.l.b16 %v148
  %v510 = vunpack.c.h.b16 %v148
  %v511 = vunpack.c.l.b16 %v149
  %v512 = vunpack.c.h.b16 %v149
  %v513 = vunpack.c.l.b16 %v150
  %v514 = vunpack.c.h.b16 %v150
  %v515 = vunpack.c.l.b16 %v151
  %v516 = vunpack.c.h.b16 %v151
  %v517 = vunpack.c.l.b16 %v152
  %v518 = vunpack.c.h.b16 %v152
  %v519 = vunpack.c.l.b16 %v153
  %v520 = vunpack.c.h.b16 %v153
  %v521 = vunpack.c.l.b16 %v154
  %v522 = vunpack.c.h.b16 %v154
  %v523 = vunpack.c.l.b16 %v155
  %v524 = vunpack.c.h.b16 %v155
  %v525 = vunpack.c.l.b16 %v156
  %v526 = vunpack.c.h.b16 %v156
  %v527 = vunpack.c.l.b16 %v157
  %v528 = vunpack.c.h.b16 %v157
  %v529 = vunpack.c.l.b16 %v158
  %v530 = vunpack.c.h.b16 %v158
  %v531 = vunpack.c.l.b16 %v159
  %v532 = vunpack.c.h.b16 %v159
  %v533 = vunpack.c.l.b16 %v160
  %v534 = vunpack.c.h.b16 %v160
  %v535 = vunpack.c.l.b16 %v161
  %v536 = vunpack.c.h.b16 %v161
  %v537 = vunpack.c.l.b16 %v162
  %v538 = vunpack.c.h.b16 %v162
  %v539 = vunpack.c.l.b16 %v163
  %v540 = vunpack.c.h.b16 %v163
  %v541 = vunpack.c.l.b16 %v164
  %v542 = vunpack.c.h.b16 %v164
  %v543 = vunpack.c.l.b16 %v165
  %v544 = vunpack.c.h.b16 %v165
  %v545 = vunpack.c.l.b16 %v166
  %v546 = vunpack.c.h.b16 %v166
  %v547 = vunpack.c.l.b16 %v167
  %v548 = vunpack.c.h.b16 %v167
  %v549 = vunpack.c.l.b16 %v168
  %v550 = vunpack.c.h.b16 %v168
  %v551 = vunpack.c.l.b16 %v169
  %v552 = vunpack.c.h.b16 %v169
  %v553 = vunpack.c.l.b16 %v170
  %v554 = vunpack.c.h.b16 %v170
  %v555 = vpack.c.b16 %v315, %v299
  %v556 = vpack.c.b16 %v316, %v300
  %v557 = vpack.c.b16 %v317, %v301
  %v558 = vpack.c.b16 %v318, %v302
  %v559 = vpack.c.b16 %v319, %v303
  %v560 = vpack.c.b16 %v320, %v304
  %v561 = vpack.c.b16 %v321, %v305
  %v562 = vpack.c.b16 %v322, %v306
  %v563 = vpack.c.b16 %v323, %v307
  %v564 = vpack.c.b16 %v324, %v308
  %v565 = vpack.c.b16 %v325, %v309
  %v566 = vpack.c.b16 %v326, %v310
  %v567 = vpack.c.b16 %v327, %v311
  %v568 = vpack.c.b16 %v328, %v312
  %v569 = vpack.c.b16 %v329, %v313
  %v570 = vpack.c.b16 %v330, %v314
  %v571 = vpack.c.b16 %v347, %v331
  %v572 = vpack.c.b16 %v348, %v332
  %v573 = vpack.c.b16 %v349, %v333
  %v574 = vpack.c.b16 %v350, %v334
  %v575 = vpack.c.b16 %v351, %v335
  %v576 = vpack.c.b16 %v352, %v336
  %v577 = vpack.c.b16 %v353, %v337
  %v578 = vpack.c.b16 %v354, %v338
  %v579 = vpack.c.b16 %v355, %v339
  %v580 = vpack.c.b16 %v356, %v340
  %v581 = vpack.c.b16 %v357, %v341
  %v582 = vpack.c.b16 %v358, %v342
  %v583 = vpack.c.b16 %v359, %v343
  %v584 = vpack.c.b16 %v360, %v344
  %v585 = vpack.c.b16 %v361, %v345
  %v586 = vpack.c.b16 %v362, %v346
  %v587 = vpack.c.b16 %v379, %v363
  %v588 = vpack.c.b16 %v380, %v364
  %v589 = vpack.c.b16 %v381, %v365
  %v590 = vpack.c.b16 %v382, %v366
  %v591 = vpack.c.b16 %v383, %v367
  %v592 = vpack.c.b16 %v384, %v368
  %v593 = vpack.c.b16 %v385, %v369
  %v594 = vpack.c.b16 %v386, %v370
  %v595 = vpack.c.b16 %v387, %v371
  %v596 = vpack.c.b16 %v388, %v372
  %v597 = vpack.c.b16 %v389, %v373
  %v598 = vpack.c.b16 %v390, %v374
  %v599 = vpack.c.b16 %v391, %v375
  %v600 = vpack.c.b16 %v392, %v376
  %v601 = vpack.c.b16 %v393, %v377
  %v602 = vpack.c.b16 %v394, %v378
  %v603 = vpack.c.b16 %v411, %v395
  %v604 = vpack.c.b16 %v412, %v396
  %v605 = vpack.c.b16 %v413, %v397
  %v606 = vpack.c.b16 %v414, %v398
  %v607 = vpack.c.b16 %v415, %v399
  %v608 = vpack.c.b16 %v416, %v400
  %v609 = vpack.c.b16 %v417, %v401
  %v610 = vpack.c.b16 %v418, %v402
  %v611 = vpack.c.b16 %v419, %v403
  %v612 = vpack.c.b16 %v420, %v404
  %v613 = vpack.c.b16 %v421, %v405
  %v614 = vpack.c.b16 %v422, %v406
  %v615 = vpack.c.b16 %v423, %v407
  %v616 = vpack.c.b16 %v424, %v408
  %v617 = vpack.c.b16 %v425, %v409
  %v618 = vpack.c.b16 %v426, %v410
  %v619 = vpack.c.b16 %v443, %v427
  %v620 = vpack.c.b16 %v444, %v428
  %v621 = vpack.c.b16 %v445, %v429
  %v622 = vpack.c.b16 %v446, %v430
  %v623 = vpack.c.b16 %v447, %v431
  %v624 = vpack.c.b16 %v448, %v432
  %v625 = vpack.c.b16 %v449, %v433
  %v626 = vpack.c.b16 %v450, %v434
  %v627 = vpack.c.b16 %v451, %v435
  %v628 = vpack.c.b16 %v452, %v436
  %v629 = vpack.c.b16 %v453, %v437
  %v630 = vpack.c.b16 %v454, %v438
  %v631 = vpack.c.b16 %v455, %v439
  %v632 = vpack.c.b16 %v456, %v440
  %v633 = vpack.c.b16 %v457, %v441
  %v634 = vpack.c.b16 %v458, %v442
  %v635 = vpack.c.b16 %v475, %v459
  %v636 = vpack.c.b16 %v476, %v460
  %v637 = vpack.c.b16 %v477, %v461
  %v638 = vpack.c.b16 %v478, %v462
  %v639 = vpack.c.b16 %v479, %v463
  %v640 = vpack.c.b16 %v480, %v464
  %v641 = vpack.c.b16 %v481, %v465
  %v642 = vpack.c.b16 %v482, %v466
  %v643 = vpack.c.b16 %v483, %v467
  %v644 = vpack.c.b16 %v484, %v468
  %v645 = vpack.c.b16 %v485, %v469
  %v646 = vpack.c.b16 %v486, %v470
  %v647 = vpack.c.b16 %v487, %v471
  %v648 = vpack.c.b16 %v488, %v472
  %v649 = vpack.c.b16 %v489, %v473
  %v650 = vpack.c.b16 %v490, %v474
  %v651 = vpack.c.b16 %v507, %v491
  %v652 = vpack.c.b16 %v508, %v492
  %v653 = vpack.c.b16 %v509, %v493
  %v654 = vpack.c.b16 %v510, %v494
  %v655 = vpack.c.b16 %v511, %v495
  %v656 = vpack.c.b16 %v512, %v496
  %v657 = vpack.c.b16 %v513, %v497
  %v658 = vpack.c.b16 %v514, %v498
  %v659 = vpack.c.b16 %v515, %v499
  %v660 = vpack.c.b16 %v516, %v500
  %v661 = vpack.c.b16 %v517, %v501
  %v662 = vpack.c.b16 %v518, %v502
  %v663 = vpack.c.b16 %v519, %v503
  %v664 = vpack.c.b16 %v520, %v504
  %v665 = vpack.c.b16 %v521, %v505
  %v666 = vpack.c.b16 %v522, %v506
  %v667 = vpack.c.b16 %v539, %v523
  %v668 = vpack.c.b16 %v540, %v524
  %v669 = vpack.c.b16 %v541, %v525
  %v670 = vpack.c.b16 %v542, %v526
  %v671 = vpack.c.b16 %v543, %v527
  %v672 = vpack.c.b16 %v544, %v528
  %v673 = vpack.c.b16 %v545, %v529
  %v674 = vpack.c.b16 %v546, %v530
  %v675 = vpack.c.b16 %v547, %v531
  %v676 = vpack.c.b16 %v548, %v532
  %v677 = vpack.c.b16 %v549, %v533
  %v678 = vpack.c.b16 %v550, %v534
  %v679 = vpack.c.b16 %v551, %v535
  %v680 = vpack.c.b16 %v552, %v536
  %v681 = vpack.c.b16 %v553, %v537
  %v682 = vpack.c.b16 %v554, %v538
  %811 = vmatpush.bf16.msra.mxu0 %v667
  %812 = vmatpush.bf16.msra.mxu0 %v651
  %813 = vmatpush.bf16.msra.mxu0 %v635
  %814 = vmatpush.bf16.msra.mxu0 %v619
  %815 = vmatpush.bf16.msra.mxu0 %v603
  %816 = vmatpush.bf16.msra.mxu0 %v587
  %817 = vmatpush.bf16.msra.mxu0 %v571
  %818 = vmatpush.bf16.msra.mxu0 %v555
  %819 = vmatmul.bf16.gmra.mxu0 %v42
  %v820 = vpop.f32.mrf.mxu0
  %v821 = vadd.f32 0.0, %v820
  %v822 = vpop.f32.mrf.mxu0
  %823 = vdwg.mxu0
  %824 = vmatpush.bf16.msra.mxu0 %v668
  %825 = vmatpush.bf16.msra.mxu0 %v652
  %826 = vmatpush.bf16.msra.mxu0 %v636
  %827 = vmatpush.bf16.msra.mxu0 %v620
  %828 = vmatpush.bf16.msra.mxu0 %v604
  %829 = vmatpush.bf16.msra.mxu0 %v588
  %830 = vmatpush.bf16.msra.mxu0 %v572
  %831 = vmatpush.bf16.msra.mxu0 %v556
  %832 = vmatmul.bf16.gmra.mxu0 %v42
  %v833 = vpop.f32.mrf.mxu0
  %v834 = vadd.f32 0.0, %v833
  %v835 = vpop.f32.mrf.mxu0
  %836 = vdwg.mxu0
  %837 = vmatpush.bf16.msra.mxu0 %v669
  %838 = vmatpush.bf16.msra.mxu0 %v653
  %839 = vmatpush.bf16.msra.mxu0 %v637
  %840 = vmatpush.bf16.msra.mxu0 %v621
  %841 = vmatpush.bf16.msra.mxu0 %v605
  %842 = vmatpush.bf16.msra.mxu0 %v589
  %843 = vmatpush.bf16.msra.mxu0 %v573
  %844 = vmatpush.bf16.msra.mxu0 %v557
  %845 = vmatmul.bf16.gmra.mxu0 %v42
  %v846 = vpop.f32.mrf.mxu0
  %v847 = vadd.f32 0.0, %v846
  %v848 = vpop.f32.mrf.mxu0
  %849 = vdwg.mxu0
  %850 = vmatpush.bf16.msra.mxu0 %v670
  %851 = vmatpush.bf16.msra.mxu0 %v654
  %852 = vmatpush.bf16.msra.mxu0 %v638
  %853 = vmatpush.bf16.msra.mxu0 %v622
  %854 = vmatpush.bf16.msra.mxu0 %v606
  %855 = vmatpush.bf16.msra.mxu0 %v590
  %856 = vmatpush.bf16.msra.mxu0 %v574
  %857 = vmatpush.bf16.msra.mxu0 %v558
  %858 = vmatmul.bf16.gmra.mxu0 %v42
  %v859 = vpop.f32.mrf.mxu0
  %v860 = vadd.f32 0.0, %v859
  %v861 = vpop.f32.mrf.mxu0
  %862 = vdwg.mxu0
  %863 = vmatpush.bf16.msra.mxu0 %v671
  %864 = vmatpush.bf16.msra.mxu0 %v655
  %865 = vmatpush.bf16.msra.mxu0 %v639
  %866 = vmatpush.bf16.msra.mxu0 %v623
  %867 = vmatpush.bf16.msra.mxu0 %v607
  %868 = vmatpush.bf16.msra.mxu0 %v591
  %869 = vmatpush.bf16.msra.mxu0 %v575
  %870 = vmatpush.bf16.msra.mxu0 %v559
  %871 = vmatmul.bf16.gmra.mxu0 %v42
  %v872 = vpop.f32.mrf.mxu0
  %v873 = vadd.f32 0.0, %v872
  %v874 = vpop.f32.mrf.mxu0
  %875 = vdwg.mxu0
  %876 = vmatpush.bf16.msra.mxu0 %v672
  %877 = vmatpush.bf16.msra.mxu0 %v656
  %878 = vmatpush.bf16.msra.mxu0 %v640
  %879 = vmatpush.bf16.msra.mxu0 %v624
  %880 = vmatpush.bf16.msra.mxu0 %v608
  %881 = vmatpush.bf16.msra.mxu0 %v592
  %882 = vmatpush.bf16.msra.mxu0 %v576
  %883 = vmatpush.bf16.msra.mxu0 %v560
  %884 = vmatmul.bf16.gmra.mxu0 %v42
  %v885 = vpop.f32.mrf.mxu0
  %v886 = vadd.f32 0.0, %v885
  %v887 = vpop.f32.mrf.mxu0
  %888 = vdwg.mxu0
  %889 = vmatpush.bf16.msra.mxu0 %v673
  %890 = vmatpush.bf16.msra.mxu0 %v657
  %891 = vmatpush.bf16.msra.mxu0 %v641
  %892 = vmatpush.bf16.msra.mxu0 %v625
  %893 = vmatpush.bf16.msra.mxu0 %v609
  %894 = vmatpush.bf16.msra.mxu0 %v593
  %895 = vmatpush.bf16.msra.mxu0 %v577
  %896 = vmatpush.bf16.msra.mxu0 %v561
  %897 = vmatmul.bf16.gmra.mxu0 %v42
  %v898 = vpop.f32.mrf.mxu0
  %v899 = vadd.f32 0.0, %v898
  %v900 = vpop.f32.mrf.mxu0
  %901 = vdwg.mxu0
  %902 = vmatpush.bf16.msra.mxu0 %v674
  %903 = vmatpush.bf16.msra.mxu0 %v658
  %904 = vmatpush.bf16.msra.mxu0 %v642
  %905 = vmatpush.bf16.msra.mxu0 %v626
  %906 = vmatpush.bf16.msra.mxu0 %v610
  %907 = vmatpush.bf16.msra.mxu0 %v594
  %908 = vmatpush.bf16.msra.mxu0 %v578
  %909 = vmatpush.bf16.msra.mxu0 %v562
  %910 = vmatmul.bf16.gmra.mxu0 %v42
  %v911 = vpop.f32.mrf.mxu0
  %v912 = vadd.f32 0.0, %v911
  %v913 = vpop.f32.mrf.mxu0
  %914 = vdwg.mxu0
  %915 = vmatpush.bf16.msra.mxu0 %v675
  %916 = vmatpush.bf16.msra.mxu0 %v659
  %917 = vmatpush.bf16.msra.mxu0 %v643
  %918 = vmatpush.bf16.msra.mxu0 %v627
  %919 = vmatpush.bf16.msra.mxu0 %v611
  %920 = vmatpush.bf16.msra.mxu0 %v595
  %921 = vmatpush.bf16.msra.mxu0 %v579
  %922 = vmatpush.bf16.msra.mxu0 %v563
  %923 = vmatmul.bf16.gmra.mxu0 %v42
  %v924 = vpop.f32.mrf.mxu0
  %v925 = vadd.f32 0.0, %v924
  %v926 = vpop.f32.mrf.mxu0
  %927 = vdwg.mxu0
  %928 = vmatpush.bf16.msra.mxu0 %v676
  %929 = vmatpush.bf16.msra.mxu0 %v660
  %930 = vmatpush.bf16.msra.mxu0 %v644
  %931 = vmatpush.bf16.msra.mxu0 %v628
  %932 = vmatpush.bf16.msra.mxu0 %v612
  %933 = vmatpush.bf16.msra.mxu0 %v596
  %934 = vmatpush.bf16.msra.mxu0 %v580
  %935 = vmatpush.bf16.msra.mxu0 %v564
  %936 = vmatmul.bf16.gmra.mxu0 %v42
  %v937 = vpop.f32.mrf.mxu0
  %v938 = vadd.f32 0.0, %v937
  %v939 = vpop.f32.mrf.mxu0
  %940 = vdwg.mxu0
  %941 = vmatpush.bf16.msra.mxu0 %v677
  %942 = vmatpush.bf16.msra.mxu0 %v661
  %943 = vmatpush.bf16.msra.mxu0 %v645
  %944 = vmatpush.bf16.msra.mxu0 %v629
  %945 = vmatpush.bf16.msra.mxu0 %v613
  %946 = vmatpush.bf16.msra.mxu0 %v597
  %947 = vmatpush.bf16.msra.mxu0 %v581
  %948 = vmatpush.bf16.msra.mxu0 %v565
  %949 = vmatmul.bf16.gmra.mxu0 %v42
  %v950 = vpop.f32.mrf.mxu0
  %v951 = vadd.f32 0.0, %v950
  %v952 = vpop.f32.mrf.mxu0
  %953 = vdwg.mxu0
  %954 = vmatpush.bf16.msra.mxu0 %v678
  %955 = vmatpush.bf16.msra.mxu0 %v662
  %956 = vmatpush.bf16.msra.mxu0 %v646
  %957 = vmatpush.bf16.msra.mxu0 %v630
  %958 = vmatpush.bf16.msra.mxu0 %v614
  %959 = vmatpush.bf16.msra.mxu0 %v598
  %960 = vmatpush.bf16.msra.mxu0 %v582
  %961 = vmatpush.bf16.msra.mxu0 %v566
  %962 = vmatmul.bf16.gmra.mxu0 %v42
  %v963 = vpop.f32.mrf.mxu0
  %v964 = vadd.f32 0.0, %v963
  %v965 = vpop.f32.mrf.mxu0
  %966 = vdwg.mxu0
  %967 = vmatpush.bf16.msra.mxu0 %v679
  %968 = vmatpush.bf16.msra.mxu0 %v663
  %969 = vmatpush.bf16.msra.mxu0 %v647
  %970 = vmatpush.bf16.msra.mxu0 %v631
  %971 = vmatpush.bf16.msra.mxu0 %v615
  %972 = vmatpush.bf16.msra.mxu0 %v599
  %973 = vmatpush.bf16.msra.mxu0 %v583
  %974 = vmatpush.bf16.msra.mxu0 %v567
  %975 = vmatmul.bf16.gmra.mxu0 %v42
  %v976 = vpop.f32.mrf.mxu0
  %v977 = vadd.f32 0.0, %v976
  %v978 = vpop.f32.mrf.mxu0
  %979 = vdwg.mxu0
  %980 = vmatpush.bf16.msra.mxu0 %v680
  %981 = vmatpush.bf16.msra.mxu0 %v664
  %982 = vmatpush.bf16.msra.mxu0 %v648
  %983 = vmatpush.bf16.msra.mxu0 %v632
  %984 = vmatpush.bf16.msra.mxu0 %v616
  %985 = vmatpush.bf16.msra.mxu0 %v600
  %986 = vmatpush.bf16.msra.mxu0 %v584
  %987 = vmatpush.bf16.msra.mxu0 %v568
  %988 = vmatmul.bf16.gmra.mxu0 %v42
  %v989 = vpop.f32.mrf.mxu0
  %v990 = vadd.f32 0.0, %v989
  %v991 = vpop.f32.mrf.mxu0
  %992 = vdwg.mxu0
  %993 = vmatpush.bf16.msra.mxu0 %v681
  %994 = vmatpush.bf16.msra.mxu0 %v665
  %995 = vmatpush.bf16.msra.mxu0 %v649
  %996 = vmatpush.bf16.msra.mxu0 %v633
  %997 = vmatpush.bf16.msra.mxu0 %v617
  %998 = vmatpush.bf16.msra.mxu0 %v601
  %999 = vmatpush.bf16.msra.mxu0 %v585
  %1000 = vmatpush.bf16.msra.mxu0 %v569
  %1001 = vmatmul.bf16.gmra.mxu0 %v42
  %v1002 = vpop.f32.mrf.mxu0
  %v1003 = vadd.f32 0.0, %v1002
  %v1004 = vpop.f32.mrf.mxu0
  %1005 = vdwg.mxu0
  %1006 = vmatpush.bf16.msra.mxu0 %v682
  %1007 = vmatpush.bf16.msra.mxu0 %v666
  %1008 = vmatpush.bf16.msra.mxu0 %v650
  %1009 = vmatpush.bf16.msra.mxu0 %v634
  %1010 = vmatpush.bf16.msra.mxu0 %v618
  %1011 = vmatpush.bf16.msra.mxu0 %v602
  %1012 = vmatpush.bf16.msra.mxu0 %v586
  %1013 = vmatpush.bf16.msra.mxu0 %v570
  %1014 = vmatmul.bf16.gmra.mxu0 %v42
  %v1015 = vpop.f32.mrf.mxu0
  %v1016 = vadd.f32 0.0, %v1015
  %v1017 = vpop.f32.mrf.mxu0
  %1018 = vdwg.mxu0
  %v1019 = vpack.c.bf16 %v834, %v821
  %v1020 = vpack.c.bf16 %v860, %v847
  %v1021 = vpack.c.bf16 %v886, %v873
  %v1022 = vpack.c.bf16 %v912, %v899
  %v1023 = vpack.c.bf16 %v938, %v925
  %v1024 = vpack.c.bf16 %v964, %v951
  %v1025 = vpack.c.bf16 %v990, %v977
  %v1026 = vpack.c.bf16 %v1016, %v1003
  %1027 = vst [vmem:[%s5] sm:$0xff] %v1019
  %1028 = vst [vmem:[%s5 + $0x8] sm:$0xff] %v1020
  %1029 = vst [vmem:[%s5 + $0x10] sm:$0xff] %v1021
  %1030 = vst [vmem:[%s5 + $0x18] sm:$0xff] %v1022
  %1031 = vst [vmem:[%s5 + $0x20] sm:$0xff] %v1023
  %1032 = vst [vmem:[%s5 + $0x28] sm:$0xff] %v1024
  %1033 = vst [vmem:[%s5 + $0x30] sm:$0xff] %v1025
  %1034 = vst [vmem:[%s5 + $0x38] sm:$0xff] %v1026
  %v1035 = vlaneseq
  %v1036 = vshrl.u32 %v1035, 7
  %vm1037 = vcmp.lt.s32.totalorder %v1036, 2
  %v1038 = vsel %vm1037, %v821, 0.0
  %v1039 = vsel %vm1037, %v834, 0.0
  %v1040 = vsel %vm1037, %v847, 0.0
  %v1041 = vsel %vm1037, %v860, 0.0
  %v1042 = vsel %vm1037, %v873, 0.0
  %v1043 = vsel %vm1037, %v886, 0.0
  %v1044 = vsel %vm1037, %v899, 0.0
  %v1045 = vsel %vm1037, %v912, 0.0
  %v1046 = vsel %vm1037, %v925, 0.0
  %v1047 = vsel %vm1037, %v938, 0.0
  %v1048 = vsel %vm1037, %v951, 0.0
  %v1049 = vsel %vm1037, %v964, 0.0
  %v1050 = vsel %vm1037, %v977, 0.0
  %v1051 = vsel %vm1037, %v990, 0.0
  %v1052 = vsel %vm1037, %v1003, 0.0
  %v1053 = vsel %vm1037, %v1016, 0.0
  %v1054 = vrot.slane %v1038, 4
  %v1055 = vadd.f32 %v1038, %v1054
  %v1056 = vrot.slane %v1055, 2
  %v1057 = vadd.f32 %v1055, %v1056
  %v1058 = vrot.slane %v1057, 1
  %v1059 = vadd.f32 %v1057, %v1058
  %v1060 = vrot.slane %v1039, 4
  %v1061 = vadd.f32 %v1039, %v1060
  %v1062 = vrot.slane %v1061, 2
  %v1063 = vadd.f32 %v1061, %v1062
  %v1064 = vrot.slane %v1063, 1
  %v1065 = vadd.f32 %v1063, %v1064
  %v1066 = vrot.slane %v1040, 4
  %v1067 = vadd.f32 %v1040, %v1066
  %v1068 = vrot.slane %v1067, 2
  %v1069 = vadd.f32 %v1067, %v1068
  %v1070 = vrot.slane %v1069, 1
  %v1071 = vadd.f32 %v1069, %v1070
  %v1072 = vrot.slane %v1041, 4
  %v1073 = vadd.f32 %v1041, %v1072
  %v1074 = vrot.slane %v1073, 2
  %v1075 = vadd.f32 %v1073, %v1074
  %v1076 = vrot.slane %v1075, 1
  %v1077 = vadd.f32 %v1075, %v1076
  %v1078 = vrot.slane %v1042, 4
  %v1079 = vadd.f32 %v1042, %v1078
  %v1080 = vrot.slane %v1079, 2
  %v1081 = vadd.f32 %v1079, %v1080
  %v1082 = vrot.slane %v1081, 1
  %v1083 = vadd.f32 %v1081, %v1082
  %v1084 = vrot.slane %v1043, 4
  %v1085 = vadd.f32 %v1043, %v1084
  %v1086 = vrot.slane %v1085, 2
  %v1087 = vadd.f32 %v1085, %v1086
  %v1088 = vrot.slane %v1087, 1
  %v1089 = vadd.f32 %v1087, %v1088
  %v1090 = vrot.slane %v1044, 4
  %v1091 = vadd.f32 %v1044, %v1090
  %v1092 = vrot.slane %v1091, 2
  %v1093 = vadd.f32 %v1091, %v1092
  %v1094 = vrot.slane %v1093, 1
  %v1095 = vadd.f32 %v1093, %v1094
  %v1096 = vrot.slane %v1045, 4
  %v1097 = vadd.f32 %v1045, %v1096
  %v1098 = vrot.slane %v1097, 2
  %v1099 = vadd.f32 %v1097, %v1098
  %v1100 = vrot.slane %v1099, 1
  %v1101 = vadd.f32 %v1099, %v1100
  %v1102 = vrot.slane %v1046, 4
  %v1103 = vadd.f32 %v1046, %v1102
  %v1104 = vrot.slane %v1103, 2
  %v1105 = vadd.f32 %v1103, %v1104
  %v1106 = vrot.slane %v1105, 1
  %v1107 = vadd.f32 %v1105, %v1106
  %v1108 = vrot.slane %v1047, 4
  %v1109 = vadd.f32 %v1047, %v1108
  %v1110 = vrot.slane %v1109, 2
  %v1111 = vadd.f32 %v1109, %v1110
  %v1112 = vrot.slane %v1111, 1
  %v1113 = vadd.f32 %v1111, %v1112
  %v1114 = vrot.slane %v1048, 4
  %v1115 = vadd.f32 %v1048, %v1114
  %v1116 = vrot.slane %v1115, 2
  %v1117 = vadd.f32 %v1115, %v1116
  %v1118 = vrot.slane %v1117, 1
  %v1119 = vadd.f32 %v1117, %v1118
  %v1120 = vrot.slane %v1049, 4
  %v1121 = vadd.f32 %v1049, %v1120
  %v1122 = vrot.slane %v1121, 2
  %v1123 = vadd.f32 %v1121, %v1122
  %v1124 = vrot.slane %v1123, 1
  %v1125 = vadd.f32 %v1123, %v1124
  %v1126 = vrot.slane %v1050, 4
  %v1127 = vadd.f32 %v1050, %v1126
  %v1128 = vrot.slane %v1127, 2
  %v1129 = vadd.f32 %v1127, %v1128
  %v1130 = vrot.slane %v1129, 1
  %v1131 = vadd.f32 %v1129, %v1130
  %v1132 = vrot.slane %v1051, 4
  %v1133 = vadd.f32 %v1051, %v1132
  %v1134 = vrot.slane %v1133, 2
  %v1135 = vadd.f32 %v1133, %v1134
  %v1136 = vrot.slane %v1135, 1
  %v1137 = vadd.f32 %v1135, %v1136
  %v1138 = vrot.slane %v1052, 4
  %v1139 = vadd.f32 %v1052, %v1138
  %v1140 = vrot.slane %v1139, 2
  %v1141 = vadd.f32 %v1139, %v1140
  %v1142 = vrot.slane %v1141, 1
  %v1143 = vadd.f32 %v1141, %v1142
  %v1144 = vrot.slane %v1053, 4
  %v1145 = vadd.f32 %v1053, %v1144
  %v1146 = vrot.slane %v1145, 2
  %v1147 = vadd.f32 %v1145, %v1146
  %v1148 = vrot.slane %v1147, 1
  %v1149 = vadd.f32 %v1147, %v1148
  %v1166 = vrot.slane %v1065, 7
  %v1167 = vrot.slane %v1071, 6
  %v1168 = vrot.slane %v1077, 5
  %v1169 = vrot.slane %v1083, 4
  %v1170 = vrot.slane %v1089, 3
  %v1171 = vrot.slane %v1095, 2
  %v1172 = vrot.slane %v1101, 1
  %v1173 = vrot.slane %v1113, 7
  %v1174 = vrot.slane %v1119, 6
  %v1175 = vrot.slane %v1125, 5
  %v1176 = vrot.slane %v1131, 4
  %v1177 = vrot.slane %v1137, 3
  %v1178 = vrot.slane %v1143, 2
  %v1179 = vrot.slane %v1149, 1
  %vm1180 = vcmask 1040384
  %v1181 = vsel %vm1180, %v1059, %v1166
  %vm1182 = vcmask 1042434
  %v1183 = vsel %vm1182, %v1167, %v1168
  %vm1184 = vcmask 1041408
  %v1185 = vsel %vm1184, %v1181, %v1183
  %vm1186 = vcmask 1044484
  %v1187 = vsel %vm1186, %v1169, %v1170
  %vm1188 = vcmask 1046534
  %v1189 = vsel %vm1188, %v1171, %v1172
  %vm1190 = vcmask 1045508
  %v1191 = vsel %vm1190, %v1187, %v1189
  %vm1192 = vcmask 1043456
  %v1193 = vsel %vm1192, %v1185, %v1191
  %v1194 = vsel %vm1180, %v1107, %v1173
  %v1195 = vsel %vm1182, %v1174, %v1175
  %v1196 = vsel %vm1184, %v1194, %v1195
  %v1197 = vsel %vm1186, %v1176, %v1177
  %v1198 = vsel %vm1188, %v1178, %v1179
  %v1199 = vsel %vm1190, %v1197, %v1198
  %v1200 = vsel %vm1192, %v1196, %v1199
  %1203 = vst [vmem:[%s6] sm:$0xff] %v1193
  %1204 = vst [vmem:[%s6 + $0x8] sm:$0xff] %v1200
  %v1205 = vmul.f32 %v1038, %v1038
  %v1206 = vmul.f32 %v1039, %v1039
  %v1207 = vmul.f32 %v1040, %v1040
  %v1208 = vmul.f32 %v1041, %v1041
  %v1209 = vmul.f32 %v1042, %v1042
  %v1210 = vmul.f32 %v1043, %v1043
  %v1211 = vmul.f32 %v1044, %v1044
  %v1212 = vmul.f32 %v1045, %v1045
  %v1213 = vmul.f32 %v1046, %v1046
  %v1214 = vmul.f32 %v1047, %v1047
  %v1215 = vmul.f32 %v1048, %v1048
  %v1216 = vmul.f32 %v1049, %v1049
  %v1217 = vmul.f32 %v1050, %v1050
  %v1218 = vmul.f32 %v1051, %v1051
  %v1219 = vmul.f32 %v1052, %v1052
  %v1220 = vmul.f32 %v1053, %v1053
  %v1221 = vrot.slane %v1205, 4
  %v1222 = vadd.f32 %v1205, %v1221
  %v1223 = vrot.slane %v1222, 2
  %v1224 = vadd.f32 %v1222, %v1223
  %v1225 = vrot.slane %v1224, 1
  %v1226 = vadd.f32 %v1224, %v1225
  %v1227 = vrot.slane %v1206, 4
  %v1228 = vadd.f32 %v1206, %v1227
  %v1229 = vrot.slane %v1228, 2
  %v1230 = vadd.f32 %v1228, %v1229
  %v1231 = vrot.slane %v1230, 1
  %v1232 = vadd.f32 %v1230, %v1231
  %v1233 = vrot.slane %v1207, 4
  %v1234 = vadd.f32 %v1207, %v1233
  %v1235 = vrot.slane %v1234, 2
  %v1236 = vadd.f32 %v1234, %v1235
  %v1237 = vrot.slane %v1236, 1
  %v1238 = vadd.f32 %v1236, %v1237
  %v1239 = vrot.slane %v1208, 4
  %v1240 = vadd.f32 %v1208, %v1239
  %v1241 = vrot.slane %v1240, 2
  %v1242 = vadd.f32 %v1240, %v1241
  %v1243 = vrot.slane %v1242, 1
  %v1244 = vadd.f32 %v1242, %v1243
  %v1245 = vrot.slane %v1209, 4
  %v1246 = vadd.f32 %v1209, %v1245
  %v1247 = vrot.slane %v1246, 2
  %v1248 = vadd.f32 %v1246, %v1247
  %v1249 = vrot.slane %v1248, 1
  %v1250 = vadd.f32 %v1248, %v1249
  %v1251 = vrot.slane %v1210, 4
  %v1252 = vadd.f32 %v1210, %v1251
  %v1253 = vrot.slane %v1252, 2
  %v1254 = vadd.f32 %v1252, %v1253
  %v1255 = vrot.slane %v1254, 1
  %v1256 = vadd.f32 %v1254, %v1255
  %v1257 = vrot.slane %v1211, 4
  %v1258 = vadd.f32 %v1211, %v1257
  %v1259 = vrot.slane %v1258, 2
  %v1260 = vadd.f32 %v1258, %v1259
  %v1261 = vrot.slane %v1260, 1
  %v1262 = vadd.f32 %v1260, %v1261
  %v1263 = vrot.slane %v1212, 4
  %v1264 = vadd.f32 %v1212, %v1263
  %v1265 = vrot.slane %v1264, 2
  %v1266 = vadd.f32 %v1264, %v1265
  %v1267 = vrot.slane %v1266, 1
  %v1268 = vadd.f32 %v1266, %v1267
  %v1269 = vrot.slane %v1213, 4
  %v1270 = vadd.f32 %v1213, %v1269
  %v1271 = vrot.slane %v1270, 2
  %v1272 = vadd.f32 %v1270, %v1271
  %v1273 = vrot.slane %v1272, 1
  %v1274 = vadd.f32 %v1272, %v1273
  %v1275 = vrot.slane %v1214, 4
  %v1276 = vadd.f32 %v1214, %v1275
  %v1277 = vrot.slane %v1276, 2
  %v1278 = vadd.f32 %v1276, %v1277
  %v1279 = vrot.slane %v1278, 1
  %v1280 = vadd.f32 %v1278, %v1279
  %v1281 = vrot.slane %v1215, 4
  %v1282 = vadd.f32 %v1215, %v1281
  %v1283 = vrot.slane %v1282, 2
  %v1284 = vadd.f32 %v1282, %v1283
  %v1285 = vrot.slane %v1284, 1
  %v1286 = vadd.f32 %v1284, %v1285
  %v1287 = vrot.slane %v1216, 4
  %v1288 = vadd.f32 %v1216, %v1287
  %v1289 = vrot.slane %v1288, 2
  %v1290 = vadd.f32 %v1288, %v1289
  %v1291 = vrot.slane %v1290, 1
  %v1292 = vadd.f32 %v1290, %v1291
  %v1293 = vrot.slane %v1217, 4
  %v1294 = vadd.f32 %v1217, %v1293
  %v1295 = vrot.slane %v1294, 2
  %v1296 = vadd.f32 %v1294, %v1295
  %v1297 = vrot.slane %v1296, 1
  %v1298 = vadd.f32 %v1296, %v1297
  %v1299 = vrot.slane %v1218, 4
  %v1300 = vadd.f32 %v1218, %v1299
  %v1301 = vrot.slane %v1300, 2
  %v1302 = vadd.f32 %v1300, %v1301
  %v1303 = vrot.slane %v1302, 1
  %v1304 = vadd.f32 %v1302, %v1303
  %v1305 = vrot.slane %v1219, 4
  %v1306 = vadd.f32 %v1219, %v1305
  %v1307 = vrot.slane %v1306, 2
  %v1308 = vadd.f32 %v1306, %v1307
  %v1309 = vrot.slane %v1308, 1
  %v1310 = vadd.f32 %v1308, %v1309
  %v1311 = vrot.slane %v1220, 4
  %v1312 = vadd.f32 %v1220, %v1311
  %v1313 = vrot.slane %v1312, 2
  %v1314 = vadd.f32 %v1312, %v1313
  %v1315 = vrot.slane %v1314, 1
  %v1316 = vadd.f32 %v1314, %v1315
  %v1333 = vrot.slane %v1232, 7
  %v1334 = vrot.slane %v1238, 6
  %v1335 = vrot.slane %v1244, 5
  %v1336 = vrot.slane %v1250, 4
  %v1337 = vrot.slane %v1256, 3
  %v1338 = vrot.slane %v1262, 2
  %v1339 = vrot.slane %v1268, 1
  %v1340 = vrot.slane %v1280, 7
  %v1341 = vrot.slane %v1286, 6
  %v1342 = vrot.slane %v1292, 5
  %v1343 = vrot.slane %v1298, 4
  %v1344 = vrot.slane %v1304, 3
  %v1345 = vrot.slane %v1310, 2
  %v1346 = vrot.slane %v1316, 1
  %v1347 = vsel %vm1180, %v1226, %v1333
  %v1348 = vsel %vm1182, %v1334, %v1335
  %v1349 = vsel %vm1184, %v1347, %v1348
  %v1350 = vsel %vm1186, %v1336, %v1337
  %v1351 = vsel %vm1188, %v1338, %v1339
  %v1352 = vsel %vm1190, %v1350, %v1351
  %v1353 = vsel %vm1192, %v1349, %v1352
  %v1354 = vsel %vm1180, %v1274, %v1340
  %v1355 = vsel %vm1182, %v1341, %v1342
  %v1356 = vsel %vm1184, %v1354, %v1355
  %v1357 = vsel %vm1186, %v1343, %v1344
  %v1358 = vsel %vm1188, %v1345, %v1346
  %v1359 = vsel %vm1190, %v1357, %v1358
  %v1360 = vsel %vm1192, %v1356, %v1359
  %1363 = vst [vmem:[%s7] sm:$0xff] %v1353
  %1364 = vst [vmem:[%s7 + $0x8] sm:$0xff] %v1360
  // Predicated region
  $region22: #{wgan_generator_forward.8} parent=0 // pred_check
    _
  $region23: #{wgan_generator_forward.8} parent=0 // pred_check_branch
    %1366 = sbr.rel (0) target = $region25
  $region24: #{wgan_generator_forward.8} parent=0 // pred_region
    _
  $region25: #{wgan_generator_forward.8} parent=0 // pred_fallthru
    _
  // Predicated region
  $region26: #{wgan_generator_forward.8} parent=0 // pred_check
    _
  $region27: #{wgan_generator_forward.8} parent=0 // pred_check_branch
    %1368 = sbr.rel (0) target = $region29
  $region28: #{wgan_generator_forward.8} parent=0 // pred_region
    _
  $region29: #{wgan_generator_forward.8} parent=0 // pred_fallthru
    _
  // Predicated region
  $region30: #{wgan_generator_forward.8} parent=0 // pred_check
    _
  $region31: #{wgan_generator_forward.8} parent=0 // pred_check_branch
    %1370 = sbr.rel (0) target = $region33
  $region32: #{wgan_generator_forward.8} parent=0 // pred_region
    _
  $region33: #{wgan_generator_forward.8} parent=0 // pred_fallthru
    _
  // Predicated region
  $region34: #{wgan_generator_forward.8} parent=0 // pred_check
    _
  $region35: #{wgan_generator_forward.8} parent=0 // pred_check_branch
    %1372 = sbr.rel (0) target = $region37
  $region36: #{wgan_generator_forward.8} parent=0 // pred_region
    _
  $region37: #{wgan_generator_forward.8} parent=0 // pred_fallthru
    _
  // Predicated region
  $region38: #{wgan_generator_forward.8} parent=0 // pred_check
    _
  $region39: #{wgan_generator_forward.8} parent=0 // pred_check_branch
    %1374 = sbr.rel (0) target = $region41
  $region40: #{wgan_generator_forward.8} parent=0 // pred_region
    _
  $region41: #{wgan_generator_forward.8} parent=0 // pred_fallthru
    _
  // Predicated region
  $region42: #{wgan_generator_forward.8} parent=0 // pred_check
    _
  $region43: #{wgan_generator_forward.8} parent=0 // pred_check_branch
    %1376 = sbr.rel (0) target = $region45
  $region44: #{wgan_generator_forward.8} parent=0 // pred_region
    _
  $region45: #{wgan_generator_forward.8} parent=0 // pred_fallthru
    _

// kernel: tile.51
$region0: #{tile.51}
  #allocation0 [shape = 's32[1]{0}', space=sflag, size = 0x4, scoped, tag = 'scoped memory for tile.51']
  %s0 = inlined_call_operand.<no memory space> [shape: f32[], index: 0, kind: input, shape index: {}]
  %s1 = inlined_call_operand.vmem [shape: f32[1,1152], index: 1, kind: output, shape index: {}]
  %v2 = vstv %s0
  %3 = vst [vmem:[%s1] sm:$0x1] %v2
  %s4 = scalar_lea.vmem %s1, 1
  %5 = vst [vmem:[%s4] sm:$0x1] %v2
  %s6 = scalar_lea.vmem %s1, 2
  %7 = vst [vmem:[%s6] sm:$0x1] %v2
  %s8 = scalar_lea.vmem %s1, 3
  %9 = vst [vmem:[%s8] sm:$0x1] %v2
  %s10 = scalar_lea.vmem %s1, 4
  %11 = vst [vmem:[%s10] sm:$0x1] %v2
  %s12 = scalar_lea.vmem %s1, 5
  %13 = vst [vmem:[%s12] sm:$0x1] %v2
  %s14 = scalar_lea.vmem %s1, 6
  %15 = vst [vmem:[%s14] sm:$0x1] %v2
  %s16 = scalar_lea.vmem %s1, 7
  %17 = vst [vmem:[%s16] sm:$0x1] %v2
  %s18 = scalar_lea.vmem %s1, 8
  %19 = vst [vmem:[%s18] sm:$0x1] %v2

// kernel: tile.70
$region0: #{tile.70}
  #allocation0 [shape = 's32[1]{0}', space=sflag, size = 0x4, scoped, tag = 'scoped memory for tile.70']
  %s0 = inlined_call_operand.vmem [shape: f32[64], index: 0, kind: input, shape index: {}]
  %s1 = inlined_call_operand.vmem [shape: f32[9,64], index: 1, kind: output, shape index: {}]
  // Predicated region
  $region2: #{tile.70} parent=0 // pred_check
    _
  $region3: #{tile.70} parent=0 // pred_check_branch
    %3 = sbr.rel (0) target = $region5
  $region4: #{tile.70} parent=0 // pred_region
    _
  $region5: #{tile.70} parent=0 // pred_fallthru
    _
  %v4 = vld [vmem:[%s0] ss:$0 sm:$0xff]
  %5 = vst [vmem:[%s1] sm:$0xff] %v4
  %s6 = scalar_lea.vmem %s1, 8
  %7 = vst [vmem:[%s6] sm:$0xff] %v4

// kernel: tile.71
$region0: #{tile.71}
  %s0 = inlined_call_operand.vmem [shape: f32[9,64], index: 0, kind: input, shape index: {}]
  %s1 = inlined_call_operand.vmem [shape: f32[576], index: 1, kind: output, shape index: {}]
  %v2 = vld [vmem:[%s0] ss:$2 sm:$0x1f]
  %vm3 = vcmask 523264
  %4 = vst.msk [vmem:[%s1] sm:$0x1f] %vm3, %v2
  %s5 = scalar_lea.vmem %s0, 1
  %v6 = vld [vmem:[%s5] ss:$2 sm:$0xf]
  %7 = vrot.lane.b32.xlu0 %v6, 64
  %v8 = vpop.permute.xlu0 %7
  %vm9 = vcmask 1048064
  %10 = vst.msk [vmem:[%s1] sm:$0xf] %vm9, %v8

// kernel: wgan_generator_forward.9
$region0: #{wgan_generator_forward.9}
  #allocation0 [shape = 'u32[]', space=smem, size = 0x4, offset = 0x4, fixed_abs, tag = 'smem constant byte address 0x4 - core index']
  #allocation1 [shape = 'u32[72,128]{1,0:T(1,128)}', space=vmem, size = 0x9000, scoped, tag = 'internal scratch']
  %s0 = inlined_call_operand.vmem [shape: bf16[32,1152], index: 0, kind: input, shape index: {}]
  %s1 = inlined_call_operand.vmem [shape: bf16[1152,256], index: 1, kind: input, shape index: {}]
  %s2 = inlined_call_operand.vmem [shape: f32[1,1152], index: 2, kind: input, shape index: {}]
  %s3 = inlined_call_operand.vmem [shape: f32[1,1152], index: 3, kind: input, shape index: {}]
  %s4 = inlined_call_operand.vmem [shape: f32[1,1152], index: 4, kind: input, shape index: {}]
  %s5 = inlined_call_operand.vmem [shape: bf16[32,256], index: 5, kind: output, shape index: {0}]
  %s6 = inlined_call_operand.vmem [shape: f32[1,1,256], index: 6, kind: output, shape index: {1}]
  %s7 = inlined_call_operand.vmem [shape: f32[1,1,256], index: 7, kind: output, shape index: {2}]
  %8 = xla_tuple %s5, %s6, %s7
  %s9 = sld [smem:[#allocation0]]
  $region46: #{wgan_generator_forward.9} parent=0
    _
  %s11 = ssub.s32 1, %s9
  %s12 = scalar_select 0, %s11, %s9
  // Predicated region
  $region2: #{wgan_generator_forward.9} parent=0 // pred_check
    _
  $region3: #{wgan_generator_forward.9} parent=0 // pred_check_branch
    %14 = sbr.rel (0) target = $region5
  $region4: #{wgan_generator_forward.9} parent=0 // pred_region
    _
  $region5: #{wgan_generator_forward.9} parent=0 // pred_fallthru
    _
  // Predicated region
  $region6: #{wgan_generator_forward.9} parent=0 // pred_check
    _
  $region7: #{wgan_generator_forward.9} parent=0 // pred_check_branch
    %16 = sbr.rel (0) target = $region9
  $region8: #{wgan_generator_forward.9} parent=0 // pred_region
    _
  $region9: #{wgan_generator_forward.9} parent=0 // pred_fallthru
    _
  // Predicated region
  $region10: #{wgan_generator_forward.9} parent=0 // pred_check
    _
  $region11: #{wgan_generator_forward.9} parent=0 // pred_check_branch
    %18 = sbr.rel (0) target = $region13
  $region12: #{wgan_generator_forward.9} parent=0 // pred_region
    _
  $region13: #{wgan_generator_forward.9} parent=0 // pred_fallthru
    _
  // Predicated region
  $region14: #{wgan_generator_forward.9} parent=0 // pred_check
    _
  $region15: #{wgan_generator_forward.9} parent=0 // pred_check_branch
    %20 = sbr.rel (0) target = $region17
  $region16: #{wgan_generator_forward.9} parent=0 // pred_region
    _
  $region17: #{wgan_generator_forward.9} parent=0 // pred_fallthru
    _
  // Predicated region
  $region18: #{wgan_generator_forward.9} parent=0 // pred_check
    _
  $region19: #{wgan_generator_forward.9} parent=0 // pred_check_branch
    %22 = sbr.rel (0) target = $region21
  $region20: #{wgan_generator_forward.9} parent=0 // pred_region
    _
  $region21: #{wgan_generator_forward.9} parent=0 // pred_fallthru
    _
  %v23 = vld [vmem:[%s0] sm:$0xff]
  %v24 = vld [vmem:[%s0 + $0x8] sm:$0xff]
  %v25 = vld [vmem:[%s0 + $0x10] sm:$0xff]
  %v26 = vld [vmem:[%s0 + $0x18] sm:$0xff]
  %v27 = vld [vmem:[%s0 + $0x20] sm:$0xf]
  %v28 = vld [vmem:[%s0 + $0x24] sm:$0xff]
  %v29 = vld [vmem:[%s0 + $0x2c] sm:$0xff]
  %v30 = vld [vmem:[%s0 + $0x34] sm:$0xff]
  %v31 = vld [vmem:[%s0 + $0x3c] sm:$0xff]
  %v32 = vld [vmem:[%s0 + $0x44] sm:$0xf]
  %v33 = vld [vmem:[%s0 + $0x48] sm:$0xff]
  %v34 = vld [vmem:[%s0 + $0x50] sm:$0xff]
  %v35 = vld [vmem:[%s0 + $0x58] sm:$0xff]
  %v36 = vld [vmem:[%s0 + $0x60] sm:$0xff]
  %v37 = vld [vmem:[%s0 + $0x68] sm:$0xf]
  %v38 = vld [vmem:[%s0 + $0x6c] sm:$0xff]
  %v39 = vld [vmem:[%s0 + $0x74] sm:$0xff]
  %v40 = vld [vmem:[%s0 + $0x7c] sm:$0xff]
  %v41 = vld [vmem:[%s0 + $0x84] sm:$0xff]
  %v42 = vld [vmem:[%s0 + $0x8c] sm:$0xf]
  %v43 = vunpack.c.l.bf16 %v23
  %v44 = vunpack.c.h.bf16 %v23
  %v45 = vunpack.c.l.bf16 %v24
  %v46 = vunpack.c.h.bf16 %v24
  %v47 = vunpack.c.l.bf16 %v25
  %v48 = vunpack.c.h.bf16 %v25
  %v49 = vunpack.c.l.bf16 %v26
  %v50 = vunpack.c.h.bf16 %v26
  %v51 = vunpack.c.l.bf16 %v27
  %v52 = vunpack.c.l.bf16 %v28
  %v53 = vunpack.c.h.bf16 %v28
  %v54 = vunpack.c.l.bf16 %v29
  %v55 = vunpack.c.h.bf16 %v29
  %v56 = vunpack.c.l.bf16 %v30
  %v57 = vunpack.c.h.bf16 %v30
  %v58 = vunpack.c.l.bf16 %v31
  %v59 = vunpack.c.h.bf16 %v31
  %v60 = vunpack.c.l.bf16 %v32
  %v61 = vunpack.c.l.bf16 %v33
  %v62 = vunpack.c.h.bf16 %v33
  %v63 = vunpack.c.l.bf16 %v34
  %v64 = vunpack.c.h.bf16 %v34
  %v65 = vunpack.c.l.bf16 %v35
  %v66 = vunpack.c.h.bf16 %v35
  %v67 = vunpack.c.l.bf16 %v36
  %v68 = vunpack.c.h.bf16 %v36
  %v69 = vunpack.c.l.bf16 %v37
  %v70 = vunpack.c.l.bf16 %v38
  %v71 = vunpack.c.h.bf16 %v38
  %v72 = vunpack.c.l.bf16 %v39
  %v73 = vunpack.c.h.bf16 %v39
  %v74 = vunpack.c.l.bf16 %v40
  %v75 = vunpack.c.h.bf16 %v40
  %v76 = vunpack.c.l.bf16 %v41
  %v77 = vunpack.c.h.bf16 %v41
  %v78 = vunpack.c.l.bf16 %v42
  %v79 = vld [vmem:[%s2] sm:$0xff]
  %v80 = vld [vmem:[%s2 + $0x8] sm:$0x1]
  %v83 = vperm.slane %v79, 0
  %v84 = vperm.slane %v79, 1
  %v85 = vperm.slane %v79, 2
  %v86 = vperm.slane %v79, 3
  %v87 = vperm.slane %v79, 4
  %v88 = vperm.slane %v79, 5
  %v89 = vperm.slane %v79, 6
  %v90 = vperm.slane %v79, 7
  %v91 = vperm.slane %v80, 0
  %v101 = vmul.f32 %v43, %v83
  %v102 = vmul.f32 %v44, %v84
  %v103 = vmul.f32 %v45, %v85
  %v104 = vmul.f32 %v46, %v86
  %v105 = vmul.f32 %v47, %v87
  %v106 = vmul.f32 %v48, %v88
  %v107 = vmul.f32 %v49, %v89
  %v108 = vmul.f32 %v50, %v90
  %v109 = vmul.f32 %v51, %v91
  %v110 = vmul.f32 %v52, %v83
  %v111 = vmul.f32 %v53, %v84
  %v112 = vmul.f32 %v54, %v85
  %v113 = vmul.f32 %v55, %v86
  %v114 = vmul.f32 %v56, %v87
  %v115 = vmul.f32 %v57, %v88
  %v116 = vmul.f32 %v58, %v89
  %v117 = vmul.f32 %v59, %v90
  %v118 = vmul.f32 %v60, %v91
  %v119 = vmul.f32 %v61, %v83
  %v120 = vmul.f32 %v62, %v84
  %v121 = vmul.f32 %v63, %v85
  %v122 = vmul.f32 %v64, %v86
  %v123 = vmul.f32 %v65, %v87
  %v124 = vmul.f32 %v66, %v88
  %v125 = vmul.f32 %v67, %v89
  %v126 = vmul.f32 %v68, %v90
  %v127 = vmul.f32 %v69, %v91
  %v128 = vmul.f32 %v70, %v83
  %v129 = vmul.f32 %v71, %v84
  %v130 = vmul.f32 %v72, %v85
  %v131 = vmul.f32 %v73, %v86
  %v132 = vmul.f32 %v74, %v87
  %v133 = vmul.f32 %v75, %v88
  %v134 = vmul.f32 %v76, %v89
  %v135 = vmul.f32 %v77, %v90
  %v136 = vmul.f32 %v78, %v91
  %v137 = vld [vmem:[%s3] sm:$0xff]
  %v138 = vld [vmem:[%s3 + $0x8] sm:$0x1]
  %v141 = vperm.slane %v137, 0
  %v142 = vperm.slane %v137, 1
  %v143 = vperm.slane %v137, 2
  %v144 = vperm.slane %v137, 3
  %v145 = vperm.slane %v137, 4
  %v146 = vperm.slane %v137, 5
  %v147 = vperm.slane %v137, 6
  %v148 = vperm.slane %v137, 7
  %v149 = vperm.slane %v138, 0
  %v159 = vadd.f32 %v101, %v141
  %v160 = vadd.f32 %v102, %v142
  %v161 = vadd.f32 %v103, %v143
  %v162 = vadd.f32 %v104, %v144
  %v163 = vadd.f32 %v105, %v145
  %v164 = vadd.f32 %v106, %v146
  %v165 = vadd.f32 %v107, %v147
  %v166 = vadd.f32 %v108, %v148
  %v167 = vadd.f32 %v109, %v149
  %v168 = vadd.f32 %v110, %v141
  %v169 = vadd.f32 %v111, %v142
  %v170 = vadd.f32 %v112, %v143
  %v171 = vadd.f32 %v113, %v144
  %v172 = vadd.f32 %v114, %v145
  %v173 = vadd.f32 %v115, %v146
  %v174 = vadd.f32 %v116, %v147
  %v175 = vadd.f32 %v117, %v148
  %v176 = vadd.f32 %v118, %v149
  %v177 = vadd.f32 %v119, %v141
  %v178 = vadd.f32 %v120, %v142
  %v179 = vadd.f32 %v121, %v143
  %v180 = vadd.f32 %v122, %v144
  %v181 = vadd.f32 %v123, %v145
  %v182 = vadd.f32 %v124, %v146
  %v183 = vadd.f32 %v125, %v147
  %v184 = vadd.f32 %v126, %v148
  %v185 = vadd.f32 %v127, %v149
  %v186 = vadd.f32 %v128, %v141
  %v187 = vadd.f32 %v129, %v142
  %v188 = vadd.f32 %v130, %v143
  %v189 = vadd.f32 %v131, %v144
  %v190 = vadd.f32 %v132, %v145
  %v191 = vadd.f32 %v133, %v146
  %v192 = vadd.f32 %v134, %v147
  %v193 = vadd.f32 %v135, %v148
  %v194 = vadd.f32 %v136, %v149
  %vm195 = vcmp.ge.f32.partialorder %v159, 0.0
  %vm196 = vcmp.ge.f32.partialorder %v160, 0.0
  %vm197 = vcmp.ge.f32.partialorder %v161, 0.0
  %vm198 = vcmp.ge.f32.partialorder %v162, 0.0
  %vm199 = vcmp.ge.f32.partialorder %v163, 0.0
  %vm200 = vcmp.ge.f32.partialorder %v164, 0.0
  %vm201 = vcmp.ge.f32.partialorder %v165, 0.0
  %vm202 = vcmp.ge.f32.partialorder %v166, 0.0
  %vm203 = vcmp.ge.f32.partialorder %v167, 0.0
  %vm204 = vcmp.ge.f32.partialorder %v168, 0.0
  %vm205 = vcmp.ge.f32.partialorder %v169, 0.0
  %vm206 = vcmp.ge.f32.partialorder %v170, 0.0
  %vm207 = vcmp.ge.f32.partialorder %v171, 0.0
  %vm208 = vcmp.ge.f32.partialorder %v172, 0.0
  %vm209 = vcmp.ge.f32.partialorder %v173, 0.0
  %vm210 = vcmp.ge.f32.partialorder %v174, 0.0
  %vm211 = vcmp.ge.f32.partialorder %v175, 0.0
  %vm212 = vcmp.ge.f32.partialorder %v176, 0.0
  %vm213 = vcmp.ge.f32.partialorder %v177, 0.0
  %vm214 = vcmp.ge.f32.partialorder %v178, 0.0
  %vm215 = vcmp.ge.f32.partialorder %v179, 0.0
  %vm216 = vcmp.ge.f32.partialorder %v180, 0.0
  %vm217 = vcmp.ge.f32.partialorder %v181, 0.0
  %vm218 = vcmp.ge.f32.partialorder %v182, 0.0
  %vm219 = vcmp.ge.f32.partialorder %v183, 0.0
  %vm220 = vcmp.ge.f32.partialorder %v184, 0.0
  %vm221 = vcmp.ge.f32.partialorder %v185, 0.0
  %vm222 = vcmp.ge.f32.partialorder %v186, 0.0
  %vm223 = vcmp.ge.f32.partialorder %v187, 0.0
  %vm224 = vcmp.ge.f32.partialorder %v188, 0.0
  %vm225 = vcmp.ge.f32.partialorder %v189, 0.0
  %vm226 = vcmp.ge.f32.partialorder %v190, 0.0
  %vm227 = vcmp.ge.f32.partialorder %v191, 0.0
  %vm228 = vcmp.ge.f32.partialorder %v192, 0.0
  %vm229 = vcmp.ge.f32.partialorder %v193, 0.0
  %vm230 = vcmp.ge.f32.partialorder %v194, 0.0
  %v231 = vld [vmem:[%s4] sm:$0xff]
  %v232 = vld [vmem:[%s4 + $0x8] sm:$0x1]
  %v235 = vperm.slane %v231, 0
  %v236 = vperm.slane %v231, 1
  %v237 = vperm.slane %v231, 2
  %v238 = vperm.slane %v231, 3
  %v239 = vperm.slane %v231, 4
  %v240 = vperm.slane %v231, 5
  %v241 = vperm.slane %v231, 6
  %v242 = vperm.slane %v231, 7
  %v243 = vperm.slane %v232, 0
  %v253 = vmul.f32 %v235, %v159
  %v254 = vmul.f32 %v236, %v160
  %v255 = vmul.f32 %v237, %v161
  %v256 = vmul.f32 %v238, %v162
  %v257 = vmul.f32 %v239, %v163
  %v258 = vmul.f32 %v240, %v164
  %v259 = vmul.f32 %v241, %v165
  %v260 = vmul.f32 %v242, %v166
  %v261 = vmul.f32 %v243, %v167
  %v262 = vmul.f32 %v235, %v168
  %v263 = vmul.f32 %v236, %v169
  %v264 = vmul.f32 %v237, %v170
  %v265 = vmul.f32 %v238, %v171
  %v266 = vmul.f32 %v239, %v172
  %v267 = vmul.f32 %v240, %v173
  %v268 = vmul.f32 %v241, %v174
  %v269 = vmul.f32 %v242, %v175
  %v270 = vmul.f32 %v243, %v176
  %v271 = vmul.f32 %v235, %v177
  %v272 = vmul.f32 %v236, %v178
  %v273 = vmul.f32 %v237, %v179
  %v274 = vmul.f32 %v238, %v180
  %v275 = vmul.f32 %v239, %v181
  %v276 = vmul.f32 %v240, %v182
  %v277 = vmul.f32 %v241, %v183
  %v278 = vmul.f32 %v242, %v184
  %v279 = vmul.f32 %v243, %v185
  %v280 = vmul.f32 %v235, %v186
  %v281 = vmul.f32 %v236, %v187
  %v282 = vmul.f32 %v237, %v188
  %v283 = vmul.f32 %v238, %v189
  %v284 = vmul.f32 %v239, %v190
  %v285 = vmul.f32 %v240, %v191
  %v286 = vmul.f32 %v241, %v192
  %v287 = vmul.f32 %v242, %v193
  %v288 = vmul.f32 %v243, %v194
  %v289 = vsel %vm195, %v159, %v253
  %v290 = vsel %vm196, %v160, %v254
  %v291 = vsel %vm197, %v161, %v255
  %v292 = vsel %vm198, %v162, %v256
  %v293 = vsel %vm199, %v163, %v257
  %v294 = vsel %vm200, %v164, %v258
  %v295 = vsel %vm201, %v165, %v259
  %v296 = vsel %vm202, %v166, %v260
  %v297 = vsel %vm203, %v167, %v261
  %v298 = vsel %vm204, %v168, %v262
  %v299 = vsel %vm205, %v169, %v263
  %v300 = vsel %vm206, %v170, %v264
  %v301 = vsel %vm207, %v171, %v265
  %v302 = vsel %vm208, %v172, %v266
  %v303 = vsel %vm209, %v173, %v267
  %v304 = vsel %vm210, %v174, %v268
  %v305 = vsel %vm211, %v175, %v269
  %v306 = vsel %vm212, %v176, %v270
  %v307 = vsel %vm213, %v177, %v271
  %v308 = vsel %vm214, %v178, %v272
  %v309 = vsel %vm215, %v179, %v273
  %v310 = vsel %vm216, %v180, %v274
  %v311 = vsel %vm217, %v181, %v275
  %v312 = vsel %vm218, %v182, %v276
  %v313 = vsel %vm219, %v183, %v277
  %v314 = vsel %vm220, %v184, %v278
  %v315 = vsel %vm221, %v185, %v279
  %v316 = vsel %vm222, %v186, %v280
  %v317 = vsel %vm223, %v187, %v281
  %v318 = vsel %vm224, %v188, %v282
  %v319 = vsel %vm225, %v189, %v283
  %v320 = vsel %vm226, %v190, %v284
  %v321 = vsel %vm227, %v191, %v285
  %v322 = vsel %vm228, %v192, %v286
  %v323 = vsel %vm229, %v193, %v287
  %v324 = vsel %vm230, %v194, %v288
  %v325 = vpack.c.bf16 %v298, %v289
  %v326 = vpack.c.bf16 %v299, %v290
  %v327 = vpack.c.bf16 %v300, %v291
  %v328 = vpack.c.bf16 %v301, %v292
  %v329 = vpack.c.bf16 %v302, %v293
  %v330 = vpack.c.bf16 %v303, %v294
  %v331 = vpack.c.bf16 %v304, %v295
  %v332 = vpack.c.bf16 %v305, %v296
  %v333 = vpack.c.bf16 %v306, %v297
  %v334 = vpack.c.bf16 %v316, %v307
  %v335 = vpack.c.bf16 %v317, %v308
  %v336 = vpack.c.bf16 %v318, %v309
  %v337 = vpack.c.bf16 %v319, %v310
  %v338 = vpack.c.bf16 %v320, %v311
  %v339 = vpack.c.bf16 %v321, %v312
  %v340 = vpack.c.bf16 %v322, %v313
  %v341 = vpack.c.bf16 %v323, %v314
  %v342 = vpack.c.bf16 %v324, %v315
  %v343 = vld [vmem:[%s1] sm:$0xff]
  %v344 = vld [vmem:[%s1 + $0x8] sm:$0xff]
  %v345 = vld [vmem:[%s1 + $0x10] sm:$0xff]
  %v346 = vld [vmem:[%s1 + $0x18] sm:$0xff]
  %v347 = vld [vmem:[%s1 + $0x20] sm:$0xff]
  %v348 = vld [vmem:[%s1 + $0x28] sm:$0xff]
  %v349 = vld [vmem:[%s1 + $0x30] sm:$0xff]
  %v350 = vld [vmem:[%s1 + $0x38] sm:$0xff]
  %v351 = vld [vmem:[%s1 + $0x40] sm:$0xff]
  %v352 = vld [vmem:[%s1 + $0x48] sm:$0xff]
  %v353 = vld [vmem:[%s1 + $0x50] sm:$0xff]
  %v354 = vld [vmem:[%s1 + $0x58] sm:$0xff]
  %v355 = vld [vmem:[%s1 + $0x60] sm:$0xff]
  %v356 = vld [vmem:[%s1 + $0x68] sm:$0xff]
  %v357 = vld [vmem:[%s1 + $0x70] sm:$0xff]
  %v358 = vld [vmem:[%s1 + $0x78] sm:$0xff]
  %v359 = vld [vmem:[%s1 + $0x80] sm:$0xff]
  %v360 = vld [vmem:[%s1 + $0x88] sm:$0xff]
  %v361 = vld [vmem:[%s1 + $0x90] sm:$0xff]
  %v362 = vld [vmem:[%s1 + $0x98] sm:$0xff]
  %v363 = vld [vmem:[%s1 + $0xa0] sm:$0xff]
  %v364 = vld [vmem:[%s1 + $0xa8] sm:$0xff]
  %v365 = vld [vmem:[%s1 + $0xb0] sm:$0xff]
  %v366 = vld [vmem:[%s1 + $0xb8] sm:$0xff]
  %v367 = vld [vmem:[%s1 + $0xc0] sm:$0xff]
  %v368 = vld [vmem:[%s1 + $0xc8] sm:$0xff]
  %v369 = vld [vmem:[%s1 + $0xd0] sm:$0xff]
  %v370 = vld [vmem:[%s1 + $0xd8] sm:$0xff]
  %v371 = vld [vmem:[%s1 + $0xe0] sm:$0xff]
  %v372 = vld [vmem:[%s1 + $0xe8] sm:$0xff]
  %v373 = vld [vmem:[%s1 + $0xf0] sm:$0xff]
  %v374 = vld [vmem:[%s1 + $0xf8] sm:$0xff]
  %v375 = vld [vmem:[%s1 + $0x100] sm:$0xff]
  %v376 = vld [vmem:[%s1 + $0x108] sm:$0xff]
  %v377 = vld [vmem:[%s1 + $0x110] sm:$0xff]
  %v378 = vld [vmem:[%s1 + $0x118] sm:$0xff]
  %v379 = vld [vmem:[%s1 + $0x120] sm:$0xff]
  %v380 = vld [vmem:[%s1 + $0x128] sm:$0xff]
  %v381 = vld [vmem:[%s1 + $0x130] sm:$0xff]
  %v382 = vld [vmem:[%s1 + $0x138] sm:$0xff]
  %v383 = vld [vmem:[%s1 + $0x140] sm:$0xff]
  %v384 = vld [vmem:[%s1 + $0x148] sm:$0xff]
  %v385 = vld [vmem:[%s1 + $0x150] sm:$0xff]
  %v386 = vld [vmem:[%s1 + $0x158] sm:$0xff]
  %v387 = vld [vmem:[%s1 + $0x160] sm:$0xff]
  %v388 = vld [vmem:[%s1 + $0x168] sm:$0xff]
  %v389 = vld [vmem:[%s1 + $0x170] sm:$0xff]
  %v390 = vld [vmem:[%s1 + $0x178] sm:$0xff]
  %v391 = vld [vmem:[%s1 + $0x180] sm:$0xff]
  %v392 = vld [vmem:[%s1 + $0x188] sm:$0xff]
  %v393 = vld [vmem:[%s1 + $0x190] sm:$0xff]
  %v394 = vld [vmem:[%s1 + $0x198] sm:$0xff]
  %v395 = vld [vmem:[%s1 + $0x1a0] sm:$0xff]
  %v396 = vld [vmem:[%s1 + $0x1a8] sm:$0xff]
  %v397 = vld [vmem:[%s1 + $0x1b0] sm:$0xff]
  %v398 = vld [vmem:[%s1 + $0x1b8] sm:$0xff]
  %v399 = vld [vmem:[%s1 + $0x1c0] sm:$0xff]
  %v400 = vld [vmem:[%s1 + $0x1c8] sm:$0xff]
  %v401 = vld [vmem:[%s1 + $0x1d0] sm:$0xff]
  %v402 = vld [vmem:[%s1 + $0x1d8] sm:$0xff]
  %v403 = vld [vmem:[%s1 + $0x1e0] sm:$0xff]
  %v404 = vld [vmem:[%s1 + $0x1e8] sm:$0xff]
  %v405 = vld [vmem:[%s1 + $0x1f0] sm:$0xff]
  %v406 = vld [vmem:[%s1 + $0x1f8] sm:$0xff]
  %v407 = vld [vmem:[%s1 + $0x200] sm:$0xff]
  %v408 = vld [vmem:[%s1 + $0x208] sm:$0xff]
  %v409 = vld [vmem:[%s1 + $0x210] sm:$0xff]
  %v410 = vld [vmem:[%s1 + $0x218] sm:$0xff]
  %v411 = vld [vmem:[%s1 + $0x220] sm:$0xff]
  %v412 = vld [vmem:[%s1 + $0x228] sm:$0xff]
  %v413 = vld [vmem:[%s1 + $0x230] sm:$0xff]
  %v414 = vld [vmem:[%s1 + $0x238] sm:$0xff]
  %v415 = vld [vmem:[%s1 + $0x240] sm:$0xff]
  %v416 = vld [vmem:[%s1 + $0x248] sm:$0xff]
  %v417 = vld [vmem:[%s1 + $0x250] sm:$0xff]
  %v418 = vld [vmem:[%s1 + $0x258] sm:$0xff]
  %v419 = vld [vmem:[%s1 + $0x260] sm:$0xff]
  %v420 = vld [vmem:[%s1 + $0x268] sm:$0xff]
  %v421 = vld [vmem:[%s1 + $0x270] sm:$0xff]
  %v422 = vld [vmem:[%s1 + $0x278] sm:$0xff]
  %v423 = vld [vmem:[%s1 + $0x280] sm:$0xff]
  %v424 = vld [vmem:[%s1 + $0x288] sm:$0xff]
  %v425 = vld [vmem:[%s1 + $0x290] sm:$0xff]
  %v426 = vld [vmem:[%s1 + $0x298] sm:$0xff]
  %v427 = vld [vmem:[%s1 + $0x2a0] sm:$0xff]
  %v428 = vld [vmem:[%s1 + $0x2a8] sm:$0xff]
  %v429 = vld [vmem:[%s1 + $0x2b0] sm:$0xff]
  %v430 = vld [vmem:[%s1 + $0x2b8] sm:$0xff]
  %v431 = vld [vmem:[%s1 + $0x2c0] sm:$0xff]
  %v432 = vld [vmem:[%s1 + $0x2c8] sm:$0xff]
  %v433 = vld [vmem:[%s1 + $0x2d0] sm:$0xff]
  %v434 = vld [vmem:[%s1 + $0x2d8] sm:$0xff]
  %v435 = vld [vmem:[%s1 + $0x2e0] sm:$0xff]
  %v436 = vld [vmem:[%s1 + $0x2e8] sm:$0xff]
  %v437 = vld [vmem:[%s1 + $0x2f0] sm:$0xff]
  %v438 = vld [vmem:[%s1 + $0x2f8] sm:$0xff]
  %v439 = vld [vmem:[%s1 + $0x300] sm:$0xff]
  %v440 = vld [vmem:[%s1 + $0x308] sm:$0xff]
  %v441 = vld [vmem:[%s1 + $0x310] sm:$0xff]
  %v442 = vld [vmem:[%s1 + $0x318] sm:$0xff]
  %v443 = vld [vmem:[%s1 + $0x320] sm:$0xff]
  %v444 = vld [vmem:[%s1 + $0x328] sm:$0xff]
  %v445 = vld [vmem:[%s1 + $0x330] sm:$0xff]
  %v446 = vld [vmem:[%s1 + $0x338] sm:$0xff]
  %v447 = vld [vmem:[%s1 + $0x340] sm:$0xff]
  %v448 = vld [vmem:[%s1 + $0x348] sm:$0xff]
  %v449 = vld [vmem:[%s1 + $0x350] sm:$0xff]
  %v450 = vld [vmem:[%s1 + $0x358] sm:$0xff]
  %v451 = vld [vmem:[%s1 + $0x360] sm:$0xff]
  %v452 = vld [vmem:[%s1 + $0x368] sm:$0xff]
  %v453 = vld [vmem:[%s1 + $0x370] sm:$0xff]
  %v454 = vld [vmem:[%s1 + $0x378] sm:$0xff]
  %v455 = vld [vmem:[%s1 + $0x380] sm:$0xff]
  %v456 = vld [vmem:[%s1 + $0x388] sm:$0xff]
  %v457 = vld [vmem:[%s1 + $0x390] sm:$0xff]
  %v458 = vld [vmem:[%s1 + $0x398] sm:$0xff]
  %v459 = vld [vmem:[%s1 + $0x3a0] sm:$0xff]
  %v460 = vld [vmem:[%s1 + $0x3a8] sm:$0xff]
  %v461 = vld [vmem:[%s1 + $0x3b0] sm:$0xff]
  %v462 = vld [vmem:[%s1 + $0x3b8] sm:$0xff]
  %v463 = vld [vmem:[%s1 + $0x3c0] sm:$0xff]
  %v464 = vld [vmem:[%s1 + $0x3c8] sm:$0xff]
  %v465 = vld [vmem:[%s1 + $0x3d0] sm:$0xff]
  %v466 = vld [vmem:[%s1 + $0x3d8] sm:$0xff]
  %v467 = vld [vmem:[%s1 + $0x3e0] sm:$0xff]
  %v468 = vld [vmem:[%s1 + $0x3e8] sm:$0xff]
  %v469 = vld [vmem:[%s1 + $0x3f0] sm:$0xff]
  %v470 = vld [vmem:[%s1 + $0x3f8] sm:$0xff]
  %v471 = vld [vmem:[%s1 + $0x400] sm:$0xff]
  %v472 = vld [vmem:[%s1 + $0x408] sm:$0xff]
  %v473 = vld [vmem:[%s1 + $0x410] sm:$0xff]
  %v474 = vld [vmem:[%s1 + $0x418] sm:$0xff]
  %v475 = vld [vmem:[%s1 + $0x420] sm:$0xff]
  %v476 = vld [vmem:[%s1 + $0x428] sm:$0xff]
  %v477 = vld [vmem:[%s1 + $0x430] sm:$0xff]
  %v478 = vld [vmem:[%s1 + $0x438] sm:$0xff]
  %v479 = vld [vmem:[%s1 + $0x440] sm:$0xff]
  %v480 = vld [vmem:[%s1 + $0x448] sm:$0xff]
  %v481 = vld [vmem:[%s1 + $0x450] sm:$0xff]
  %v482 = vld [vmem:[%s1 + $0x458] sm:$0xff]
  %v483 = vld [vmem:[%s1 + $0x460] sm:$0xff]
  %v484 = vld [vmem:[%s1 + $0x468] sm:$0xff]
  %v485 = vld [vmem:[%s1 + $0x470] sm:$0xff]
  %v486 = vld [vmem:[%s1 + $0x478] sm:$0xff]
  %v631 = vunpack.c.l.b16 %v343
  %v632 = vunpack.c.h.b16 %v343
  %v633 = vunpack.c.l.b16 %v344
  %v634 = vunpack.c.h.b16 %v344
  %v635 = vunpack.c.l.b16 %v345
  %v636 = vunpack.c.h.b16 %v345
  %v637 = vunpack.c.l.b16 %v346
  %v638 = vunpack.c.h.b16 %v346
  %v639 = vunpack.c.l.b16 %v347
  %v640 = vunpack.c.h.b16 %v347
  %v641 = vunpack.c.l.b16 %v348
  %v642 = vunpack.c.h.b16 %v348
  %v643 = vunpack.c.l.b16 %v349
  %v644 = vunpack.c.h.b16 %v349
  %v645 = vunpack.c.l.b16 %v350
  %v646 = vunpack.c.h.b16 %v350
  %v647 = vunpack.c.l.b16 %v351
  %v648 = vunpack.c.h.b16 %v351
  %v649 = vunpack.c.l.b16 %v352
  %v650 = vunpack.c.h.b16 %v352
  %v651 = vunpack.c.l.b16 %v353
  %v652 = vunpack.c.h.b16 %v353
  %v653 = vunpack.c.l.b16 %v354
  %v654 = vunpack.c.h.b16 %v354
  %v655 = vunpack.c.l.b16 %v355
  %v656 = vunpack.c.h.b16 %v355
  %v657 = vunpack.c.l.b16 %v356
  %v658 = vunpack.c.h.b16 %v356
  %v659 = vunpack.c.l.b16 %v357
  %v660 = vunpack.c.h.b16 %v357
  %v661 = vunpack.c.l.b16 %v358
  %v662 = vunpack.c.h.b16 %v358
  %v663 = vunpack.c.l.b16 %v359
  %v664 = vunpack.c.h.b16 %v359
  %v665 = vunpack.c.l.b16 %v360
  %v666 = vunpack.c.h.b16 %v360
  %v667 = vunpack.c.l.b16 %v361
  %v668 = vunpack.c.h.b16 %v361
  %v669 = vunpack.c.l.b16 %v362
  %v670 = vunpack.c.h.b16 %v362
  %v671 = vunpack.c.l.b16 %v363
  %v672 = vunpack.c.h.b16 %v363
  %v673 = vunpack.c.l.b16 %v364
  %v674 = vunpack.c.h.b16 %v364
  %v675 = vunpack.c.l.b16 %v365
  %v676 = vunpack.c.h.b16 %v365
  %v677 = vunpack.c.l.b16 %v366
  %v678 = vunpack.c.h.b16 %v366
  %v679 = vunpack.c.l.b16 %v367
  %v680 = vunpack.c.h.b16 %v367
  %v681 = vunpack.c.l.b16 %v368
  %v682 = vunpack.c.h.b16 %v368
  %v683 = vunpack.c.l.b16 %v369
  %v684 = vunpack.c.h.b16 %v369
  %v685 = vunpack.c.l.b16 %v370
  %v686 = vunpack.c.h.b16 %v370
  %v687 = vunpack.c.l.b16 %v371
  %v688 = vunpack.c.h.b16 %v371
  %v689 = vunpack.c.l.b16 %v372
  %v690 = vunpack.c.h.b16 %v372
  %v691 = vunpack.c.l.b16 %v373
  %v692 = vunpack.c.h.b16 %v373
  %v693 = vunpack.c.l.b16 %v374
  %v694 = vunpack.c.h.b16 %v374
  %v695 = vunpack.c.l.b16 %v375
  %v696 = vunpack.c.h.b16 %v375
  %v697 = vunpack.c.l.b16 %v376
  %v698 = vunpack.c.h.b16 %v376
  %v699 = vunpack.c.l.b16 %v377
  %v700 = vunpack.c.h.b16 %v377
  %v701 = vunpack.c.l.b16 %v378
  %v702 = vunpack.c.h.b16 %v378
  %v703 = vunpack.c.l.b16 %v379
  %v704 = vunpack.c.h.b16 %v379
  %v705 = vunpack.c.l.b16 %v380
  %v706 = vunpack.c.h.b16 %v380
  %v707 = vunpack.c.l.b16 %v381
  %v708 = vunpack.c.h.b16 %v381
  %v709 = vunpack.c.l.b16 %v382
  %v710 = vunpack.c.h.b16 %v382
  %v711 = vunpack.c.l.b16 %v383
  %v712 = vunpack.c.h.b16 %v383
  %v713 = vunpack.c.l.b16 %v384
  %v714 = vunpack.c.h.b16 %v384
  %v715 = vunpack.c.l.b16 %v385
  %v716 = vunpack.c.h.b16 %v385
  %v717 = vunpack.c.l.b16 %v386
  %v718 = vunpack.c.h.b16 %v386
  %v719 = vunpack.c.l.b16 %v387
  %v720 = vunpack.c.h.b16 %v387
  %v721 = vunpack.c.l.b16 %v388
  %v722 = vunpack.c.h.b16 %v388
  %v723 = vunpack.c.l.b16 %v389
  %v724 = vunpack.c.h.b16 %v389
  %v725 = vunpack.c.l.b16 %v390
  %v726 = vunpack.c.h.b16 %v390
  %v727 = vunpack.c.l.b16 %v391
  %v728 = vunpack.c.h.b16 %v391
  %v729 = vunpack.c.l.b16 %v392
  %v730 = vunpack.c.h.b16 %v392
  %v731 = vunpack.c.l.b16 %v393
  %v732 = vunpack.c.h.b16 %v393
  %v733 = vunpack.c.l.b16 %v394
  %v734 = vunpack.c.h.b16 %v394
  %v735 = vunpack.c.l.b16 %v395
  %v736 = vunpack.c.h.b16 %v395
  %v737 = vunpack.c.l.b16 %v396
  %v738 = vunpack.c.h.b16 %v396
  %v739 = vunpack.c.l.b16 %v397
  %v740 = vunpack.c.h.b16 %v397
  %v741 = vunpack.c.l.b16 %v398
  %v742 = vunpack.c.h.b16 %v398
  %v743 = vunpack.c.l.b16 %v399
  %v744 = vunpack.c.h.b16 %v399
  %v745 = vunpack.c.l.b16 %v400
  %v746 = vunpack.c.h.b16 %v400
  %v747 = vunpack.c.l.b16 %v401
  %v748 = vunpack.c.h.b16 %v401
  %v749 = vunpack.c.l.b16 %v402
  %v750 = vunpack.c.h.b16 %v402
  %v751 = vunpack.c.l.b16 %v403
  %v752 = vunpack.c.h.b16 %v403
  %v753 = vunpack.c.l.b16 %v404
  %v754 = vunpack.c.h.b16 %v404
  %v755 = vunpack.c.l.b16 %v405
  %v756 = vunpack.c.h.b16 %v405
  %v757 = vunpack.c.l.b16 %v406
  %v758 = vunpack.c.h.b16 %v406
  %v759 = vunpack.c.l.b16 %v407
  %v760 = vunpack.c.h.b16 %v407
  %v761 = vunpack.c.l.b16 %v408
  %v762 = vunpack.c.h.b16 %v408
  %v763 = vunpack.c.l.b16 %v409
  %v764 = vunpack.c.h.b16 %v409
  %v765 = vunpack.c.l.b16 %v410
  %v766 = vunpack.c.h.b16 %v410
  %v767 = vunpack.c.l.b16 %v411
  %v768 = vunpack.c.h.b16 %v411
  %v769 = vunpack.c.l.b16 %v412
  %v770 = vunpack.c.h.b16 %v412
  %v771 = vunpack.c.l.b16 %v413
  %v772 = vunpack.c.h.b16 %v413
  %v773 = vunpack.c.l.b16 %v414
  %v774 = vunpack.c.h.b16 %v414
  %v775 = vunpack.c.l.b16 %v415
  %v776 = vunpack.c.h.b16 %v415
  %v777 = vunpack.c.l.b16 %v416
  %v778 = vunpack.c.h.b16 %v416
  %v779 = vunpack.c.l.b16 %v417
  %v780 = vunpack.c.h.b16 %v417
  %v781 = vunpack.c.l.b16 %v418
  %v782 = vunpack.c.h.b16 %v418
  %v783 = vunpack.c.l.b16 %v419
  %v784 = vunpack.c.h.b16 %v419
  %v785 = vunpack.c.l.b16 %v420
  %v786 = vunpack.c.h.b16 %v420
  %v787 = vunpack.c.l.b16 %v421
  %v788 = vunpack.c.h.b16 %v421
  %v789 = vunpack.c.l.b16 %v422
  %v790 = vunpack.c.h.b16 %v422
  %v791 = vunpack.c.l.b16 %v423
  %v792 = vunpack.c.h.b16 %v423
  %v793 = vunpack.c.l.b16 %v424
  %v794 = vunpack.c.h.b16 %v424
  %v795 = vunpack.c.l.b16 %v425
  %v796 = vunpack.c.h.b16 %v425
  %v797 = vunpack.c.l.b16 %v426
  %v798 = vunpack.c.h.b16 %v426
  %v799 = vunpack.c.l.b16 %v427
  %v800 = vunpack.c.h.b16 %v427
  %v801 = vunpack.c.l.b16 %v428
  %v802 = vunpack.c.h.b16 %v428
  %v803 = vunpack.c.l.b16 %v429
  %v804 = vunpack.c.h.b16 %v429
  %v805 = vunpack.c.l.b16 %v430
  %v806 = vunpack.c.h.b16 %v430
  %v807 = vunpack.c.l.b16 %v431
  %v808 = vunpack.c.h.b16 %v431
  %v809 = vunpack.c.l.b16 %v432
  %v810 = vunpack.c.h.b16 %v432
  %v811 = vunpack.c.l.b16 %v433
  %v812 = vunpack.c.h.b16 %v433
  %v813 = vunpack.c.l.b16 %v434
  %v814 = vunpack.c.h.b16 %v434
  %v815 = vunpack.c.l.b16 %v435
  %v816 = vunpack.c.h.b16 %v435
  %v817 = vunpack.c.l.b16 %v436
  %v818 = vunpack.c.h.b16 %v436
  %v819 = vunpack.c.l.b16 %v437
  %v820 = vunpack.c.h.b16 %v437
  %v821 = vunpack.c.l.b16 %v438
  %v822 = vunpack.c.h.b16 %v438
  %v823 = vunpack.c.l.b16 %v439
  %v824 = vunpack.c.h.b16 %v439
  %v825 = vunpack.c.l.b16 %v440
  %v826 = vunpack.c.h.b16 %v440
  %v827 = vunpack.c.l.b16 %v441
  %v828 = vunpack.c.h.b16 %v441
  %v829 = vunpack.c.l.b16 %v442
  %v830 = vunpack.c.h.b16 %v442
  %v831 = vunpack.c.l.b16 %v443
  %v832 = vunpack.c.h.b16 %v443
  %v833 = vunpack.c.l.b16 %v444
  %v834 = vunpack.c.h.b16 %v444
  %v835 = vunpack.c.l.b16 %v445
  %v836 = vunpack.c.h.b16 %v445
  %v837 = vunpack.c.l.b16 %v446
  %v838 = vunpack.c.h.b16 %v446
  %v839 = vunpack.c.l.b16 %v447
  %v840 = vunpack.c.h.b16 %v447
  %v841 = vunpack.c.l.b16 %v448
  %v842 = vunpack.c.h.b16 %v448
  %v843 = vunpack.c.l.b16 %v449
  %v844 = vunpack.c.h.b16 %v449
  %v845 = vunpack.c.l.b16 %v450
  %v846 = vunpack.c.h.b16 %v450
  %v847 = vunpack.c.l.b16 %v451
  %v848 = vunpack.c.h.b16 %v451
  %v849 = vunpack.c.l.b16 %v452
  %v850 = vunpack.c.h.b16 %v452
  %v851 = vunpack.c.l.b16 %v453
  %v852 = vunpack.c.h.b16 %v453
  %v853 = vunpack.c.l.b16 %v454
  %v854 = vunpack.c.h.b16 %v454
  %v855 = vunpack.c.l.b16 %v455
  %v856 = vunpack.c.h.b16 %v455
  %v857 = vunpack.c.l.b16 %v456
  %v858 = vunpack.c.h.b16 %v456
  %v859 = vunpack.c.l.b16 %v457
  %v860 = vunpack.c.h.b16 %v457
  %v861 = vunpack.c.l.b16 %v458
  %v862 = vunpack.c.h.b16 %v458
  %v863 = vunpack.c.l.b16 %v459
  %v864 = vunpack.c.h.b16 %v459
  %v865 = vunpack.c.l.b16 %v460
  %v866 = vunpack.c.h.b16 %v460
  %v867 = vunpack.c.l.b16 %v461
  %v868 = vunpack.c.h.b16 %v461
  %v869 = vunpack.c.l.b16 %v462
  %v870 = vunpack.c.h.b16 %v462
  %v871 = vunpack.c.l.b16 %v463
  %v872 = vunpack.c.h.b16 %v463
  %v873 = vunpack.c.l.b16 %v464
  %v874 = vunpack.c.h.b16 %v464
  %v875 = vunpack.c.l.b16 %v465
  %v876 = vunpack.c.h.b16 %v465
  %v877 = vunpack.c.l.b16 %v466
  %v878 = vunpack.c.h.b16 %v466
  %v879 = vunpack.c.l.b16 %v467
  %v880 = vunpack.c.h.b16 %v467
  %v881 = vunpack.c.l.b16 %v468
  %v882 = vunpack.c.h.b16 %v468
  %v883 = vunpack.c.l.b16 %v469
  %v884 = vunpack.c.h.b16 %v469
  %v885 = vunpack.c.l.b16 %v470
  %v886 = vunpack.c.h.b16 %v470
  %v887 = vunpack.c.l.b16 %v471
  %v888 = vunpack.c.h.b16 %v471
  %v889 = vunpack.c.l.b16 %v472
  %v890 = vunpack.c.h.b16 %v472
  %v891 = vunpack.c.l.b16 %v473
  %v892 = vunpack.c.h.b16 %v473
  %v893 = vunpack.c.l.b16 %v474
  %v894 = vunpack.c.h.b16 %v474
  %v895 = vunpack.c.l.b16 %v475
  %v896 = vunpack.c.h.b16 %v475
  %v897 = vunpack.c.l.b16 %v476
  %v898 = vunpack.c.h.b16 %v476
  %v899 = vunpack.c.l.b16 %v477
  %v900 = vunpack.c.h.b16 %v477
  %v901 = vunpack.c.l.b16 %v478
  %v902 = vunpack.c.h.b16 %v478
  %v903 = vunpack.c.l.b16 %v479
  %v904 = vunpack.c.h.b16 %v479
  %v905 = vunpack.c.l.b16 %v480
  %v906 = vunpack.c.h.b16 %v480
  %v907 = vunpack.c.l.b16 %v481
  %v908 = vunpack.c.h.b16 %v481
  %v909 = vunpack.c.l.b16 %v482
  %v910 = vunpack.c.h.b16 %v482
  %v911 = vunpack.c.l.b16 %v483
  %v912 = vunpack.c.h.b16 %v483
  %v913 = vunpack.c.l.b16 %v484
  %v914 = vunpack.c.h.b16 %v484
  %v915 = vunpack.c.l.b16 %v485
  %v916 = vunpack.c.h.b16 %v485
  %v917 = vunpack.c.l.b16 %v486
  %v918 = vunpack.c.h.b16 %v486
  %v919 = vpack.c.b16 %v633, %v631
  %v920 = vpack.c.b16 %v634, %v632
  %v921 = vpack.c.b16 %v637, %v635
  %v922 = vpack.c.b16 %v638, %v636
  %v923 = vpack.c.b16 %v641, %v639
  %v924 = vpack.c.b16 %v642, %v640
  %v925 = vpack.c.b16 %v645, %v643
  %v926 = vpack.c.b16 %v646, %v644
  %v927 = vpack.c.b16 %v649, %v647
  %v928 = vpack.c.b16 %v650, %v648
  %v929 = vpack.c.b16 %v653, %v651
  %v930 = vpack.c.b16 %v654, %v652
  %v931 = vpack.c.b16 %v657, %v655
  %v932 = vpack.c.b16 %v658, %v656
  %v933 = vpack.c.b16 %v661, %v659
  %v934 = vpack.c.b16 %v662, %v660
  %v935 = vpack.c.b16 %v665, %v663
  %v936 = vpack.c.b16 %v666, %v664
  %v937 = vpack.c.b16 %v669, %v667
  %v938 = vpack.c.b16 %v670, %v668
  %v939 = vpack.c.b16 %v673, %v671
  %v940 = vpack.c.b16 %v674, %v672
  %v941 = vpack.c.b16 %v677, %v675
  %v942 = vpack.c.b16 %v678, %v676
  %v943 = vpack.c.b16 %v681, %v679
  %v944 = vpack.c.b16 %v682, %v680
  %v945 = vpack.c.b16 %v685, %v683
  %v946 = vpack.c.b16 %v686, %v684
  %v947 = vpack.c.b16 %v689, %v687
  %v948 = vpack.c.b16 %v690, %v688
  %v949 = vpack.c.b16 %v693, %v691
  %v950 = vpack.c.b16 %v694, %v692
  %v951 = vpack.c.b16 %v697, %v695
  %v952 = vpack.c.b16 %v698, %v696
  %v953 = vpack.c.b16 %v701, %v699
  %v954 = vpack.c.b16 %v702, %v700
  %v955 = vpack.c.b16 %v705, %v703
  %v956 = vpack.c.b16 %v706, %v704
  %v957 = vpack.c.b16 %v709, %v707
  %v958 = vpack.c.b16 %v710, %v708
  %v959 = vpack.c.b16 %v713, %v711
  %v960 = vpack.c.b16 %v714, %v712
  %v961 = vpack.c.b16 %v717, %v715
  %v962 = vpack.c.b16 %v718, %v716
  %v963 = vpack.c.b16 %v721, %v719
  %v964 = vpack.c.b16 %v722, %v720
  %v965 = vpack.c.b16 %v725, %v723
  %v966 = vpack.c.b16 %v726, %v724
  %v967 = vpack.c.b16 %v729, %v727
  %v968 = vpack.c.b16 %v730, %v728
  %v969 = vpack.c.b16 %v733, %v731
  %v970 = vpack.c.b16 %v734, %v732
  %v971 = vpack.c.b16 %v737, %v735
  %v972 = vpack.c.b16 %v738, %v736
  %v973 = vpack.c.b16 %v741, %v739
  %v974 = vpack.c.b16 %v742, %v740
  %v975 = vpack.c.b16 %v745, %v743
  %v976 = vpack.c.b16 %v746, %v744
  %v977 = vpack.c.b16 %v749, %v747
  %v978 = vpack.c.b16 %v750, %v748
  %v979 = vpack.c.b16 %v753, %v751
  %v980 = vpack.c.b16 %v754, %v752
  %v981 = vpack.c.b16 %v757, %v755
  %v982 = vpack.c.b16 %v758, %v756
  %v983 = vpack.c.b16 %v761, %v759
  %v984 = vpack.c.b16 %v762, %v760
  %v985 = vpack.c.b16 %v765, %v763
  %v986 = vpack.c.b16 %v766, %v764
  %v987 = vpack.c.b16 %v769, %v767
  %v988 = vpack.c.b16 %v770, %v768
  %v989 = vpack.c.b16 %v773, %v771
  %v990 = vpack.c.b16 %v774, %v772
  %v991 = vpack.c.b16 %v777, %v775
  %v992 = vpack.c.b16 %v778, %v776
  %v993 = vpack.c.b16 %v781, %v779
  %v994 = vpack.c.b16 %v782, %v780
  %v995 = vpack.c.b16 %v785, %v783
  %v996 = vpack.c.b16 %v786, %v784
  %v997 = vpack.c.b16 %v789, %v787
  %v998 = vpack.c.b16 %v790, %v788
  %v999 = vpack.c.b16 %v793, %v791
  %v1000 = vpack.c.b16 %v794, %v792
  %v1001 = vpack.c.b16 %v797, %v795
  %v1002 = vpack.c.b16 %v798, %v796
  %v1003 = vpack.c.b16 %v801, %v799
  %v1004 = vpack.c.b16 %v802, %v800
  %v1005 = vpack.c.b16 %v805, %v803
  %v1006 = vpack.c.b16 %v806, %v804
  %v1007 = vpack.c.b16 %v809, %v807
  %v1008 = vpack.c.b16 %v810, %v808
  %v1009 = vpack.c.b16 %v813, %v811
  %v1010 = vpack.c.b16 %v814, %v812
  %v1011 = vpack.c.b16 %v817, %v815
  %v1012 = vpack.c.b16 %v818, %v816
  %v1013 = vpack.c.b16 %v821, %v819
  %v1014 = vpack.c.b16 %v822, %v820
  %v1015 = vpack.c.b16 %v825, %v823
  %v1016 = vpack.c.b16 %v826, %v824
  %v1017 = vpack.c.b16 %v829, %v827
  %v1018 = vpack.c.b16 %v830, %v828
  %v1019 = vpack.c.b16 %v833, %v831
  %v1020 = vpack.c.b16 %v834, %v832
  %v1021 = vpack.c.b16 %v837, %v835
  %v1022 = vpack.c.b16 %v838, %v836
  %v1023 = vpack.c.b16 %v841, %v839
  %v1024 = vpack.c.b16 %v842, %v840
  %v1025 = vpack.c.b16 %v845, %v843
  %v1026 = vpack.c.b16 %v846, %v844
  %v1027 = vpack.c.b16 %v849, %v847
  %v1028 = vpack.c.b16 %v850, %v848
  %v1029 = vpack.c.b16 %v853, %v851
  %v1030 = vpack.c.b16 %v854, %v852
  %v1031 = vpack.c.b16 %v857, %v855
  %v1032 = vpack.c.b16 %v858, %v856
  %v1033 = vpack.c.b16 %v861, %v859
  %v1034 = vpack.c.b16 %v862, %v860
  %v1035 = vpack.c.b16 %v865, %v863
  %v1036 = vpack.c.b16 %v866, %v864
  %v1037 = vpack.c.b16 %v869, %v867
  %v1038 = vpack.c.b16 %v870, %v868
  %v1039 = vpack.c.b16 %v873, %v871
  %v1040 = vpack.c.b16 %v874, %v872
  %v1041 = vpack.c.b16 %v877, %v875
  %v1042 = vpack.c.b16 %v878, %v876
  %v1043 = vpack.c.b16 %v881, %v879
  %v1044 = vpack.c.b16 %v882, %v880
  %v1045 = vpack.c.b16 %v885, %v883
  %v1046 = vpack.c.b16 %v886, %v884
  %v1047 = vpack.c.b16 %v889, %v887
  %v1048 = vpack.c.b16 %v890, %v888
  %v1049 = vpack.c.b16 %v893, %v891
  %v1050 = vpack.c.b16 %v894, %v892
  %v1051 = vpack.c.b16 %v897, %v895
  %v1052 = vpack.c.b16 %v898, %v896
  %v1053 = vpack.c.b16 %v901, %v899
  %v1054 = vpack.c.b16 %v902, %v900
  %v1055 = vpack.c.b16 %v905, %v903
  %v1056 = vpack.c.b16 %v906, %v904
  %v1057 = vpack.c.b16 %v909, %v907
  %v1058 = vpack.c.b16 %v910, %v908
  %v1059 = vpack.c.b16 %v913, %v911
  %v1060 = vpack.c.b16 %v914, %v912
  %v1061 = vpack.c.b16 %v917, %v915
  %v1062 = vpack.c.b16 %v918, %v916
  %1207 = vmatpush.bf16.msra.mxu0 %v933
  %1208 = vmatpush.bf16.msra.mxu0 %v931
  %1209 = vmatpush.bf16.msra.mxu0 %v929
  %1210 = vmatpush.bf16.msra.mxu0 %v927
  %1211 = vmatpush.bf16.msra.mxu0 %v925
  %1212 = vmatpush.bf16.msra.mxu0 %v923
  %1213 = vmatpush.bf16.msra.mxu0 %v921
  %1214 = vmatpush.bf16.msra.mxu0 %v919
  %1215 = vmatmul.bf16.gmra.mxu0 %v325
  %v1216 = vpop.f32.mrf.mxu0
  %v1217 = vadd.f32 0.0, %v1216
  %v1218 = vpop.f32.mrf.mxu0
  %v1219 = vadd.f32 0.0, %v1218
  %1220 = vmatmul.bf16.gmra.mxu0 %v334
  %v1221 = vpop.f32.mrf.mxu0
  %v1222 = vadd.f32 0.0, %v1221
  %v1223 = vpop.f32.mrf.mxu0
  %v1224 = vadd.f32 0.0, %v1223
  %1225 = vdwg.mxu0
  %1226 = vmatpush.bf16.msra.mxu0 %v949
  %1227 = vmatpush.bf16.msra.mxu0 %v947
  %1228 = vmatpush.bf16.msra.mxu0 %v945
  %1229 = vmatpush.bf16.msra.mxu0 %v943
  %1230 = vmatpush.bf16.msra.mxu0 %v941
  %1231 = vmatpush.bf16.msra.mxu0 %v939
  %1232 = vmatpush.bf16.msra.mxu0 %v937
  %1233 = vmatpush.bf16.msra.mxu0 %v935
  %1234 = vmatmul.bf16.gmra.mxu0 %v326
  %v1235 = vpop.f32.mrf.mxu0
  %v1236 = vadd.f32 %v1217, %v1235
  %v1237 = vpop.f32.mrf.mxu0
  %v1238 = vadd.f32 %v1219, %v1237
  %1239 = vmatmul.bf16.gmra.mxu0 %v335
  %v1240 = vpop.f32.mrf.mxu0
  %v1241 = vadd.f32 %v1222, %v1240
  %v1242 = vpop.f32.mrf.mxu0
  %v1243 = vadd.f32 %v1224, %v1242
  %1244 = vdwg.mxu0
  %1245 = vmatpush.bf16.msra.mxu0 %v965
  %1246 = vmatpush.bf16.msra.mxu0 %v963
  %1247 = vmatpush.bf16.msra.mxu0 %v961
  %1248 = vmatpush.bf16.msra.mxu0 %v959
  %1249 = vmatpush.bf16.msra.mxu0 %v957
  %1250 = vmatpush.bf16.msra.mxu0 %v955
  %1251 = vmatpush.bf16.msra.mxu0 %v953
  %1252 = vmatpush.bf16.msra.mxu0 %v951
  %1253 = vmatmul.bf16.gmra.mxu0 %v327
  %v1254 = vpop.f32.mrf.mxu0
  %v1255 = vadd.f32 %v1236, %v1254
  %v1256 = vpop.f32.mrf.mxu0
  %v1257 = vadd.f32 %v1238, %v1256
  %1258 = vmatmul.bf16.gmra.mxu0 %v336
  %v1259 = vpop.f32.mrf.mxu0
  %v1260 = vadd.f32 %v1241, %v1259
  %v1261 = vpop.f32.mrf.mxu0
  %v1262 = vadd.f32 %v1243, %v1261
  %1263 = vdwg.mxu0
  %1264 = vmatpush.bf16.msra.mxu0 %v981
  %1265 = vmatpush.bf16.msra.mxu0 %v979
  %1266 = vmatpush.bf16.msra.mxu0 %v977
  %1267 = vmatpush.bf16.msra.mxu0 %v975
  %1268 = vmatpush.bf16.msra.mxu0 %v973
  %1269 = vmatpush.bf16.msra.mxu0 %v971
  %1270 = vmatpush.bf16.msra.mxu0 %v969
  %1271 = vmatpush.bf16.msra.mxu0 %v967
  %1272 = vmatmul.bf16.gmra.mxu0 %v328
  %v1273 = vpop.f32.mrf.mxu0
  %v1274 = vadd.f32 %v1255, %v1273
  %v1275 = vpop.f32.mrf.mxu0
  %v1276 = vadd.f32 %v1257, %v1275
  %1277 = vmatmul.bf16.gmra.mxu0 %v337
  %v1278 = vpop.f32.mrf.mxu0
  %v1279 = vadd.f32 %v1260, %v1278
  %v1280 = vpop.f32.mrf.mxu0
  %v1281 = vadd.f32 %v1262, %v1280
  %1282 = vdwg.mxu0
  %1283 = vmatpush.bf16.msra.mxu0 %v997
  %1284 = vmatpush.bf16.msra.mxu0 %v995
  %1285 = vmatpush.bf16.msra.mxu0 %v993
  %1286 = vmatpush.bf16.msra.mxu0 %v991
  %1287 = vmatpush.bf16.msra.mxu0 %v989
  %1288 = vmatpush.bf16.msra.mxu0 %v987
  %1289 = vmatpush.bf16.msra.mxu0 %v985
  %1290 = vmatpush.bf16.msra.mxu0 %v983
  %1291 = vmatmul.bf16.gmra.mxu0 %v329
  %v1292 = vpop.f32.mrf.mxu0
  %v1293 = vadd.f32 %v1274, %v1292
  %v1294 = vpop.f32.mrf.mxu0
  %v1295 = vadd.f32 %v1276, %v1294
  %1296 = vmatmul.bf16.gmra.mxu0 %v338
  %v1297 = vpop.f32.mrf.mxu0
  %v1298 = vadd.f32 %v1279, %v1297
  %v1299 = vpop.f32.mrf.mxu0
  %v1300 = vadd.f32 %v1281, %v1299
  %1301 = vdwg.mxu0
  %1302 = vmatpush.bf16.msra.mxu0 %v1013
  %1303 = vmatpush.bf16.msra.mxu0 %v1011
  %1304 = vmatpush.bf16.msra.mxu0 %v1009
  %1305 = vmatpush.bf16.msra.mxu0 %v1007
  %1306 = vmatpush.bf16.msra.mxu0 %v1005
  %1307 = vmatpush.bf16.msra.mxu0 %v1003
  %1308 = vmatpush.bf16.msra.mxu0 %v1001
  %1309 = vmatpush.bf16.msra.mxu0 %v999
  %1310 = vmatmul.bf16.gmra.mxu0 %v330
  %v1311 = vpop.f32.mrf.mxu0
  %v1312 = vadd.f32 %v1293, %v1311
  %v1313 = vpop.f32.mrf.mxu0
  %v1314 = vadd.f32 %v1295, %v1313
  %1315 = vmatmul.bf16.gmra.mxu0 %v339
  %v1316 = vpop.f32.mrf.mxu0
  %v1317 = vadd.f32 %v1298, %v1316
  %v1318 = vpop.f32.mrf.mxu0
  %v1319 = vadd.f32 %v1300, %v1318
  %1320 = vdwg.mxu0
  %1321 = vmatpush.bf16.msra.mxu0 %v1029
  %1322 = vmatpush.bf16.msra.mxu0 %v1027
  %1323 = vmatpush.bf16.msra.mxu0 %v1025
  %1324 = vmatpush.bf16.msra.mxu0 %v1023
  %1325 = vmatpush.bf16.msra.mxu0 %v1021
  %1326 = vmatpush.bf16.msra.mxu0 %v1019
  %1327 = vmatpush.bf16.msra.mxu0 %v1017
  %1328 = vmatpush.bf16.msra.mxu0 %v1015
  %1329 = vmatmul.bf16.gmra.mxu0 %v331
  %v1330 = vpop.f32.mrf.mxu0
  %v1331 = vadd.f32 %v1312, %v1330
  %v1332 = vpop.f32.mrf.mxu0
  %v1333 = vadd.f32 %v1314, %v1332
  %1334 = vmatmul.bf16.gmra.mxu0 %v340
  %v1335 = vpop.f32.mrf.mxu0
  %v1336 = vadd.f32 %v1317, %v1335
  %v1337 = vpop.f32.mrf.mxu0
  %v1338 = vadd.f32 %v1319, %v1337
  %1339 = vdwg.mxu0
  %1340 = vmatpush.bf16.msra.mxu0 %v1045
  %1341 = vmatpush.bf16.msra.mxu0 %v1043
  %1342 = vmatpush.bf16.msra.mxu0 %v1041
  %1343 = vmatpush.bf16.msra.mxu0 %v1039
  %1344 = vmatpush.bf16.msra.mxu0 %v1037
  %1345 = vmatpush.bf16.msra.mxu0 %v1035
  %1346 = vmatpush.bf16.msra.mxu0 %v1033
  %1347 = vmatpush.bf16.msra.mxu0 %v1031
  %1348 = vmatmul.bf16.gmra.mxu0 %v332
  %v1349 = vpop.f32.mrf.mxu0
  %v1350 = vadd.f32 %v1331, %v1349
  %v1351 = vpop.f32.mrf.mxu0
  %v1352 = vadd.f32 %v1333, %v1351
  %1353 = vmatmul.bf16.gmra.mxu0 %v341
  %v1354 = vpop.f32.mrf.mxu0
  %v1355 = vadd.f32 %v1336, %v1354
  %v1356 = vpop.f32.mrf.mxu0
  %v1357 = vadd.f32 %v1338, %v1356
  %1358 = vdwg.mxu0
  %1359 = vmatpush.bf16.msra.mxu0 %v1061
  %1360 = vmatpush.bf16.msra.mxu0 %v1059
  %1361 = vmatpush.bf16.msra.mxu0 %v1057
  %1362 = vmatpush.bf16.msra.mxu0 %v1055
  %1363 = vmatpush.bf16.msra.mxu0 %v1053
  %1364 = vmatpush.bf16.msra.mxu0 %v1051
  %1365 = vmatpush.bf16.msra.mxu0 %v1049
  %1366 = vmatpush.bf16.msra.mxu0 %v1047
  %1367 = vmatmul.bf16.gmra.mxu0 %v333
  %v1368 = vpop.f32.mrf.mxu0
  %v1369 = vadd.f32 %v1350, %v1368
  %v1370 = vpop.f32.mrf.mxu0
  %v1371 = vadd.f32 %v1352, %v1370
  %1372 = vmatmul.bf16.gmra.mxu0 %v342
  %v1373 = vpop.f32.mrf.mxu0
  %v1374 = vadd.f32 %v1355, %v1373
  %v1375 = vpop.f32.mrf.mxu0
  %v1376 = vadd.f32 %v1357, %v1375
  %1377 = vdwg.mxu0
  %1378 = vmatpush.bf16.msra.mxu0 %v934
  %1379 = vmatpush.bf16.msra.mxu0 %v932
  %1380 = vmatpush.bf16.msra.mxu0 %v930
  %1381 = vmatpush.bf16.msra.mxu0 %v928
  %1382 = vmatpush.bf16.msra.mxu0 %v926
  %1383 = vmatpush.bf16.msra.mxu0 %v924
  %1384 = vmatpush.bf16.msra.mxu0 %v922
  %1385 = vmatpush.bf16.msra.mxu0 %v920
  %1386 = vmatmul.bf16.gmra.mxu0 %v325
  %v1387 = vpop.f32.mrf.mxu0
  %v1388 = vadd.f32 0.0, %v1387
  %v1389 = vpop.f32.mrf.mxu0
  %v1390 = vadd.f32 0.0, %v1389
  %1391 = vmatmul.bf16.gmra.mxu0 %v334
  %v1392 = vpop.f32.mrf.mxu0
  %v1393 = vadd.f32 0.0, %v1392
  %v1394 = vpop.f32.mrf.mxu0
  %v1395 = vadd.f32 0.0, %v1394
  %1396 = vdwg.mxu0
  %1397 = vmatpush.bf16.msra.mxu0 %v950
  %1398 = vmatpush.bf16.msra.mxu0 %v948
  %1399 = vmatpush.bf16.msra.mxu0 %v946
  %1400 = vmatpush.bf16.msra.mxu0 %v944
  %1401 = vmatpush.bf16.msra.mxu0 %v942
  %1402 = vmatpush.bf16.msra.mxu0 %v940
  %1403 = vmatpush.bf16.msra.mxu0 %v938
  %1404 = vmatpush.bf16.msra.mxu0 %v936
  %1405 = vmatmul.bf16.gmra.mxu0 %v326
  %v1406 = vpop.f32.mrf.mxu0
  %v1407 = vadd.f32 %v1388, %v1406
  %v1408 = vpop.f32.mrf.mxu0
  %v1409 = vadd.f32 %v1390, %v1408
  %1410 = vmatmul.bf16.gmra.mxu0 %v335
  %v1411 = vpop.f32.mrf.mxu0
  %v1412 = vadd.f32 %v1393, %v1411
  %v1413 = vpop.f32.mrf.mxu0
  %v1414 = vadd.f32 %v1395, %v1413
  %1415 = vdwg.mxu0
  %1416 = vmatpush.bf16.msra.mxu0 %v966
  %1417 = vmatpush.bf16.msra.mxu0 %v964
  %1418 = vmatpush.bf16.msra.mxu0 %v962
  %1419 = vmatpush.bf16.msra.mxu0 %v960
  %1420 = vmatpush.bf16.msra.mxu0 %v958
  %1421 = vmatpush.bf16.msra.mxu0 %v956
  %1422 = vmatpush.bf16.msra.mxu0 %v954
  %1423 = vmatpush.bf16.msra.mxu0 %v952
  %1424 = vmatmul.bf16.gmra.mxu0 %v327
  %v1425 = vpop.f32.mrf.mxu0
  %v1426 = vadd.f32 %v1407, %v1425
  %v1427 = vpop.f32.mrf.mxu0
  %v1428 = vadd.f32 %v1409, %v1427
  %1429 = vmatmul.bf16.gmra.mxu0 %v336
  %v1430 = vpop.f32.mrf.mxu0
  %v1431 = vadd.f32 %v1412, %v1430
  %v1432 = vpop.f32.mrf.mxu0
  %v1433 = vadd.f32 %v1414, %v1432
  %1434 = vdwg.mxu0
  %1435 = vmatpush.bf16.msra.mxu0 %v982
  %1436 = vmatpush.bf16.msra.mxu0 %v980
  %1437 = vmatpush.bf16.msra.mxu0 %v978
  %1438 = vmatpush.bf16.msra.mxu0 %v976
  %1439 = vmatpush.bf16.msra.mxu0 %v974
  %1440 = vmatpush.bf16.msra.mxu0 %v972
  %1441 = vmatpush.bf16.msra.mxu0 %v970
  %1442 = vmatpush.bf16.msra.mxu0 %v968
  %1443 = vmatmul.bf16.gmra.mxu0 %v328
  %v1444 = vpop.f32.mrf.mxu0
  %v1445 = vadd.f32 %v1426, %v1444
  %v1446 = vpop.f32.mrf.mxu0
  %v1447 = vadd.f32 %v1428, %v1446
  %1448 = vmatmul.bf16.gmra.mxu0 %v337
  %v1449 = vpop.f32.mrf.mxu0
  %v1450 = vadd.f32 %v1431, %v1449
  %v1451 = vpop.f32.mrf.mxu0
  %v1452 = vadd.f32 %v1433, %v1451
  %1453 = vdwg.mxu0
  %1454 = vmatpush.bf16.msra.mxu0 %v998
  %1455 = vmatpush.bf16.msra.mxu0 %v996
  %1456 = vmatpush.bf16.msra.mxu0 %v994
  %1457 = vmatpush.bf16.msra.mxu0 %v992
  %1458 = vmatpush.bf16.msra.mxu0 %v990
  %1459 = vmatpush.bf16.msra.mxu0 %v988
  %1460 = vmatpush.bf16.msra.mxu0 %v986
  %1461 = vmatpush.bf16.msra.mxu0 %v984
  %1462 = vmatmul.bf16.gmra.mxu0 %v329
  %v1463 = vpop.f32.mrf.mxu0
  %v1464 = vadd.f32 %v1445, %v1463
  %v1465 = vpop.f32.mrf.mxu0
  %v1466 = vadd.f32 %v1447, %v1465
  %1467 = vmatmul.bf16.gmra.mxu0 %v338
  %v1468 = vpop.f32.mrf.mxu0
  %v1469 = vadd.f32 %v1450, %v1468
  %v1470 = vpop.f32.mrf.mxu0
  %v1471 = vadd.f32 %v1452, %v1470
  %1472 = vdwg.mxu0
  %1473 = vmatpush.bf16.msra.mxu0 %v1014
  %1474 = vmatpush.bf16.msra.mxu0 %v1012
  %1475 = vmatpush.bf16.msra.mxu0 %v1010
  %1476 = vmatpush.bf16.msra.mxu0 %v1008
  %1477 = vmatpush.bf16.msra.mxu0 %v1006
  %1478 = vmatpush.bf16.msra.mxu0 %v1004
  %1479 = vmatpush.bf16.msra.mxu0 %v1002
  %1480 = vmatpush.bf16.msra.mxu0 %v1000
  %1481 = vmatmul.bf16.gmra.mxu0 %v330
  %v1482 = vpop.f32.mrf.mxu0
  %v1483 = vadd.f32 %v1464, %v1482
  %v1484 = vpop.f32.mrf.mxu0
  %v1485 = vadd.f32 %v1466, %v1484
  %1486 = vmatmul.bf16.gmra.mxu0 %v339
  %v1487 = vpop.f32.mrf.mxu0
  %v1488 = vadd.f32 %v1469, %v1487
  %v1489 = vpop.f32.mrf.mxu0
  %v1490 = vadd.f32 %v1471, %v1489
  %1491 = vdwg.mxu0
  %1492 = vmatpush.bf16.msra.mxu0 %v1030
  %1493 = vmatpush.bf16.msra.mxu0 %v1028
  %1494 = vmatpush.bf16.msra.mxu0 %v1026
  %1495 = vmatpush.bf16.msra.mxu0 %v1024
  %1496 = vmatpush.bf16.msra.mxu0 %v1022
  %1497 = vmatpush.bf16.msra.mxu0 %v1020
  %1498 = vmatpush.bf16.msra.mxu0 %v1018
  %1499 = vmatpush.bf16.msra.mxu0 %v1016
  %1500 = vmatmul.bf16.gmra.mxu0 %v331
  %v1501 = vpop.f32.mrf.mxu0
  %v1502 = vadd.f32 %v1483, %v1501
  %v1503 = vpop.f32.mrf.mxu0
  %v1504 = vadd.f32 %v1485, %v1503
  %1505 = vmatmul.bf16.gmra.mxu0 %v340
  %v1506 = vpop.f32.mrf.mxu0
  %v1507 = vadd.f32 %v1488, %v1506
  %v1508 = vpop.f32.mrf.mxu0
  %v1509 = vadd.f32 %v1490, %v1508
  %1510 = vdwg.mxu0
  %1511 = vmatpush.bf16.msra.mxu0 %v1046
  %1512 = vmatpush.bf16.msra.mxu0 %v1044
  %1513 = vmatpush.bf16.msra.mxu0 %v1042
  %1514 = vmatpush.bf16.msra.mxu0 %v1040
  %1515 = vmatpush.bf16.msra.mxu0 %v1038
  %1516 = vmatpush.bf16.msra.mxu0 %v1036
  %1517 = vmatpush.bf16.msra.mxu0 %v1034
  %1518 = vmatpush.bf16.msra.mxu0 %v1032
  %1519 = vmatmul.bf16.gmra.mxu0 %v332
  %v1520 = vpop.f32.mrf.mxu0
  %v1521 = vadd.f32 %v1502, %v1520
  %v1522 = vpop.f32.mrf.mxu0
  %v1523 = vadd.f32 %v1504, %v1522
  %1524 = vmatmul.bf16.gmra.mxu0 %v341
  %v1525 = vpop.f32.mrf.mxu0
  %v1526 = vadd.f32 %v1507, %v1525
  %v1527 = vpop.f32.mrf.mxu0
  %v1528 = vadd.f32 %v1509, %v1527
  %1529 = vdwg.mxu0
  %1530 = vmatpush.bf16.msra.mxu0 %v1062
  %1531 = vmatpush.bf16.msra.mxu0 %v1060
  %1532 = vmatpush.bf16.msra.mxu0 %v1058
  %1533 = vmatpush.bf16.msra.mxu0 %v1056
  %1534 = vmatpush.bf16.msra.mxu0 %v1054
  %1535 = vmatpush.bf16.msra.mxu0 %v1052
  %1536 = vmatpush.bf16.msra.mxu0 %v1050
  %1537 = vmatpush.bf16.msra.mxu0 %v1048
  %1538 = vmatmul.bf16.gmra.mxu0 %v333
  %v1539 = vpop.f32.mrf.mxu0
  %v1540 = vadd.f32 %v1521, %v1539
  %v1541 = vpop.f32.mrf.mxu0
  %v1542 = vadd.f32 %v1523, %v1541
  %1543 = vmatmul.bf16.gmra.mxu0 %v342
  %v1544 = vpop.f32.mrf.mxu0
  %v1545 = vadd.f32 %v1526, %v1544
  %v1546 = vpop.f32.mrf.mxu0
  %v1547 = vadd.f32 %v1528, %v1546
  %1548 = vdwg.mxu0
  %v1549 = vpack.c.bf16 %v1540, %v1369
  %v1550 = vpack.c.bf16 %v1542, %v1371
  %v1551 = vpack.c.bf16 %v1545, %v1374
  %v1552 = vpack.c.bf16 %v1547, %v1376
  %1553 = vst [vmem:[%s5] sm:$0xff] %v1549
  %1554 = vst [vmem:[%s5 + $0x8] sm:$0xff] %v1550
  %1555 = vst [vmem:[%s5 + $0x10] sm:$0xff] %v1551
  %1556 = vst [vmem:[%s5 + $0x18] sm:$0xff] %v1552
  %v1557 = vadd.f32 %v1369, %v1371
  %v1558 = vadd.f32 %v1557, %v1374
  %v1559 = vadd.f32 %v1558, %v1376
  %v1560 = vrot.slane %v1559, 4
  %v1561 = vadd.f32 %v1559, %v1560
  %v1562 = vrot.slane %v1561, 2
  %v1563 = vadd.f32 %v1561, %v1562
  %v1564 = vrot.slane %v1563, 1
  %v1565 = vadd.f32 %v1563, %v1564
  %v1566 = vadd.f32 %v1540, %v1542
  %v1567 = vadd.f32 %v1566, %v1545
  %v1568 = vadd.f32 %v1567, %v1547
  %v1569 = vrot.slane %v1568, 4
  %v1570 = vadd.f32 %v1568, %v1569
  %v1571 = vrot.slane %v1570, 2
  %v1572 = vadd.f32 %v1570, %v1571
  %v1573 = vrot.slane %v1572, 1
  %v1574 = vadd.f32 %v1572, %v1573
  %v1577 = vrot.slane %v1574, 7
  %vm1578 = vcmask 1040384
  %v1579 = vsel %vm1578, %v1565, %v1577
  %v1581 = vlaneseq
  %vm1582 = vcmp.ge.s32.totalorder %v1581, 0
  %vm1583 = vcmp.lt.s32.totalorder %v1581, 256
  %vm1584 = vmand %vm1582, %vm1583
  %1585 = vst.msk [vmem:[%s6] sm:$0x3] %vm1584, %v1579
  %v1586 = vmul.f32 %v1369, %v1369
  %v1587 = vmul.f32 %v1540, %v1540
  %v1588 = vmul.f32 %v1371, %v1371
  %v1589 = vmul.f32 %v1542, %v1542
  %v1590 = vmul.f32 %v1374, %v1374
  %v1591 = vmul.f32 %v1545, %v1545
  %v1592 = vmul.f32 %v1376, %v1376
  %v1593 = vmul.f32 %v1547, %v1547
  %v1594 = vadd.f32 %v1586, %v1588
  %v1595 = vadd.f32 %v1594, %v1590
  %v1596 = vadd.f32 %v1595, %v1592
  %v1597 = vrot.slane %v1596, 4
  %v1598 = vadd.f32 %v1596, %v1597
  %v1599 = vrot.slane %v1598, 2
  %v1600 = vadd.f32 %v1598, %v1599
  %v1601 = vrot.slane %v1600, 1
  %v1602 = vadd.f32 %v1600, %v1601
  %v1603 = vadd.f32 %v1587, %v1589
  %v1604 = vadd.f32 %v1603, %v1591
  %v1605 = vadd.f32 %v1604, %v1593
  %v1606 = vrot.slane %v1605, 4
  %v1607 = vadd.f32 %v1605, %v1606
  %v1608 = vrot.slane %v1607, 2
  %v1609 = vadd.f32 %v1607, %v1608
  %v1610 = vrot.slane %v1609, 1
  %v1611 = vadd.f32 %v1609, %v1610
  %v1614 = vrot.slane %v1611, 7
  %v1615 = vsel %vm1578, %v1602, %v1614
  %1617 = vst.msk [vmem:[%s7] sm:$0x3] %vm1584, %v1615
  // Predicated region
  $region22: #{wgan_generator_forward.9} parent=0 // pred_check
    _
  $region23: #{wgan_generator_forward.9} parent=0 // pred_check_branch
    %1619 = sbr.rel (0) target = $region25
  $region24: #{wgan_generator_forward.9} parent=0 // pred_region
    _
  $region25: #{wgan_generator_forward.9} parent=0 // pred_fallthru
    _
  // Predicated region
  $region26: #{wgan_generator_forward.9} parent=0 // pred_check
    _
  $region27: #{wgan_generator_forward.9} parent=0 // pred_check_branch
    %1621 = sbr.rel (0) target = $region29
  $region28: #{wgan_generator_forward.9} parent=0 // pred_region
    _
  $region29: #{wgan_generator_forward.9} parent=0 // pred_fallthru
    _
  // Predicated region
  $region30: #{wgan_generator_forward.9} parent=0 // pred_check
    _
  $region31: #{wgan_generator_forward.9} parent=0 // pred_check_branch
    %1623 = sbr.rel (0) target = $region33
  $region32: #{wgan_generator_forward.9} parent=0 // pred_region
    _
  $region33: #{wgan_generator_forward.9} parent=0 // pred_fallthru
    _
  // Predicated region
  $region34: #{wgan_generator_forward.9} parent=0 // pred_check
    _
  $region35: #{wgan_generator_forward.9} parent=0 // pred_check_branch
    %1625 = sbr.rel (0) target = $region37
  $region36: #{wgan_generator_forward.9} parent=0 // pred_region
    _
  $region37: #{wgan_generator_forward.9} parent=0 // pred_fallthru
    _
  // Predicated region
  $region38: #{wgan_generator_forward.9} parent=0 // pred_check
    _
  $region39: #{wgan_generator_forward.9} parent=0 // pred_check_branch
    %1627 = sbr.rel (0) target = $region41
  $region40: #{wgan_generator_forward.9} parent=0 // pred_region
    _
  $region41: #{wgan_generator_forward.9} parent=0 // pred_fallthru
    _
  // Predicated region
  $region42: #{wgan_generator_forward.9} parent=0 // pred_check
    _
  $region43: #{wgan_generator_forward.9} parent=0 // pred_check_branch
    %1629 = sbr.rel (0) target = $region45
  $region44: #{wgan_generator_forward.9} parent=0 // pred_region
    _
  $region45: #{wgan_generator_forward.9} parent=0 // pred_fallthru
    _

// kernel: tile.81
$region0: #{tile.81}
  %s0 = inlined_call_operand.vmem [shape: f32[9,32], index: 0, kind: input, shape index: {}]
  %s1 = inlined_call_operand.vmem [shape: f32[288], index: 1, kind: output, shape index: {}]
  $region1: #{tile.81} parent=0
    #allocation0 [shape = 'u8[4096]{0}', space=vmem, size = 0x1000, scoped, tag = 'scoped mem for output reshape']
    %v2 = vld [vmem:[%s0] ss:$4 sm:$0x7]
    %vm3 = vcmask 261120
    %4 = vst.msk [vmem:[#allocation0] sm:$0x7] %vm3, %v2
    %s5 = scalar_lea.vmem %s0, 3
    %s6 = smov 3
    %v7 = vld [vmem:[%s5] ss:$4 sm:%s6]
    %8 = vrot.lane.b32.xlu0 %v7, 96
    %v9 = vpop.permute.xlu0 %8
    %vm10 = vcmask 1048320
    %11 = vst.msk [vmem:[#allocation0] sm:$0x3] %vm10, %v9
    %s12 = scalar_lea.vmem %s0, 2
    %s13 = smov 3
    %v14 = vld [vmem:[%s12] ss:$4 sm:%s13]
    %15 = vrot.lane.b32.xlu0 %v14, 64
    %v16 = vpop.permute.xlu0 %15
    %vm17 = vcmask 785920
    %18 = vst.msk [vmem:[#allocation0] sm:$0x3] %vm17, %v16
    %s19 = scalar_lea.vmem %s0, 1
    %s20 = smov 3
    %v21 = vld [vmem:[%s19] ss:$4 sm:%s20]
    %22 = vrot.lane.b32.xlu0 %v21, 32
    %v23 = vpop.permute.xlu0 %22
    %vm24 = vcmask 523520
    %25 = vst.msk [vmem:[#allocation0] sm:$0x3] %vm24, %v23
    %s27 = ssub.s32 16, 1
    %v28 = vld [vmem:[#allocation0] sm:%s27]
    %s30 = ssub.s32 16, 1
    %31 = vst [vmem:[%s1] sm:%s30] %v28

// kernel: tile.80
$region0: #{tile.80}
  #allocation0 [shape = 's32[1]{0}', space=sflag, size = 0x4, scoped, tag = 'scoped memory for tile.80']
  %s0 = inlined_call_operand.vmem [shape: f32[32], index: 0, kind: input, shape index: {}]
  %s1 = inlined_call_operand.vmem [shape: f32[9,32], index: 1, kind: output, shape index: {}]
  // Predicated region
  $region2: #{tile.80} parent=0 // pred_check
    _
  $region3: #{tile.80} parent=0 // pred_check_branch
    %3 = sbr.rel (0) target = $region5
  $region4: #{tile.80} parent=0 // pred_region
    _
  $region5: #{tile.80} parent=0 // pred_fallthru
    _
  %v4 = vld [vmem:[%s0] ss:$0 sm:$0xff]
  %5 = vst [vmem:[%s1] sm:$0xff] %v4
  %s6 = scalar_lea.vmem %s1, 8
  %7 = vst [vmem:[%s6] sm:$0xff] %v4

// kernel: wgan_generator_forward.10
$region0: #{wgan_generator_forward.10}
  #allocation0 [shape = 'u32[]', space=smem, size = 0x4, offset = 0x4, fixed_abs, tag = 'smem constant byte address 0x4 - core index']
  #allocation1 [shape = 'u32[72,128]{1,0:T(1,128)}', space=vmem, size = 0x9000, scoped, tag = 'internal scratch']
  %s0 = inlined_call_operand.vmem [shape: bf16[128,640], index: 0, kind: input, shape index: {}]
  %s1 = inlined_call_operand.vmem [shape: bf16[640,128], index: 1, kind: input, shape index: {}]
  %s2 = inlined_call_operand.vmem [shape: f32[1,640], index: 2, kind: input, shape index: {}]
  %s3 = inlined_call_operand.vmem [shape: f32[1,640], index: 3, kind: input, shape index: {}]
  %s4 = inlined_call_operand.vmem [shape: f32[1,640], index: 4, kind: input, shape index: {}]
  %s5 = inlined_call_operand.vmem [shape: bf16[128,128], index: 5, kind: output, shape index: {0}]
  %s6 = inlined_call_operand.vmem [shape: f32[1,1,128], index: 6, kind: output, shape index: {1}]
  %s7 = inlined_call_operand.vmem [shape: f32[1,1,128], index: 7, kind: output, shape index: {2}]
  %8 = xla_tuple %s5, %s6, %s7
  %s9 = sld [smem:[#allocation0]]
  $region46: #{wgan_generator_forward.10} parent=0
    _
  %s11 = ssub.s32 1, %s9
  %s12 = scalar_select 0, %s11, %s9
  // Predicated region
  $region2: #{wgan_generator_forward.10} parent=0 // pred_check
    _
  $region3: #{wgan_generator_forward.10} parent=0 // pred_check_branch
    %14 = sbr.rel (0) target = $region5
  $region4: #{wgan_generator_forward.10} parent=0 // pred_region
    _
  $region5: #{wgan_generator_forward.10} parent=0 // pred_fallthru
    _
  // Predicated region
  $region6: #{wgan_generator_forward.10} parent=0 // pred_check
    _
  $region7: #{wgan_generator_forward.10} parent=0 // pred_check_branch
    %16 = sbr.rel (0) target = $region9
  $region8: #{wgan_generator_forward.10} parent=0 // pred_region
    _
  $region9: #{wgan_generator_forward.10} parent=0 // pred_fallthru
    _
  // Predicated region
  $region10: #{wgan_generator_forward.10} parent=0 // pred_check
    _
  $region11: #{wgan_generator_forward.10} parent=0 // pred_check_branch
    %18 = sbr.rel (0) target = $region13
  $region12: #{wgan_generator_forward.10} parent=0 // pred_region
    _
  $region13: #{wgan_generator_forward.10} parent=0 // pred_fallthru
    _
  // Predicated region
  $region14: #{wgan_generator_forward.10} parent=0 // pred_check
    _
  $region15: #{wgan_generator_forward.10} parent=0 // pred_check_branch
    %20 = sbr.rel (0) target = $region17
  $region16: #{wgan_generator_forward.10} parent=0 // pred_region
    _
  $region17: #{wgan_generator_forward.10} parent=0 // pred_fallthru
    _
  // Predicated region
  $region18: #{wgan_generator_forward.10} parent=0 // pred_check
    _
  $region19: #{wgan_generator_forward.10} parent=0 // pred_check_branch
    %22 = sbr.rel (0) target = $region21
  $region20: #{wgan_generator_forward.10} parent=0 // pred_region
    _
  $region21: #{wgan_generator_forward.10} parent=0 // pred_fallthru
    _
  %v23 = vld [vmem:[%s0] sm:$0xff]
  %v24 = vld [vmem:[%s0 + $0x8] sm:$0xff]
  %v25 = vld [vmem:[%s0 + $0x10] sm:$0xf]
  %v26 = vld [vmem:[%s0 + $0x14] sm:$0xff]
  %v27 = vld [vmem:[%s0 + $0x1c] sm:$0xff]
  %v28 = vld [vmem:[%s0 + $0x24] sm:$0xf]
  %v29 = vld [vmem:[%s0 + $0x28] sm:$0xff]
  %v30 = vld [vmem:[%s0 + $0x30] sm:$0xff]
  %v31 = vld [vmem:[%s0 + $0x38] sm:$0xf]
  %v32 = vld [vmem:[%s0 + $0x3c] sm:$0xff]
  %v33 = vld [vmem:[%s0 + $0x44] sm:$0xff]
  %v34 = vld [vmem:[%s0 + $0x4c] sm:$0xf]
  %v35 = vld [vmem:[%s0 + $0x50] sm:$0xff]
  %v36 = vld [vmem:[%s0 + $0x58] sm:$0xff]
  %v37 = vld [vmem:[%s0 + $0x60] sm:$0xf]
  %v38 = vld [vmem:[%s0 + $0x64] sm:$0xff]
  %v39 = vld [vmem:[%s0 + $0x6c] sm:$0xff]
  %v40 = vld [vmem:[%s0 + $0x74] sm:$0xf]
  %v41 = vld [vmem:[%s0 + $0x78] sm:$0xff]
  %v42 = vld [vmem:[%s0 + $0x80] sm:$0xff]
  %v43 = vld [vmem:[%s0 + $0x88] sm:$0xf]
  %v44 = vld [vmem:[%s0 + $0x8c] sm:$0xff]
  %v45 = vld [vmem:[%s0 + $0x94] sm:$0xff]
  %v46 = vld [vmem:[%s0 + $0x9c] sm:$0xf]
  %v47 = vld [vmem:[%s0 + $0xa0] sm:$0xff]
  %v48 = vld [vmem:[%s0 + $0xa8] sm:$0xff]
  %v49 = vld [vmem:[%s0 + $0xb0] sm:$0xf]
  %v50 = vld [vmem:[%s0 + $0xb4] sm:$0xff]
  %v51 = vld [vmem:[%s0 + $0xbc] sm:$0xff]
  %v52 = vld [vmem:[%s0 + $0xc4] sm:$0xf]
  %v53 = vld [vmem:[%s0 + $0xc8] sm:$0xff]
  %v54 = vld [vmem:[%s0 + $0xd0] sm:$0xff]
  %v55 = vld [vmem:[%s0 + $0xd8] sm:$0xf]
  %v56 = vld [vmem:[%s0 + $0xdc] sm:$0xff]
  %v57 = vld [vmem:[%s0 + $0xe4] sm:$0xff]
  %v58 = vld [vmem:[%s0 + $0xec] sm:$0xf]
  %v59 = vld [vmem:[%s0 + $0xf0] sm:$0xff]
  %v60 = vld [vmem:[%s0 + $0xf8] sm:$0xff]
  %v61 = vld [vmem:[%s0 + $0x100] sm:$0xf]
  %v62 = vld [vmem:[%s0 + $0x104] sm:$0xff]
  %v63 = vld [vmem:[%s0 + $0x10c] sm:$0xff]
  %v64 = vld [vmem:[%s0 + $0x114] sm:$0xf]
  %v65 = vld [vmem:[%s0 + $0x118] sm:$0xff]
  %v66 = vld [vmem:[%s0 + $0x120] sm:$0xff]
  %v67 = vld [vmem:[%s0 + $0x128] sm:$0xf]
  %v68 = vld [vmem:[%s0 + $0x12c] sm:$0xff]
  %v69 = vld [vmem:[%s0 + $0x134] sm:$0xff]
  %v70 = vld [vmem:[%s0 + $0x13c] sm:$0xf]
  %v71 = vunpack.c.l.bf16 %v23
  %v72 = vunpack.c.h.bf16 %v23
  %v73 = vunpack.c.l.bf16 %v24
  %v74 = vunpack.c.h.bf16 %v24
  %v75 = vunpack.c.l.bf16 %v25
  %v76 = vunpack.c.l.bf16 %v26
  %v77 = vunpack.c.h.bf16 %v26
  %v78 = vunpack.c.l.bf16 %v27
  %v79 = vunpack.c.h.bf16 %v27
  %v80 = vunpack.c.l.bf16 %v28
  %v81 = vunpack.c.l.bf16 %v29
  %v82 = vunpack.c.h.bf16 %v29
  %v83 = vunpack.c.l.bf16 %v30
  %v84 = vunpack.c.h.bf16 %v30
  %v85 = vunpack.c.l.bf16 %v31
  %v86 = vunpack.c.l.bf16 %v32
  %v87 = vunpack.c.h.bf16 %v32
  %v88 = vunpack.c.l.bf16 %v33
  %v89 = vunpack.c.h.bf16 %v33
  %v90 = vunpack.c.l.bf16 %v34
  %v91 = vunpack.c.l.bf16 %v35
  %v92 = vunpack.c.h.bf16 %v35
  %v93 = vunpack.c.l.bf16 %v36
  %v94 = vunpack.c.h.bf16 %v36
  %v95 = vunpack.c.l.bf16 %v37
  %v96 = vunpack.c.l.bf16 %v38
  %v97 = vunpack.c.h.bf16 %v38
  %v98 = vunpack.c.l.bf16 %v39
  %v99 = vunpack.c.h.bf16 %v39
  %v100 = vunpack.c.l.bf16 %v40
  %v101 = vunpack.c.l.bf16 %v41
  %v102 = vunpack.c.h.bf16 %v41
  %v103 = vunpack.c.l.bf16 %v42
  %v104 = vunpack.c.h.bf16 %v42
  %v105 = vunpack.c.l.bf16 %v43
  %v106 = vunpack.c.l.bf16 %v44
  %v107 = vunpack.c.h.bf16 %v44
  %v108 = vunpack.c.l.bf16 %v45
  %v109 = vunpack.c.h.bf16 %v45
  %v110 = vunpack.c.l.bf16 %v46
  %v111 = vunpack.c.l.bf16 %v47
  %v112 = vunpack.c.h.bf16 %v47
  %v113 = vunpack.c.l.bf16 %v48
  %v114 = vunpack.c.h.bf16 %v48
  %v115 = vunpack.c.l.bf16 %v49
  %v116 = vunpack.c.l.bf16 %v50
  %v117 = vunpack.c.h.bf16 %v50
  %v118 = vunpack.c.l.bf16 %v51
  %v119 = vunpack.c.h.bf16 %v51
  %v120 = vunpack.c.l.bf16 %v52
  %v121 = vunpack.c.l.bf16 %v53
  %v122 = vunpack.c.h.bf16 %v53
  %v123 = vunpack.c.l.bf16 %v54
  %v124 = vunpack.c.h.bf16 %v54
  %v125 = vunpack.c.l.bf16 %v55
  %v126 = vunpack.c.l.bf16 %v56
  %v127 = vunpack.c.h.bf16 %v56
  %v128 = vunpack.c.l.bf16 %v57
  %v129 = vunpack.c.h.bf16 %v57
  %v130 = vunpack.c.l.bf16 %v58
  %v131 = vunpack.c.l.bf16 %v59
  %v132 = vunpack.c.h.bf16 %v59
  %v133 = vunpack.c.l.bf16 %v60
  %v134 = vunpack.c.h.bf16 %v60
  %v135 = vunpack.c.l.bf16 %v61
  %v136 = vunpack.c.l.bf16 %v62
  %v137 = vunpack.c.h.bf16 %v62
  %v138 = vunpack.c.l.bf16 %v63
  %v139 = vunpack.c.h.bf16 %v63
  %v140 = vunpack.c.l.bf16 %v64
  %v141 = vunpack.c.l.bf16 %v65
  %v142 = vunpack.c.h.bf16 %v65
  %v143 = vunpack.c.l.bf16 %v66
  %v144 = vunpack.c.h.bf16 %v66
  %v145 = vunpack.c.l.bf16 %v67
  %v146 = vunpack.c.l.bf16 %v68
  %v147 = vunpack.c.h.bf16 %v68
  %v148 = vunpack.c.l.bf16 %v69
  %v149 = vunpack.c.h.bf16 %v69
  %v150 = vunpack.c.l.bf16 %v70
  %v151 = vld [vmem:[%s2] sm:$0x1f]
  %v153 = vperm.slane %v151, 0
  %v154 = vperm.slane %v151, 1
  %v155 = vperm.slane %v151, 2
  %v156 = vperm.slane %v151, 3
  %v157 = vperm.slane %v151, 4
  %v163 = vmul.f32 %v71, %v153
  %v164 = vmul.f32 %v72, %v154
  %v165 = vmul.f32 %v73, %v155
  %v166 = vmul.f32 %v74, %v156
  %v167 = vmul.f32 %v75, %v157
  %v168 = vmul.f32 %v76, %v153
  %v169 = vmul.f32 %v77, %v154
  %v170 = vmul.f32 %v78, %v155
  %v171 = vmul.f32 %v79, %v156
  %v172 = vmul.f32 %v80, %v157
  %v173 = vmul.f32 %v81, %v153
  %v174 = vmul.f32 %v82, %v154
  %v175 = vmul.f32 %v83, %v155
  %v176 = vmul.f32 %v84, %v156
  %v177 = vmul.f32 %v85, %v157
  %v178 = vmul.f32 %v86, %v153
  %v179 = vmul.f32 %v87, %v154
  %v180 = vmul.f32 %v88, %v155
  %v181 = vmul.f32 %v89, %v156
  %v182 = vmul.f32 %v90, %v157
  %v183 = vmul.f32 %v91, %v153
  %v184 = vmul.f32 %v92, %v154
  %v185 = vmul.f32 %v93, %v155
  %v186 = vmul.f32 %v94, %v156
  %v187 = vmul.f32 %v95, %v157
  %v188 = vmul.f32 %v96, %v153
  %v189 = vmul.f32 %v97, %v154
  %v190 = vmul.f32 %v98, %v155
  %v191 = vmul.f32 %v99, %v156
  %v192 = vmul.f32 %v100, %v157
  %v193 = vmul.f32 %v101, %v153
  %v194 = vmul.f32 %v102, %v154
  %v195 = vmul.f32 %v103, %v155
  %v196 = vmul.f32 %v104, %v156
  %v197 = vmul.f32 %v105, %v157
  %v198 = vmul.f32 %v106, %v153
  %v199 = vmul.f32 %v107, %v154
  %v200 = vmul.f32 %v108, %v155
  %v201 = vmul.f32 %v109, %v156
  %v202 = vmul.f32 %v110, %v157
  %v203 = vmul.f32 %v111, %v153
  %v204 = vmul.f32 %v112, %v154
  %v205 = vmul.f32 %v113, %v155
  %v206 = vmul.f32 %v114, %v156
  %v207 = vmul.f32 %v115, %v157
  %v208 = vmul.f32 %v116, %v153
  %v209 = vmul.f32 %v117, %v154
  %v210 = vmul.f32 %v118, %v155
  %v211 = vmul.f32 %v119, %v156
  %v212 = vmul.f32 %v120, %v157
  %v213 = vmul.f32 %v121, %v153
  %v214 = vmul.f32 %v122, %v154
  %v215 = vmul.f32 %v123, %v155
  %v216 = vmul.f32 %v124, %v156
  %v217 = vmul.f32 %v125, %v157
  %v218 = vmul.f32 %v126, %v153
  %v219 = vmul.f32 %v127, %v154
  %v220 = vmul.f32 %v128, %v155
  %v221 = vmul.f32 %v129, %v156
  %v222 = vmul.f32 %v130, %v157
  %v223 = vmul.f32 %v131, %v153
  %v224 = vmul.f32 %v132, %v154
  %v225 = vmul.f32 %v133, %v155
  %v226 = vmul.f32 %v134, %v156
  %v227 = vmul.f32 %v135, %v157
  %v228 = vmul.f32 %v136, %v153
  %v229 = vmul.f32 %v137, %v154
  %v230 = vmul.f32 %v138, %v155
  %v231 = vmul.f32 %v139, %v156
  %v232 = vmul.f32 %v140, %v157
  %v233 = vmul.f32 %v141, %v153
  %v234 = vmul.f32 %v142, %v154
  %v235 = vmul.f32 %v143, %v155
  %v236 = vmul.f32 %v144, %v156
  %v237 = vmul.f32 %v145, %v157
  %v238 = vmul.f32 %v146, %v153
  %v239 = vmul.f32 %v147, %v154
  %v240 = vmul.f32 %v148, %v155
  %v241 = vmul.f32 %v149, %v156
  %v242 = vmul.f32 %v150, %v157
  %v243 = vld [vmem:[%s3] sm:$0x1f]
  %v245 = vperm.slane %v243, 0
  %v246 = vperm.slane %v243, 1
  %v247 = vperm.slane %v243, 2
  %v248 = vperm.slane %v243, 3
  %v249 = vperm.slane %v243, 4
  %v255 = vadd.f32 %v163, %v245
  %v256 = vadd.f32 %v164, %v246
  %v257 = vadd.f32 %v165, %v247
  %v258 = vadd.f32 %v166, %v248
  %v259 = vadd.f32 %v167, %v249
  %v260 = vadd.f32 %v168, %v245
  %v261 = vadd.f32 %v169, %v246
  %v262 = vadd.f32 %v170, %v247
  %v263 = vadd.f32 %v171, %v248
  %v264 = vadd.f32 %v172, %v249
  %v265 = vadd.f32 %v173, %v245
  %v266 = vadd.f32 %v174, %v246
  %v267 = vadd.f32 %v175, %v247
  %v268 = vadd.f32 %v176, %v248
  %v269 = vadd.f32 %v177, %v249
  %v270 = vadd.f32 %v178, %v245
  %v271 = vadd.f32 %v179, %v246
  %v272 = vadd.f32 %v180, %v247
  %v273 = vadd.f32 %v181, %v248
  %v274 = vadd.f32 %v182, %v249
  %v275 = vadd.f32 %v183, %v245
  %v276 = vadd.f32 %v184, %v246
  %v277 = vadd.f32 %v185, %v247
  %v278 = vadd.f32 %v186, %v248
  %v279 = vadd.f32 %v187, %v249
  %v280 = vadd.f32 %v188, %v245
  %v281 = vadd.f32 %v189, %v246
  %v282 = vadd.f32 %v190, %v247
  %v283 = vadd.f32 %v191, %v248
  %v284 = vadd.f32 %v192, %v249
  %v285 = vadd.f32 %v193, %v245
  %v286 = vadd.f32 %v194, %v246
  %v287 = vadd.f32 %v195, %v247
  %v288 = vadd.f32 %v196, %v248
  %v289 = vadd.f32 %v197, %v249
  %v290 = vadd.f32 %v198, %v245
  %v291 = vadd.f32 %v199, %v246
  %v292 = vadd.f32 %v200, %v247
  %v293 = vadd.f32 %v201, %v248
  %v294 = vadd.f32 %v202, %v249
  %v295 = vadd.f32 %v203, %v245
  %v296 = vadd.f32 %v204, %v246
  %v297 = vadd.f32 %v205, %v247
  %v298 = vadd.f32 %v206, %v248
  %v299 = vadd.f32 %v207, %v249
  %v300 = vadd.f32 %v208, %v245
  %v301 = vadd.f32 %v209, %v246
  %v302 = vadd.f32 %v210, %v247
  %v303 = vadd.f32 %v211, %v248
  %v304 = vadd.f32 %v212, %v249
  %v305 = vadd.f32 %v213, %v245
  %v306 = vadd.f32 %v214, %v246
  %v307 = vadd.f32 %v215, %v247
  %v308 = vadd.f32 %v216, %v248
  %v309 = vadd.f32 %v217, %v249
  %v310 = vadd.f32 %v218, %v245
  %v311 = vadd.f32 %v219, %v246
  %v312 = vadd.f32 %v220, %v247
  %v313 = vadd.f32 %v221, %v248
  %v314 = vadd.f32 %v222, %v249
  %v315 = vadd.f32 %v223, %v245
  %v316 = vadd.f32 %v224, %v246
  %v317 = vadd.f32 %v225, %v247
  %v318 = vadd.f32 %v226, %v248
  %v319 = vadd.f32 %v227, %v249
  %v320 = vadd.f32 %v228, %v245
  %v321 = vadd.f32 %v229, %v246
  %v322 = vadd.f32 %v230, %v247
  %v323 = vadd.f32 %v231, %v248
  %v324 = vadd.f32 %v232, %v249
  %v325 = vadd.f32 %v233, %v245
  %v326 = vadd.f32 %v234, %v246
  %v327 = vadd.f32 %v235, %v247
  %v328 = vadd.f32 %v236, %v248
  %v329 = vadd.f32 %v237, %v249
  %v330 = vadd.f32 %v238, %v245
  %v331 = vadd.f32 %v239, %v246
  %v332 = vadd.f32 %v240, %v247
  %v333 = vadd.f32 %v241, %v248
  %v334 = vadd.f32 %v242, %v249
  %vm335 = vcmp.ge.f32.partialorder %v255, 0.0
  %vm336 = vcmp.ge.f32.partialorder %v256, 0.0
  %vm337 = vcmp.ge.f32.partialorder %v257, 0.0
  %vm338 = vcmp.ge.f32.partialorder %v258, 0.0
  %vm339 = vcmp.ge.f32.partialorder %v259, 0.0
  %vm340 = vcmp.ge.f32.partialorder %v260, 0.0
  %vm341 = vcmp.ge.f32.partialorder %v261, 0.0
  %vm342 = vcmp.ge.f32.partialorder %v262, 0.0
  %vm343 = vcmp.ge.f32.partialorder %v263, 0.0
  %vm344 = vcmp.ge.f32.partialorder %v264, 0.0
  %vm345 = vcmp.ge.f32.partialorder %v265, 0.0
  %vm346 = vcmp.ge.f32.partialorder %v266, 0.0
  %vm347 = vcmp.ge.f32.partialorder %v267, 0.0
  %vm348 = vcmp.ge.f32.partialorder %v268, 0.0
  %vm349 = vcmp.ge.f32.partialorder %v269, 0.0
  %vm350 = vcmp.ge.f32.partialorder %v270, 0.0
  %vm351 = vcmp.ge.f32.partialorder %v271, 0.0
  %vm352 = vcmp.ge.f32.partialorder %v272, 0.0
  %vm353 = vcmp.ge.f32.partialorder %v273, 0.0
  %vm354 = vcmp.ge.f32.partialorder %v274, 0.0
  %vm355 = vcmp.ge.f32.partialorder %v275, 0.0
  %vm356 = vcmp.ge.f32.partialorder %v276, 0.0
  %vm357 = vcmp.ge.f32.partialorder %v277, 0.0
  %vm358 = vcmp.ge.f32.partialorder %v278, 0.0
  %vm359 = vcmp.ge.f32.partialorder %v279, 0.0
  %vm360 = vcmp.ge.f32.partialorder %v280, 0.0
  %vm361 = vcmp.ge.f32.partialorder %v281, 0.0
  %vm362 = vcmp.ge.f32.partialorder %v282, 0.0
  %vm363 = vcmp.ge.f32.partialorder %v283, 0.0
  %vm364 = vcmp.ge.f32.partialorder %v284, 0.0
  %vm365 = vcmp.ge.f32.partialorder %v285, 0.0
  %vm366 = vcmp.ge.f32.partialorder %v286, 0.0
  %vm367 = vcmp.ge.f32.partialorder %v287, 0.0
  %vm368 = vcmp.ge.f32.partialorder %v288, 0.0
  %vm369 = vcmp.ge.f32.partialorder %v289, 0.0
  %vm370 = vcmp.ge.f32.partialorder %v290, 0.0
  %vm371 = vcmp.ge.f32.partialorder %v291, 0.0
  %vm372 = vcmp.ge.f32.partialorder %v292, 0.0
  %vm373 = vcmp.ge.f32.partialorder %v293, 0.0
  %vm374 = vcmp.ge.f32.partialorder %v294, 0.0
  %vm375 = vcmp.ge.f32.partialorder %v295, 0.0
  %vm376 = vcmp.ge.f32.partialorder %v296, 0.0
  %vm377 = vcmp.ge.f32.partialorder %v297, 0.0
  %vm378 = vcmp.ge.f32.partialorder %v298, 0.0
  %vm379 = vcmp.ge.f32.partialorder %v299, 0.0
  %vm380 = vcmp.ge.f32.partialorder %v300, 0.0
  %vm381 = vcmp.ge.f32.partialorder %v301, 0.0
  %vm382 = vcmp.ge.f32.partialorder %v302, 0.0
  %vm383 = vcmp.ge.f32.partialorder %v303, 0.0
  %vm384 = vcmp.ge.f32.partialorder %v304, 0.0
  %vm385 = vcmp.ge.f32.partialorder %v305, 0.0
  %vm386 = vcmp.ge.f32.partialorder %v306, 0.0
  %vm387 = vcmp.ge.f32.partialorder %v307, 0.0
  %vm388 = vcmp.ge.f32.partialorder %v308, 0.0
  %vm389 = vcmp.ge.f32.partialorder %v309, 0.0
  %vm390 = vcmp.ge.f32.partialorder %v310, 0.0
  %vm391 = vcmp.ge.f32.partialorder %v311, 0.0
  %vm392 = vcmp.ge.f32.partialorder %v312, 0.0
  %vm393 = vcmp.ge.f32.partialorder %v313, 0.0
  %vm394 = vcmp.ge.f32.partialorder %v314, 0.0
  %vm395 = vcmp.ge.f32.partialorder %v315, 0.0
  %vm396 = vcmp.ge.f32.partialorder %v316, 0.0
  %vm397 = vcmp.ge.f32.partialorder %v317, 0.0
  %vm398 = vcmp.ge.f32.partialorder %v318, 0.0
  %vm399 = vcmp.ge.f32.partialorder %v319, 0.0
  %vm400 = vcmp.ge.f32.partialorder %v320, 0.0
  %vm401 = vcmp.ge.f32.partialorder %v321, 0.0
  %vm402 = vcmp.ge.f32.partialorder %v322, 0.0
  %vm403 = vcmp.ge.f32.partialorder %v323, 0.0
  %vm404 = vcmp.ge.f32.partialorder %v324, 0.0
  %vm405 = vcmp.ge.f32.partialorder %v325, 0.0
  %vm406 = vcmp.ge.f32.partialorder %v326, 0.0
  %vm407 = vcmp.ge.f32.partialorder %v327, 0.0
  %vm408 = vcmp.ge.f32.partialorder %v328, 0.0
  %vm409 = vcmp.ge.f32.partialorder %v329, 0.0
  %vm410 = vcmp.ge.f32.partialorder %v330, 0.0
  %vm411 = vcmp.ge.f32.partialorder %v331, 0.0
  %vm412 = vcmp.ge.f32.partialorder %v332, 0.0
  %vm413 = vcmp.ge.f32.partialorder %v333, 0.0
  %vm414 = vcmp.ge.f32.partialorder %v334, 0.0
  %v415 = vld [vmem:[%s4] sm:$0x1f]
  %v417 = vperm.slane %v415, 0
  %v418 = vperm.slane %v415, 1
  %v419 = vperm.slane %v415, 2
  %v420 = vperm.slane %v415, 3
  %v421 = vperm.slane %v415, 4
  %v427 = vmul.f32 %v417, %v255
  %v428 = vmul.f32 %v418, %v256
  %v429 = vmul.f32 %v419, %v257
  %v430 = vmul.f32 %v420, %v258
  %v431 = vmul.f32 %v421, %v259
  %v432 = vmul.f32 %v417, %v260
  %v433 = vmul.f32 %v418, %v261
  %v434 = vmul.f32 %v419, %v262
  %v435 = vmul.f32 %v420, %v263
  %v436 = vmul.f32 %v421, %v264
  %v437 = vmul.f32 %v417, %v265
  %v438 = vmul.f32 %v418, %v266
  %v439 = vmul.f32 %v419, %v267
  %v440 = vmul.f32 %v420, %v268
  %v441 = vmul.f32 %v421, %v269
  %v442 = vmul.f32 %v417, %v270
  %v443 = vmul.f32 %v418, %v271
  %v444 = vmul.f32 %v419, %v272
  %v445 = vmul.f32 %v420, %v273
  %v446 = vmul.f32 %v421, %v274
  %v447 = vmul.f32 %v417, %v275
  %v448 = vmul.f32 %v418, %v276
  %v449 = vmul.f32 %v419, %v277
  %v450 = vmul.f32 %v420, %v278
  %v451 = vmul.f32 %v421, %v279
  %v452 = vmul.f32 %v417, %v280
  %v453 = vmul.f32 %v418, %v281
  %v454 = vmul.f32 %v419, %v282
  %v455 = vmul.f32 %v420, %v283
  %v456 = vmul.f32 %v421, %v284
  %v457 = vmul.f32 %v417, %v285
  %v458 = vmul.f32 %v418, %v286
  %v459 = vmul.f32 %v419, %v287
  %v460 = vmul.f32 %v420, %v288
  %v461 = vmul.f32 %v421, %v289
  %v462 = vmul.f32 %v417, %v290
  %v463 = vmul.f32 %v418, %v291
  %v464 = vmul.f32 %v419, %v292
  %v465 = vmul.f32 %v420, %v293
  %v466 = vmul.f32 %v421, %v294
  %v467 = vmul.f32 %v417, %v295
  %v468 = vmul.f32 %v418, %v296
  %v469 = vmul.f32 %v419, %v297
  %v470 = vmul.f32 %v420, %v298
  %v471 = vmul.f32 %v421, %v299
  %v472 = vmul.f32 %v417, %v300
  %v473 = vmul.f32 %v418, %v301
  %v474 = vmul.f32 %v419, %v302
  %v475 = vmul.f32 %v420, %v303
  %v476 = vmul.f32 %v421, %v304
  %v477 = vmul.f32 %v417, %v305
  %v478 = vmul.f32 %v418, %v306
  %v479 = vmul.f32 %v419, %v307
  %v480 = vmul.f32 %v420, %v308
  %v481 = vmul.f32 %v421, %v309
  %v482 = vmul.f32 %v417, %v310
  %v483 = vmul.f32 %v418, %v311
  %v484 = vmul.f32 %v419, %v312
  %v485 = vmul.f32 %v420, %v313
  %v486 = vmul.f32 %v421, %v314
  %v487 = vmul.f32 %v417, %v315
  %v488 = vmul.f32 %v418, %v316
  %v489 = vmul.f32 %v419, %v317
  %v490 = vmul.f32 %v420, %v318
  %v491 = vmul.f32 %v421, %v319
  %v492 = vmul.f32 %v417, %v320
  %v493 = vmul.f32 %v418, %v321
  %v494 = vmul.f32 %v419, %v322
  %v495 = vmul.f32 %v420, %v323
  %v496 = vmul.f32 %v421, %v324
  %v497 = vmul.f32 %v417, %v325
  %v498 = vmul.f32 %v418, %v326
  %v499 = vmul.f32 %v419, %v327
  %v500 = vmul.f32 %v420, %v328
  %v501 = vmul.f32 %v421, %v329
  %v502 = vmul.f32 %v417, %v330
  %v503 = vmul.f32 %v418, %v331
  %v504 = vmul.f32 %v419, %v332
  %v505 = vmul.f32 %v420, %v333
  %v506 = vmul.f32 %v421, %v334
  %v507 = vsel %vm335, %v255, %v427
  %v508 = vsel %vm336, %v256, %v428
  %v509 = vsel %vm337, %v257, %v429
  %v510 = vsel %vm338, %v258, %v430
  %v511 = vsel %vm339, %v259, %v431
  %v512 = vsel %vm340, %v260, %v432
  %v513 = vsel %vm341, %v261, %v433
  %v514 = vsel %vm342, %v262, %v434
  %v515 = vsel %vm343, %v263, %v435
  %v516 = vsel %vm344, %v264, %v436
  %v517 = vsel %vm345, %v265, %v437
  %v518 = vsel %vm346, %v266, %v438
  %v519 = vsel %vm347, %v267, %v439
  %v520 = vsel %vm348, %v268, %v440
  %v521 = vsel %vm349, %v269, %v441
  %v522 = vsel %vm350, %v270, %v442
  %v523 = vsel %vm351, %v271, %v443
  %v524 = vsel %vm352, %v272, %v444
  %v525 = vsel %vm353, %v273, %v445
  %v526 = vsel %vm354, %v274, %v446
  %v527 = vsel %vm355, %v275, %v447
  %v528 = vsel %vm356, %v276, %v448
  %v529 = vsel %vm357, %v277, %v449
  %v530 = vsel %vm358, %v278, %v450
  %v531 = vsel %vm359, %v279, %v451
  %v532 = vsel %vm360, %v280, %v452
  %v533 = vsel %vm361, %v281, %v453
  %v534 = vsel %vm362, %v282, %v454
  %v535 = vsel %vm363, %v283, %v455
  %v536 = vsel %vm364, %v284, %v456
  %v537 = vsel %vm365, %v285, %v457
  %v538 = vsel %vm366, %v286, %v458
  %v539 = vsel %vm367, %v287, %v459
  %v540 = vsel %vm368, %v288, %v460
  %v541 = vsel %vm369, %v289, %v461
  %v542 = vsel %vm370, %v290, %v462
  %v543 = vsel %vm371, %v291, %v463
  %v544 = vsel %vm372, %v292, %v464
  %v545 = vsel %vm373, %v293, %v465
  %v546 = vsel %vm374, %v294, %v466
  %v547 = vsel %vm375, %v295, %v467
  %v548 = vsel %vm376, %v296, %v468
  %v549 = vsel %vm377, %v297, %v469
  %v550 = vsel %vm378, %v298, %v470
  %v551 = vsel %vm379, %v299, %v471
  %v552 = vsel %vm380, %v300, %v472
  %v553 = vsel %vm381, %v301, %v473
  %v554 = vsel %vm382, %v302, %v474
  %v555 = vsel %vm383, %v303, %v475
  %v556 = vsel %vm384, %v304, %v476
  %v557 = vsel %vm385, %v305, %v477
  %v558 = vsel %vm386, %v306, %v478
  %v559 = vsel %vm387, %v307, %v479
  %v560 = vsel %vm388, %v308, %v480
  %v561 = vsel %vm389, %v309, %v481
  %v562 = vsel %vm390, %v310, %v482
  %v563 = vsel %vm391, %v311, %v483
  %v564 = vsel %vm392, %v312, %v484
  %v565 = vsel %vm393, %v313, %v485
  %v566 = vsel %vm394, %v314, %v486
  %v567 = vsel %vm395, %v315, %v487
  %v568 = vsel %vm396, %v316, %v488
  %v569 = vsel %vm397, %v317, %v489
  %v570 = vsel %vm398, %v318, %v490
  %v571 = vsel %vm399, %v319, %v491
  %v572 = vsel %vm400, %v320, %v492
  %v573 = vsel %vm401, %v321, %v493
  %v574 = vsel %vm402, %v322, %v494
  %v575 = vsel %vm403, %v323, %v495
  %v576 = vsel %vm404, %v324, %v496
  %v577 = vsel %vm405, %v325, %v497
  %v578 = vsel %vm406, %v326, %v498
  %v579 = vsel %vm407, %v327, %v499
  %v580 = vsel %vm408, %v328, %v500
  %v581 = vsel %vm409, %v329, %v501
  %v582 = vsel %vm410, %v330, %v502
  %v583 = vsel %vm411, %v331, %v503
  %v584 = vsel %vm412, %v332, %v504
  %v585 = vsel %vm413, %v333, %v505
  %v586 = vsel %vm414, %v334, %v506
  %v587 = vpack.c.bf16 %v512, %v507
  %v588 = vpack.c.bf16 %v513, %v508
  %v589 = vpack.c.bf16 %v514, %v509
  %v590 = vpack.c.bf16 %v515, %v510
  %v591 = vpack.c.bf16 %v516, %v511
  %v592 = vpack.c.bf16 %v522, %v517
  %v593 = vpack.c.bf16 %v523, %v518
  %v594 = vpack.c.bf16 %v524, %v519
  %v595 = vpack.c.bf16 %v525, %v520
  %v596 = vpack.c.bf16 %v526, %v521
  %v597 = vpack.c.bf16 %v532, %v527
  %v598 = vpack.c.bf16 %v533, %v528
  %v599 = vpack.c.bf16 %v534, %v529
  %v600 = vpack.c.bf16 %v535, %v530
  %v601 = vpack.c.bf16 %v536, %v531
  %v602 = vpack.c.bf16 %v542, %v537
  %v603 = vpack.c.bf16 %v543, %v538
  %v604 = vpack.c.bf16 %v544, %v539
  %v605 = vpack.c.bf16 %v545, %v540
  %v606 = vpack.c.bf16 %v546, %v541
  %v607 = vpack.c.bf16 %v552, %v547
  %v608 = vpack.c.bf16 %v553, %v548
  %v609 = vpack.c.bf16 %v554, %v549
  %v610 = vpack.c.bf16 %v555, %v550
  %v611 = vpack.c.bf16 %v556, %v551
  %v612 = vpack.c.bf16 %v562, %v557
  %v613 = vpack.c.bf16 %v563, %v558
  %v614 = vpack.c.bf16 %v564, %v559
  %v615 = vpack.c.bf16 %v565, %v560
  %v616 = vpack.c.bf16 %v566, %v561
  %v617 = vpack.c.bf16 %v572, %v567
  %v618 = vpack.c.bf16 %v573, %v568
  %v619 = vpack.c.bf16 %v574, %v569
  %v620 = vpack.c.bf16 %v575, %v570
  %v621 = vpack.c.bf16 %v576, %v571
  %v622 = vpack.c.bf16 %v582, %v577
  %v623 = vpack.c.bf16 %v583, %v578
  %v624 = vpack.c.bf16 %v584, %v579
  %v625 = vpack.c.bf16 %v585, %v580
  %v626 = vpack.c.bf16 %v586, %v581
  %v627 = vld [vmem:[%s1] sm:$0xf]
  %v628 = vld [vmem:[%s1 + $0x4] sm:$0xf]
  %v629 = vld [vmem:[%s1 + $0x8] sm:$0xf]
  %v630 = vld [vmem:[%s1 + $0xc] sm:$0xf]
  %v631 = vld [vmem:[%s1 + $0x10] sm:$0xf]
  %v632 = vld [vmem:[%s1 + $0x14] sm:$0xf]
  %v633 = vld [vmem:[%s1 + $0x18] sm:$0xf]
  %v634 = vld [vmem:[%s1 + $0x1c] sm:$0xf]
  %v635 = vld [vmem:[%s1 + $0x20] sm:$0xf]
  %v636 = vld [vmem:[%s1 + $0x24] sm:$0xf]
  %v637 = vld [vmem:[%s1 + $0x28] sm:$0xf]
  %v638 = vld [vmem:[%s1 + $0x2c] sm:$0xf]
  %v639 = vld [vmem:[%s1 + $0x30] sm:$0xf]
  %v640 = vld [vmem:[%s1 + $0x34] sm:$0xf]
  %v641 = vld [vmem:[%s1 + $0x38] sm:$0xf]
  %v642 = vld [vmem:[%s1 + $0x3c] sm:$0xf]
  %v643 = vld [vmem:[%s1 + $0x40] sm:$0xf]
  %v644 = vld [vmem:[%s1 + $0x44] sm:$0xf]
  %v645 = vld [vmem:[%s1 + $0x48] sm:$0xf]
  %v646 = vld [vmem:[%s1 + $0x4c] sm:$0xf]
  %v647 = vld [vmem:[%s1 + $0x50] sm:$0xf]
  %v648 = vld [vmem:[%s1 + $0x54] sm:$0xf]
  %v649 = vld [vmem:[%s1 + $0x58] sm:$0xf]
  %v650 = vld [vmem:[%s1 + $0x5c] sm:$0xf]
  %v651 = vld [vmem:[%s1 + $0x60] sm:$0xf]
  %v652 = vld [vmem:[%s1 + $0x64] sm:$0xf]
  %v653 = vld [vmem:[%s1 + $0x68] sm:$0xf]
  %v654 = vld [vmem:[%s1 + $0x6c] sm:$0xf]
  %v655 = vld [vmem:[%s1 + $0x70] sm:$0xf]
  %v656 = vld [vmem:[%s1 + $0x74] sm:$0xf]
  %v657 = vld [vmem:[%s1 + $0x78] sm:$0xf]
  %v658 = vld [vmem:[%s1 + $0x7c] sm:$0xf]
  %v659 = vld [vmem:[%s1 + $0x80] sm:$0xf]
  %v660 = vld [vmem:[%s1 + $0x84] sm:$0xf]
  %v661 = vld [vmem:[%s1 + $0x88] sm:$0xf]
  %v662 = vld [vmem:[%s1 + $0x8c] sm:$0xf]
  %v663 = vld [vmem:[%s1 + $0x90] sm:$0xf]
  %v664 = vld [vmem:[%s1 + $0x94] sm:$0xf]
  %v665 = vld [vmem:[%s1 + $0x98] sm:$0xf]
  %v666 = vld [vmem:[%s1 + $0x9c] sm:$0xf]
  %v667 = vld [vmem:[%s1 + $0xa0] sm:$0xf]
  %v668 = vld [vmem:[%s1 + $0xa4] sm:$0xf]
  %v669 = vld [vmem:[%s1 + $0xa8] sm:$0xf]
  %v670 = vld [vmem:[%s1 + $0xac] sm:$0xf]
  %v671 = vld [vmem:[%s1 + $0xb0] sm:$0xf]
  %v672 = vld [vmem:[%s1 + $0xb4] sm:$0xf]
  %v673 = vld [vmem:[%s1 + $0xb8] sm:$0xf]
  %v674 = vld [vmem:[%s1 + $0xbc] sm:$0xf]
  %v675 = vld [vmem:[%s1 + $0xc0] sm:$0xf]
  %v676 = vld [vmem:[%s1 + $0xc4] sm:$0xf]
  %v677 = vld [vmem:[%s1 + $0xc8] sm:$0xf]
  %v678 = vld [vmem:[%s1 + $0xcc] sm:$0xf]
  %v679 = vld [vmem:[%s1 + $0xd0] sm:$0xf]
  %v680 = vld [vmem:[%s1 + $0xd4] sm:$0xf]
  %v681 = vld [vmem:[%s1 + $0xd8] sm:$0xf]
  %v682 = vld [vmem:[%s1 + $0xdc] sm:$0xf]
  %v683 = vld [vmem:[%s1 + $0xe0] sm:$0xf]
  %v684 = vld [vmem:[%s1 + $0xe4] sm:$0xf]
  %v685 = vld [vmem:[%s1 + $0xe8] sm:$0xf]
  %v686 = vld [vmem:[%s1 + $0xec] sm:$0xf]
  %v687 = vld [vmem:[%s1 + $0xf0] sm:$0xf]
  %v688 = vld [vmem:[%s1 + $0xf4] sm:$0xf]
  %v689 = vld [vmem:[%s1 + $0xf8] sm:$0xf]
  %v690 = vld [vmem:[%s1 + $0xfc] sm:$0xf]
  %v691 = vld [vmem:[%s1 + $0x100] sm:$0xf]
  %v692 = vld [vmem:[%s1 + $0x104] sm:$0xf]
  %v693 = vld [vmem:[%s1 + $0x108] sm:$0xf]
  %v694 = vld [vmem:[%s1 + $0x10c] sm:$0xf]
  %v695 = vld [vmem:[%s1 + $0x110] sm:$0xf]
  %v696 = vld [vmem:[%s1 + $0x114] sm:$0xf]
  %v697 = vld [vmem:[%s1 + $0x118] sm:$0xf]
  %v698 = vld [vmem:[%s1 + $0x11c] sm:$0xf]
  %v699 = vld [vmem:[%s1 + $0x120] sm:$0xf]
  %v700 = vld [vmem:[%s1 + $0x124] sm:$0xf]
  %v701 = vld [vmem:[%s1 + $0x128] sm:$0xf]
  %v702 = vld [vmem:[%s1 + $0x12c] sm:$0xf]
  %v703 = vld [vmem:[%s1 + $0x130] sm:$0xf]
  %v704 = vld [vmem:[%s1 + $0x134] sm:$0xf]
  %v705 = vld [vmem:[%s1 + $0x138] sm:$0xf]
  %v706 = vld [vmem:[%s1 + $0x13c] sm:$0xf]
  %v787 = vunpack.c.l.b16 %v627
  %v788 = vunpack.c.l.b16 %v628
  %v789 = vunpack.c.l.b16 %v629
  %v790 = vunpack.c.l.b16 %v630
  %v791 = vunpack.c.l.b16 %v631
  %v792 = vunpack.c.l.b16 %v632
  %v793 = vunpack.c.l.b16 %v633
  %v794 = vunpack.c.l.b16 %v634
  %v795 = vunpack.c.l.b16 %v635
  %v796 = vunpack.c.l.b16 %v636
  %v797 = vunpack.c.l.b16 %v637
  %v798 = vunpack.c.l.b16 %v638
  %v799 = vunpack.c.l.b16 %v639
  %v800 = vunpack.c.l.b16 %v640
  %v801 = vunpack.c.l.b16 %v641
  %v802 = vunpack.c.l.b16 %v642
  %v803 = vunpack.c.l.b16 %v643
  %v804 = vunpack.c.l.b16 %v644
  %v805 = vunpack.c.l.b16 %v645
  %v806 = vunpack.c.l.b16 %v646
  %v807 = vunpack.c.l.b16 %v647
  %v808 = vunpack.c.l.b16 %v648
  %v809 = vunpack.c.l.b16 %v649
  %v810 = vunpack.c.l.b16 %v650
  %v811 = vunpack.c.l.b16 %v651
  %v812 = vunpack.c.l.b16 %v652
  %v813 = vunpack.c.l.b16 %v653
  %v814 = vunpack.c.l.b16 %v654
  %v815 = vunpack.c.l.b16 %v655
  %v816 = vunpack.c.l.b16 %v656
  %v817 = vunpack.c.l.b16 %v657
  %v818 = vunpack.c.l.b16 %v658
  %v819 = vunpack.c.l.b16 %v659
  %v820 = vunpack.c.l.b16 %v660
  %v821 = vunpack.c.l.b16 %v661
  %v822 = vunpack.c.l.b16 %v662
  %v823 = vunpack.c.l.b16 %v663
  %v824 = vunpack.c.l.b16 %v664
  %v825 = vunpack.c.l.b16 %v665
  %v826 = vunpack.c.l.b16 %v666
  %v827 = vunpack.c.l.b16 %v667
  %v828 = vunpack.c.l.b16 %v668
  %v829 = vunpack.c.l.b16 %v669
  %v830 = vunpack.c.l.b16 %v670
  %v831 = vunpack.c.l.b16 %v671
  %v832 = vunpack.c.l.b16 %v672
  %v833 = vunpack.c.l.b16 %v673
  %v834 = vunpack.c.l.b16 %v674
  %v835 = vunpack.c.l.b16 %v675
  %v836 = vunpack.c.l.b16 %v676
  %v837 = vunpack.c.l.b16 %v677
  %v838 = vunpack.c.l.b16 %v678
  %v839 = vunpack.c.l.b16 %v679
  %v840 = vunpack.c.l.b16 %v680
  %v841 = vunpack.c.l.b16 %v681
  %v842 = vunpack.c.l.b16 %v682
  %v843 = vunpack.c.l.b16 %v683
  %v844 = vunpack.c.l.b16 %v684
  %v845 = vunpack.c.l.b16 %v685
  %v846 = vunpack.c.l.b16 %v686
  %v847 = vunpack.c.l.b16 %v687
  %v848 = vunpack.c.l.b16 %v688
  %v849 = vunpack.c.l.b16 %v689
  %v850 = vunpack.c.l.b16 %v690
  %v851 = vunpack.c.l.b16 %v691
  %v852 = vunpack.c.l.b16 %v692
  %v853 = vunpack.c.l.b16 %v693
  %v854 = vunpack.c.l.b16 %v694
  %v855 = vunpack.c.l.b16 %v695
  %v856 = vunpack.c.l.b16 %v696
  %v857 = vunpack.c.l.b16 %v697
  %v858 = vunpack.c.l.b16 %v698
  %v859 = vunpack.c.l.b16 %v699
  %v860 = vunpack.c.l.b16 %v700
  %v861 = vunpack.c.l.b16 %v701
  %v862 = vunpack.c.l.b16 %v702
  %v863 = vunpack.c.l.b16 %v703
  %v864 = vunpack.c.l.b16 %v704
  %v865 = vunpack.c.l.b16 %v705
  %v866 = vunpack.c.l.b16 %v706
  %v867 = vpack.c.b16 %v788, %v787
  %v868 = vpack.c.b16 %v790, %v789
  %v869 = vpack.c.b16 %v792, %v791
  %v870 = vpack.c.b16 %v794, %v793
  %v871 = vpack.c.b16 %v796, %v795
  %v872 = vpack.c.b16 %v798, %v797
  %v873 = vpack.c.b16 %v800, %v799
  %v874 = vpack.c.b16 %v802, %v801
  %v875 = vpack.c.b16 %v804, %v803
  %v876 = vpack.c.b16 %v806, %v805
  %v877 = vpack.c.b16 %v808, %v807
  %v878 = vpack.c.b16 %v810, %v809
  %v879 = vpack.c.b16 %v812, %v811
  %v880 = vpack.c.b16 %v814, %v813
  %v881 = vpack.c.b16 %v816, %v815
  %v882 = vpack.c.b16 %v818, %v817
  %v883 = vpack.c.b16 %v820, %v819
  %v884 = vpack.c.b16 %v822, %v821
  %v885 = vpack.c.b16 %v824, %v823
  %v886 = vpack.c.b16 %v826, %v825
  %v887 = vpack.c.b16 %v828, %v827
  %v888 = vpack.c.b16 %v830, %v829
  %v889 = vpack.c.b16 %v832, %v831
  %v890 = vpack.c.b16 %v834, %v833
  %v891 = vpack.c.b16 %v836, %v835
  %v892 = vpack.c.b16 %v838, %v837
  %v893 = vpack.c.b16 %v840, %v839
  %v894 = vpack.c.b16 %v842, %v841
  %v895 = vpack.c.b16 %v844, %v843
  %v896 = vpack.c.b16 %v846, %v845
  %v897 = vpack.c.b16 %v848, %v847
  %v898 = vpack.c.b16 %v850, %v849
  %v899 = vpack.c.b16 %v852, %v851
  %v900 = vpack.c.b16 %v854, %v853
  %v901 = vpack.c.b16 %v856, %v855
  %v902 = vpack.c.b16 %v858, %v857
  %v903 = vpack.c.b16 %v860, %v859
  %v904 = vpack.c.b16 %v862, %v861
  %v905 = vpack.c.b16 %v864, %v863
  %v906 = vpack.c.b16 %v866, %v865
  %947 = vmatpush.bf16.msra.mxu0 %v874
  %948 = vmatpush.bf16.msra.mxu0 %v873
  %949 = vmatpush.bf16.msra.mxu0 %v872
  %950 = vmatpush.bf16.msra.mxu0 %v871
  %951 = vmatpush.bf16.msra.mxu0 %v870
  %952 = vmatpush.bf16.msra.mxu0 %v869
  %953 = vmatpush.bf16.msra.mxu0 %v868
  %954 = vmatpush.bf16.msra.mxu0 %v867
  %955 = vmatmul.bf16.gmra.mxu0 %v587
  %v956 = vpop.f32.mrf.mxu0
  %v957 = vadd.f32 0.0, %v956
  %v958 = vpop.f32.mrf.mxu0
  %v959 = vadd.f32 0.0, %v958
  %960 = vmatmul.bf16.gmra.mxu0 %v592
  %v961 = vpop.f32.mrf.mxu0
  %v962 = vadd.f32 0.0, %v961
  %v963 = vpop.f32.mrf.mxu0
  %v964 = vadd.f32 0.0, %v963
  %965 = vmatmul.bf16.gmra.mxu0 %v597
  %v966 = vpop.f32.mrf.mxu0
  %v967 = vadd.f32 0.0, %v966
  %v968 = vpop.f32.mrf.mxu0
  %v969 = vadd.f32 0.0, %v968
  %970 = vmatmul.bf16.gmra.mxu0 %v602
  %v971 = vpop.f32.mrf.mxu0
  %v972 = vadd.f32 0.0, %v971
  %v973 = vpop.f32.mrf.mxu0
  %v974 = vadd.f32 0.0, %v973
  %975 = vmatmul.bf16.gmra.mxu0 %v607
  %v976 = vpop.f32.mrf.mxu0
  %v977 = vadd.f32 0.0, %v976
  %v978 = vpop.f32.mrf.mxu0
  %v979 = vadd.f32 0.0, %v978
  %980 = vmatmul.bf16.gmra.mxu0 %v612
  %v981 = vpop.f32.mrf.mxu0
  %v982 = vadd.f32 0.0, %v981
  %v983 = vpop.f32.mrf.mxu0
  %v984 = vadd.f32 0.0, %v983
  %985 = vmatmul.bf16.gmra.mxu0 %v617
  %v986 = vpop.f32.mrf.mxu0
  %v987 = vadd.f32 0.0, %v986
  %v988 = vpop.f32.mrf.mxu0
  %v989 = vadd.f32 0.0, %v988
  %990 = vmatmul.bf16.gmra.mxu0 %v622
  %v991 = vpop.f32.mrf.mxu0
  %v992 = vadd.f32 0.0, %v991
  %v993 = vpop.f32.mrf.mxu0
  %v994 = vadd.f32 0.0, %v993
  %995 = vdwg.mxu0
  %996 = vmatpush.bf16.msra.mxu0 %v882
  %997 = vmatpush.bf16.msra.mxu0 %v881
  %998 = vmatpush.bf16.msra.mxu0 %v880
  %999 = vmatpush.bf16.msra.mxu0 %v879
  %1000 = vmatpush.bf16.msra.mxu0 %v878
  %1001 = vmatpush.bf16.msra.mxu0 %v877
  %1002 = vmatpush.bf16.msra.mxu0 %v876
  %1003 = vmatpush.bf16.msra.mxu0 %v875
  %1004 = vmatmul.bf16.gmra.mxu0 %v588
  %v1005 = vpop.f32.mrf.mxu0
  %v1006 = vadd.f32 %v957, %v1005
  %v1007 = vpop.f32.mrf.mxu0
  %v1008 = vadd.f32 %v959, %v1007
  %1009 = vmatmul.bf16.gmra.mxu0 %v593
  %v1010 = vpop.f32.mrf.mxu0
  %v1011 = vadd.f32 %v962, %v1010
  %v1012 = vpop.f32.mrf.mxu0
  %v1013 = vadd.f32 %v964, %v1012
  %1014 = vmatmul.bf16.gmra.mxu0 %v598
  %v1015 = vpop.f32.mrf.mxu0
  %v1016 = vadd.f32 %v967, %v1015
  %v1017 = vpop.f32.mrf.mxu0
  %v1018 = vadd.f32 %v969, %v1017
  %1019 = vmatmul.bf16.gmra.mxu0 %v603
  %v1020 = vpop.f32.mrf.mxu0
  %v1021 = vadd.f32 %v972, %v1020
  %v1022 = vpop.f32.mrf.mxu0
  %v1023 = vadd.f32 %v974, %v1022
  %1024 = vmatmul.bf16.gmra.mxu0 %v608
  %v1025 = vpop.f32.mrf.mxu0
  %v1026 = vadd.f32 %v977, %v1025
  %v1027 = vpop.f32.mrf.mxu0
  %v1028 = vadd.f32 %v979, %v1027
  %1029 = vmatmul.bf16.gmra.mxu0 %v613
  %v1030 = vpop.f32.mrf.mxu0
  %v1031 = vadd.f32 %v982, %v1030
  %v1032 = vpop.f32.mrf.mxu0
  %v1033 = vadd.f32 %v984, %v1032
  %1034 = vmatmul.bf16.gmra.mxu0 %v618
  %v1035 = vpop.f32.mrf.mxu0
  %v1036 = vadd.f32 %v987, %v1035
  %v1037 = vpop.f32.mrf.mxu0
  %v1038 = vadd.f32 %v989, %v1037
  %1039 = vmatmul.bf16.gmra.mxu0 %v623
  %v1040 = vpop.f32.mrf.mxu0
  %v1041 = vadd.f32 %v992, %v1040
  %v1042 = vpop.f32.mrf.mxu0
  %v1043 = vadd.f32 %v994, %v1042
  %1044 = vdwg.mxu0
  %1045 = vmatpush.bf16.msra.mxu0 %v890
  %1046 = vmatpush.bf16.msra.mxu0 %v889
  %1047 = vmatpush.bf16.msra.mxu0 %v888
  %1048 = vmatpush.bf16.msra.mxu0 %v887
  %1049 = vmatpush.bf16.msra.mxu0 %v886
  %1050 = vmatpush.bf16.msra.mxu0 %v885
  %1051 = vmatpush.bf16.msra.mxu0 %v884
  %1052 = vmatpush.bf16.msra.mxu0 %v883
  %1053 = vmatmul.bf16.gmra.mxu0 %v589
  %v1054 = vpop.f32.mrf.mxu0
  %v1055 = vadd.f32 %v1006, %v1054
  %v1056 = vpop.f32.mrf.mxu0
  %v1057 = vadd.f32 %v1008, %v1056
  %1058 = vmatmul.bf16.gmra.mxu0 %v594
  %v1059 = vpop.f32.mrf.mxu0
  %v1060 = vadd.f32 %v1011, %v1059
  %v1061 = vpop.f32.mrf.mxu0
  %v1062 = vadd.f32 %v1013, %v1061
  %1063 = vmatmul.bf16.gmra.mxu0 %v599
  %v1064 = vpop.f32.mrf.mxu0
  %v1065 = vadd.f32 %v1016, %v1064
  %v1066 = vpop.f32.mrf.mxu0
  %v1067 = vadd.f32 %v1018, %v1066
  %1068 = vmatmul.bf16.gmra.mxu0 %v604
  %v1069 = vpop.f32.mrf.mxu0
  %v1070 = vadd.f32 %v1021, %v1069
  %v1071 = vpop.f32.mrf.mxu0
  %v1072 = vadd.f32 %v1023, %v1071
  %1073 = vmatmul.bf16.gmra.mxu0 %v609
  %v1074 = vpop.f32.mrf.mxu0
  %v1075 = vadd.f32 %v1026, %v1074
  %v1076 = vpop.f32.mrf.mxu0
  %v1077 = vadd.f32 %v1028, %v1076
  %1078 = vmatmul.bf16.gmra.mxu0 %v614
  %v1079 = vpop.f32.mrf.mxu0
  %v1080 = vadd.f32 %v1031, %v1079
  %v1081 = vpop.f32.mrf.mxu0
  %v1082 = vadd.f32 %v1033, %v1081
  %1083 = vmatmul.bf16.gmra.mxu0 %v619
  %v1084 = vpop.f32.mrf.mxu0
  %v1085 = vadd.f32 %v1036, %v1084
  %v1086 = vpop.f32.mrf.mxu0
  %v1087 = vadd.f32 %v1038, %v1086
  %1088 = vmatmul.bf16.gmra.mxu0 %v624
  %v1089 = vpop.f32.mrf.mxu0
  %v1090 = vadd.f32 %v1041, %v1089
  %v1091 = vpop.f32.mrf.mxu0
  %v1092 = vadd.f32 %v1043, %v1091
  %1093 = vdwg.mxu0
  %1094 = vmatpush.bf16.msra.mxu0 %v898
  %1095 = vmatpush.bf16.msra.mxu0 %v897
  %1096 = vmatpush.bf16.msra.mxu0 %v896
  %1097 = vmatpush.bf16.msra.mxu0 %v895
  %1098 = vmatpush.bf16.msra.mxu0 %v894
  %1099 = vmatpush.bf16.msra.mxu0 %v893
  %1100 = vmatpush.bf16.msra.mxu0 %v892
  %1101 = vmatpush.bf16.msra.mxu0 %v891
  %1102 = vmatmul.bf16.gmra.mxu0 %v590
  %v1103 = vpop.f32.mrf.mxu0
  %v1104 = vadd.f32 %v1055, %v1103
  %v1105 = vpop.f32.mrf.mxu0
  %v1106 = vadd.f32 %v1057, %v1105
  %1107 = vmatmul.bf16.gmra.mxu0 %v595
  %v1108 = vpop.f32.mrf.mxu0
  %v1109 = vadd.f32 %v1060, %v1108
  %v1110 = vpop.f32.mrf.mxu0
  %v1111 = vadd.f32 %v1062, %v1110
  %1112 = vmatmul.bf16.gmra.mxu0 %v600
  %v1113 = vpop.f32.mrf.mxu0
  %v1114 = vadd.f32 %v1065, %v1113
  %v1115 = vpop.f32.mrf.mxu0
  %v1116 = vadd.f32 %v1067, %v1115
  %1117 = vmatmul.bf16.gmra.mxu0 %v605
  %v1118 = vpop.f32.mrf.mxu0
  %v1119 = vadd.f32 %v1070, %v1118
  %v1120 = vpop.f32.mrf.mxu0
  %v1121 = vadd.f32 %v1072, %v1120
  %1122 = vmatmul.bf16.gmra.mxu0 %v610
  %v1123 = vpop.f32.mrf.mxu0
  %v1124 = vadd.f32 %v1075, %v1123
  %v1125 = vpop.f32.mrf.mxu0
  %v1126 = vadd.f32 %v1077, %v1125
  %1127 = vmatmul.bf16.gmra.mxu0 %v615
  %v1128 = vpop.f32.mrf.mxu0
  %v1129 = vadd.f32 %v1080, %v1128
  %v1130 = vpop.f32.mrf.mxu0
  %v1131 = vadd.f32 %v1082, %v1130
  %1132 = vmatmul.bf16.gmra.mxu0 %v620
  %v1133 = vpop.f32.mrf.mxu0
  %v1134 = vadd.f32 %v1085, %v1133
  %v1135 = vpop.f32.mrf.mxu0
  %v1136 = vadd.f32 %v1087, %v1135
  %1137 = vmatmul.bf16.gmra.mxu0 %v625
  %v1138 = vpop.f32.mrf.mxu0
  %v1139 = vadd.f32 %v1090, %v1138
  %v1140 = vpop.f32.mrf.mxu0
  %v1141 = vadd.f32 %v1092, %v1140
  %1142 = vdwg.mxu0
  %1143 = vmatpush.bf16.msra.mxu0 %v906
  %1144 = vmatpush.bf16.msra.mxu0 %v905
  %1145 = vmatpush.bf16.msra.mxu0 %v904
  %1146 = vmatpush.bf16.msra.mxu0 %v903
  %1147 = vmatpush.bf16.msra.mxu0 %v902
  %1148 = vmatpush.bf16.msra.mxu0 %v901
  %1149 = vmatpush.bf16.msra.mxu0 %v900
  %1150 = vmatpush.bf16.msra.mxu0 %v899
  %1151 = vmatmul.bf16.gmra.mxu0 %v591
  %v1152 = vpop.f32.mrf.mxu0
  %v1153 = vadd.f32 %v1104, %v1152
  %v1154 = vpop.f32.mrf.mxu0
  %v1155 = vadd.f32 %v1106, %v1154
  %1156 = vmatmul.bf16.gmra.mxu0 %v596
  %v1157 = vpop.f32.mrf.mxu0
  %v1158 = vadd.f32 %v1109, %v1157
  %v1159 = vpop.f32.mrf.mxu0
  %v1160 = vadd.f32 %v1111, %v1159
  %1161 = vmatmul.bf16.gmra.mxu0 %v601
  %v1162 = vpop.f32.mrf.mxu0
  %v1163 = vadd.f32 %v1114, %v1162
  %v1164 = vpop.f32.mrf.mxu0
  %v1165 = vadd.f32 %v1116, %v1164
  %1166 = vmatmul.bf16.gmra.mxu0 %v606
  %v1167 = vpop.f32.mrf.mxu0
  %v1168 = vadd.f32 %v1119, %v1167
  %v1169 = vpop.f32.mrf.mxu0
  %v1170 = vadd.f32 %v1121, %v1169
  %1171 = vmatmul.bf16.gmra.mxu0 %v611
  %v1172 = vpop.f32.mrf.mxu0
  %v1173 = vadd.f32 %v1124, %v1172
  %v1174 = vpop.f32.mrf.mxu0
  %v1175 = vadd.f32 %v1126, %v1174
  %1176 = vmatmul.bf16.gmra.mxu0 %v616
  %v1177 = vpop.f32.mrf.mxu0
  %v1178 = vadd.f32 %v1129, %v1177
  %v1179 = vpop.f32.mrf.mxu0
  %v1180 = vadd.f32 %v1131, %v1179
  %1181 = vmatmul.bf16.gmra.mxu0 %v621
  %v1182 = vpop.f32.mrf.mxu0
  %v1183 = vadd.f32 %v1134, %v1182
  %v1184 = vpop.f32.mrf.mxu0
  %v1185 = vadd.f32 %v1136, %v1184
  %1186 = vmatmul.bf16.gmra.mxu0 %v626
  %v1187 = vpop.f32.mrf.mxu0
  %v1188 = vadd.f32 %v1139, %v1187
  %v1189 = vpop.f32.mrf.mxu0
  %v1190 = vadd.f32 %v1141, %v1189
  %1191 = vdwg.mxu0
  %v1192 = vpack.c.bf16 %v1153, %v1153
  %v1193 = vpack.c.bf16 %v1155, %v1155
  %v1194 = vpack.c.bf16 %v1158, %v1158
  %v1195 = vpack.c.bf16 %v1160, %v1160
  %v1196 = vpack.c.bf16 %v1163, %v1163
  %v1197 = vpack.c.bf16 %v1165, %v1165
  %v1198 = vpack.c.bf16 %v1168, %v1168
  %v1199 = vpack.c.bf16 %v1170, %v1170
  %v1200 = vpack.c.bf16 %v1173, %v1173
  %v1201 = vpack.c.bf16 %v1175, %v1175
  %v1202 = vpack.c.bf16 %v1178, %v1178
  %v1203 = vpack.c.bf16 %v1180, %v1180
  %v1204 = vpack.c.bf16 %v1183, %v1183
  %v1205 = vpack.c.bf16 %v1185, %v1185
  %v1206 = vpack.c.bf16 %v1188, %v1188
  %v1207 = vpack.c.bf16 %v1190, %v1190
  %1208 = vst [vmem:[%s5] sm:$0xf] %v1192
  %1209 = vst [vmem:[%s5 + $0x4] sm:$0xf] %v1193
  %1210 = vst [vmem:[%s5 + $0x8] sm:$0xf] %v1194
  %1211 = vst [vmem:[%s5 + $0xc] sm:$0xf] %v1195
  %1212 = vst [vmem:[%s5 + $0x10] sm:$0xf] %v1196
  %1213 = vst [vmem:[%s5 + $0x14] sm:$0xf] %v1197
  %1214 = vst [vmem:[%s5 + $0x18] sm:$0xf] %v1198
  %1215 = vst [vmem:[%s5 + $0x1c] sm:$0xf] %v1199
  %1216 = vst [vmem:[%s5 + $0x20] sm:$0xf] %v1200
  %1217 = vst [vmem:[%s5 + $0x24] sm:$0xf] %v1201
  %1218 = vst [vmem:[%s5 + $0x28] sm:$0xf] %v1202
  %1219 = vst [vmem:[%s5 + $0x2c] sm:$0xf] %v1203
  %1220 = vst [vmem:[%s5 + $0x30] sm:$0xf] %v1204
  %1221 = vst [vmem:[%s5 + $0x34] sm:$0xf] %v1205
  %1222 = vst [vmem:[%s5 + $0x38] sm:$0xf] %v1206
  %1223 = vst [vmem:[%s5 + $0x3c] sm:$0xf] %v1207
  %v1224 = vadd.f32 %v1153, %v1155
  %v1225 = vadd.f32 %v1224, %v1158
  %v1226 = vadd.f32 %v1225, %v1160
  %v1227 = vadd.f32 %v1226, %v1163
  %v1228 = vadd.f32 %v1227, %v1165
  %v1229 = vadd.f32 %v1228, %v1168
  %v1230 = vadd.f32 %v1229, %v1170
  %v1231 = vadd.f32 %v1230, %v1173
  %v1232 = vadd.f32 %v1231, %v1175
  %v1233 = vadd.f32 %v1232, %v1178
  %v1234 = vadd.f32 %v1233, %v1180
  %v1235 = vadd.f32 %v1234, %v1183
  %v1236 = vadd.f32 %v1235, %v1185
  %v1237 = vadd.f32 %v1236, %v1188
  %v1238 = vadd.f32 %v1237, %v1190
  %v1239 = vrot.slane %v1238, 4
  %v1240 = vadd.f32 %v1238, %v1239
  %v1241 = vrot.slane %v1240, 2
  %v1242 = vadd.f32 %v1240, %v1241
  %v1243 = vrot.slane %v1242, 1
  %v1244 = vadd.f32 %v1242, %v1243
  %1245 = vst [vmem:[%s6] sm:$0x1] %v1244
  %v1246 = vmul.f32 %v1153, %v1153
  %v1247 = vmul.f32 %v1155, %v1155
  %v1248 = vmul.f32 %v1158, %v1158
  %v1249 = vmul.f32 %v1160, %v1160
  %v1250 = vmul.f32 %v1163, %v1163
  %v1251 = vmul.f32 %v1165, %v1165
  %v1252 = vmul.f32 %v1168, %v1168
  %v1253 = vmul.f32 %v1170, %v1170
  %v1254 = vmul.f32 %v1173, %v1173
  %v1255 = vmul.f32 %v1175, %v1175
  %v1256 = vmul.f32 %v1178, %v1178
  %v1257 = vmul.f32 %v1180, %v1180
  %v1258 = vmul.f32 %v1183, %v1183
  %v1259 = vmul.f32 %v1185, %v1185
  %v1260 = vmul.f32 %v1188, %v1188
  %v1261 = vmul.f32 %v1190, %v1190
  %v1262 = vadd.f32 %v1246, %v1247
  %v1263 = vadd.f32 %v1262, %v1248
  %v1264 = vadd.f32 %v1263, %v1249
  %v1265 = vadd.f32 %v1264, %v1250
  %v1266 = vadd.f32 %v1265, %v1251
  %v1267 = vadd.f32 %v1266, %v1252
  %v1268 = vadd.f32 %v1267, %v1253
  %v1269 = vadd.f32 %v1268, %v1254
  %v1270 = vadd.f32 %v1269, %v1255
  %v1271 = vadd.f32 %v1270, %v1256
  %v1272 = vadd.f32 %v1271, %v1257
  %v1273 = vadd.f32 %v1272, %v1258
  %v1274 = vadd.f32 %v1273, %v1259
  %v1275 = vadd.f32 %v1274, %v1260
  %v1276 = vadd.f32 %v1275, %v1261
  %v1277 = vrot.slane %v1276, 4
  %v1278 = vadd.f32 %v1276, %v1277
  %v1279 = vrot.slane %v1278, 2
  %v1280 = vadd.f32 %v1278, %v1279
  %v1281 = vrot.slane %v1280, 1
  %v1282 = vadd.f32 %v1280, %v1281
  %1283 = vst [vmem:[%s7] sm:$0x1] %v1282
  // Predicated region
  $region22: #{wgan_generator_forward.10} parent=0 // pred_check
    _
  $region23: #{wgan_generator_forward.10} parent=0 // pred_check_branch
    %1285 = sbr.rel (0) target = $region25
  $region24: #{wgan_generator_forward.10} parent=0 // pred_region
    _
  $region25: #{wgan_generator_forward.10} parent=0 // pred_fallthru
    _
  // Predicated region
  $region26: #{wgan_generator_forward.10} parent=0 // pred_check
    _
  $region27: #{wgan_generator_forward.10} parent=0 // pred_check_branch
    %1287 = sbr.rel (0) target = $region29
  $region28: #{wgan_generator_forward.10} parent=0 // pred_region
    _
  $region29: #{wgan_generator_forward.10} parent=0 // pred_fallthru
    _
  // Predicated region
  $region30: #{wgan_generator_forward.10} parent=0 // pred_check
    _
  $region31: #{wgan_generator_forward.10} parent=0 // pred_check_branch
    %1289 = sbr.rel (0) target = $region33
  $region32: #{wgan_generator_forward.10} parent=0 // pred_region
    _
  $region33: #{wgan_generator_forward.10} parent=0 // pred_fallthru
    _
  // Predicated region
  $region34: #{wgan_generator_forward.10} parent=0 // pred_check
    _
  $region35: #{wgan_generator_forward.10} parent=0 // pred_check_branch
    %1291 = sbr.rel (0) target = $region37
  $region36: #{wgan_generator_forward.10} parent=0 // pred_region
    _
  $region37: #{wgan_generator_forward.10} parent=0 // pred_fallthru
    _
  // Predicated region
  $region38: #{wgan_generator_forward.10} parent=0 // pred_check
    _
  $region39: #{wgan_generator_forward.10} parent=0 // pred_check_branch
    %1293 = sbr.rel (0) target = $region41
  $region40: #{wgan_generator_forward.10} parent=0 // pred_region
    _
  $region41: #{wgan_generator_forward.10} parent=0 // pred_fallthru
    _
  // Predicated region
  $region42: #{wgan_generator_forward.10} parent=0 // pred_check
    _
  $region43: #{wgan_generator_forward.10} parent=0 // pred_check_branch
    %1295 = sbr.rel (0) target = $region45
  $region44: #{wgan_generator_forward.10} parent=0 // pred_region
    _
  $region45: #{wgan_generator_forward.10} parent=0 // pred_fallthru
    _

// kernel: tile.90
$region0: #{tile.90}
  #allocation0 [shape = 's32[1]{0}', space=sflag, size = 0x4, scoped, tag = 'scoped memory for tile.90']
  %s0 = inlined_call_operand.vmem [shape: f32[16], index: 0, kind: input, shape index: {}]
  %s1 = inlined_call_operand.vmem [shape: f32[9,16], index: 1, kind: output, shape index: {}]
  // Predicated region
  $region2: #{tile.90} parent=0 // pred_check
    _
  $region3: #{tile.90} parent=0 // pred_check_branch
    %3 = sbr.rel (0) target = $region5
  $region4: #{tile.90} parent=0 // pred_region
    _
  $region5: #{tile.90} parent=0 // pred_fallthru
    _
  %v4 = vld [vmem:[%s0] ss:$0 sm:$0xff]
  %5 = vst [vmem:[%s1] sm:$0xff] %v4
  %s6 = scalar_lea.vmem %s1, 8
  %7 = vst [vmem:[%s6] sm:$0xff] %v4

// kernel: tile.91
$region0: #{tile.91}
  %s0 = inlined_call_operand.vmem [shape: f32[9,16], index: 0, kind: input, shape index: {}]
  %s1 = inlined_call_operand.vmem [shape: f32[144], index: 1, kind: output, shape index: {}]
  $region1: #{tile.91} parent=0
    #allocation0 [shape = 'u8[4096]{0}', space=vmem, size = 0x1000, scoped, tag = 'scoped mem for output reshape']
    %s2 = smov 3
    %v3 = vld [vmem:[%s0] ss:$8 sm:%s2]
    %vm4 = vcmask 130048
    %5 = vst.msk [vmem:[#allocation0] sm:$0x3] %vm4, %v3
    %s6 = scalar_lea.vmem %s0, 7
    %v7 = vld [vmem:[%s6] sm:$0x1]
    %8 = vrot.lane.b32.xlu0 %v7, 112
    %v9 = vpop.permute.xlu0 %8
    %vm10 = vcmask 1048448
    %11 = vst.msk [vmem:[#allocation0] sm:$0x1] %vm10, %v9
    %s12 = scalar_lea.vmem %s0, 6
    %v13 = vld [vmem:[%s12] sm:$0x1]
    %14 = vrot.lane.b32.xlu0 %v13, 96
    %v15 = vpop.permute.xlu0 %14
    %vm16 = vcmask 917248
    %17 = vst.msk [vmem:[#allocation0] sm:$0x1] %vm16, %v15
    %s18 = scalar_lea.vmem %s0, 5
    %v19 = vld [vmem:[%s18] sm:$0x1]
    %20 = vrot.lane.b32.xlu0 %v19, 80
    %v21 = vpop.permute.xlu0 %20
    %vm22 = vcmask 786048
    %23 = vst.msk [vmem:[#allocation0] sm:$0x1] %vm22, %v21
    %s24 = scalar_lea.vmem %s0, 4
    %v25 = vld [vmem:[%s24] sm:$0x1]
    %26 = vrot.lane.b32.xlu0 %v25, 64
    %v27 = vpop.permute.xlu0 %26
    %vm28 = vcmask 654848
    %29 = vst.msk [vmem:[#allocation0] sm:$0x1] %vm28, %v27
    %s30 = scalar_lea.vmem %s0, 3
    %v31 = vld [vmem:[%s30] sm:$0x1]
    %32 = vrot.lane.b32.xlu0 %v31, 48
    %v33 = vpop.permute.xlu0 %32
    %vm34 = vcmask 523648
    %35 = vst.msk [vmem:[#allocation0] sm:$0x1] %vm34, %v33
    %s36 = scalar_lea.vmem %s0, 2
    %v37 = vld [vmem:[%s36] sm:$0x1]
    %38 = vrot.lane.b32.xlu0 %v37, 32
    %v39 = vpop.permute.xlu0 %38
    %vm40 = vcmask 392448
    %41 = vst.msk [vmem:[#allocation0] sm:$0x1] %vm40, %v39
    %s42 = scalar_lea.vmem %s0, 1
    %v43 = vld [vmem:[%s42] sm:$0x1]
    %44 = vrot.lane.b32.xlu0 %v43, 16
    %v45 = vpop.permute.xlu0 %44
    %vm46 = vcmask 261248
    %47 = vst.msk [vmem:[#allocation0] sm:$0x1] %vm46, %v45
    %s49 = ssub.s32 4, 1
    %v50 = vld [vmem:[#allocation0] sm:%s49]
    %s52 = ssub.s32 4, 1
    %53 = vst [vmem:[%s1] sm:%s52] %v50

// kernel: wgan_generator_forward.11
$region0: #{wgan_generator_forward.11}
  #allocation0 [shape = 'u32[]', space=smem, size = 0x4, offset = 0x4, fixed_abs, tag = 'smem constant byte address 0x4 - core index']
  #allocation1 [shape = 'u32[72,128]{1,0:T(1,128)}', space=vmem, size = 0x9000, scoped, tag = 'internal scratch']
  %s0 = inlined_call_operand.vmem [shape: bf16[512,384], index: 0, kind: input, shape index: {}]
  %s1 = inlined_call_operand.vmem [shape: bf16[384,128], index: 1, kind: input, shape index: {}]
  %s2 = inlined_call_operand.vmem [shape: f32[1,384], index: 2, kind: input, shape index: {}]
  %s3 = inlined_call_operand.vmem [shape: f32[1,384], index: 3, kind: input, shape index: {}]
  %s4 = inlined_call_operand.vmem [shape: f32[1,384], index: 4, kind: input, shape index: {}]
  %s5 = inlined_call_operand.vmem [shape: bf16[512,128], index: 5, kind: output, shape index: {0}]
  %s6 = inlined_call_operand.vmem [shape: f32[1,1,128], index: 6, kind: output, shape index: {1}]
  %s7 = inlined_call_operand.vmem [shape: f32[1,1,128], index: 7, kind: output, shape index: {2}]
  %8 = xla_tuple %s5, %s6, %s7
  %s9 = sld [smem:[#allocation0]]
  $region46: #{wgan_generator_forward.11} parent=0
    _
  %s11 = ssub.s32 1, %s9
  %s12 = scalar_select 0, %s11, %s9
  // Predicated region
  $region2: #{wgan_generator_forward.11} parent=0 // pred_check
    _
  $region3: #{wgan_generator_forward.11} parent=0 // pred_check_branch
    %14 = sbr.rel (0) target = $region5
  $region4: #{wgan_generator_forward.11} parent=0 // pred_region
    _
  $region5: #{wgan_generator_forward.11} parent=0 // pred_fallthru
    _
  // Predicated region
  $region6: #{wgan_generator_forward.11} parent=0 // pred_check
    _
  $region7: #{wgan_generator_forward.11} parent=0 // pred_check_branch
    %16 = sbr.rel (0) target = $region9
  $region8: #{wgan_generator_forward.11} parent=0 // pred_region
    _
  $region9: #{wgan_generator_forward.11} parent=0 // pred_fallthru
    _
  // Predicated region
  $region10: #{wgan_generator_forward.11} parent=0 // pred_check
    _
  $region11: #{wgan_generator_forward.11} parent=0 // pred_check_branch
    %18 = sbr.rel (0) target = $region13
  $region12: #{wgan_generator_forward.11} parent=0 // pred_region
    _
  $region13: #{wgan_generator_forward.11} parent=0 // pred_fallthru
    _
  // Predicated region
  $region14: #{wgan_generator_forward.11} parent=0 // pred_check
    _
  $region15: #{wgan_generator_forward.11} parent=0 // pred_check_branch
    %20 = sbr.rel (0) target = $region17
  $region16: #{wgan_generator_forward.11} parent=0 // pred_region
    _
  $region17: #{wgan_generator_forward.11} parent=0 // pred_fallthru
    _
  // Predicated region
  $region18: #{wgan_generator_forward.11} parent=0 // pred_check
    _
  $region19: #{wgan_generator_forward.11} parent=0 // pred_check_branch
    %22 = sbr.rel (0) target = $region21
  $region20: #{wgan_generator_forward.11} parent=0 // pred_region
    _
  $region21: #{wgan_generator_forward.11} parent=0 // pred_fallthru
    _
  %v23 = vld [vmem:[%s0] sm:$0xff]
  %v24 = vld [vmem:[%s0 + $0x8] sm:$0xf]
  %v25 = vld [vmem:[%s0 + $0xc] sm:$0xff]
  %v26 = vld [vmem:[%s0 + $0x14] sm:$0xf]
  %v27 = vld [vmem:[%s0 + $0x18] sm:$0xff]
  %v28 = vld [vmem:[%s0 + $0x20] sm:$0xf]
  %v29 = vld [vmem:[%s0 + $0x24] sm:$0xff]
  %v30 = vld [vmem:[%s0 + $0x2c] sm:$0xf]
  %v31 = vld [vmem:[%s0 + $0x30] sm:$0xff]
  %v32 = vld [vmem:[%s0 + $0x38] sm:$0xf]
  %v33 = vld [vmem:[%s0 + $0x3c] sm:$0xff]
  %v34 = vld [vmem:[%s0 + $0x44] sm:$0xf]
  %v35 = vld [vmem:[%s0 + $0x48] sm:$0xff]
  %v36 = vld [vmem:[%s0 + $0x50] sm:$0xf]
  %v37 = vld [vmem:[%s0 + $0x54] sm:$0xff]
  %v38 = vld [vmem:[%s0 + $0x5c] sm:$0xf]
  %v39 = vld [vmem:[%s0 + $0x60] sm:$0xff]
  %v40 = vld [vmem:[%s0 + $0x68] sm:$0xf]
  %v41 = vld [vmem:[%s0 + $0x6c] sm:$0xff]
  %v42 = vld [vmem:[%s0 + $0x74] sm:$0xf]
  %v43 = vld [vmem:[%s0 + $0x78] sm:$0xff]
  %v44 = vld [vmem:[%s0 + $0x80] sm:$0xf]
  %v45 = vld [vmem:[%s0 + $0x84] sm:$0xff]
  %v46 = vld [vmem:[%s0 + $0x8c] sm:$0xf]
  %v47 = vld [vmem:[%s0 + $0x90] sm:$0xff]
  %v48 = vld [vmem:[%s0 + $0x98] sm:$0xf]
  %v49 = vld [vmem:[%s0 + $0x9c] sm:$0xff]
  %v50 = vld [vmem:[%s0 + $0xa4] sm:$0xf]
  %v51 = vld [vmem:[%s0 + $0xa8] sm:$0xff]
  %v52 = vld [vmem:[%s0 + $0xb0] sm:$0xf]
  %v53 = vld [vmem:[%s0 + $0xb4] sm:$0xff]
  %v54 = vld [vmem:[%s0 + $0xbc] sm:$0xf]
  %v55 = vld [vmem:[%s0 + $0xc0] sm:$0xff]
  %v56 = vld [vmem:[%s0 + $0xc8] sm:$0xf]
  %v57 = vld [vmem:[%s0 + $0xcc] sm:$0xff]
  %v58 = vld [vmem:[%s0 + $0xd4] sm:$0xf]
  %v59 = vld [vmem:[%s0 + $0xd8] sm:$0xff]
  %v60 = vld [vmem:[%s0 + $0xe0] sm:$0xf]
  %v61 = vld [vmem:[%s0 + $0xe4] sm:$0xff]
  %v62 = vld [vmem:[%s0 + $0xec] sm:$0xf]
  %v63 = vld [vmem:[%s0 + $0xf0] sm:$0xff]
  %v64 = vld [vmem:[%s0 + $0xf8] sm:$0xf]
  %v65 = vld [vmem:[%s0 + $0xfc] sm:$0xff]
  %v66 = vld [vmem:[%s0 + $0x104] sm:$0xf]
  %v67 = vld [vmem:[%s0 + $0x108] sm:$0xff]
  %v68 = vld [vmem:[%s0 + $0x110] sm:$0xf]
  %v69 = vld [vmem:[%s0 + $0x114] sm:$0xff]
  %v70 = vld [vmem:[%s0 + $0x11c] sm:$0xf]
  %v71 = vld [vmem:[%s0 + $0x120] sm:$0xff]
  %v72 = vld [vmem:[%s0 + $0x128] sm:$0xf]
  %v73 = vld [vmem:[%s0 + $0x12c] sm:$0xff]
  %v74 = vld [vmem:[%s0 + $0x134] sm:$0xf]
  %v75 = vld [vmem:[%s0 + $0x138] sm:$0xff]
  %v76 = vld [vmem:[%s0 + $0x140] sm:$0xf]
  %v77 = vld [vmem:[%s0 + $0x144] sm:$0xff]
  %v78 = vld [vmem:[%s0 + $0x14c] sm:$0xf]
  %v79 = vld [vmem:[%s0 + $0x150] sm:$0xff]
  %v80 = vld [vmem:[%s0 + $0x158] sm:$0xf]
  %v81 = vld [vmem:[%s0 + $0x15c] sm:$0xff]
  %v82 = vld [vmem:[%s0 + $0x164] sm:$0xf]
  %v83 = vld [vmem:[%s0 + $0x168] sm:$0xff]
  %v84 = vld [vmem:[%s0 + $0x170] sm:$0xf]
  %v85 = vld [vmem:[%s0 + $0x174] sm:$0xff]
  %v86 = vld [vmem:[%s0 + $0x17c] sm:$0xf]
  %v87 = vld [vmem:[%s0 + $0x180] sm:$0xff]
  %v88 = vld [vmem:[%s0 + $0x188] sm:$0xf]
  %v89 = vld [vmem:[%s0 + $0x18c] sm:$0xff]
  %v90 = vld [vmem:[%s0 + $0x194] sm:$0xf]
  %v91 = vld [vmem:[%s0 + $0x198] sm:$0xff]
  %v92 = vld [vmem:[%s0 + $0x1a0] sm:$0xf]
  %v93 = vld [vmem:[%s0 + $0x1a4] sm:$0xff]
  %v94 = vld [vmem:[%s0 + $0x1ac] sm:$0xf]
  %v95 = vld [vmem:[%s0 + $0x1b0] sm:$0xff]
  %v96 = vld [vmem:[%s0 + $0x1b8] sm:$0xf]
  %v97 = vld [vmem:[%s0 + $0x1bc] sm:$0xff]
  %v98 = vld [vmem:[%s0 + $0x1c4] sm:$0xf]
  %v99 = vld [vmem:[%s0 + $0x1c8] sm:$0xff]
  %v100 = vld [vmem:[%s0 + $0x1d0] sm:$0xf]
  %v101 = vld [vmem:[%s0 + $0x1d4] sm:$0xff]
  %v102 = vld [vmem:[%s0 + $0x1dc] sm:$0xf]
  %v103 = vld [vmem:[%s0 + $0x1e0] sm:$0xff]
  %v104 = vld [vmem:[%s0 + $0x1e8] sm:$0xf]
  %v105 = vld [vmem:[%s0 + $0x1ec] sm:$0xff]
  %v106 = vld [vmem:[%s0 + $0x1f4] sm:$0xf]
  %v107 = vld [vmem:[%s0 + $0x1f8] sm:$0xff]
  %v108 = vld [vmem:[%s0 + $0x200] sm:$0xf]
  %v109 = vld [vmem:[%s0 + $0x204] sm:$0xff]
  %v110 = vld [vmem:[%s0 + $0x20c] sm:$0xf]
  %v111 = vld [vmem:[%s0 + $0x210] sm:$0xff]
  %v112 = vld [vmem:[%s0 + $0x218] sm:$0xf]
  %v113 = vld [vmem:[%s0 + $0x21c] sm:$0xff]
  %v114 = vld [vmem:[%s0 + $0x224] sm:$0xf]
  %v115 = vld [vmem:[%s0 + $0x228] sm:$0xff]
  %v116 = vld [vmem:[%s0 + $0x230] sm:$0xf]
  %v117 = vld [vmem:[%s0 + $0x234] sm:$0xff]
  %v118 = vld [vmem:[%s0 + $0x23c] sm:$0xf]
  %v119 = vld [vmem:[%s0 + $0x240] sm:$0xff]
  %v120 = vld [vmem:[%s0 + $0x248] sm:$0xf]
  %v121 = vld [vmem:[%s0 + $0x24c] sm:$0xff]
  %v122 = vld [vmem:[%s0 + $0x254] sm:$0xf]
  %v123 = vld [vmem:[%s0 + $0x258] sm:$0xff]
  %v124 = vld [vmem:[%s0 + $0x260] sm:$0xf]
  %v125 = vld [vmem:[%s0 + $0x264] sm:$0xff]
  %v126 = vld [vmem:[%s0 + $0x26c] sm:$0xf]
  %v127 = vld [vmem:[%s0 + $0x270] sm:$0xff]
  %v128 = vld [vmem:[%s0 + $0x278] sm:$0xf]
  %v129 = vld [vmem:[%s0 + $0x27c] sm:$0xff]
  %v130 = vld [vmem:[%s0 + $0x284] sm:$0xf]
  %v131 = vld [vmem:[%s0 + $0x288] sm:$0xff]
  %v132 = vld [vmem:[%s0 + $0x290] sm:$0xf]
  %v133 = vld [vmem:[%s0 + $0x294] sm:$0xff]
  %v134 = vld [vmem:[%s0 + $0x29c] sm:$0xf]
  %v135 = vld [vmem:[%s0 + $0x2a0] sm:$0xff]
  %v136 = vld [vmem:[%s0 + $0x2a8] sm:$0xf]
  %v137 = vld [vmem:[%s0 + $0x2ac] sm:$0xff]
  %v138 = vld [vmem:[%s0 + $0x2b4] sm:$0xf]
  %v139 = vld [vmem:[%s0 + $0x2b8] sm:$0xff]
  %v140 = vld [vmem:[%s0 + $0x2c0] sm:$0xf]
  %v141 = vld [vmem:[%s0 + $0x2c4] sm:$0xff]
  %v142 = vld [vmem:[%s0 + $0x2cc] sm:$0xf]
  %v143 = vld [vmem:[%s0 + $0x2d0] sm:$0xff]
  %v144 = vld [vmem:[%s0 + $0x2d8] sm:$0xf]
  %v145 = vld [vmem:[%s0 + $0x2dc] sm:$0xff]
  %v146 = vld [vmem:[%s0 + $0x2e4] sm:$0xf]
  %v147 = vld [vmem:[%s0 + $0x2e8] sm:$0xff]
  %v148 = vld [vmem:[%s0 + $0x2f0] sm:$0xf]
  %v149 = vld [vmem:[%s0 + $0x2f4] sm:$0xff]
  %v150 = vld [vmem:[%s0 + $0x2fc] sm:$0xf]
  %v151 = vunpack.c.l.bf16 %v23
  %v152 = vunpack.c.h.bf16 %v23
  %v153 = vunpack.c.l.bf16 %v24
  %v154 = vunpack.c.l.bf16 %v25
  %v155 = vunpack.c.h.bf16 %v25
  %v156 = vunpack.c.l.bf16 %v26
  %v157 = vunpack.c.l.bf16 %v27
  %v158 = vunpack.c.h.bf16 %v27
  %v159 = vunpack.c.l.bf16 %v28
  %v160 = vunpack.c.l.bf16 %v29
  %v161 = vunpack.c.h.bf16 %v29
  %v162 = vunpack.c.l.bf16 %v30
  %v163 = vunpack.c.l.bf16 %v31
  %v164 = vunpack.c.h.bf16 %v31
  %v165 = vunpack.c.l.bf16 %v32
  %v166 = vunpack.c.l.bf16 %v33
  %v167 = vunpack.c.h.bf16 %v33
  %v168 = vunpack.c.l.bf16 %v34
  %v169 = vunpack.c.l.bf16 %v35
  %v170 = vunpack.c.h.bf16 %v35
  %v171 = vunpack.c.l.bf16 %v36
  %v172 = vunpack.c.l.bf16 %v37
  %v173 = vunpack.c.h.bf16 %v37
  %v174 = vunpack.c.l.bf16 %v38
  %v175 = vunpack.c.l.bf16 %v39
  %v176 = vunpack.c.h.bf16 %v39
  %v177 = vunpack.c.l.bf16 %v40
  %v178 = vunpack.c.l.bf16 %v41
  %v179 = vunpack.c.h.bf16 %v41
  %v180 = vunpack.c.l.bf16 %v42
  %v181 = vunpack.c.l.bf16 %v43
  %v182 = vunpack.c.h.bf16 %v43
  %v183 = vunpack.c.l.bf16 %v44
  %v184 = vunpack.c.l.bf16 %v45
  %v185 = vunpack.c.h.bf16 %v45
  %v186 = vunpack.c.l.bf16 %v46
  %v187 = vunpack.c.l.bf16 %v47
  %v188 = vunpack.c.h.bf16 %v47
  %v189 = vunpack.c.l.bf16 %v48
  %v190 = vunpack.c.l.bf16 %v49
  %v191 = vunpack.c.h.bf16 %v49
  %v192 = vunpack.c.l.bf16 %v50
  %v193 = vunpack.c.l.bf16 %v51
  %v194 = vunpack.c.h.bf16 %v51
  %v195 = vunpack.c.l.bf16 %v52
  %v196 = vunpack.c.l.bf16 %v53
  %v197 = vunpack.c.h.bf16 %v53
  %v198 = vunpack.c.l.bf16 %v54
  %v199 = vunpack.c.l.bf16 %v55
  %v200 = vunpack.c.h.bf16 %v55
  %v201 = vunpack.c.l.bf16 %v56
  %v202 = vunpack.c.l.bf16 %v57
  %v203 = vunpack.c.h.bf16 %v57
  %v204 = vunpack.c.l.bf16 %v58
  %v205 = vunpack.c.l.bf16 %v59
  %v206 = vunpack.c.h.bf16 %v59
  %v207 = vunpack.c.l.bf16 %v60
  %v208 = vunpack.c.l.bf16 %v61
  %v209 = vunpack.c.h.bf16 %v61
  %v210 = vunpack.c.l.bf16 %v62
  %v211 = vunpack.c.l.bf16 %v63
  %v212 = vunpack.c.h.bf16 %v63
  %v213 = vunpack.c.l.bf16 %v64
  %v214 = vunpack.c.l.bf16 %v65
  %v215 = vunpack.c.h.bf16 %v65
  %v216 = vunpack.c.l.bf16 %v66
  %v217 = vunpack.c.l.bf16 %v67
  %v218 = vunpack.c.h.bf16 %v67
  %v219 = vunpack.c.l.bf16 %v68
  %v220 = vunpack.c.l.bf16 %v69
  %v221 = vunpack.c.h.bf16 %v69
  %v222 = vunpack.c.l.bf16 %v70
  %v223 = vunpack.c.l.bf16 %v71
  %v224 = vunpack.c.h.bf16 %v71
  %v225 = vunpack.c.l.bf16 %v72
  %v226 = vunpack.c.l.bf16 %v73
  %v227 = vunpack.c.h.bf16 %v73
  %v228 = vunpack.c.l.bf16 %v74
  %v229 = vunpack.c.l.bf16 %v75
  %v230 = vunpack.c.h.bf16 %v75
  %v231 = vunpack.c.l.bf16 %v76
  %v232 = vunpack.c.l.bf16 %v77
  %v233 = vunpack.c.h.bf16 %v77
  %v234 = vunpack.c.l.bf16 %v78
  %v235 = vunpack.c.l.bf16 %v79
  %v236 = vunpack.c.h.bf16 %v79
  %v237 = vunpack.c.l.bf16 %v80
  %v238 = vunpack.c.l.bf16 %v81
  %v239 = vunpack.c.h.bf16 %v81
  %v240 = vunpack.c.l.bf16 %v82
  %v241 = vunpack.c.l.bf16 %v83
  %v242 = vunpack.c.h.bf16 %v83
  %v243 = vunpack.c.l.bf16 %v84
  %v244 = vunpack.c.l.bf16 %v85
  %v245 = vunpack.c.h.bf16 %v85
  %v246 = vunpack.c.l.bf16 %v86
  %v247 = vunpack.c.l.bf16 %v87
  %v248 = vunpack.c.h.bf16 %v87
  %v249 = vunpack.c.l.bf16 %v88
  %v250 = vunpack.c.l.bf16 %v89
  %v251 = vunpack.c.h.bf16 %v89
  %v252 = vunpack.c.l.bf16 %v90
  %v253 = vunpack.c.l.bf16 %v91
  %v254 = vunpack.c.h.bf16 %v91
  %v255 = vunpack.c.l.bf16 %v92
  %v256 = vunpack.c.l.bf16 %v93
  %v257 = vunpack.c.h.bf16 %v93
  %v258 = vunpack.c.l.bf16 %v94
  %v259 = vunpack.c.l.bf16 %v95
  %v260 = vunpack.c.h.bf16 %v95
  %v261 = vunpack.c.l.bf16 %v96
  %v262 = vunpack.c.l.bf16 %v97
  %v263 = vunpack.c.h.bf16 %v97
  %v264 = vunpack.c.l.bf16 %v98
  %v265 = vunpack.c.l.bf16 %v99
  %v266 = vunpack.c.h.bf16 %v99
  %v267 = vunpack.c.l.bf16 %v100
  %v268 = vunpack.c.l.bf16 %v101
  %v269 = vunpack.c.h.bf16 %v101
  %v270 = vunpack.c.l.bf16 %v102
  %v271 = vunpack.c.l.bf16 %v103
  %v272 = vunpack.c.h.bf16 %v103
  %v273 = vunpack.c.l.bf16 %v104
  %v274 = vunpack.c.l.bf16 %v105
  %v275 = vunpack.c.h.bf16 %v105
  %v276 = vunpack.c.l.bf16 %v106
  %v277 = vunpack.c.l.bf16 %v107
  %v278 = vunpack.c.h.bf16 %v107
  %v279 = vunpack.c.l.bf16 %v108
  %v280 = vunpack.c.l.bf16 %v109
  %v281 = vunpack.c.h.bf16 %v109
  %v282 = vunpack.c.l.bf16 %v110
  %v283 = vunpack.c.l.bf16 %v111
  %v284 = vunpack.c.h.bf16 %v111
  %v285 = vunpack.c.l.bf16 %v112
  %v286 = vunpack.c.l.bf16 %v113
  %v287 = vunpack.c.h.bf16 %v113
  %v288 = vunpack.c.l.bf16 %v114
  %v289 = vunpack.c.l.bf16 %v115
  %v290 = vunpack.c.h.bf16 %v115
  %v291 = vunpack.c.l.bf16 %v116
  %v292 = vunpack.c.l.bf16 %v117
  %v293 = vunpack.c.h.bf16 %v117
  %v294 = vunpack.c.l.bf16 %v118
  %v295 = vunpack.c.l.bf16 %v119
  %v296 = vunpack.c.h.bf16 %v119
  %v297 = vunpack.c.l.bf16 %v120
  %v298 = vunpack.c.l.bf16 %v121
  %v299 = vunpack.c.h.bf16 %v121
  %v300 = vunpack.c.l.bf16 %v122
  %v301 = vunpack.c.l.bf16 %v123
  %v302 = vunpack.c.h.bf16 %v123
  %v303 = vunpack.c.l.bf16 %v124
  %v304 = vunpack.c.l.bf16 %v125
  %v305 = vunpack.c.h.bf16 %v125
  %v306 = vunpack.c.l.bf16 %v126
  %v307 = vunpack.c.l.bf16 %v127
  %v308 = vunpack.c.h.bf16 %v127
  %v309 = vunpack.c.l.bf16 %v128
  %v310 = vunpack.c.l.bf16 %v129
  %v311 = vunpack.c.h.bf16 %v129
  %v312 = vunpack.c.l.bf16 %v130
  %v313 = vunpack.c.l.bf16 %v131
  %v314 = vunpack.c.h.bf16 %v131
  %v315 = vunpack.c.l.bf16 %v132
  %v316 = vunpack.c.l.bf16 %v133
  %v317 = vunpack.c.h.bf16 %v133
  %v318 = vunpack.c.l.bf16 %v134
  %v319 = vunpack.c.l.bf16 %v135
  %v320 = vunpack.c.h.bf16 %v135
  %v321 = vunpack.c.l.bf16 %v136
  %v322 = vunpack.c.l.bf16 %v137
  %v323 = vunpack.c.h.bf16 %v137
  %v324 = vunpack.c.l.bf16 %v138
  %v325 = vunpack.c.l.bf16 %v139
  %v326 = vunpack.c.h.bf16 %v139
  %v327 = vunpack.c.l.bf16 %v140
  %v328 = vunpack.c.l.bf16 %v141
  %v329 = vunpack.c.h.bf16 %v141
  %v330 = vunpack.c.l.bf16 %v142
  %v331 = vunpack.c.l.bf16 %v143
  %v332 = vunpack.c.h.bf16 %v143
  %v333 = vunpack.c.l.bf16 %v144
  %v334 = vunpack.c.l.bf16 %v145
  %v335 = vunpack.c.h.bf16 %v145
  %v336 = vunpack.c.l.bf16 %v146
  %v337 = vunpack.c.l.bf16 %v147
  %v338 = vunpack.c.h.bf16 %v147
  %v339 = vunpack.c.l.bf16 %v148
  %v340 = vunpack.c.l.bf16 %v149
  %v341 = vunpack.c.h.bf16 %v149
  %v342 = vunpack.c.l.bf16 %v150
  %v343 = vld [vmem:[%s2] sm:$0x7]
  %v345 = vperm.slane %v343, 0
  %v346 = vperm.slane %v343, 1
  %v347 = vperm.slane %v343, 2
  %v351 = vmul.f32 %v151, %v345
  %v352 = vmul.f32 %v152, %v346
  %v353 = vmul.f32 %v153, %v347
  %v354 = vmul.f32 %v154, %v345
  %v355 = vmul.f32 %v155, %v346
  %v356 = vmul.f32 %v156, %v347
  %v357 = vmul.f32 %v157, %v345
  %v358 = vmul.f32 %v158, %v346
  %v359 = vmul.f32 %v159, %v347
  %v360 = vmul.f32 %v160, %v345
  %v361 = vmul.f32 %v161, %v346
  %v362 = vmul.f32 %v162, %v347
  %v363 = vmul.f32 %v163, %v345
  %v364 = vmul.f32 %v164, %v346
  %v365 = vmul.f32 %v165, %v347
  %v366 = vmul.f32 %v166, %v345
  %v367 = vmul.f32 %v167, %v346
  %v368 = vmul.f32 %v168, %v347
  %v369 = vmul.f32 %v169, %v345
  %v370 = vmul.f32 %v170, %v346
  %v371 = vmul.f32 %v171, %v347
  %v372 = vmul.f32 %v172, %v345
  %v373 = vmul.f32 %v173, %v346
  %v374 = vmul.f32 %v174, %v347
  %v375 = vmul.f32 %v175, %v345
  %v376 = vmul.f32 %v176, %v346
  %v377 = vmul.f32 %v177, %v347
  %v378 = vmul.f32 %v178, %v345
  %v379 = vmul.f32 %v179, %v346
  %v380 = vmul.f32 %v180, %v347
  %v381 = vmul.f32 %v181, %v345
  %v382 = vmul.f32 %v182, %v346
  %v383 = vmul.f32 %v183, %v347
  %v384 = vmul.f32 %v184, %v345
  %v385 = vmul.f32 %v185, %v346
  %v386 = vmul.f32 %v186, %v347
  %v387 = vmul.f32 %v187, %v345
  %v388 = vmul.f32 %v188, %v346
  %v389 = vmul.f32 %v189, %v347
  %v390 = vmul.f32 %v190, %v345
  %v391 = vmul.f32 %v191, %v346
  %v392 = vmul.f32 %v192, %v347
  %v393 = vmul.f32 %v193, %v345
  %v394 = vmul.f32 %v194, %v346
  %v395 = vmul.f32 %v195, %v347
  %v396 = vmul.f32 %v196, %v345
  %v397 = vmul.f32 %v197, %v346
  %v398 = vmul.f32 %v198, %v347
  %v399 = vmul.f32 %v199, %v345
  %v400 = vmul.f32 %v200, %v346
  %v401 = vmul.f32 %v201, %v347
  %v402 = vmul.f32 %v202, %v345
  %v403 = vmul.f32 %v203, %v346
  %v404 = vmul.f32 %v204, %v347
  %v405 = vmul.f32 %v205, %v345
  %v406 = vmul.f32 %v206, %v346
  %v407 = vmul.f32 %v207, %v347
  %v408 = vmul.f32 %v208, %v345
  %v409 = vmul.f32 %v209, %v346
  %v410 = vmul.f32 %v210, %v347
  %v411 = vmul.f32 %v211, %v345
  %v412 = vmul.f32 %v212, %v346
  %v413 = vmul.f32 %v213, %v347
  %v414 = vmul.f32 %v214, %v345
  %v415 = vmul.f32 %v215, %v346
  %v416 = vmul.f32 %v216, %v347
  %v417 = vmul.f32 %v217, %v345
  %v418 = vmul.f32 %v218, %v346
  %v419 = vmul.f32 %v219, %v347
  %v420 = vmul.f32 %v220, %v345
  %v421 = vmul.f32 %v221, %v346
  %v422 = vmul.f32 %v222, %v347
  %v423 = vmul.f32 %v223, %v345
  %v424 = vmul.f32 %v224, %v346
  %v425 = vmul.f32 %v225, %v347
  %v426 = vmul.f32 %v226, %v345
  %v427 = vmul.f32 %v227, %v346
  %v428 = vmul.f32 %v228, %v347
  %v429 = vmul.f32 %v229, %v345
  %v430 = vmul.f32 %v230, %v346
  %v431 = vmul.f32 %v231, %v347
  %v432 = vmul.f32 %v232, %v345
  %v433 = vmul.f32 %v233, %v346
  %v434 = vmul.f32 %v234, %v347
  %v435 = vmul.f32 %v235, %v345
  %v436 = vmul.f32 %v236, %v346
  %v437 = vmul.f32 %v237, %v347
  %v438 = vmul.f32 %v238, %v345
  %v439 = vmul.f32 %v239, %v346
  %v440 = vmul.f32 %v240, %v347
  %v441 = vmul.f32 %v241, %v345
  %v442 = vmul.f32 %v242, %v346
  %v443 = vmul.f32 %v243, %v347
  %v444 = vmul.f32 %v244, %v345
  %v445 = vmul.f32 %v245, %v346
  %v446 = vmul.f32 %v246, %v347
  %v447 = vmul.f32 %v247, %v345
  %v448 = vmul.f32 %v248, %v346
  %v449 = vmul.f32 %v249, %v347
  %v450 = vmul.f32 %v250, %v345
  %v451 = vmul.f32 %v251, %v346
  %v452 = vmul.f32 %v252, %v347
  %v453 = vmul.f32 %v253, %v345
  %v454 = vmul.f32 %v254, %v346
  %v455 = vmul.f32 %v255, %v347
  %v456 = vmul.f32 %v256, %v345
  %v457 = vmul.f32 %v257, %v346
  %v458 = vmul.f32 %v258, %v347
  %v459 = vmul.f32 %v259, %v345
  %v460 = vmul.f32 %v260, %v346
  %v461 = vmul.f32 %v261, %v347
  %v462 = vmul.f32 %v262, %v345
  %v463 = vmul.f32 %v263, %v346
  %v464 = vmul.f32 %v264, %v347
  %v465 = vmul.f32 %v265, %v345
  %v466 = vmul.f32 %v266, %v346
  %v467 = vmul.f32 %v267, %v347
  %v468 = vmul.f32 %v268, %v345
  %v469 = vmul.f32 %v269, %v346
  %v470 = vmul.f32 %v270, %v347
  %v471 = vmul.f32 %v271, %v345
  %v472 = vmul.f32 %v272, %v346
  %v473 = vmul.f32 %v273, %v347
  %v474 = vmul.f32 %v274, %v345
  %v475 = vmul.f32 %v275, %v346
  %v476 = vmul.f32 %v276, %v347
  %v477 = vmul.f32 %v277, %v345
  %v478 = vmul.f32 %v278, %v346
  %v479 = vmul.f32 %v279, %v347
  %v480 = vmul.f32 %v280, %v345
  %v481 = vmul.f32 %v281, %v346
  %v482 = vmul.f32 %v282, %v347
  %v483 = vmul.f32 %v283, %v345
  %v484 = vmul.f32 %v284, %v346
  %v485 = vmul.f32 %v285, %v347
  %v486 = vmul.f32 %v286, %v345
  %v487 = vmul.f32 %v287, %v346
  %v488 = vmul.f32 %v288, %v347
  %v489 = vmul.f32 %v289, %v345
  %v490 = vmul.f32 %v290, %v346
  %v491 = vmul.f32 %v291, %v347
  %v492 = vmul.f32 %v292, %v345
  %v493 = vmul.f32 %v293, %v346
  %v494 = vmul.f32 %v294, %v347
  %v495 = vmul.f32 %v295, %v345
  %v496 = vmul.f32 %v296, %v346
  %v497 = vmul.f32 %v297, %v347
  %v498 = vmul.f32 %v298, %v345
  %v499 = vmul.f32 %v299, %v346
  %v500 = vmul.f32 %v300, %v347
  %v501 = vmul.f32 %v301, %v345
  %v502 = vmul.f32 %v302, %v346
  %v503 = vmul.f32 %v303, %v347
  %v504 = vmul.f32 %v304, %v345
  %v505 = vmul.f32 %v305, %v346
  %v506 = vmul.f32 %v306, %v347
  %v507 = vmul.f32 %v307, %v345
  %v508 = vmul.f32 %v308, %v346
  %v509 = vmul.f32 %v309, %v347
  %v510 = vmul.f32 %v310, %v345
  %v511 = vmul.f32 %v311, %v346
  %v512 = vmul.f32 %v312, %v347
  %v513 = vmul.f32 %v313, %v345
  %v514 = vmul.f32 %v314, %v346
  %v515 = vmul.f32 %v315, %v347
  %v516 = vmul.f32 %v316, %v345
  %v517 = vmul.f32 %v317, %v346
  %v518 = vmul.f32 %v318, %v347
  %v519 = vmul.f32 %v319, %v345
  %v520 = vmul.f32 %v320, %v346
  %v521 = vmul.f32 %v321, %v347
  %v522 = vmul.f32 %v322, %v345
  %v523 = vmul.f32 %v323, %v346
  %v524 = vmul.f32 %v324, %v347
  %v525 = vmul.f32 %v325, %v345
  %v526 = vmul.f32 %v326, %v346
  %v527 = vmul.f32 %v327, %v347
  %v528 = vmul.f32 %v328, %v345
  %v529 = vmul.f32 %v329, %v346
  %v530 = vmul.f32 %v330, %v347
  %v531 = vmul.f32 %v331, %v345
  %v532 = vmul.f32 %v332, %v346
  %v533 = vmul.f32 %v333, %v347
  %v534 = vmul.f32 %v334, %v345
  %v535 = vmul.f32 %v335, %v346
  %v536 = vmul.f32 %v336, %v347
  %v537 = vmul.f32 %v337, %v345
  %v538 = vmul.f32 %v338, %v346
  %v539 = vmul.f32 %v339, %v347
  %v540 = vmul.f32 %v340, %v345
  %v541 = vmul.f32 %v341, %v346
  %v542 = vmul.f32 %v342, %v347
  %v543 = vld [vmem:[%s3] sm:$0x7]
  %v545 = vperm.slane %v543, 0
  %v546 = vperm.slane %v543, 1
  %v547 = vperm.slane %v543, 2
  %v551 = vadd.f32 %v351, %v545
  %v552 = vadd.f32 %v352, %v546
  %v553 = vadd.f32 %v353, %v547
  %v554 = vadd.f32 %v354, %v545
  %v555 = vadd.f32 %v355, %v546
  %v556 = vadd.f32 %v356, %v547
  %v557 = vadd.f32 %v357, %v545
  %v558 = vadd.f32 %v358, %v546
  %v559 = vadd.f32 %v359, %v547
  %v560 = vadd.f32 %v360, %v545
  %v561 = vadd.f32 %v361, %v546
  %v562 = vadd.f32 %v362, %v547
  %v563 = vadd.f32 %v363, %v545
  %v564 = vadd.f32 %v364, %v546
  %v565 = vadd.f32 %v365, %v547
  %v566 = vadd.f32 %v366, %v545
  %v567 = vadd.f32 %v367, %v546
  %v568 = vadd.f32 %v368, %v547
  %v569 = vadd.f32 %v369, %v545
  %v570 = vadd.f32 %v370, %v546
  %v571 = vadd.f32 %v371, %v547
  %v572 = vadd.f32 %v372, %v545
  %v573 = vadd.f32 %v373, %v546
  %v574 = vadd.f32 %v374, %v547
  %v575 = vadd.f32 %v375, %v545
  %v576 = vadd.f32 %v376, %v546
  %v577 = vadd.f32 %v377, %v547
  %v578 = vadd.f32 %v378, %v545
  %v579 = vadd.f32 %v379, %v546
  %v580 = vadd.f32 %v380, %v547
  %v581 = vadd.f32 %v381, %v545
  %v582 = vadd.f32 %v382, %v546
  %v583 = vadd.f32 %v383, %v547
  %v584 = vadd.f32 %v384, %v545
  %v585 = vadd.f32 %v385, %v546
  %v586 = vadd.f32 %v386, %v547
  %v587 = vadd.f32 %v387, %v545
  %v588 = vadd.f32 %v388, %v546
  %v589 = vadd.f32 %v389, %v547
  %v590 = vadd.f32 %v390, %v545
  %v591 = vadd.f32 %v391, %v546
  %v592 = vadd.f32 %v392, %v547
  %v593 = vadd.f32 %v393, %v545
  %v594 = vadd.f32 %v394, %v546
  %v595 = vadd.f32 %v395, %v547
  %v596 = vadd.f32 %v396, %v545
  %v597 = vadd.f32 %v397, %v546
  %v598 = vadd.f32 %v398, %v547
  %v599 = vadd.f32 %v399, %v545
  %v600 = vadd.f32 %v400, %v546
  %v601 = vadd.f32 %v401, %v547
  %v602 = vadd.f32 %v402, %v545
  %v603 = vadd.f32 %v403, %v546
  %v604 = vadd.f32 %v404, %v547
  %v605 = vadd.f32 %v405, %v545
  %v606 = vadd.f32 %v406, %v546
  %v607 = vadd.f32 %v407, %v547
  %v608 = vadd.f32 %v408, %v545
  %v609 = vadd.f32 %v409, %v546
  %v610 = vadd.f32 %v410, %v547
  %v611 = vadd.f32 %v411, %v545
  %v612 = vadd.f32 %v412, %v546
  %v613 = vadd.f32 %v413, %v547
  %v614 = vadd.f32 %v414, %v545
  %v615 = vadd.f32 %v415, %v546
  %v616 = vadd.f32 %v416, %v547
  %v617 = vadd.f32 %v417, %v545
  %v618 = vadd.f32 %v418, %v546
  %v619 = vadd.f32 %v419, %v547
  %v620 = vadd.f32 %v420, %v545
  %v621 = vadd.f32 %v421, %v546
  %v622 = vadd.f32 %v422, %v547
  %v623 = vadd.f32 %v423, %v545
  %v624 = vadd.f32 %v424, %v546
  %v625 = vadd.f32 %v425, %v547
  %v626 = vadd.f32 %v426, %v545
  %v627 = vadd.f32 %v427, %v546
  %v628 = vadd.f32 %v428, %v547
  %v629 = vadd.f32 %v429, %v545
  %v630 = vadd.f32 %v430, %v546
  %v631 = vadd.f32 %v431, %v547
  %v632 = vadd.f32 %v432, %v545
  %v633 = vadd.f32 %v433, %v546
  %v634 = vadd.f32 %v434, %v547
  %v635 = vadd.f32 %v435, %v545
  %v636 = vadd.f32 %v436, %v546
  %v637 = vadd.f32 %v437, %v547
  %v638 = vadd.f32 %v438, %v545
  %v639 = vadd.f32 %v439, %v546
  %v640 = vadd.f32 %v440, %v547
  %v641 = vadd.f32 %v441, %v545
  %v642 = vadd.f32 %v442, %v546
  %v643 = vadd.f32 %v443, %v547
  %v644 = vadd.f32 %v444, %v545
  %v645 = vadd.f32 %v445, %v546
  %v646 = vadd.f32 %v446, %v547
  %v647 = vadd.f32 %v447, %v545
  %v648 = vadd.f32 %v448, %v546
  %v649 = vadd.f32 %v449, %v547
  %v650 = vadd.f32 %v450, %v545
  %v651 = vadd.f32 %v451, %v546
  %v652 = vadd.f32 %v452, %v547
  %v653 = vadd.f32 %v453, %v545
  %v654 = vadd.f32 %v454, %v546
  %v655 = vadd.f32 %v455, %v547
  %v656 = vadd.f32 %v456, %v545
  %v657 = vadd.f32 %v457, %v546
  %v658 = vadd.f32 %v458, %v547
  %v659 = vadd.f32 %v459, %v545
  %v660 = vadd.f32 %v460, %v546
  %v661 = vadd.f32 %v461, %v547
  %v662 = vadd.f32 %v462, %v545
  %v663 = vadd.f32 %v463, %v546
  %v664 = vadd.f32 %v464, %v547
  %v665 = vadd.f32 %v465, %v545
  %v666 = vadd.f32 %v466, %v546
  %v667 = vadd.f32 %v467, %v547
  %v668 = vadd.f32 %v468, %v545
  %v669 = vadd.f32 %v469, %v546
  %v670 = vadd.f32 %v470, %v547
  %v671 = vadd.f32 %v471, %v545
  %v672 = vadd.f32 %v472, %v546
  %v673 = vadd.f32 %v473, %v547
  %v674 = vadd.f32 %v474, %v545
  %v675 = vadd.f32 %v475, %v546
  %v676 = vadd.f32 %v476, %v547
  %v677 = vadd.f32 %v477, %v545
  %v678 = vadd.f32 %v478, %v546
  %v679 = vadd.f32 %v479, %v547
  %v680 = vadd.f32 %v480, %v545
  %v681 = vadd.f32 %v481, %v546
  %v682 = vadd.f32 %v482, %v547
  %v683 = vadd.f32 %v483, %v545
  %v684 = vadd.f32 %v484, %v546
  %v685 = vadd.f32 %v485, %v547
  %v686 = vadd.f32 %v486, %v545
  %v687 = vadd.f32 %v487, %v546
  %v688 = vadd.f32 %v488, %v547
  %v689 = vadd.f32 %v489, %v545
  %v690 = vadd.f32 %v490, %v546
  %v691 = vadd.f32 %v491, %v547
  %v692 = vadd.f32 %v492, %v545
  %v693 = vadd.f32 %v493, %v546
  %v694 = vadd.f32 %v494, %v547
  %v695 = vadd.f32 %v495, %v545
  %v696 = vadd.f32 %v496, %v546
  %v697 = vadd.f32 %v497, %v547
  %v698 = vadd.f32 %v498, %v545
  %v699 = vadd.f32 %v499, %v546
  %v700 = vadd.f32 %v500, %v547
  %v701 = vadd.f32 %v501, %v545
  %v702 = vadd.f32 %v502, %v546
  %v703 = vadd.f32 %v503, %v547
  %v704 = vadd.f32 %v504, %v545
  %v705 = vadd.f32 %v505, %v546
  %v706 = vadd.f32 %v506, %v547
  %v707 = vadd.f32 %v507, %v545
  %v708 = vadd.f32 %v508, %v546
  %v709 = vadd.f32 %v509, %v547
  %v710 = vadd.f32 %v510, %v545
  %v711 = vadd.f32 %v511, %v546
  %v712 = vadd.f32 %v512, %v547
  %v713 = vadd.f32 %v513, %v545
  %v714 = vadd.f32 %v514, %v546
  %v715 = vadd.f32 %v515, %v547
  %v716 = vadd.f32 %v516, %v545
  %v717 = vadd.f32 %v517, %v546
  %v718 = vadd.f32 %v518, %v547
  %v719 = vadd.f32 %v519, %v545
  %v720 = vadd.f32 %v520, %v546
  %v721 = vadd.f32 %v521, %v547
  %v722 = vadd.f32 %v522, %v545
  %v723 = vadd.f32 %v523, %v546
  %v724 = vadd.f32 %v524, %v547
  %v725 = vadd.f32 %v525, %v545
  %v726 = vadd.f32 %v526, %v546
  %v727 = vadd.f32 %v527, %v547
  %v728 = vadd.f32 %v528, %v545
  %v729 = vadd.f32 %v529, %v546
  %v730 = vadd.f32 %v530, %v547
  %v731 = vadd.f32 %v531, %v545
  %v732 = vadd.f32 %v532, %v546
  %v733 = vadd.f32 %v533, %v547
  %v734 = vadd.f32 %v534, %v545
  %v735 = vadd.f32 %v535, %v546
  %v736 = vadd.f32 %v536, %v547
  %v737 = vadd.f32 %v537, %v545
  %v738 = vadd.f32 %v538, %v546
  %v739 = vadd.f32 %v539, %v547
  %v740 = vadd.f32 %v540, %v545
  %v741 = vadd.f32 %v541, %v546
  %v742 = vadd.f32 %v542, %v547
  %vm743 = vcmp.ge.f32.partialorder %v551, 0.0
  %vm744 = vcmp.ge.f32.partialorder %v552, 0.0
  %vm745 = vcmp.ge.f32.partialorder %v553, 0.0
  %vm746 = vcmp.ge.f32.partialorder %v554, 0.0
  %vm747 = vcmp.ge.f32.partialorder %v555, 0.0
  %vm748 = vcmp.ge.f32.partialorder %v556, 0.0
  %vm749 = vcmp.ge.f32.partialorder %v557, 0.0
  %vm750 = vcmp.ge.f32.partialorder %v558, 0.0
  %vm751 = vcmp.ge.f32.partialorder %v559, 0.0
  %vm752 = vcmp.ge.f32.partialorder %v560, 0.0
  %vm753 = vcmp.ge.f32.partialorder %v561, 0.0
  %vm754 = vcmp.ge.f32.partialorder %v562, 0.0
  %vm755 = vcmp.ge.f32.partialorder %v563, 0.0
  %vm756 = vcmp.ge.f32.partialorder %v564, 0.0
  %vm757 = vcmp.ge.f32.partialorder %v565, 0.0
  %vm758 = vcmp.ge.f32.partialorder %v566, 0.0
  %vm759 = vcmp.ge.f32.partialorder %v567, 0.0
  %vm760 = vcmp.ge.f32.partialorder %v568, 0.0
  %vm761 = vcmp.ge.f32.partialorder %v569, 0.0
  %vm762 = vcmp.ge.f32.partialorder %v570, 0.0
  %vm763 = vcmp.ge.f32.partialorder %v571, 0.0
  %vm764 = vcmp.ge.f32.partialorder %v572, 0.0
  %vm765 = vcmp.ge.f32.partialorder %v573, 0.0
  %vm766 = vcmp.ge.f32.partialorder %v574, 0.0
  %vm767 = vcmp.ge.f32.partialorder %v575, 0.0
  %vm768 = vcmp.ge.f32.partialorder %v576, 0.0
  %vm769 = vcmp.ge.f32.partialorder %v577, 0.0
  %vm770 = vcmp.ge.f32.partialorder %v578, 0.0
  %vm771 = vcmp.ge.f32.partialorder %v579, 0.0
  %vm772 = vcmp.ge.f32.partialorder %v580, 0.0
  %vm773 = vcmp.ge.f32.partialorder %v581, 0.0
  %vm774 = vcmp.ge.f32.partialorder %v582, 0.0
  %vm775 = vcmp.ge.f32.partialorder %v583, 0.0
  %vm776 = vcmp.ge.f32.partialorder %v584, 0.0
  %vm777 = vcmp.ge.f32.partialorder %v585, 0.0
  %vm778 = vcmp.ge.f32.partialorder %v586, 0.0
  %vm779 = vcmp.ge.f32.partialorder %v587, 0.0
  %vm780 = vcmp.ge.f32.partialorder %v588, 0.0
  %vm781 = vcmp.ge.f32.partialorder %v589, 0.0
  %vm782 = vcmp.ge.f32.partialorder %v590, 0.0
  %vm783 = vcmp.ge.f32.partialorder %v591, 0.0
  %vm784 = vcmp.ge.f32.partialorder %v592, 0.0
  %vm785 = vcmp.ge.f32.partialorder %v593, 0.0
  %vm786 = vcmp.ge.f32.partialorder %v594, 0.0
  %vm787 = vcmp.ge.f32.partialorder %v595, 0.0
  %vm788 = vcmp.ge.f32.partialorder %v596, 0.0
  %vm789 = vcmp.ge.f32.partialorder %v597, 0.0
  %vm790 = vcmp.ge.f32.partialorder %v598, 0.0
  %vm791 = vcmp.ge.f32.partialorder %v599, 0.0
  %vm792 = vcmp.ge.f32.partialorder %v600, 0.0
  %vm793 = vcmp.ge.f32.partialorder %v601, 0.0
  %vm794 = vcmp.ge.f32.partialorder %v602, 0.0
  %vm795 = vcmp.ge.f32.partialorder %v603, 0.0
  %vm796 = vcmp.ge.f32.partialorder %v604, 0.0
  %vm797 = vcmp.ge.f32.partialorder %v605, 0.0
  %vm798 = vcmp.ge.f32.partialorder %v606, 0.0
  %vm799 = vcmp.ge.f32.partialorder %v607, 0.0
  %vm800 = vcmp.ge.f32.partialorder %v608, 0.0
  %vm801 = vcmp.ge.f32.partialorder %v609, 0.0
  %vm802 = vcmp.ge.f32.partialorder %v610, 0.0
  %vm803 = vcmp.ge.f32.partialorder %v611, 0.0
  %vm804 = vcmp.ge.f32.partialorder %v612, 0.0
  %vm805 = vcmp.ge.f32.partialorder %v613, 0.0
  %vm806 = vcmp.ge.f32.partialorder %v614, 0.0
  %vm807 = vcmp.ge.f32.partialorder %v615, 0.0
  %vm808 = vcmp.ge.f32.partialorder %v616, 0.0
  %vm809 = vcmp.ge.f32.partialorder %v617, 0.0
  %vm810 = vcmp.ge.f32.partialorder %v618, 0.0
  %vm811 = vcmp.ge.f32.partialorder %v619, 0.0
  %vm812 = vcmp.ge.f32.partialorder %v620, 0.0
  %vm813 = vcmp.ge.f32.partialorder %v621, 0.0
  %vm814 = vcmp.ge.f32.partialorder %v622, 0.0
  %vm815 = vcmp.ge.f32.partialorder %v623, 0.0
  %vm816 = vcmp.ge.f32.partialorder %v624, 0.0
  %vm817 = vcmp.ge.f32.partialorder %v625, 0.0
  %vm818 = vcmp.ge.f32.partialorder %v626, 0.0
  %vm819 = vcmp.ge.f32.partialorder %v627, 0.0
  %vm820 = vcmp.ge.f32.partialorder %v628, 0.0
  %vm821 = vcmp.ge.f32.partialorder %v629, 0.0
  %vm822 = vcmp.ge.f32.partialorder %v630, 0.0
  %vm823 = vcmp.ge.f32.partialorder %v631, 0.0
  %vm824 = vcmp.ge.f32.partialorder %v632, 0.0
  %vm825 = vcmp.ge.f32.partialorder %v633, 0.0
  %vm826 = vcmp.ge.f32.partialorder %v634, 0.0
  %vm827 = vcmp.ge.f32.partialorder %v635, 0.0
  %vm828 = vcmp.ge.f32.partialorder %v636, 0.0
  %vm829 = vcmp.ge.f32.partialorder %v637, 0.0
  %vm830 = vcmp.ge.f32.partialorder %v638, 0.0
  %vm831 = vcmp.ge.f32.partialorder %v639, 0.0
  %vm832 = vcmp.ge.f32.partialorder %v640, 0.0
  %vm833 = vcmp.ge.f32.partialorder %v641, 0.0
  %vm834 = vcmp.ge.f32.partialorder %v642, 0.0
  %vm835 = vcmp.ge.f32.partialorder %v643, 0.0
  %vm836 = vcmp.ge.f32.partialorder %v644, 0.0
  %vm837 = vcmp.ge.f32.partialorder %v645, 0.0
  %vm838 = vcmp.ge.f32.partialorder %v646, 0.0
  %vm839 = vcmp.ge.f32.partialorder %v647, 0.0
  %vm840 = vcmp.ge.f32.partialorder %v648, 0.0
  %vm841 = vcmp.ge.f32.partialorder %v649, 0.0
  %vm842 = vcmp.ge.f32.partialorder %v650, 0.0
  %vm843 = vcmp.ge.f32.partialorder %v651, 0.0
  %vm844 = vcmp.ge.f32.partialorder %v652, 0.0
  %vm845 = vcmp.ge.f32.partialorder %v653, 0.0
  %vm846 = vcmp.ge.f32.partialorder %v654, 0.0
  %vm847 = vcmp.ge.f32.partialorder %v655, 0.0
  %vm848 = vcmp.ge.f32.partialorder %v656, 0.0
  %vm849 = vcmp.ge.f32.partialorder %v657, 0.0
  %vm850 = vcmp.ge.f32.partialorder %v658, 0.0
  %vm851 = vcmp.ge.f32.partialorder %v659, 0.0
  %vm852 = vcmp.ge.f32.partialorder %v660, 0.0
  %vm853 = vcmp.ge.f32.partialorder %v661, 0.0
  %vm854 = vcmp.ge.f32.partialorder %v662, 0.0
  %vm855 = vcmp.ge.f32.partialorder %v663, 0.0
  %vm856 = vcmp.ge.f32.partialorder %v664, 0.0
  %vm857 = vcmp.ge.f32.partialorder %v665, 0.0
  %vm858 = vcmp.ge.f32.partialorder %v666, 0.0
  %vm859 = vcmp.ge.f32.partialorder %v667, 0.0
  %vm860 = vcmp.ge.f32.partialorder %v668, 0.0
  %vm861 = vcmp.ge.f32.partialorder %v669, 0.0
  %vm862 = vcmp.ge.f32.partialorder %v670, 0.0
  %vm863 = vcmp.ge.f32.partialorder %v671, 0.0
  %vm864 = vcmp.ge.f32.partialorder %v672, 0.0
  %vm865 = vcmp.ge.f32.partialorder %v673, 0.0
  %vm866 = vcmp.ge.f32.partialorder %v674, 0.0
  %vm867 = vcmp.ge.f32.partialorder %v675, 0.0
  %vm868 = vcmp.ge.f32.partialorder %v676, 0.0
  %vm869 = vcmp.ge.f32.partialorder %v677, 0.0
  %vm870 = vcmp.ge.f32.partialorder %v678, 0.0
  %vm871 = vcmp.ge.f32.partialorder %v679, 0.0
  %vm872 = vcmp.ge.f32.partialorder %v680, 0.0
  %vm873 = vcmp.ge.f32.partialorder %v681, 0.0
  %vm874 = vcmp.ge.f32.partialorder %v682, 0.0
  %vm875 = vcmp.ge.f32.partialorder %v683, 0.0
  %vm876 = vcmp.ge.f32.partialorder %v684, 0.0
  %vm877 = vcmp.ge.f32.partialorder %v685, 0.0
  %vm878 = vcmp.ge.f32.partialorder %v686, 0.0
  %vm879 = vcmp.ge.f32.partialorder %v687, 0.0
  %vm880 = vcmp.ge.f32.partialorder %v688, 0.0
  %vm881 = vcmp.ge.f32.partialorder %v689, 0.0
  %vm882 = vcmp.ge.f32.partialorder %v690, 0.0
  %vm883 = vcmp.ge.f32.partialorder %v691, 0.0
  %vm884 = vcmp.ge.f32.partialorder %v692, 0.0
  %vm885 = vcmp.ge.f32.partialorder %v693, 0.0
  %vm886 = vcmp.ge.f32.partialorder %v694, 0.0
  %vm887 = vcmp.ge.f32.partialorder %v695, 0.0
  %vm888 = vcmp.ge.f32.partialorder %v696, 0.0
  %vm889 = vcmp.ge.f32.partialorder %v697, 0.0
  %vm890 = vcmp.ge.f32.partialorder %v698, 0.0
  %vm891 = vcmp.ge.f32.partialorder %v699, 0.0
  %vm892 = vcmp.ge.f32.partialorder %v700, 0.0
  %vm893 = vcmp.ge.f32.partialorder %v701, 0.0
  %vm894 = vcmp.ge.f32.partialorder %v702, 0.0
  %vm895 = vcmp.ge.f32.partialorder %v703, 0.0
  %vm896 = vcmp.ge.f32.partialorder %v704, 0.0
  %vm897 = vcmp.ge.f32.partialorder %v705, 0.0
  %vm898 = vcmp.ge.f32.partialorder %v706, 0.0
  %vm899 = vcmp.ge.f32.partialorder %v707, 0.0
  %vm900 = vcmp.ge.f32.partialorder %v708, 0.0
  %vm901 = vcmp.ge.f32.partialorder %v709, 0.0
  %vm902 = vcmp.ge.f32.partialorder %v710, 0.0
  %vm903 = vcmp.ge.f32.partialorder %v711, 0.0
  %vm904 = vcmp.ge.f32.partialorder %v712, 0.0
  %vm905 = vcmp.ge.f32.partialorder %v713, 0.0
  %vm906 = vcmp.ge.f32.partialorder %v714, 0.0
  %vm907 = vcmp.ge.f32.partialorder %v715, 0.0
  %vm908 = vcmp.ge.f32.partialorder %v716, 0.0
  %vm909 = vcmp.ge.f32.partialorder %v717, 0.0
  %vm910 = vcmp.ge.f32.partialorder %v718, 0.0
  %vm911 = vcmp.ge.f32.partialorder %v719, 0.0
  %vm912 = vcmp.ge.f32.partialorder %v720, 0.0
  %vm913 = vcmp.ge.f32.partialorder %v721, 0.0
  %vm914 = vcmp.ge.f32.partialorder %v722, 0.0
  %vm915 = vcmp.ge.f32.partialorder %v723, 0.0
  %vm916 = vcmp.ge.f32.partialorder %v724, 0.0
  %vm917 = vcmp.ge.f32.partialorder %v725, 0.0
  %vm918 = vcmp.ge.f32.partialorder %v726, 0.0
  %vm919 = vcmp.ge.f32.partialorder %v727, 0.0
  %vm920 = vcmp.ge.f32.partialorder %v728, 0.0
  %vm921 = vcmp.ge.f32.partialorder %v729, 0.0
  %vm922 = vcmp.ge.f32.partialorder %v730, 0.0
  %vm923 = vcmp.ge.f32.partialorder %v731, 0.0
  %vm924 = vcmp.ge.f32.partialorder %v732, 0.0
  %vm925 = vcmp.ge.f32.partialorder %v733, 0.0
  %vm926 = vcmp.ge.f32.partialorder %v734, 0.0
  %vm927 = vcmp.ge.f32.partialorder %v735, 0.0
  %vm928 = vcmp.ge.f32.partialorder %v736, 0.0
  %vm929 = vcmp.ge.f32.partialorder %v737, 0.0
  %vm930 = vcmp.ge.f32.partialorder %v738, 0.0
  %vm931 = vcmp.ge.f32.partialorder %v739, 0.0
  %vm932 = vcmp.ge.f32.partialorder %v740, 0.0
  %vm933 = vcmp.ge.f32.partialorder %v741, 0.0
  %vm934 = vcmp.ge.f32.partialorder %v742, 0.0
  %v935 = vld [vmem:[%s4] sm:$0x7]
  %v937 = vperm.slane %v935, 0
  %v938 = vperm.slane %v935, 1
  %v939 = vperm.slane %v935, 2
  %v943 = vmul.f32 %v937, %v551
  %v944 = vmul.f32 %v938, %v552
  %v945 = vmul.f32 %v939, %v553
  %v946 = vmul.f32 %v937, %v554
  %v947 = vmul.f32 %v938, %v555
  %v948 = vmul.f32 %v939, %v556
  %v949 = vmul.f32 %v937, %v557
  %v950 = vmul.f32 %v938, %v558
  %v951 = vmul.f32 %v939, %v559
  %v952 = vmul.f32 %v937, %v560
  %v953 = vmul.f32 %v938, %v561
  %v954 = vmul.f32 %v939, %v562
  %v955 = vmul.f32 %v937, %v563
  %v956 = vmul.f32 %v938, %v564
  %v957 = vmul.f32 %v939, %v565
  %v958 = vmul.f32 %v937, %v566
  %v959 = vmul.f32 %v938, %v567
  %v960 = vmul.f32 %v939, %v568
  %v961 = vmul.f32 %v937, %v569
  %v962 = vmul.f32 %v938, %v570
  %v963 = vmul.f32 %v939, %v571
  %v964 = vmul.f32 %v937, %v572
  %v965 = vmul.f32 %v938, %v573
  %v966 = vmul.f32 %v939, %v574
  %v967 = vmul.f32 %v937, %v575
  %v968 = vmul.f32 %v938, %v576
  %v969 = vmul.f32 %v939, %v577
  %v970 = vmul.f32 %v937, %v578
  %v971 = vmul.f32 %v938, %v579
  %v972 = vmul.f32 %v939, %v580
  %v973 = vmul.f32 %v937, %v581
  %v974 = vmul.f32 %v938, %v582
  %v975 = vmul.f32 %v939, %v583
  %v976 = vmul.f32 %v937, %v584
  %v977 = vmul.f32 %v938, %v585
  %v978 = vmul.f32 %v939, %v586
  %v979 = vmul.f32 %v937, %v587
  %v980 = vmul.f32 %v938, %v588
  %v981 = vmul.f32 %v939, %v589
  %v982 = vmul.f32 %v937, %v590
  %v983 = vmul.f32 %v938, %v591
  %v984 = vmul.f32 %v939, %v592
  %v985 = vmul.f32 %v937, %v593
  %v986 = vmul.f32 %v938, %v594
  %v987 = vmul.f32 %v939, %v595
  %v988 = vmul.f32 %v937, %v596
  %v989 = vmul.f32 %v938, %v597
  %v990 = vmul.f32 %v939, %v598
  %v991 = vmul.f32 %v937, %v599
  %v992 = vmul.f32 %v938, %v600
  %v993 = vmul.f32 %v939, %v601
  %v994 = vmul.f32 %v937, %v602
  %v995 = vmul.f32 %v938, %v603
  %v996 = vmul.f32 %v939, %v604
  %v997 = vmul.f32 %v937, %v605
  %v998 = vmul.f32 %v938, %v606
  %v999 = vmul.f32 %v939, %v607
  %v1000 = vmul.f32 %v937, %v608
  %v1001 = vmul.f32 %v938, %v609
  %v1002 = vmul.f32 %v939, %v610
  %v1003 = vmul.f32 %v937, %v611
  %v1004 = vmul.f32 %v938, %v612
  %v1005 = vmul.f32 %v939, %v613
  %v1006 = vmul.f32 %v937, %v614
  %v1007 = vmul.f32 %v938, %v615
  %v1008 = vmul.f32 %v939, %v616
  %v1009 = vmul.f32 %v937, %v617
  %v1010 = vmul.f32 %v938, %v618
  %v1011 = vmul.f32 %v939, %v619
  %v1012 = vmul.f32 %v937, %v620
  %v1013 = vmul.f32 %v938, %v621
  %v1014 = vmul.f32 %v939, %v622
  %v1015 = vmul.f32 %v937, %v623
  %v1016 = vmul.f32 %v938, %v624
  %v1017 = vmul.f32 %v939, %v625
  %v1018 = vmul.f32 %v937, %v626
  %v1019 = vmul.f32 %v938, %v627
  %v1020 = vmul.f32 %v939, %v628
  %v1021 = vmul.f32 %v937, %v629
  %v1022 = vmul.f32 %v938, %v630
  %v1023 = vmul.f32 %v939, %v631
  %v1024 = vmul.f32 %v937, %v632
  %v1025 = vmul.f32 %v938, %v633
  %v1026 = vmul.f32 %v939, %v634
  %v1027 = vmul.f32 %v937, %v635
  %v1028 = vmul.f32 %v938, %v636
  %v1029 = vmul.f32 %v939, %v637
  %v1030 = vmul.f32 %v937, %v638
  %v1031 = vmul.f32 %v938, %v639
  %v1032 = vmul.f32 %v939, %v640
  %v1033 = vmul.f32 %v937, %v641
  %v1034 = vmul.f32 %v938, %v642
  %v1035 = vmul.f32 %v939, %v643
  %v1036 = vmul.f32 %v937, %v644
  %v1037 = vmul.f32 %v938, %v645
  %v1038 = vmul.f32 %v939, %v646
  %v1039 = vmul.f32 %v937, %v647
  %v1040 = vmul.f32 %v938, %v648
  %v1041 = vmul.f32 %v939, %v649
  %v1042 = vmul.f32 %v937, %v650
  %v1043 = vmul.f32 %v938, %v651
  %v1044 = vmul.f32 %v939, %v652
  %v1045 = vmul.f32 %v937, %v653
  %v1046 = vmul.f32 %v938, %v654
  %v1047 = vmul.f32 %v939, %v655
  %v1048 = vmul.f32 %v937, %v656
  %v1049 = vmul.f32 %v938, %v657
  %v1050 = vmul.f32 %v939, %v658
  %v1051 = vmul.f32 %v937, %v659
  %v1052 = vmul.f32 %v938, %v660
  %v1053 = vmul.f32 %v939, %v661
  %v1054 = vmul.f32 %v937, %v662
  %v1055 = vmul.f32 %v938, %v663
  %v1056 = vmul.f32 %v939, %v664
  %v1057 = vmul.f32 %v937, %v665
  %v1058 = vmul.f32 %v938, %v666
  %v1059 = vmul.f32 %v939, %v667
  %v1060 = vmul.f32 %v937, %v668
  %v1061 = vmul.f32 %v938, %v669
  %v1062 = vmul.f32 %v939, %v670
  %v1063 = vmul.f32 %v937, %v671
  %v1064 = vmul.f32 %v938, %v672
  %v1065 = vmul.f32 %v939, %v673
  %v1066 = vmul.f32 %v937, %v674
  %v1067 = vmul.f32 %v938, %v675
  %v1068 = vmul.f32 %v939, %v676
  %v1069 = vmul.f32 %v937, %v677
  %v1070 = vmul.f32 %v938, %v678
  %v1071 = vmul.f32 %v939, %v679
  %v1072 = vmul.f32 %v937, %v680
  %v1073 = vmul.f32 %v938, %v681
  %v1074 = vmul.f32 %v939, %v682
  %v1075 = vmul.f32 %v937, %v683
  %v1076 = vmul.f32 %v938, %v684
  %v1077 = vmul.f32 %v939, %v685
  %v1078 = vmul.f32 %v937, %v686
  %v1079 = vmul.f32 %v938, %v687
  %v1080 = vmul.f32 %v939, %v688
  %v1081 = vmul.f32 %v937, %v689
  %v1082 = vmul.f32 %v938, %v690
  %v1083 = vmul.f32 %v939, %v691
  %v1084 = vmul.f32 %v937, %v692
  %v1085 = vmul.f32 %v938, %v693
  %v1086 = vmul.f32 %v939, %v694
  %v1087 = vmul.f32 %v937, %v695
  %v1088 = vmul.f32 %v938, %v696
  %v1089 = vmul.f32 %v939, %v697
  %v1090 = vmul.f32 %v937, %v698
  %v1091 = vmul.f32 %v938, %v699
  %v1092 = vmul.f32 %v939, %v700
  %v1093 = vmul.f32 %v937, %v701
  %v1094 = vmul.f32 %v938, %v702
  %v1095 = vmul.f32 %v939, %v703
  %v1096 = vmul.f32 %v937, %v704
  %v1097 = vmul.f32 %v938, %v705
  %v1098 = vmul.f32 %v939, %v706
  %v1099 = vmul.f32 %v937, %v707
  %v1100 = vmul.f32 %v938, %v708
  %v1101 = vmul.f32 %v939, %v709
  %v1102 = vmul.f32 %v937, %v710
  %v1103 = vmul.f32 %v938, %v711
  %v1104 = vmul.f32 %v939, %v712
  %v1105 = vmul.f32 %v937, %v713
  %v1106 = vmul.f32 %v938, %v714
  %v1107 = vmul.f32 %v939, %v715
  %v1108 = vmul.f32 %v937, %v716
  %v1109 = vmul.f32 %v938, %v717
  %v1110 = vmul.f32 %v939, %v718
  %v1111 = vmul.f32 %v937, %v719
  %v1112 = vmul.f32 %v938, %v720
  %v1113 = vmul.f32 %v939, %v721
  %v1114 = vmul.f32 %v937, %v722
  %v1115 = vmul.f32 %v938, %v723
  %v1116 = vmul.f32 %v939, %v724
  %v1117 = vmul.f32 %v937, %v725
  %v1118 = vmul.f32 %v938, %v726
  %v1119 = vmul.f32 %v939, %v727
  %v1120 = vmul.f32 %v937, %v728
  %v1121 = vmul.f32 %v938, %v729
  %v1122 = vmul.f32 %v939, %v730
  %v1123 = vmul.f32 %v937, %v731
  %v1124 = vmul.f32 %v938, %v732
  %v1125 = vmul.f32 %v939, %v733
  %v1126 = vmul.f32 %v937, %v734
  %v1127 = vmul.f32 %v938, %v735
  %v1128 = vmul.f32 %v939, %v736
  %v1129 = vmul.f32 %v937, %v737
  %v1130 = vmul.f32 %v938, %v738
  %v1131 = vmul.f32 %v939, %v739
  %v1132 = vmul.f32 %v937, %v740
  %v1133 = vmul.f32 %v938, %v741
  %v1134 = vmul.f32 %v939, %v742
  %v1135 = vsel %vm743, %v551, %v943
  %v1136 = vsel %vm744, %v552, %v944
  %v1137 = vsel %vm745, %v553, %v945
  %v1138 = vsel %vm746, %v554, %v946
  %v1139 = vsel %vm747, %v555, %v947
  %v1140 = vsel %vm748, %v556, %v948
  %v1141 = vsel %vm749, %v557, %v949
  %v1142 = vsel %vm750, %v558, %v950
  %v1143 = vsel %vm751, %v559, %v951
  %v1144 = vsel %vm752, %v560, %v952
  %v1145 = vsel %vm753, %v561, %v953
  %v1146 = vsel %vm754, %v562, %v954
  %v1147 = vsel %vm755, %v563, %v955
  %v1148 = vsel %vm756, %v564, %v956
  %v1149 = vsel %vm757, %v565, %v957
  %v1150 = vsel %vm758, %v566, %v958
  %v1151 = vsel %vm759, %v567, %v959
  %v1152 = vsel %vm760, %v568, %v960
  %v1153 = vsel %vm761, %v569, %v961
  %v1154 = vsel %vm762, %v570, %v962
  %v1155 = vsel %vm763, %v571, %v963
  %v1156 = vsel %vm764, %v572, %v964
  %v1157 = vsel %vm765, %v573, %v965
  %v1158 = vsel %vm766, %v574, %v966
  %v1159 = vsel %vm767, %v575, %v967
  %v1160 = vsel %vm768, %v576, %v968
  %v1161 = vsel %vm769, %v577, %v969
  %v1162 = vsel %vm770, %v578, %v970
  %v1163 = vsel %vm771, %v579, %v971
  %v1164 = vsel %vm772, %v580, %v972
  %v1165 = vsel %vm773, %v581, %v973
  %v1166 = vsel %vm774, %v582, %v974
  %v1167 = vsel %vm775, %v583, %v975
  %v1168 = vsel %vm776, %v584, %v976
  %v1169 = vsel %vm777, %v585, %v977
  %v1170 = vsel %vm778, %v586, %v978
  %v1171 = vsel %vm779, %v587, %v979
  %v1172 = vsel %vm780, %v588, %v980
  %v1173 = vsel %vm781, %v589, %v981
  %v1174 = vsel %vm782, %v590, %v982
  %v1175 = vsel %vm783, %v591, %v983
  %v1176 = vsel %vm784, %v592, %v984
  %v1177 = vsel %vm785, %v593, %v985
  %v1178 = vsel %vm786, %v594, %v986
  %v1179 = vsel %vm787, %v595, %v987
  %v1180 = vsel %vm788, %v596, %v988
  %v1181 = vsel %vm789, %v597, %v989
  %v1182 = vsel %vm790, %v598, %v990
  %v1183 = vsel %vm791, %v599, %v991
  %v1184 = vsel %vm792, %v600, %v992
  %v1185 = vsel %vm793, %v601, %v993
  %v1186 = vsel %vm794, %v602, %v994
  %v1187 = vsel %vm795, %v603, %v995
  %v1188 = vsel %vm796, %v604, %v996
  %v1189 = vsel %vm797, %v605, %v997
  %v1190 = vsel %vm798, %v606, %v998
  %v1191 = vsel %vm799, %v607, %v999
  %v1192 = vsel %vm800, %v608, %v1000
  %v1193 = vsel %vm801, %v609, %v1001
  %v1194 = vsel %vm802, %v610, %v1002
  %v1195 = vsel %vm803, %v611, %v1003
  %v1196 = vsel %vm804, %v612, %v1004
  %v1197 = vsel %vm805, %v613, %v1005
  %v1198 = vsel %vm806, %v614, %v1006
  %v1199 = vsel %vm807, %v615, %v1007
  %v1200 = vsel %vm808, %v616, %v1008
  %v1201 = vsel %vm809, %v617, %v1009
  %v1202 = vsel %vm810, %v618, %v1010
  %v1203 = vsel %vm811, %v619, %v1011
  %v1204 = vsel %vm812, %v620, %v1012
  %v1205 = vsel %vm813, %v621, %v1013
  %v1206 = vsel %vm814, %v622, %v1014
  %v1207 = vsel %vm815, %v623, %v1015
  %v1208 = vsel %vm816, %v624, %v1016
  %v1209 = vsel %vm817, %v625, %v1017
  %v1210 = vsel %vm818, %v626, %v1018
  %v1211 = vsel %vm819, %v627, %v1019
  %v1212 = vsel %vm820, %v628, %v1020
  %v1213 = vsel %vm821, %v629, %v1021
  %v1214 = vsel %vm822, %v630, %v1022
  %v1215 = vsel %vm823, %v631, %v1023
  %v1216 = vsel %vm824, %v632, %v1024
  %v1217 = vsel %vm825, %v633, %v1025
  %v1218 = vsel %vm826, %v634, %v1026
  %v1219 = vsel %vm827, %v635, %v1027
  %v1220 = vsel %vm828, %v636, %v1028
  %v1221 = vsel %vm829, %v637, %v1029
  %v1222 = vsel %vm830, %v638, %v1030
  %v1223 = vsel %vm831, %v639, %v1031
  %v1224 = vsel %vm832, %v640, %v1032
  %v1225 = vsel %vm833, %v641, %v1033
  %v1226 = vsel %vm834, %v642, %v1034
  %v1227 = vsel %vm835, %v643, %v1035
  %v1228 = vsel %vm836, %v644, %v1036
  %v1229 = vsel %vm837, %v645, %v1037
  %v1230 = vsel %vm838, %v646, %v1038
  %v1231 = vsel %vm839, %v647, %v1039
  %v1232 = vsel %vm840, %v648, %v1040
  %v1233 = vsel %vm841, %v649, %v1041
  %v1234 = vsel %vm842, %v650, %v1042
  %v1235 = vsel %vm843, %v651, %v1043
  %v1236 = vsel %vm844, %v652, %v1044
  %v1237 = vsel %vm845, %v653, %v1045
  %v1238 = vsel %vm846, %v654, %v1046
  %v1239 = vsel %vm847, %v655, %v1047
  %v1240 = vsel %vm848, %v656, %v1048
  %v1241 = vsel %vm849, %v657, %v1049
  %v1242 = vsel %vm850, %v658, %v1050
  %v1243 = vsel %vm851, %v659, %v1051
  %v1244 = vsel %vm852, %v660, %v1052
  %v1245 = vsel %vm853, %v661, %v1053
  %v1246 = vsel %vm854, %v662, %v1054
  %v1247 = vsel %vm855, %v663, %v1055
  %v1248 = vsel %vm856, %v664, %v1056
  %v1249 = vsel %vm857, %v665, %v1057
  %v1250 = vsel %vm858, %v666, %v1058
  %v1251 = vsel %vm859, %v667, %v1059
  %v1252 = vsel %vm860, %v668, %v1060
  %v1253 = vsel %vm861, %v669, %v1061
  %v1254 = vsel %vm862, %v670, %v1062
  %v1255 = vsel %vm863, %v671, %v1063
  %v1256 = vsel %vm864, %v672, %v1064
  %v1257 = vsel %vm865, %v673, %v1065
  %v1258 = vsel %vm866, %v674, %v1066
  %v1259 = vsel %vm867, %v675, %v1067
  %v1260 = vsel %vm868, %v676, %v1068
  %v1261 = vsel %vm869, %v677, %v1069
  %v1262 = vsel %vm870, %v678, %v1070
  %v1263 = vsel %vm871, %v679, %v1071
  %v1264 = vsel %vm872, %v680, %v1072
  %v1265 = vsel %vm873, %v681, %v1073
  %v1266 = vsel %vm874, %v682, %v1074
  %v1267 = vsel %vm875, %v683, %v1075
  %v1268 = vsel %vm876, %v684, %v1076
  %v1269 = vsel %vm877, %v685, %v1077
  %v1270 = vsel %vm878, %v686, %v1078
  %v1271 = vsel %vm879, %v687, %v1079
  %v1272 = vsel %vm880, %v688, %v1080
  %v1273 = vsel %vm881, %v689, %v1081
  %v1274 = vsel %vm882, %v690, %v1082
  %v1275 = vsel %vm883, %v691, %v1083
  %v1276 = vsel %vm884, %v692, %v1084
  %v1277 = vsel %vm885, %v693, %v1085
  %v1278 = vsel %vm886, %v694, %v1086
  %v1279 = vsel %vm887, %v695, %v1087
  %v1280 = vsel %vm888, %v696, %v1088
  %v1281 = vsel %vm889, %v697, %v1089
  %v1282 = vsel %vm890, %v698, %v1090
  %v1283 = vsel %vm891, %v699, %v1091
  %v1284 = vsel %vm892, %v700, %v1092
  %v1285 = vsel %vm893, %v701, %v1093
  %v1286 = vsel %vm894, %v702, %v1094
  %v1287 = vsel %vm895, %v703, %v1095
  %v1288 = vsel %vm896, %v704, %v1096
  %v1289 = vsel %vm897, %v705, %v1097
  %v1290 = vsel %vm898, %v706, %v1098
  %v1291 = vsel %vm899, %v707, %v1099
  %v1292 = vsel %vm900, %v708, %v1100
  %v1293 = vsel %vm901, %v709, %v1101
  %v1294 = vsel %vm902, %v710, %v1102
  %v1295 = vsel %vm903, %v711, %v1103
  %v1296 = vsel %vm904, %v712, %v1104
  %v1297 = vsel %vm905, %v713, %v1105
  %v1298 = vsel %vm906, %v714, %v1106
  %v1299 = vsel %vm907, %v715, %v1107
  %v1300 = vsel %vm908, %v716, %v1108
  %v1301 = vsel %vm909, %v717, %v1109
  %v1302 = vsel %vm910, %v718, %v1110
  %v1303 = vsel %vm911, %v719, %v1111
  %v1304 = vsel %vm912, %v720, %v1112
  %v1305 = vsel %vm913, %v721, %v1113
  %v1306 = vsel %vm914, %v722, %v1114
  %v1307 = vsel %vm915, %v723, %v1115
  %v1308 = vsel %vm916, %v724, %v1116
  %v1309 = vsel %vm917, %v725, %v1117
  %v1310 = vsel %vm918, %v726, %v1118
  %v1311 = vsel %vm919, %v727, %v1119
  %v1312 = vsel %vm920, %v728, %v1120
  %v1313 = vsel %vm921, %v729, %v1121
  %v1314 = vsel %vm922, %v730, %v1122
  %v1315 = vsel %vm923, %v731, %v1123
  %v1316 = vsel %vm924, %v732, %v1124
  %v1317 = vsel %vm925, %v733, %v1125
  %v1318 = vsel %vm926, %v734, %v1126
  %v1319 = vsel %vm927, %v735, %v1127
  %v1320 = vsel %vm928, %v736, %v1128
  %v1321 = vsel %vm929, %v737, %v1129
  %v1322 = vsel %vm930, %v738, %v1130
  %v1323 = vsel %vm931, %v739, %v1131
  %v1324 = vsel %vm932, %v740, %v1132
  %v1325 = vsel %vm933, %v741, %v1133
  %v1326 = vsel %vm934, %v742, %v1134
  %v1327 = vpack.c.bf16 %v1138, %v1135
  %v1328 = vpack.c.bf16 %v1139, %v1136
  %v1329 = vpack.c.bf16 %v1140, %v1137
  %v1330 = vpack.c.bf16 %v1144, %v1141
  %v1331 = vpack.c.bf16 %v1145, %v1142
  %v1332 = vpack.c.bf16 %v1146, %v1143
  %v1333 = vpack.c.bf16 %v1150, %v1147
  %v1334 = vpack.c.bf16 %v1151, %v1148
  %v1335 = vpack.c.bf16 %v1152, %v1149
  %v1336 = vpack.c.bf16 %v1156, %v1153
  %v1337 = vpack.c.bf16 %v1157, %v1154
  %v1338 = vpack.c.bf16 %v1158, %v1155
  %v1339 = vpack.c.bf16 %v1162, %v1159
  %v1340 = vpack.c.bf16 %v1163, %v1160
  %v1341 = vpack.c.bf16 %v1164, %v1161
  %v1342 = vpack.c.bf16 %v1168, %v1165
  %v1343 = vpack.c.bf16 %v1169, %v1166
  %v1344 = vpack.c.bf16 %v1170, %v1167
  %v1345 = vpack.c.bf16 %v1174, %v1171
  %v1346 = vpack.c.bf16 %v1175, %v1172
  %v1347 = vpack.c.bf16 %v1176, %v1173
  %v1348 = vpack.c.bf16 %v1180, %v1177
  %v1349 = vpack.c.bf16 %v1181, %v1178
  %v1350 = vpack.c.bf16 %v1182, %v1179
  %v1351 = vpack.c.bf16 %v1186, %v1183
  %v1352 = vpack.c.bf16 %v1187, %v1184
  %v1353 = vpack.c.bf16 %v1188, %v1185
  %v1354 = vpack.c.bf16 %v1192, %v1189
  %v1355 = vpack.c.bf16 %v1193, %v1190
  %v1356 = vpack.c.bf16 %v1194, %v1191
  %v1357 = vpack.c.bf16 %v1198, %v1195
  %v1358 = vpack.c.bf16 %v1199, %v1196
  %v1359 = vpack.c.bf16 %v1200, %v1197
  %v1360 = vpack.c.bf16 %v1204, %v1201
  %v1361 = vpack.c.bf16 %v1205, %v1202
  %v1362 = vpack.c.bf16 %v1206, %v1203
  %v1363 = vpack.c.bf16 %v1210, %v1207
  %v1364 = vpack.c.bf16 %v1211, %v1208
  %v1365 = vpack.c.bf16 %v1212, %v1209
  %v1366 = vpack.c.bf16 %v1216, %v1213
  %v1367 = vpack.c.bf16 %v1217, %v1214
  %v1368 = vpack.c.bf16 %v1218, %v1215
  %v1369 = vpack.c.bf16 %v1222, %v1219
  %v1370 = vpack.c.bf16 %v1223, %v1220
  %v1371 = vpack.c.bf16 %v1224, %v1221
  %v1372 = vpack.c.bf16 %v1228, %v1225
  %v1373 = vpack.c.bf16 %v1229, %v1226
  %v1374 = vpack.c.bf16 %v1230, %v1227
  %v1375 = vpack.c.bf16 %v1234, %v1231
  %v1376 = vpack.c.bf16 %v1235, %v1232
  %v1377 = vpack.c.bf16 %v1236, %v1233
  %v1378 = vpack.c.bf16 %v1240, %v1237
  %v1379 = vpack.c.bf16 %v1241, %v1238
  %v1380 = vpack.c.bf16 %v1242, %v1239
  %v1381 = vpack.c.bf16 %v1246, %v1243
  %v1382 = vpack.c.bf16 %v1247, %v1244
  %v1383 = vpack.c.bf16 %v1248, %v1245
  %v1384 = vpack.c.bf16 %v1252, %v1249
  %v1385 = vpack.c.bf16 %v1253, %v1250
  %v1386 = vpack.c.bf16 %v1254, %v1251
  %v1387 = vpack.c.bf16 %v1258, %v1255
  %v1388 = vpack.c.bf16 %v1259, %v1256
  %v1389 = vpack.c.bf16 %v1260, %v1257
  %v1390 = vpack.c.bf16 %v1264, %v1261
  %v1391 = vpack.c.bf16 %v1265, %v1262
  %v1392 = vpack.c.bf16 %v1266, %v1263
  %v1393 = vpack.c.bf16 %v1270, %v1267
  %v1394 = vpack.c.bf16 %v1271, %v1268
  %v1395 = vpack.c.bf16 %v1272, %v1269
  %v1396 = vpack.c.bf16 %v1276, %v1273
  %v1397 = vpack.c.bf16 %v1277, %v1274
  %v1398 = vpack.c.bf16 %v1278, %v1275
  %v1399 = vpack.c.bf16 %v1282, %v1279
  %v1400 = vpack.c.bf16 %v1283, %v1280
  %v1401 = vpack.c.bf16 %v1284, %v1281
  %v1402 = vpack.c.bf16 %v1288, %v1285
  %v1403 = vpack.c.bf16 %v1289, %v1286
  %v1404 = vpack.c.bf16 %v1290, %v1287
  %v1405 = vpack.c.bf16 %v1294, %v1291
  %v1406 = vpack.c.bf16 %v1295, %v1292
  %v1407 = vpack.c.bf16 %v1296, %v1293
  %v1408 = vpack.c.bf16 %v1300, %v1297
  %v1409 = vpack.c.bf16 %v1301, %v1298
  %v1410 = vpack.c.bf16 %v1302, %v1299
  %v1411 = vpack.c.bf16 %v1306, %v1303
  %v1412 = vpack.c.bf16 %v1307, %v1304
  %v1413 = vpack.c.bf16 %v1308, %v1305
  %v1414 = vpack.c.bf16 %v1312, %v1309
  %v1415 = vpack.c.bf16 %v1313, %v1310
  %v1416 = vpack.c.bf16 %v1314, %v1311
  %v1417 = vpack.c.bf16 %v1318, %v1315
  %v1418 = vpack.c.bf16 %v1319, %v1316
  %v1419 = vpack.c.bf16 %v1320, %v1317
  %v1420 = vpack.c.bf16 %v1324, %v1321
  %v1421 = vpack.c.bf16 %v1325, %v1322
  %v1422 = vpack.c.bf16 %v1326, %v1323
  %v1423 = vld [vmem:[%s1] sm:$0xf]
  %v1424 = vld [vmem:[%s1 + $0x4] sm:$0xf]
  %v1425 = vld [vmem:[%s1 + $0x8] sm:$0xf]
  %v1426 = vld [vmem:[%s1 + $0xc] sm:$0xf]
  %v1427 = vld [vmem:[%s1 + $0x10] sm:$0xf]
  %v1428 = vld [vmem:[%s1 + $0x14] sm:$0xf]
  %v1429 = vld [vmem:[%s1 + $0x18] sm:$0xf]
  %v1430 = vld [vmem:[%s1 + $0x1c] sm:$0xf]
  %v1431 = vld [vmem:[%s1 + $0x20] sm:$0xf]
  %v1432 = vld [vmem:[%s1 + $0x24] sm:$0xf]
  %v1433 = vld [vmem:[%s1 + $0x28] sm:$0xf]
  %v1434 = vld [vmem:[%s1 + $0x2c] sm:$0xf]
  %v1435 = vld [vmem:[%s1 + $0x30] sm:$0xf]
  %v1436 = vld [vmem:[%s1 + $0x34] sm:$0xf]
  %v1437 = vld [vmem:[%s1 + $0x38] sm:$0xf]
  %v1438 = vld [vmem:[%s1 + $0x3c] sm:$0xf]
  %v1439 = vld [vmem:[%s1 + $0x40] sm:$0xf]
  %v1440 = vld [vmem:[%s1 + $0x44] sm:$0xf]
  %v1441 = vld [vmem:[%s1 + $0x48] sm:$0xf]
  %v1442 = vld [vmem:[%s1 + $0x4c] sm:$0xf]
  %v1443 = vld [vmem:[%s1 + $0x50] sm:$0xf]
  %v1444 = vld [vmem:[%s1 + $0x54] sm:$0xf]
  %v1445 = vld [vmem:[%s1 + $0x58] sm:$0xf]
  %v1446 = vld [vmem:[%s1 + $0x5c] sm:$0xf]
  %v1447 = vld [vmem:[%s1 + $0x60] sm:$0xf]
  %v1448 = vld [vmem:[%s1 + $0x64] sm:$0xf]
  %v1449 = vld [vmem:[%s1 + $0x68] sm:$0xf]
  %v1450 = vld [vmem:[%s1 + $0x6c] sm:$0xf]
  %v1451 = vld [vmem:[%s1 + $0x70] sm:$0xf]
  %v1452 = vld [vmem:[%s1 + $0x74] sm:$0xf]
  %v1453 = vld [vmem:[%s1 + $0x78] sm:$0xf]
  %v1454 = vld [vmem:[%s1 + $0x7c] sm:$0xf]
  %v1455 = vld [vmem:[%s1 + $0x80] sm:$0xf]
  %v1456 = vld [vmem:[%s1 + $0x84] sm:$0xf]
  %v1457 = vld [vmem:[%s1 + $0x88] sm:$0xf]
  %v1458 = vld [vmem:[%s1 + $0x8c] sm:$0xf]
  %v1459 = vld [vmem:[%s1 + $0x90] sm:$0xf]
  %v1460 = vld [vmem:[%s1 + $0x94] sm:$0xf]
  %v1461 = vld [vmem:[%s1 + $0x98] sm:$0xf]
  %v1462 = vld [vmem:[%s1 + $0x9c] sm:$0xf]
  %v1463 = vld [vmem:[%s1 + $0xa0] sm:$0xf]
  %v1464 = vld [vmem:[%s1 + $0xa4] sm:$0xf]
  %v1465 = vld [vmem:[%s1 + $0xa8] sm:$0xf]
  %v1466 = vld [vmem:[%s1 + $0xac] sm:$0xf]
  %v1467 = vld [vmem:[%s1 + $0xb0] sm:$0xf]
  %v1468 = vld [vmem:[%s1 + $0xb4] sm:$0xf]
  %v1469 = vld [vmem:[%s1 + $0xb8] sm:$0xf]
  %v1470 = vld [vmem:[%s1 + $0xbc] sm:$0xf]
  %v1519 = vunpack.c.l.b16 %v1423
  %v1520 = vunpack.c.l.b16 %v1424
  %v1521 = vunpack.c.l.b16 %v1425
  %v1522 = vunpack.c.l.b16 %v1426
  %v1523 = vunpack.c.l.b16 %v1427
  %v1524 = vunpack.c.l.b16 %v1428
  %v1525 = vunpack.c.l.b16 %v1429
  %v1526 = vunpack.c.l.b16 %v1430
  %v1527 = vunpack.c.l.b16 %v1431
  %v1528 = vunpack.c.l.b16 %v1432
  %v1529 = vunpack.c.l.b16 %v1433
  %v1530 = vunpack.c.l.b16 %v1434
  %v1531 = vunpack.c.l.b16 %v1435
  %v1532 = vunpack.c.l.b16 %v1436
  %v1533 = vunpack.c.l.b16 %v1437
  %v1534 = vunpack.c.l.b16 %v1438
  %v1535 = vunpack.c.l.b16 %v1439
  %v1536 = vunpack.c.l.b16 %v1440
  %v1537 = vunpack.c.l.b16 %v1441
  %v1538 = vunpack.c.l.b16 %v1442
  %v1539 = vunpack.c.l.b16 %v1443
  %v1540 = vunpack.c.l.b16 %v1444
  %v1541 = vunpack.c.l.b16 %v1445
  %v1542 = vunpack.c.l.b16 %v1446
  %v1543 = vunpack.c.l.b16 %v1447
  %v1544 = vunpack.c.l.b16 %v1448
  %v1545 = vunpack.c.l.b16 %v1449
  %v1546 = vunpack.c.l.b16 %v1450
  %v1547 = vunpack.c.l.b16 %v1451
  %v1548 = vunpack.c.l.b16 %v1452
  %v1549 = vunpack.c.l.b16 %v1453
  %v1550 = vunpack.c.l.b16 %v1454
  %v1551 = vunpack.c.l.b16 %v1455
  %v1552 = vunpack.c.l.b16 %v1456
  %v1553 = vunpack.c.l.b16 %v1457
  %v1554 = vunpack.c.l.b16 %v1458
  %v1555 = vunpack.c.l.b16 %v1459
  %v1556 = vunpack.c.l.b16 %v1460
  %v1557 = vunpack.c.l.b16 %v1461
  %v1558 = vunpack.c.l.b16 %v1462
  %v1559 = vunpack.c.l.b16 %v1463
  %v1560 = vunpack.c.l.b16 %v1464
  %v1561 = vunpack.c.l.b16 %v1465
  %v1562 = vunpack.c.l.b16 %v1466
  %v1563 = vunpack.c.l.b16 %v1467
  %v1564 = vunpack.c.l.b16 %v1468
  %v1565 = vunpack.c.l.b16 %v1469
  %v1566 = vunpack.c.l.b16 %v1470
  %v1567 = vpack.c.b16 %v1520, %v1519
  %v1568 = vpack.c.b16 %v1522, %v1521
  %v1569 = vpack.c.b16 %v1524, %v1523
  %v1570 = vpack.c.b16 %v1526, %v1525
  %v1571 = vpack.c.b16 %v1528, %v1527
  %v1572 = vpack.c.b16 %v1530, %v1529
  %v1573 = vpack.c.b16 %v1532, %v1531
  %v1574 = vpack.c.b16 %v1534, %v1533
  %v1575 = vpack.c.b16 %v1536, %v1535
  %v1576 = vpack.c.b16 %v1538, %v1537
  %v1577 = vpack.c.b16 %v1540, %v1539
  %v1578 = vpack.c.b16 %v1542, %v1541
  %v1579 = vpack.c.b16 %v1544, %v1543
  %v1580 = vpack.c.b16 %v1546, %v1545
  %v1581 = vpack.c.b16 %v1548, %v1547
  %v1582 = vpack.c.b16 %v1550, %v1549
  %v1583 = vpack.c.b16 %v1552, %v1551
  %v1584 = vpack.c.b16 %v1554, %v1553
  %v1585 = vpack.c.b16 %v1556, %v1555
  %v1586 = vpack.c.b16 %v1558, %v1557
  %v1587 = vpack.c.b16 %v1560, %v1559
  %v1588 = vpack.c.b16 %v1562, %v1561
  %v1589 = vpack.c.b16 %v1564, %v1563
  %v1590 = vpack.c.b16 %v1566, %v1565
  %1615 = vmatpush.bf16.msra.mxu0 %v1574
  %1616 = vmatpush.bf16.msra.mxu0 %v1573
  %1617 = vmatpush.bf16.msra.mxu0 %v1572
  %1618 = vmatpush.bf16.msra.mxu0 %v1571
  %1619 = vmatpush.bf16.msra.mxu0 %v1570
  %1620 = vmatpush.bf16.msra.mxu0 %v1569
  %1621 = vmatpush.bf16.msra.mxu0 %v1568
  %1622 = vmatpush.bf16.msra.mxu0 %v1567
  %1623 = vmatmul.bf16.gmra.mxu0 %v1327
  %v1624 = vpop.f32.mrf.mxu0
  %v1625 = vadd.f32 0.0, %v1624
  %v1626 = vpop.f32.mrf.mxu0
  %v1627 = vadd.f32 0.0, %v1626
  %1628 = vmatmul.bf16.gmra.mxu0 %v1330
  %v1629 = vpop.f32.mrf.mxu0
  %v1630 = vadd.f32 0.0, %v1629
  %v1631 = vpop.f32.mrf.mxu0
  %v1632 = vadd.f32 0.0, %v1631
  %1633 = vmatmul.bf16.gmra.mxu0 %v1333
  %v1634 = vpop.f32.mrf.mxu0
  %v1635 = vadd.f32 0.0, %v1634
  %v1636 = vpop.f32.mrf.mxu0
  %v1637 = vadd.f32 0.0, %v1636
  %1638 = vmatmul.bf16.gmra.mxu0 %v1336
  %v1639 = vpop.f32.mrf.mxu0
  %v1640 = vadd.f32 0.0, %v1639
  %v1641 = vpop.f32.mrf.mxu0
  %v1642 = vadd.f32 0.0, %v1641
  %1643 = vmatmul.bf16.gmra.mxu0 %v1339
  %v1644 = vpop.f32.mrf.mxu0
  %v1645 = vadd.f32 0.0, %v1644
  %v1646 = vpop.f32.mrf.mxu0
  %v1647 = vadd.f32 0.0, %v1646
  %1648 = vmatmul.bf16.gmra.mxu0 %v1342
  %v1649 = vpop.f32.mrf.mxu0
  %v1650 = vadd.f32 0.0, %v1649
  %v1651 = vpop.f32.mrf.mxu0
  %v1652 = vadd.f32 0.0, %v1651
  %1653 = vmatmul.bf16.gmra.mxu0 %v1345
  %v1654 = vpop.f32.mrf.mxu0
  %v1655 = vadd.f32 0.0, %v1654
  %v1656 = vpop.f32.mrf.mxu0
  %v1657 = vadd.f32 0.0, %v1656
  %1658 = vmatmul.bf16.gmra.mxu0 %v1348
  %v1659 = vpop.f32.mrf.mxu0
  %v1660 = vadd.f32 0.0, %v1659
  %v1661 = vpop.f32.mrf.mxu0
  %v1662 = vadd.f32 0.0, %v1661
  %1663 = vmatmul.bf16.gmra.mxu0 %v1351
  %v1664 = vpop.f32.mrf.mxu0
  %v1665 = vadd.f32 0.0, %v1664
  %v1666 = vpop.f32.mrf.mxu0
  %v1667 = vadd.f32 0.0, %v1666
  %1668 = vmatmul.bf16.gmra.mxu0 %v1354
  %v1669 = vpop.f32.mrf.mxu0
  %v1670 = vadd.f32 0.0, %v1669
  %v1671 = vpop.f32.mrf.mxu0
  %v1672 = vadd.f32 0.0, %v1671
  %1673 = vmatmul.bf16.gmra.mxu0 %v1357
  %v1674 = vpop.f32.mrf.mxu0
  %v1675 = vadd.f32 0.0, %v1674
  %v1676 = vpop.f32.mrf.mxu0
  %v1677 = vadd.f32 0.0, %v1676
  %1678 = vmatmul.bf16.gmra.mxu0 %v1360
  %v1679 = vpop.f32.mrf.mxu0
  %v1680 = vadd.f32 0.0, %v1679
  %v1681 = vpop.f32.mrf.mxu0
  %v1682 = vadd.f32 0.0, %v1681
  %1683 = vmatmul.bf16.gmra.mxu0 %v1363
  %v1684 = vpop.f32.mrf.mxu0
  %v1685 = vadd.f32 0.0, %v1684
  %v1686 = vpop.f32.mrf.mxu0
  %v1687 = vadd.f32 0.0, %v1686
  %1688 = vmatmul.bf16.gmra.mxu0 %v1366
  %v1689 = vpop.f32.mrf.mxu0
  %v1690 = vadd.f32 0.0, %v1689
  %v1691 = vpop.f32.mrf.mxu0
  %v1692 = vadd.f32 0.0, %v1691
  %1693 = vmatmul.bf16.gmra.mxu0 %v1369
  %v1694 = vpop.f32.mrf.mxu0
  %v1695 = vadd.f32 0.0, %v1694
  %v1696 = vpop.f32.mrf.mxu0
  %v1697 = vadd.f32 0.0, %v1696
  %1698 = vmatmul.bf16.gmra.mxu0 %v1372
  %v1699 = vpop.f32.mrf.mxu0
  %v1700 = vadd.f32 0.0, %v1699
  %v1701 = vpop.f32.mrf.mxu0
  %v1702 = vadd.f32 0.0, %v1701
  %1703 = vmatmul.bf16.gmra.mxu0 %v1375
  %v1704 = vpop.f32.mrf.mxu0
  %v1705 = vadd.f32 0.0, %v1704
  %v1706 = vpop.f32.mrf.mxu0
  %v1707 = vadd.f32 0.0, %v1706
  %1708 = vmatmul.bf16.gmra.mxu0 %v1378
  %v1709 = vpop.f32.mrf.mxu0
  %v1710 = vadd.f32 0.0, %v1709
  %v1711 = vpop.f32.mrf.mxu0
  %v1712 = vadd.f32 0.0, %v1711
  %1713 = vmatmul.bf16.gmra.mxu0 %v1381
  %v1714 = vpop.f32.mrf.mxu0
  %v1715 = vadd.f32 0.0, %v1714
  %v1716 = vpop.f32.mrf.mxu0
  %v1717 = vadd.f32 0.0, %v1716
  %1718 = vmatmul.bf16.gmra.mxu0 %v1384
  %v1719 = vpop.f32.mrf.mxu0
  %v1720 = vadd.f32 0.0, %v1719
  %v1721 = vpop.f32.mrf.mxu0
  %v1722 = vadd.f32 0.0, %v1721
  %1723 = vmatmul.bf16.gmra.mxu0 %v1387
  %v1724 = vpop.f32.mrf.mxu0
  %v1725 = vadd.f32 0.0, %v1724
  %v1726 = vpop.f32.mrf.mxu0
  %v1727 = vadd.f32 0.0, %v1726
  %1728 = vmatmul.bf16.gmra.mxu0 %v1390
  %v1729 = vpop.f32.mrf.mxu0
  %v1730 = vadd.f32 0.0, %v1729
  %v1731 = vpop.f32.mrf.mxu0
  %v1732 = vadd.f32 0.0, %v1731
  %1733 = vmatmul.bf16.gmra.mxu0 %v1393
  %v1734 = vpop.f32.mrf.mxu0
  %v1735 = vadd.f32 0.0, %v1734
  %v1736 = vpop.f32.mrf.mxu0
  %v1737 = vadd.f32 0.0, %v1736
  %1738 = vmatmul.bf16.gmra.mxu0 %v1396
  %v1739 = vpop.f32.mrf.mxu0
  %v1740 = vadd.f32 0.0, %v1739
  %v1741 = vpop.f32.mrf.mxu0
  %v1742 = vadd.f32 0.0, %v1741
  %1743 = vmatmul.bf16.gmra.mxu0 %v1399
  %v1744 = vpop.f32.mrf.mxu0
  %v1745 = vadd.f32 0.0, %v1744
  %v1746 = vpop.f32.mrf.mxu0
  %v1747 = vadd.f32 0.0, %v1746
  %1748 = vmatmul.bf16.gmra.mxu0 %v1402
  %v1749 = vpop.f32.mrf.mxu0
  %v1750 = vadd.f32 0.0, %v1749
  %v1751 = vpop.f32.mrf.mxu0
  %v1752 = vadd.f32 0.0, %v1751
  %1753 = vmatmul.bf16.gmra.mxu0 %v1405
  %v1754 = vpop.f32.mrf.mxu0
  %v1755 = vadd.f32 0.0, %v1754
  %v1756 = vpop.f32.mrf.mxu0
  %v1757 = vadd.f32 0.0, %v1756
  %1758 = vmatmul.bf16.gmra.mxu0 %v1408
  %v1759 = vpop.f32.mrf.mxu0
  %v1760 = vadd.f32 0.0, %v1759
  %v1761 = vpop.f32.mrf.mxu0
  %v1762 = vadd.f32 0.0, %v1761
  %1763 = vmatmul.bf16.gmra.mxu0 %v1411
  %v1764 = vpop.f32.mrf.mxu0
  %v1765 = vadd.f32 0.0, %v1764
  %v1766 = vpop.f32.mrf.mxu0
  %v1767 = vadd.f32 0.0, %v1766
  %1768 = vmatmul.bf16.gmra.mxu0 %v1414
  %v1769 = vpop.f32.mrf.mxu0
  %v1770 = vadd.f32 0.0, %v1769
  %v1771 = vpop.f32.mrf.mxu0
  %v1772 = vadd.f32 0.0, %v1771
  %1773 = vmatmul.bf16.gmra.mxu0 %v1417
  %v1774 = vpop.f32.mrf.mxu0
  %v1775 = vadd.f32 0.0, %v1774
  %v1776 = vpop.f32.mrf.mxu0
  %v1777 = vadd.f32 0.0, %v1776
  %1778 = vmatmul.bf16.gmra.mxu0 %v1420
  %v1779 = vpop.f32.mrf.mxu0
  %v1780 = vadd.f32 0.0, %v1779
  %v1781 = vpop.f32.mrf.mxu0
  %v1782 = vadd.f32 0.0, %v1781
  %1783 = vdwg.mxu0
  %1784 = vmatpush.bf16.msra.mxu0 %v1582
  %1785 = vmatpush.bf16.msra.mxu0 %v1581
  %1786 = vmatpush.bf16.msra.mxu0 %v1580
  %1787 = vmatpush.bf16.msra.mxu0 %v1579
  %1788 = vmatpush.bf16.msra.mxu0 %v1578
  %1789 = vmatpush.bf16.msra.mxu0 %v1577
  %1790 = vmatpush.bf16.msra.mxu0 %v1576
  %1791 = vmatpush.bf16.msra.mxu0 %v1575
  %1792 = vmatmul.bf16.gmra.mxu0 %v1328
  %v1793 = vpop.f32.mrf.mxu0
  %v1794 = vadd.f32 %v1625, %v1793
  %v1795 = vpop.f32.mrf.mxu0
  %v1796 = vadd.f32 %v1627, %v1795
  %1797 = vmatmul.bf16.gmra.mxu0 %v1331
  %v1798 = vpop.f32.mrf.mxu0
  %v1799 = vadd.f32 %v1630, %v1798
  %v1800 = vpop.f32.mrf.mxu0
  %v1801 = vadd.f32 %v1632, %v1800
  %1802 = vmatmul.bf16.gmra.mxu0 %v1334
  %v1803 = vpop.f32.mrf.mxu0
  %v1804 = vadd.f32 %v1635, %v1803
  %v1805 = vpop.f32.mrf.mxu0
  %v1806 = vadd.f32 %v1637, %v1805
  %1807 = vmatmul.bf16.gmra.mxu0 %v1337
  %v1808 = vpop.f32.mrf.mxu0
  %v1809 = vadd.f32 %v1640, %v1808
  %v1810 = vpop.f32.mrf.mxu0
  %v1811 = vadd.f32 %v1642, %v1810
  %1812 = vmatmul.bf16.gmra.mxu0 %v1340
  %v1813 = vpop.f32.mrf.mxu0
  %v1814 = vadd.f32 %v1645, %v1813
  %v1815 = vpop.f32.mrf.mxu0
  %v1816 = vadd.f32 %v1647, %v1815
  %1817 = vmatmul.bf16.gmra.mxu0 %v1343
  %v1818 = vpop.f32.mrf.mxu0
  %v1819 = vadd.f32 %v1650, %v1818
  %v1820 = vpop.f32.mrf.mxu0
  %v1821 = vadd.f32 %v1652, %v1820
  %1822 = vmatmul.bf16.gmra.mxu0 %v1346
  %v1823 = vpop.f32.mrf.mxu0
  %v1824 = vadd.f32 %v1655, %v1823
  %v1825 = vpop.f32.mrf.mxu0
  %v1826 = vadd.f32 %v1657, %v1825
  %1827 = vmatmul.bf16.gmra.mxu0 %v1349
  %v1828 = vpop.f32.mrf.mxu0
  %v1829 = vadd.f32 %v1660, %v1828
  %v1830 = vpop.f32.mrf.mxu0
  %v1831 = vadd.f32 %v1662, %v1830
  %1832 = vmatmul.bf16.gmra.mxu0 %v1352
  %v1833 = vpop.f32.mrf.mxu0
  %v1834 = vadd.f32 %v1665, %v1833
  %v1835 = vpop.f32.mrf.mxu0
  %v1836 = vadd.f32 %v1667, %v1835
  %1837 = vmatmul.bf16.gmra.mxu0 %v1355
  %v1838 = vpop.f32.mrf.mxu0
  %v1839 = vadd.f32 %v1670, %v1838
  %v1840 = vpop.f32.mrf.mxu0
  %v1841 = vadd.f32 %v1672, %v1840
  %1842 = vmatmul.bf16.gmra.mxu0 %v1358
  %v1843 = vpop.f32.mrf.mxu0
  %v1844 = vadd.f32 %v1675, %v1843
  %v1845 = vpop.f32.mrf.mxu0
  %v1846 = vadd.f32 %v1677, %v1845
  %1847 = vmatmul.bf16.gmra.mxu0 %v1361
  %v1848 = vpop.f32.mrf.mxu0
  %v1849 = vadd.f32 %v1680, %v1848
  %v1850 = vpop.f32.mrf.mxu0
  %v1851 = vadd.f32 %v1682, %v1850
  %1852 = vmatmul.bf16.gmra.mxu0 %v1364
  %v1853 = vpop.f32.mrf.mxu0
  %v1854 = vadd.f32 %v1685, %v1853
  %v1855 = vpop.f32.mrf.mxu0
  %v1856 = vadd.f32 %v1687, %v1855
  %1857 = vmatmul.bf16.gmra.mxu0 %v1367
  %v1858 = vpop.f32.mrf.mxu0
  %v1859 = vadd.f32 %v1690, %v1858
  %v1860 = vpop.f32.mrf.mxu0
  %v1861 = vadd.f32 %v1692, %v1860
  %1862 = vmatmul.bf16.gmra.mxu0 %v1370
  %v1863 = vpop.f32.mrf.mxu0
  %v1864 = vadd.f32 %v1695, %v1863
  %v1865 = vpop.f32.mrf.mxu0
  %v1866 = vadd.f32 %v1697, %v1865
  %1867 = vmatmul.bf16.gmra.mxu0 %v1373
  %v1868 = vpop.f32.mrf.mxu0
  %v1869 = vadd.f32 %v1700, %v1868
  %v1870 = vpop.f32.mrf.mxu0
  %v1871 = vadd.f32 %v1702, %v1870
  %1872 = vmatmul.bf16.gmra.mxu0 %v1376
  %v1873 = vpop.f32.mrf.mxu0
  %v1874 = vadd.f32 %v1705, %v1873
  %v1875 = vpop.f32.mrf.mxu0
  %v1876 = vadd.f32 %v1707, %v1875
  %1877 = vmatmul.bf16.gmra.mxu0 %v1379
  %v1878 = vpop.f32.mrf.mxu0
  %v1879 = vadd.f32 %v1710, %v1878
  %v1880 = vpop.f32.mrf.mxu0
  %v1881 = vadd.f32 %v1712, %v1880
  %1882 = vmatmul.bf16.gmra.mxu0 %v1382
  %v1883 = vpop.f32.mrf.mxu0
  %v1884 = vadd.f32 %v1715, %v1883
  %v1885 = vpop.f32.mrf.mxu0
  %v1886 = vadd.f32 %v1717, %v1885
  %1887 = vmatmul.bf16.gmra.mxu0 %v1385
  %v1888 = vpop.f32.mrf.mxu0
  %v1889 = vadd.f32 %v1720, %v1888
  %v1890 = vpop.f32.mrf.mxu0
  %v1891 = vadd.f32 %v1722, %v1890
  %1892 = vmatmul.bf16.gmra.mxu0 %v1388
  %v1893 = vpop.f32.mrf.mxu0
  %v1894 = vadd.f32 %v1725, %v1893
  %v1895 = vpop.f32.mrf.mxu0
  %v1896 = vadd.f32 %v1727, %v1895
  %1897 = vmatmul.bf16.gmra.mxu0 %v1391
  %v1898 = vpop.f32.mrf.mxu0
  %v1899 = vadd.f32 %v1730, %v1898
  %v1900 = vpop.f32.mrf.mxu0
  %v1901 = vadd.f32 %v1732, %v1900
  %1902 = vmatmul.bf16.gmra.mxu0 %v1394
  %v1903 = vpop.f32.mrf.mxu0
  %v1904 = vadd.f32 %v1735, %v1903
  %v1905 = vpop.f32.mrf.mxu0
  %v1906 = vadd.f32 %v1737, %v1905
  %1907 = vmatmul.bf16.gmra.mxu0 %v1397
  %v1908 = vpop.f32.mrf.mxu0
  %v1909 = vadd.f32 %v1740, %v1908
  %v1910 = vpop.f32.mrf.mxu0
  %v1911 = vadd.f32 %v1742, %v1910
  %1912 = vmatmul.bf16.gmra.mxu0 %v1400
  %v1913 = vpop.f32.mrf.mxu0
  %v1914 = vadd.f32 %v1745, %v1913
  %v1915 = vpop.f32.mrf.mxu0
  %v1916 = vadd.f32 %v1747, %v1915
  %1917 = vmatmul.bf16.gmra.mxu0 %v1403
  %v1918 = vpop.f32.mrf.mxu0
  %v1919 = vadd.f32 %v1750, %v1918
  %v1920 = vpop.f32.mrf.mxu0
  %v1921 = vadd.f32 %v1752, %v1920
  %1922 = vmatmul.bf16.gmra.mxu0 %v1406
  %v1923 = vpop.f32.mrf.mxu0
  %v1924 = vadd.f32 %v1755, %v1923
  %v1925 = vpop.f32.mrf.mxu0
  %v1926 = vadd.f32 %v1757, %v1925
  %1927 = vmatmul.bf16.gmra.mxu0 %v1409
  %v1928 = vpop.f32.mrf.mxu0
  %v1929 = vadd.f32 %v1760, %v1928
  %v1930 = vpop.f32.mrf.mxu0
  %v1931 = vadd.f32 %v1762, %v1930
  %1932 = vmatmul.bf16.gmra.mxu0 %v1412
  %v1933 = vpop.f32.mrf.mxu0
  %v1934 = vadd.f32 %v1765, %v1933
  %v1935 = vpop.f32.mrf.mxu0
  %v1936 = vadd.f32 %v1767, %v1935
  %1937 = vmatmul.bf16.gmra.mxu0 %v1415
  %v1938 = vpop.f32.mrf.mxu0
  %v1939 = vadd.f32 %v1770, %v1938
  %v1940 = vpop.f32.mrf.mxu0
  %v1941 = vadd.f32 %v1772, %v1940
  %1942 = vmatmul.bf16.gmra.mxu0 %v1418
  %v1943 = vpop.f32.mrf.mxu0
  %v1944 = vadd.f32 %v1775, %v1943
  %v1945 = vpop.f32.mrf.mxu0
  %v1946 = vadd.f32 %v1777, %v1945
  %1947 = vmatmul.bf16.gmra.mxu0 %v1421
  %v1948 = vpop.f32.mrf.mxu0
  %v1949 = vadd.f32 %v1780, %v1948
  %v1950 = vpop.f32.mrf.mxu0
  %v1951 = vadd.f32 %v1782, %v1950
  %1952 = vdwg.mxu0
  %1953 = vmatpush.bf16.msra.mxu0 %v1590
  %1954 = vmatpush.bf16.msra.mxu0 %v1589
  %1955 = vmatpush.bf16.msra.mxu0 %v1588
  %1956 = vmatpush.bf16.msra.mxu0 %v1587
  %1957 = vmatpush.bf16.msra.mxu0 %v1586
  %1958 = vmatpush.bf16.msra.mxu0 %v1585
  %1959 = vmatpush.bf16.msra.mxu0 %v1584
  %1960 = vmatpush.bf16.msra.mxu0 %v1583
  %1961 = vmatmul.bf16.gmra.mxu0 %v1329
  %v1962 = vpop.f32.mrf.mxu0
  %v1963 = vadd.f32 %v1794, %v1962
  %v1964 = vpop.f32.mrf.mxu0
  %v1965 = vadd.f32 %v1796, %v1964
  %1966 = vmatmul.bf16.gmra.mxu0 %v1332
  %v1967 = vpop.f32.mrf.mxu0
  %v1968 = vadd.f32 %v1799, %v1967
  %v1969 = vpop.f32.mrf.mxu0
  %v1970 = vadd.f32 %v1801, %v1969
  %1971 = vmatmul.bf16.gmra.mxu0 %v1335
  %v1972 = vpop.f32.mrf.mxu0
  %v1973 = vadd.f32 %v1804, %v1972
  %v1974 = vpop.f32.mrf.mxu0
  %v1975 = vadd.f32 %v1806, %v1974
  %1976 = vmatmul.bf16.gmra.mxu0 %v1338
  %v1977 = vpop.f32.mrf.mxu0
  %v1978 = vadd.f32 %v1809, %v1977
  %v1979 = vpop.f32.mrf.mxu0
  %v1980 = vadd.f32 %v1811, %v1979
  %1981 = vmatmul.bf16.gmra.mxu0 %v1341
  %v1982 = vpop.f32.mrf.mxu0
  %v1983 = vadd.f32 %v1814, %v1982
  %v1984 = vpop.f32.mrf.mxu0
  %v1985 = vadd.f32 %v1816, %v1984
  %1986 = vmatmul.bf16.gmra.mxu0 %v1344
  %v1987 = vpop.f32.mrf.mxu0
  %v1988 = vadd.f32 %v1819, %v1987
  %v1989 = vpop.f32.mrf.mxu0
  %v1990 = vadd.f32 %v1821, %v1989
  %1991 = vmatmul.bf16.gmra.mxu0 %v1347
  %v1992 = vpop.f32.mrf.mxu0
  %v1993 = vadd.f32 %v1824, %v1992
  %v1994 = vpop.f32.mrf.mxu0
  %v1995 = vadd.f32 %v1826, %v1994
  %1996 = vmatmul.bf16.gmra.mxu0 %v1350
  %v1997 = vpop.f32.mrf.mxu0
  %v1998 = vadd.f32 %v1829, %v1997
  %v1999 = vpop.f32.mrf.mxu0
  %v2000 = vadd.f32 %v1831, %v1999
  %2001 = vmatmul.bf16.gmra.mxu0 %v1353
  %v2002 = vpop.f32.mrf.mxu0
  %v2003 = vadd.f32 %v1834, %v2002
  %v2004 = vpop.f32.mrf.mxu0
  %v2005 = vadd.f32 %v1836, %v2004
  %2006 = vmatmul.bf16.gmra.mxu0 %v1356
  %v2007 = vpop.f32.mrf.mxu0
  %v2008 = vadd.f32 %v1839, %v2007
  %v2009 = vpop.f32.mrf.mxu0
  %v2010 = vadd.f32 %v1841, %v2009
  %2011 = vmatmul.bf16.gmra.mxu0 %v1359
  %v2012 = vpop.f32.mrf.mxu0
  %v2013 = vadd.f32 %v1844, %v2012
  %v2014 = vpop.f32.mrf.mxu0
  %v2015 = vadd.f32 %v1846, %v2014
  %2016 = vmatmul.bf16.gmra.mxu0 %v1362
  %v2017 = vpop.f32.mrf.mxu0
  %v2018 = vadd.f32 %v1849, %v2017
  %v2019 = vpop.f32.mrf.mxu0
  %v2020 = vadd.f32 %v1851, %v2019
  %2021 = vmatmul.bf16.gmra.mxu0 %v1365
  %v2022 = vpop.f32.mrf.mxu0
  %v2023 = vadd.f32 %v1854, %v2022
  %v2024 = vpop.f32.mrf.mxu0
  %v2025 = vadd.f32 %v1856, %v2024
  %2026 = vmatmul.bf16.gmra.mxu0 %v1368
  %v2027 = vpop.f32.mrf.mxu0
  %v2028 = vadd.f32 %v1859, %v2027
  %v2029 = vpop.f32.mrf.mxu0
  %v2030 = vadd.f32 %v1861, %v2029
  %2031 = vmatmul.bf16.gmra.mxu0 %v1371
  %v2032 = vpop.f32.mrf.mxu0
  %v2033 = vadd.f32 %v1864, %v2032
  %v2034 = vpop.f32.mrf.mxu0
  %v2035 = vadd.f32 %v1866, %v2034
  %2036 = vmatmul.bf16.gmra.mxu0 %v1374
  %v2037 = vpop.f32.mrf.mxu0
  %v2038 = vadd.f32 %v1869, %v2037
  %v2039 = vpop.f32.mrf.mxu0
  %v2040 = vadd.f32 %v1871, %v2039
  %2041 = vmatmul.bf16.gmra.mxu0 %v1377
  %v2042 = vpop.f32.mrf.mxu0
  %v2043 = vadd.f32 %v1874, %v2042
  %v2044 = vpop.f32.mrf.mxu0
  %v2045 = vadd.f32 %v1876, %v2044
  %2046 = vmatmul.bf16.gmra.mxu0 %v1380
  %v2047 = vpop.f32.mrf.mxu0
  %v2048 = vadd.f32 %v1879, %v2047
  %v2049 = vpop.f32.mrf.mxu0
  %v2050 = vadd.f32 %v1881, %v2049
  %2051 = vmatmul.bf16.gmra.mxu0 %v1383
  %v2052 = vpop.f32.mrf.mxu0
  %v2053 = vadd.f32 %v1884, %v2052
  %v2054 = vpop.f32.mrf.mxu0
  %v2055 = vadd.f32 %v1886, %v2054
  %2056 = vmatmul.bf16.gmra.mxu0 %v1386
  %v2057 = vpop.f32.mrf.mxu0
  %v2058 = vadd.f32 %v1889, %v2057
  %v2059 = vpop.f32.mrf.mxu0
  %v2060 = vadd.f32 %v1891, %v2059
  %2061 = vmatmul.bf16.gmra.mxu0 %v1389
  %v2062 = vpop.f32.mrf.mxu0
  %v2063 = vadd.f32 %v1894, %v2062
  %v2064 = vpop.f32.mrf.mxu0
  %v2065 = vadd.f32 %v1896, %v2064
  %2066 = vmatmul.bf16.gmra.mxu0 %v1392
  %v2067 = vpop.f32.mrf.mxu0
  %v2068 = vadd.f32 %v1899, %v2067
  %v2069 = vpop.f32.mrf.mxu0
  %v2070 = vadd.f32 %v1901, %v2069
  %2071 = vmatmul.bf16.gmra.mxu0 %v1395
  %v2072 = vpop.f32.mrf.mxu0
  %v2073 = vadd.f32 %v1904, %v2072
  %v2074 = vpop.f32.mrf.mxu0
  %v2075 = vadd.f32 %v1906, %v2074
  %2076 = vmatmul.bf16.gmra.mxu0 %v1398
  %v2077 = vpop.f32.mrf.mxu0
  %v2078 = vadd.f32 %v1909, %v2077
  %v2079 = vpop.f32.mrf.mxu0
  %v2080 = vadd.f32 %v1911, %v2079
  %2081 = vmatmul.bf16.gmra.mxu0 %v1401
  %v2082 = vpop.f32.mrf.mxu0
  %v2083 = vadd.f32 %v1914, %v2082
  %v2084 = vpop.f32.mrf.mxu0
  %v2085 = vadd.f32 %v1916, %v2084
  %2086 = vmatmul.bf16.gmra.mxu0 %v1404
  %v2087 = vpop.f32.mrf.mxu0
  %v2088 = vadd.f32 %v1919, %v2087
  %v2089 = vpop.f32.mrf.mxu0
  %v2090 = vadd.f32 %v1921, %v2089
  %2091 = vmatmul.bf16.gmra.mxu0 %v1407
  %v2092 = vpop.f32.mrf.mxu0
  %v2093 = vadd.f32 %v1924, %v2092
  %v2094 = vpop.f32.mrf.mxu0
  %v2095 = vadd.f32 %v1926, %v2094
  %2096 = vmatmul.bf16.gmra.mxu0 %v1410
  %v2097 = vpop.f32.mrf.mxu0
  %v2098 = vadd.f32 %v1929, %v2097
  %v2099 = vpop.f32.mrf.mxu0
  %v2100 = vadd.f32 %v1931, %v2099
  %2101 = vmatmul.bf16.gmra.mxu0 %v1413
  %v2102 = vpop.f32.mrf.mxu0
  %v2103 = vadd.f32 %v1934, %v2102
  %v2104 = vpop.f32.mrf.mxu0
  %v2105 = vadd.f32 %v1936, %v2104
  %2106 = vmatmul.bf16.gmra.mxu0 %v1416
  %v2107 = vpop.f32.mrf.mxu0
  %v2108 = vadd.f32 %v1939, %v2107
  %v2109 = vpop.f32.mrf.mxu0
  %v2110 = vadd.f32 %v1941, %v2109
  %2111 = vmatmul.bf16.gmra.mxu0 %v1419
  %v2112 = vpop.f32.mrf.mxu0
  %v2113 = vadd.f32 %v1944, %v2112
  %v2114 = vpop.f32.mrf.mxu0
  %v2115 = vadd.f32 %v1946, %v2114
  %2116 = vmatmul.bf16.gmra.mxu0 %v1422
  %v2117 = vpop.f32.mrf.mxu0
  %v2118 = vadd.f32 %v1949, %v2117
  %v2119 = vpop.f32.mrf.mxu0
  %v2120 = vadd.f32 %v1951, %v2119
  %2121 = vdwg.mxu0
  %v2122 = vpack.c.bf16 %v1963, %v1963
  %v2123 = vpack.c.bf16 %v1965, %v1965
  %v2124 = vpack.c.bf16 %v1968, %v1968
  %v2125 = vpack.c.bf16 %v1970, %v1970
  %v2126 = vpack.c.bf16 %v1973, %v1973
  %v2127 = vpack.c.bf16 %v1975, %v1975
  %v2128 = vpack.c.bf16 %v1978, %v1978
  %v2129 = vpack.c.bf16 %v1980, %v1980
  %v2130 = vpack.c.bf16 %v1983, %v1983
  %v2131 = vpack.c.bf16 %v1985, %v1985
  %v2132 = vpack.c.bf16 %v1988, %v1988
  %v2133 = vpack.c.bf16 %v1990, %v1990
  %v2134 = vpack.c.bf16 %v1993, %v1993
  %v2135 = vpack.c.bf16 %v1995, %v1995
  %v2136 = vpack.c.bf16 %v1998, %v1998
  %v2137 = vpack.c.bf16 %v2000, %v2000
  %v2138 = vpack.c.bf16 %v2003, %v2003
  %v2139 = vpack.c.bf16 %v2005, %v2005
  %v2140 = vpack.c.bf16 %v2008, %v2008
  %v2141 = vpack.c.bf16 %v2010, %v2010
  %v2142 = vpack.c.bf16 %v2013, %v2013
  %v2143 = vpack.c.bf16 %v2015, %v2015
  %v2144 = vpack.c.bf16 %v2018, %v2018
  %v2145 = vpack.c.bf16 %v2020, %v2020
  %v2146 = vpack.c.bf16 %v2023, %v2023
  %v2147 = vpack.c.bf16 %v2025, %v2025
  %v2148 = vpack.c.bf16 %v2028, %v2028
  %v2149 = vpack.c.bf16 %v2030, %v2030
  %v2150 = vpack.c.bf16 %v2033, %v2033
  %v2151 = vpack.c.bf16 %v2035, %v2035
  %v2152 = vpack.c.bf16 %v2038, %v2038
  %v2153 = vpack.c.bf16 %v2040, %v2040
  %v2154 = vpack.c.bf16 %v2043, %v2043
  %v2155 = vpack.c.bf16 %v2045, %v2045
  %v2156 = vpack.c.bf16 %v2048, %v2048
  %v2157 = vpack.c.bf16 %v2050, %v2050
  %v2158 = vpack.c.bf16 %v2053, %v2053
  %v2159 = vpack.c.bf16 %v2055, %v2055
  %v2160 = vpack.c.bf16 %v2058, %v2058
  %v2161 = vpack.c.bf16 %v2060, %v2060
  %v2162 = vpack.c.bf16 %v2063, %v2063
  %v2163 = vpack.c.bf16 %v2065, %v2065
  %v2164 = vpack.c.bf16 %v2068, %v2068
  %v2165 = vpack.c.bf16 %v2070, %v2070
  %v2166 = vpack.c.bf16 %v2073, %v2073
  %v2167 = vpack.c.bf16 %v2075, %v2075
  %v2168 = vpack.c.bf16 %v2078, %v2078
  %v2169 = vpack.c.bf16 %v2080, %v2080
  %v2170 = vpack.c.bf16 %v2083, %v2083
  %v2171 = vpack.c.bf16 %v2085, %v2085
  %v2172 = vpack.c.bf16 %v2088, %v2088
  %v2173 = vpack.c.bf16 %v2090, %v2090
  %v2174 = vpack.c.bf16 %v2093, %v2093
  %v2175 = vpack.c.bf16 %v2095, %v2095
  %v2176 = vpack.c.bf16 %v2098, %v2098
  %v2177 = vpack.c.bf16 %v2100, %v2100
  %v2178 = vpack.c.bf16 %v2103, %v2103
  %v2179 = vpack.c.bf16 %v2105, %v2105
  %v2180 = vpack.c.bf16 %v2108, %v2108
  %v2181 = vpack.c.bf16 %v2110, %v2110
  %v2182 = vpack.c.bf16 %v2113, %v2113
  %v2183 = vpack.c.bf16 %v2115, %v2115
  %v2184 = vpack.c.bf16 %v2118, %v2118
  %v2185 = vpack.c.bf16 %v2120, %v2120
  %2186 = vst [vmem:[%s5] sm:$0xf] %v2122
  %2187 = vst [vmem:[%s5 + $0x4] sm:$0xf] %v2123
  %2188 = vst [vmem:[%s5 + $0x8] sm:$0xf] %v2124
  %2189 = vst [vmem:[%s5 + $0xc] sm:$0xf] %v2125
  %2190 = vst [vmem:[%s5 + $0x10] sm:$0xf] %v2126
  %2191 = vst [vmem:[%s5 + $0x14] sm:$0xf] %v2127
  %2192 = vst [vmem:[%s5 + $0x18] sm:$0xf] %v2128
  %2193 = vst [vmem:[%s5 + $0x1c] sm:$0xf] %v2129
  %2194 = vst [vmem:[%s5 + $0x20] sm:$0xf] %v2130
  %2195 = vst [vmem:[%s5 + $0x24] sm:$0xf] %v2131
  %2196 = vst [vmem:[%s5 + $0x28] sm:$0xf] %v2132
  %2197 = vst [vmem:[%s5 + $0x2c] sm:$0xf] %v2133
  %2198 = vst [vmem:[%s5 + $0x30] sm:$0xf] %v2134
  %2199 = vst [vmem:[%s5 + $0x34] sm:$0xf] %v2135
  %2200 = vst [vmem:[%s5 + $0x38] sm:$0xf] %v2136
  %2201 = vst [vmem:[%s5 + $0x3c] sm:$0xf] %v2137
  %2202 = vst [vmem:[%s5 + $0x40] sm:$0xf] %v2138
  %2203 = vst [vmem:[%s5 + $0x44] sm:$0xf] %v2139
  %2204 = vst [vmem:[%s5 + $0x48] sm:$0xf] %v2140
  %2205 = vst [vmem:[%s5 + $0x4c] sm:$0xf] %v2141
  %2206 = vst [vmem:[%s5 + $0x50] sm:$0xf] %v2142
  %2207 = vst [vmem:[%s5 + $0x54] sm:$0xf] %v2143
  %2208 = vst [vmem:[%s5 + $0x58] sm:$0xf] %v2144
  %2209 = vst [vmem:[%s5 + $0x5c] sm:$0xf] %v2145
  %2210 = vst [vmem:[%s5 + $0x60] sm:$0xf] %v2146
  %2211 = vst [vmem:[%s5 + $0x64] sm:$0xf] %v2147
  %2212 = vst [vmem:[%s5 + $0x68] sm:$0xf] %v2148
  %2213 = vst [vmem:[%s5 + $0x6c] sm:$0xf] %v2149
  %2214 = vst [vmem:[%s5 + $0x70] sm:$0xf] %v2150
  %2215 = vst [vmem:[%s5 + $0x74] sm:$0xf] %v2151
  %2216 = vst [vmem:[%s5 + $0x78] sm:$0xf] %v2152
  %2217 = vst [vmem:[%s5 + $0x7c] sm:$0xf] %v2153
  %2218 = vst [vmem:[%s5 + $0x80] sm:$0xf] %v2154
  %2219 = vst [vmem:[%s5 + $0x84] sm:$0xf] %v2155
  %2220 = vst [vmem:[%s5 + $0x88] sm:$0xf] %v2156
  %2221 = vst [vmem:[%s5 + $0x8c] sm:$0xf] %v2157
  %2222 = vst [vmem:[%s5 + $0x90] sm:$0xf] %v2158
  %2223 = vst [vmem:[%s5 + $0x94] sm:$0xf] %v2159
  %2224 = vst [vmem:[%s5 + $0x98] sm:$0xf] %v2160
  %2225 = vst [vmem:[%s5 + $0x9c] sm:$0xf] %v2161
  %2226 = vst [vmem:[%s5 + $0xa0] sm:$0xf] %v2162
  %2227 = vst [vmem:[%s5 + $0xa4] sm:$0xf] %v2163
  %2228 = vst [vmem:[%s5 + $0xa8] sm:$0xf] %v2164
  %2229 = vst [vmem:[%s5 + $0xac] sm:$0xf] %v2165
  %2230 = vst [vmem:[%s5 + $0xb0] sm:$0xf] %v2166
  %2231 = vst [vmem:[%s5 + $0xb4] sm:$0xf] %v2167
  %2232 = vst [vmem:[%s5 + $0xb8] sm:$0xf] %v2168
  %2233 = vst [vmem:[%s5 + $0xbc] sm:$0xf] %v2169
  %2234 = vst [vmem:[%s5 + $0xc0] sm:$0xf] %v2170
  %2235 = vst [vmem:[%s5 + $0xc4] sm:$0xf] %v2171
  %2236 = vst [vmem:[%s5 + $0xc8] sm:$0xf] %v2172
  %2237 = vst [vmem:[%s5 + $0xcc] sm:$0xf] %v2173
  %2238 = vst [vmem:[%s5 + $0xd0] sm:$0xf] %v2174
  %2239 = vst [vmem:[%s5 + $0xd4] sm:$0xf] %v2175
  %2240 = vst [vmem:[%s5 + $0xd8] sm:$0xf] %v2176
  %2241 = vst [vmem:[%s5 + $0xdc] sm:$0xf] %v2177
  %2242 = vst [vmem:[%s5 + $0xe0] sm:$0xf] %v2178
  %2243 = vst [vmem:[%s5 + $0xe4] sm:$0xf] %v2179
  %2244 = vst [vmem:[%s5 + $0xe8] sm:$0xf] %v2180
  %2245 = vst [vmem:[%s5 + $0xec] sm:$0xf] %v2181
  %2246 = vst [vmem:[%s5 + $0xf0] sm:$0xf] %v2182
  %2247 = vst [vmem:[%s5 + $0xf4] sm:$0xf] %v2183
  %2248 = vst [vmem:[%s5 + $0xf8] sm:$0xf] %v2184
  %2249 = vst [vmem:[%s5 + $0xfc] sm:$0xf] %v2185
  %v2250 = vadd.f32 %v1963, %v1965
  %v2251 = vadd.f32 %v2250, %v1968
  %v2252 = vadd.f32 %v2251, %v1970
  %v2253 = vadd.f32 %v2252, %v1973
  %v2254 = vadd.f32 %v2253, %v1975
  %v2255 = vadd.f32 %v2254, %v1978
  %v2256 = vadd.f32 %v2255, %v1980
  %v2257 = vadd.f32 %v2256, %v1983
  %v2258 = vadd.f32 %v2257, %v1985
  %v2259 = vadd.f32 %v2258, %v1988
  %v2260 = vadd.f32 %v2259, %v1990
  %v2261 = vadd.f32 %v2260, %v1993
  %v2262 = vadd.f32 %v2261, %v1995
  %v2263 = vadd.f32 %v2262, %v1998
  %v2264 = vadd.f32 %v2263, %v2000
  %v2265 = vadd.f32 %v2264, %v2003
  %v2266 = vadd.f32 %v2265, %v2005
  %v2267 = vadd.f32 %v2266, %v2008
  %v2268 = vadd.f32 %v2267, %v2010
  %v2269 = vadd.f32 %v2268, %v2013
  %v2270 = vadd.f32 %v2269, %v2015
  %v2271 = vadd.f32 %v2270, %v2018
  %v2272 = vadd.f32 %v2271, %v2020
  %v2273 = vadd.f32 %v2272, %v2023
  %v2274 = vadd.f32 %v2273, %v2025
  %v2275 = vadd.f32 %v2274, %v2028
  %v2276 = vadd.f32 %v2275, %v2030
  %v2277 = vadd.f32 %v2276, %v2033
  %v2278 = vadd.f32 %v2277, %v2035
  %v2279 = vadd.f32 %v2278, %v2038
  %v2280 = vadd.f32 %v2279, %v2040
  %v2281 = vadd.f32 %v2280, %v2043
  %v2282 = vadd.f32 %v2281, %v2045
  %v2283 = vadd.f32 %v2282, %v2048
  %v2284 = vadd.f32 %v2283, %v2050
  %v2285 = vadd.f32 %v2284, %v2053
  %v2286 = vadd.f32 %v2285, %v2055
  %v2287 = vadd.f32 %v2286, %v2058
  %v2288 = vadd.f32 %v2287, %v2060
  %v2289 = vadd.f32 %v2288, %v2063
  %v2290 = vadd.f32 %v2289, %v2065
  %v2291 = vadd.f32 %v2290, %v2068
  %v2292 = vadd.f32 %v2291, %v2070
  %v2293 = vadd.f32 %v2292, %v2073
  %v2294 = vadd.f32 %v2293, %v2075
  %v2295 = vadd.f32 %v2294, %v2078
  %v2296 = vadd.f32 %v2295, %v2080
  %v2297 = vadd.f32 %v2296, %v2083
  %v2298 = vadd.f32 %v2297, %v2085
  %v2299 = vadd.f32 %v2298, %v2088
  %v2300 = vadd.f32 %v2299, %v2090
  %v2301 = vadd.f32 %v2300, %v2093
  %v2302 = vadd.f32 %v2301, %v2095
  %v2303 = vadd.f32 %v2302, %v2098
  %v2304 = vadd.f32 %v2303, %v2100
  %v2305 = vadd.f32 %v2304, %v2103
  %v2306 = vadd.f32 %v2305, %v2105
  %v2307 = vadd.f32 %v2306, %v2108
  %v2308 = vadd.f32 %v2307, %v2110
  %v2309 = vadd.f32 %v2308, %v2113
  %v2310 = vadd.f32 %v2309, %v2115
  %v2311 = vadd.f32 %v2310, %v2118
  %v2312 = vadd.f32 %v2311, %v2120
  %v2313 = vrot.slane %v2312, 4
  %v2314 = vadd.f32 %v2312, %v2313
  %v2315 = vrot.slane %v2314, 2
  %v2316 = vadd.f32 %v2314, %v2315
  %v2317 = vrot.slane %v2316, 1
  %v2318 = vadd.f32 %v2316, %v2317
  %2319 = vst [vmem:[%s6] sm:$0x1] %v2318
  %v2320 = vmul.f32 %v1963, %v1963
  %v2321 = vmul.f32 %v1965, %v1965
  %v2322 = vmul.f32 %v1968, %v1968
  %v2323 = vmul.f32 %v1970, %v1970
  %v2324 = vmul.f32 %v1973, %v1973
  %v2325 = vmul.f32 %v1975, %v1975
  %v2326 = vmul.f32 %v1978, %v1978
  %v2327 = vmul.f32 %v1980, %v1980
  %v2328 = vmul.f32 %v1983, %v1983
  %v2329 = vmul.f32 %v1985, %v1985
  %v2330 = vmul.f32 %v1988, %v1988
  %v2331 = vmul.f32 %v1990, %v1990
  %v2332 = vmul.f32 %v1993, %v1993
  %v2333 = vmul.f32 %v1995, %v1995
  %v2334 = vmul.f32 %v1998, %v1998
  %v2335 = vmul.f32 %v2000, %v2000
  %v2336 = vmul.f32 %v2003, %v2003
  %v2337 = vmul.f32 %v2005, %v2005
  %v2338 = vmul.f32 %v2008, %v2008
  %v2339 = vmul.f32 %v2010, %v2010
  %v2340 = vmul.f32 %v2013, %v2013
  %v2341 = vmul.f32 %v2015, %v2015
  %v2342 = vmul.f32 %v2018, %v2018
  %v2343 = vmul.f32 %v2020, %v2020
  %v2344 = vmul.f32 %v2023, %v2023
  %v2345 = vmul.f32 %v2025, %v2025
  %v2346 = vmul.f32 %v2028, %v2028
  %v2347 = vmul.f32 %v2030, %v2030
  %v2348 = vmul.f32 %v2033, %v2033
  %v2349 = vmul.f32 %v2035, %v2035
  %v2350 = vmul.f32 %v2038, %v2038
  %v2351 = vmul.f32 %v2040, %v2040
  %v2352 = vmul.f32 %v2043, %v2043
  %v2353 = vmul.f32 %v2045, %v2045
  %v2354 = vmul.f32 %v2048, %v2048
  %v2355 = vmul.f32 %v2050, %v2050
  %v2356 = vmul.f32 %v2053, %v2053
  %v2357 = vmul.f32 %v2055, %v2055
  %v2358 = vmul.f32 %v2058, %v2058
  %v2359 = vmul.f32 %v2060, %v2060
  %v2360 = vmul.f32 %v2063, %v2063
  %v2361 = vmul.f32 %v2065, %v2065
  %v2362 = vmul.f32 %v2068, %v2068
  %v2363 = vmul.f32 %v2070, %v2070
  %v2364 = vmul.f32 %v2073, %v2073
  %v2365 = vmul.f32 %v2075, %v2075
  %v2366 = vmul.f32 %v2078, %v2078
  %v2367 = vmul.f32 %v2080, %v2080
  %v2368 = vmul.f32 %v2083, %v2083
  %v2369 = vmul.f32 %v2085, %v2085
  %v2370 = vmul.f32 %v2088, %v2088
  %v2371 = vmul.f32 %v2090, %v2090
  %v2372 = vmul.f32 %v2093, %v2093
  %v2373 = vmul.f32 %v2095, %v2095
  %v2374 = vmul.f32 %v2098, %v2098
  %v2375 = vmul.f32 %v2100, %v2100
  %v2376 = vmul.f32 %v2103, %v2103
  %v2377 = vmul.f32 %v2105, %v2105
  %v2378 = vmul.f32 %v2108, %v2108
  %v2379 = vmul.f32 %v2110, %v2110
  %v2380 = vmul.f32 %v2113, %v2113
  %v2381 = vmul.f32 %v2115, %v2115
  %v2382 = vmul.f32 %v2118, %v2118
  %v2383 = vmul.f32 %v2120, %v2120
  %v2384 = vadd.f32 %v2320, %v2321
  %v2385 = vadd.f32 %v2384, %v2322
  %v2386 = vadd.f32 %v2385, %v2323
  %v2387 = vadd.f32 %v2386, %v2324
  %v2388 = vadd.f32 %v2387, %v2325
  %v2389 = vadd.f32 %v2388, %v2326
  %v2390 = vadd.f32 %v2389, %v2327
  %v2391 = vadd.f32 %v2390, %v2328
  %v2392 = vadd.f32 %v2391, %v2329
  %v2393 = vadd.f32 %v2392, %v2330
  %v2394 = vadd.f32 %v2393, %v2331
  %v2395 = vadd.f32 %v2394, %v2332
  %v2396 = vadd.f32 %v2395, %v2333
  %v2397 = vadd.f32 %v2396, %v2334
  %v2398 = vadd.f32 %v2397, %v2335
  %v2399 = vadd.f32 %v2398, %v2336
  %v2400 = vadd.f32 %v2399, %v2337
  %v2401 = vadd.f32 %v2400, %v2338
  %v2402 = vadd.f32 %v2401, %v2339
  %v2403 = vadd.f32 %v2402, %v2340
  %v2404 = vadd.f32 %v2403, %v2341
  %v2405 = vadd.f32 %v2404, %v2342
  %v2406 = vadd.f32 %v2405, %v2343
  %v2407 = vadd.f32 %v2406, %v2344
  %v2408 = vadd.f32 %v2407, %v2345
  %v2409 = vadd.f32 %v2408, %v2346
  %v2410 = vadd.f32 %v2409, %v2347
  %v2411 = vadd.f32 %v2410, %v2348
  %v2412 = vadd.f32 %v2411, %v2349
  %v2413 = vadd.f32 %v2412, %v2350
  %v2414 = vadd.f32 %v2413, %v2351
  %v2415 = vadd.f32 %v2414, %v2352
  %v2416 = vadd.f32 %v2415, %v2353
  %v2417 = vadd.f32 %v2416, %v2354
  %v2418 = vadd.f32 %v2417, %v2355
  %v2419 = vadd.f32 %v2418, %v2356
  %v2420 = vadd.f32 %v2419, %v2357
  %v2421 = vadd.f32 %v2420, %v2358
  %v2422 = vadd.f32 %v2421, %v2359
  %v2423 = vadd.f32 %v2422, %v2360
  %v2424 = vadd.f32 %v2423, %v2361
  %v2425 = vadd.f32 %v2424, %v2362
  %v2426 = vadd.f32 %v2425, %v2363
  %v2427 = vadd.f32 %v2426, %v2364
  %v2428 = vadd.f32 %v2427, %v2365
  %v2429 = vadd.f32 %v2428, %v2366
  %v2430 = vadd.f32 %v2429, %v2367
  %v2431 = vadd.f32 %v2430, %v2368
  %v2432 = vadd.f32 %v2431, %v2369
  %v2433 = vadd.f32 %v2432, %v2370
  %v2434 = vadd.f32 %v2433, %v2371
  %v2435 = vadd.f32 %v2434, %v2372
  %v2436 = vadd.f32 %v2435, %v2373
  %v2437 = vadd.f32 %v2436, %v2374
  %v2438 = vadd.f32 %v2437, %v2375
  %v2439 = vadd.f32 %v2438, %v2376
  %v2440 = vadd.f32 %v2439, %v2377
  %v2441 = vadd.f32 %v2440, %v2378
  %v2442 = vadd.f32 %v2441, %v2379
  %v2443 = vadd.f32 %v2442, %v2380
  %v2444 = vadd.f32 %v2443, %v2381
  %v2445 = vadd.f32 %v2444, %v2382
  %v2446 = vadd.f32 %v2445, %v2383
  %v2447 = vrot.slane %v2446, 4
  %v2448 = vadd.f32 %v2446, %v2447
  %v2449 = vrot.slane %v2448, 2
  %v2450 = vadd.f32 %v2448, %v2449
  %v2451 = vrot.slane %v2450, 1
  %v2452 = vadd.f32 %v2450, %v2451
  %2453 = vst [vmem:[%s7] sm:$0x1] %v2452
  // Predicated region
  $region22: #{wgan_generator_forward.11} parent=0 // pred_check
    _
  $region23: #{wgan_generator_forward.11} parent=0 // pred_check_branch
    %2455 = sbr.rel (0) target = $region25
  $region24: #{wgan_generator_forward.11} parent=0 // pred_region
    _
  $region25: #{wgan_generator_forward.11} parent=0 // pred_fallthru
    _
  // Predicated region
  $region26: #{wgan_generator_forward.11} parent=0 // pred_check
    _
  $region27: #{wgan_generator_forward.11} parent=0 // pred_check_branch
    %2457 = sbr.rel (0) target = $region29
  $region28: #{wgan_generator_forward.11} parent=0 // pred_region
    _
  $region29: #{wgan_generator_forward.11} parent=0 // pred_fallthru
    _
  // Predicated region
  $region30: #{wgan_generator_forward.11} parent=0 // pred_check
    _
  $region31: #{wgan_generator_forward.11} parent=0 // pred_check_branch
    %2459 = sbr.rel (0) target = $region33
  $region32: #{wgan_generator_forward.11} parent=0 // pred_region
    _
  $region33: #{wgan_generator_forward.11} parent=0 // pred_fallthru
    _
  // Predicated region
  $region34: #{wgan_generator_forward.11} parent=0 // pred_check
    _
  $region35: #{wgan_generator_forward.11} parent=0 // pred_check_branch
    %2461 = sbr.rel (0) target = $region37
  $region36: #{wgan_generator_forward.11} parent=0 // pred_region
    _
  $region37: #{wgan_generator_forward.11} parent=0 // pred_fallthru
    _
  // Predicated region
  $region38: #{wgan_generator_forward.11} parent=0 // pred_check
    _
  $region39: #{wgan_generator_forward.11} parent=0 // pred_check_branch
    %2463 = sbr.rel (0) target = $region41
  $region40: #{wgan_generator_forward.11} parent=0 // pred_region
    _
  $region41: #{wgan_generator_forward.11} parent=0 // pred_fallthru
    _
  // Predicated region
  $region42: #{wgan_generator_forward.11} parent=0 // pred_check
    _
  $region43: #{wgan_generator_forward.11} parent=0 // pred_check_branch
    %2465 = sbr.rel (0) target = $region45
  $region44: #{wgan_generator_forward.11} parent=0 // pred_region
    _
  $region45: #{wgan_generator_forward.11} parent=0 // pred_fallthru
    _

// kernel: tile.100
$region0: #{tile.100}
  #allocation0 [shape = 's32[1]{0}', space=sflag, size = 0x4, scoped, tag = 'scoped memory for tile.100']
  %s0 = inlined_call_operand.vmem [shape: f32[8], index: 0, kind: input, shape index: {}]
  %s1 = inlined_call_operand.vmem [shape: f32[9,8], index: 1, kind: output, shape index: {}]
  // Predicated region
  $region2: #{tile.100} parent=0 // pred_check
    _
  $region3: #{tile.100} parent=0 // pred_check_branch
    %3 = sbr.rel (0) target = $region5
  $region4: #{tile.100} parent=0 // pred_region
    _
  $region5: #{tile.100} parent=0 // pred_fallthru
    _
  %v4 = vld [vmem:[%s0] ss:$0 sm:$0xff]
  %5 = vst [vmem:[%s1] sm:$0xff] %v4
  %s6 = scalar_lea.vmem %s1, 8
  %7 = vst [vmem:[%s6] sm:$0xff] %v4

// kernel: tile.101
$region0: #{tile.101}
  %s0 = inlined_call_operand.vmem [shape: f32[9,8], index: 0, kind: input, shape index: {}]
  %s1 = inlined_call_operand.vmem [shape: f32[72], index: 1, kind: output, shape index: {}]
  $region1: #{tile.101} parent=0
    #allocation0 [shape = 'u8[4096]{0}', space=vmem, size = 0x1000, scoped, tag = 'scoped mem for output reshape']
    %v2 = vld [vmem:[%s0] sm:$0x1]
    %vm3 = vcmask 64512
    %4 = vst.msk [vmem:[#allocation0] sm:$0x1] %vm3, %v2
    %s5 = scalar_lea.vmem %s0, 8
    %v6 = vld [vmem:[%s5] sm:$0x1]
    %7 = vrot.lane.b32.xlu0 %v6, 64
    %v8 = vpop.permute.xlu0 %7
    %vm9 = vcmask 589312
    %10 = vst.msk [vmem:[#allocation0] sm:$0x1] %vm9, %v8
    %s11 = scalar_lea.vmem %s0, 7
    %v12 = vld [vmem:[%s11] sm:$0x1]
    %13 = vrot.lane.b32.xlu0 %v12, 56
    %v14 = vpop.permute.xlu0 %13
    %vm15 = vcmask 523712
    %16 = vst.msk [vmem:[#allocation0] sm:$0x1] %vm15, %v14
    %s17 = scalar_lea.vmem %s0, 6
    %v18 = vld [vmem:[%s17] sm:$0x1]
    %19 = vrot.lane.b32.xlu0 %v18, 48
    %v20 = vpop.permute.xlu0 %19
    %vm21 = vcmask 458112
    %22 = vst.msk [vmem:[#allocation0] sm:$0x1] %vm21, %v20
    %s23 = scalar_lea.vmem %s0, 5
    %v24 = vld [vmem:[%s23] sm:$0x1]
    %25 = vrot.lane.b32.xlu0 %v24, 40
    %v26 = vpop.permute.xlu0 %25
    %vm27 = vcmask 392512
    %28 = vst.msk [vmem:[#allocation0] sm:$0x1] %vm27, %v26
    %s29 = scalar_lea.vmem %s0, 4
    %v30 = vld [vmem:[%s29] sm:$0x1]
    %31 = vrot.lane.b32.xlu0 %v30, 32
    %v32 = vpop.permute.xlu0 %31
    %vm33 = vcmask 326912
    %34 = vst.msk [vmem:[#allocation0] sm:$0x1] %vm33, %v32
    %s35 = scalar_lea.vmem %s0, 3
    %v36 = vld [vmem:[%s35] sm:$0x1]
    %37 = vrot.lane.b32.xlu0 %v36, 24
    %v38 = vpop.permute.xlu0 %37
    %vm39 = vcmask 261312
    %40 = vst.msk [vmem:[#allocation0] sm:$0x1] %vm39, %v38
    %s41 = scalar_lea.vmem %s0, 2
    %v42 = vld [vmem:[%s41] sm:$0x1]
    %43 = vrot.lane.b32.xlu0 %v42, 16
    %v44 = vpop.permute.xlu0 %43
    %vm45 = vcmask 195712
    %46 = vst.msk [vmem:[#allocation0] sm:$0x1] %vm45, %v44
    %s47 = scalar_lea.vmem %s0, 1
    %v48 = vld [vmem:[%s47] sm:$0x1]
    %49 = vrot.lane.b32.xlu0 %v48, 8
    %v50 = vpop.permute.xlu0 %49
    %vm51 = vcmask 130112
    %52 = vst.msk [vmem:[#allocation0] sm:$0x1] %vm51, %v50
    %s54 = ssub.s32 2, 1
    %v55 = vld [vmem:[#allocation0] sm:%s54]
    %s57 = ssub.s32 2, 1
    %58 = vst [vmem:[%s1] sm:%s57] %v55

// kernel: wgan_generator_forward.12
$region0: #{wgan_generator_forward.12}
  #allocation0 [shape = 'u32[]', space=smem, size = 0x4, offset = 0x4, fixed_abs, tag = 'smem constant byte address 0x4 - core index']
  #allocation1 [shape = 'u32[72,128]{1,0:T(1,128)}', space=vmem, size = 0x9000, scoped, tag = 'internal scratch']
  %s0 = inlined_call_operand.vmem [shape: bf16[2048,256], index: 0, kind: input, shape index: {}]
  %s1 = inlined_call_operand.vmem [shape: bf16[256,128], index: 1, kind: input, shape index: {}]
  %s2 = inlined_call_operand.vmem [shape: f32[1,256], index: 2, kind: input, shape index: {}]
  %s3 = inlined_call_operand.vmem [shape: f32[1,256], index: 3, kind: input, shape index: {}]
  %s4 = inlined_call_operand.vmem [shape: f32[1,256], index: 4, kind: input, shape index: {}]
  %s5 = inlined_call_operand.vmem [shape: bf16[2048,128], index: 5, kind: output, shape index: {0}]
  %s6 = inlined_call_operand.vmem [shape: f32[4,1,128], index: 6, kind: output, shape index: {1}]
  %s7 = inlined_call_operand.vmem [shape: f32[4,1,128], index: 7, kind: output, shape index: {2}]
  %8 = xla_tuple %s5, %s6, %s7
  %s9 = sld [smem:[#allocation0]]
  $region69: #{wgan_generator_forward.12} parent=0
    _
  %s11 = ssub.s32 1, %s9
  %s12 = scalar_select 0, %s11, %s9
  loop: start=0, step=1, limit=6
  $region2: #{wgan_generator_forward.12} parent=0 // loop_pre_header
    _
  $region3: #{wgan_generator_forward.12} parent=0 // loop_header
    %s14 = sphi 0, %s18
    %p15 = scmp.ge.s32.totalorder %s14, 6
    %s24 = sphi 0, %s26
    %s27 = sphi 0, %s24
    %s28 = sphi 0, %s27
    %s44 = sphi 0, %s28
    %s48 = sphi 0, %s48
    %s50 = sphi 0, %s48
    %s51 = sphi 0, %s50
    %s65 = sphi 0, %s51
    %s69 = sphi 0, %s69
    %s71 = sphi 0, %s69
    %s72 = sphi 0, %s71
    %s86 = sphi 0, %s72
    %s90 = sphi 0, %s90
    %s92 = sphi 0, %s90
    %s93 = sphi 0, %s92
    %s107 = sphi 0, %s93
    %s111 = sphi 0, %s111
    %s113 = sphi 0, %s111
    %s114 = sphi 0, %s113
    %s128 = sphi 0, %s114
    %s134 = sphi 0, %s136
    %s137 = sphi 0, %s134
    %s138 = sphi 0, %s137
    %s154 = sphi 0, %s138
    %s160 = sphi 0, %s162
    %s163 = sphi 0, %s160
    %s164 = sphi 0, %s163
    %s180 = sphi 0, %s164
    %s186 = sphi 0, %s188
    %s189 = sphi 0, %s186
    %s190 = sphi 0, %s189
    %s206 = sphi 0, %s190
  $region4: #{wgan_generator_forward.12} parent=0 // loop_header_branch
    %17 = sbr.rel (%p15) target = $region8
  $region5: #{wgan_generator_forward.12} parent=0 // loop_body
    %s19 = ssub.s32 %s14, 1
    %s20 = ssub.s32 %s14, 2
    %s21 = sadd.s32 %s14, 1
    %s22 = ssub.s32 %s14, %s21
    %p23 = scmp.eq.s32.totalorder %s22, 0
    %s25 = sadd.s32 %s24, 1
    %s26 = scalar_select %p23, %s24, %s25
    %p29 = pneg %p23
    %p30 = scmp.eq.s32.totalorder %s14, 3
    %p31 = por %p29, %p30
    %p32 = scmp.ne.s32.totalorder %s24, %s27
    %p33 = scmp.eq.s32.totalorder %s14, 0
    %p34 = por %p32, %p33
    %p35 = scmp.ne.s32.totalorder %s24, %s27
    %p36 = scmp.eq.s32.totalorder %s19, 3
    %p37 = por %p35, %p36
    %p38 = scmp.ne.s32.totalorder %s27, %s28
    %p39 = scmp.eq.s32.totalorder %s19, 0
    %p40 = por %p38, %p39
    %p41 = scmp.ne.s32.totalorder %s27, %s28
    %p42 = scmp.eq.s32.totalorder %s20, 3
    %p43 = por %p41, %p42
    %p45 = scmp.ne.s32.totalorder %s28, %s44
    %p46 = scmp.eq.s32.totalorder %s20, 0
    %p47 = por %p45, %p46
    %s49 = sadd.s32 %s48, 1
    %p52 = scmp.eq.s32.totalorder %s14, 3
    %p53 = scmp.ne.s32.totalorder %s48, %s50
    %p54 = scmp.eq.s32.totalorder %s14, 0
    %p55 = por %p53, %p54
    %p56 = scmp.ne.s32.totalorder %s48, %s50
    %p57 = scmp.eq.s32.totalorder %s19, 3
    %p58 = por %p56, %p57
    %p59 = scmp.ne.s32.totalorder %s50, %s51
    %p60 = scmp.eq.s32.totalorder %s19, 0
    %p61 = por %p59, %p60
    %p62 = scmp.ne.s32.totalorder %s50, %s51
    %p63 = scmp.eq.s32.totalorder %s20, 3
    %p64 = por %p62, %p63
    %p66 = scmp.ne.s32.totalorder %s51, %s65
    %p67 = scmp.eq.s32.totalorder %s20, 0
    %p68 = por %p66, %p67
    %s70 = sadd.s32 %s69, 1
    %p73 = scmp.eq.s32.totalorder %s14, 3
    %p74 = scmp.ne.s32.totalorder %s69, %s71
    %p75 = scmp.eq.s32.totalorder %s14, 0
    %p76 = por %p74, %p75
    %p77 = scmp.ne.s32.totalorder %s69, %s71
    %p78 = scmp.eq.s32.totalorder %s19, 3
    %p79 = por %p77, %p78
    %p80 = scmp.ne.s32.totalorder %s71, %s72
    %p81 = scmp.eq.s32.totalorder %s19, 0
    %p82 = por %p80, %p81
    %p83 = scmp.ne.s32.totalorder %s71, %s72
    %p84 = scmp.eq.s32.totalorder %s20, 3
    %p85 = por %p83, %p84
    %p87 = scmp.ne.s32.totalorder %s72, %s86
    %p88 = scmp.eq.s32.totalorder %s20, 0
    %p89 = por %p87, %p88
    %s91 = sadd.s32 %s90, 1
    %p94 = scmp.eq.s32.totalorder %s14, 3
    %p95 = scmp.ne.s32.totalorder %s90, %s92
    %p96 = scmp.eq.s32.totalorder %s14, 0
    %p97 = por %p95, %p96
    %p98 = scmp.ne.s32.totalorder %s90, %s92
    %p99 = scmp.eq.s32.totalorder %s19, 3
    %p100 = por %p98, %p99
    %p101 = scmp.ne.s32.totalorder %s92, %s93
    %p102 = scmp.eq.s32.totalorder %s19, 0
    %p103 = por %p101, %p102
    %p104 = scmp.ne.s32.totalorder %s92, %s93
    %p105 = scmp.eq.s32.totalorder %s20, 3
    %p106 = por %p104, %p105
    %p108 = scmp.ne.s32.totalorder %s93, %s107
    %p109 = scmp.eq.s32.totalorder %s20, 0
    %p110 = por %p108, %p109
    %s112 = sadd.s32 %s111, 1
    %p115 = scmp.eq.s32.totalorder %s14, 3
    %p116 = scmp.ne.s32.totalorder %s111, %s113
    %p117 = scmp.eq.s32.totalorder %s14, 0
    %p118 = por %p116, %p117
    %p119 = scmp.ne.s32.totalorder %s111, %s113
    %p120 = scmp.eq.s32.totalorder %s19, 3
    %p121 = por %p119, %p120
    %p122 = scmp.ne.s32.totalorder %s113, %s114
    %p123 = scmp.eq.s32.totalorder %s19, 0
    %p124 = por %p122, %p123
    %p125 = scmp.ne.s32.totalorder %s113, %s114
    %p126 = scmp.eq.s32.totalorder %s20, 3
    %p127 = por %p125, %p126
    %p129 = scmp.ne.s32.totalorder %s114, %s128
    %p130 = scmp.eq.s32.totalorder %s20, 0
    %p131 = por %p129, %p130
    %s132 = ssub.s32 %s14, %s21
    %p133 = scmp.eq.s32.totalorder %s132, 0
    %s135 = sadd.s32 %s134, 1
    %s136 = scalar_select %p133, %s134, %s135
    %p139 = pneg %p133
    %p140 = scmp.eq.s32.totalorder %s14, 3
    %p141 = por %p139, %p140
    %p142 = scmp.ne.s32.totalorder %s134, %s137
    %p143 = scmp.eq.s32.totalorder %s14, 0
    %p144 = por %p142, %p143
    %p145 = scmp.ne.s32.totalorder %s134, %s137
    %p146 = scmp.eq.s32.totalorder %s19, 3
    %p147 = por %p145, %p146
    %p148 = scmp.ne.s32.totalorder %s137, %s138
    %p149 = scmp.eq.s32.totalorder %s19, 0
    %p150 = por %p148, %p149
    %p151 = scmp.ne.s32.totalorder %s137, %s138
    %p152 = scmp.eq.s32.totalorder %s20, 3
    %p153 = por %p151, %p152
    %p155 = scmp.ne.s32.totalorder %s138, %s154
    %p156 = scmp.eq.s32.totalorder %s20, 0
    %p157 = por %p155, %p156
    %s158 = ssub.s32 %s14, %s21
    %p159 = scmp.eq.s32.totalorder %s158, 0
    %s161 = sadd.s32 %s160, 1
    %s162 = scalar_select %p159, %s160, %s161
    %p165 = pneg %p159
    %p166 = scmp.eq.s32.totalorder %s14, 3
    %p167 = por %p165, %p166
    %p168 = scmp.ne.s32.totalorder %s160, %s163
    %p169 = scmp.eq.s32.totalorder %s14, 0
    %p170 = por %p168, %p169
    %p171 = scmp.ne.s32.totalorder %s160, %s163
    %p172 = scmp.eq.s32.totalorder %s19, 3
    %p173 = por %p171, %p172
    %p174 = scmp.ne.s32.totalorder %s163, %s164
    %p175 = scmp.eq.s32.totalorder %s19, 0
    %p176 = por %p174, %p175
    %p177 = scmp.ne.s32.totalorder %s163, %s164
    %p178 = scmp.eq.s32.totalorder %s20, 3
    %p179 = por %p177, %p178
    %p181 = scmp.ne.s32.totalorder %s164, %s180
    %p182 = scmp.eq.s32.totalorder %s20, 0
    %p183 = por %p181, %p182
    %s184 = ssub.s32 %s14, %s21
    %p185 = scmp.eq.s32.totalorder %s184, 0
    %s187 = sadd.s32 %s186, 1
    %s188 = scalar_select %p185, %s186, %s187
    %p191 = pneg %p185
    %p192 = scmp.eq.s32.totalorder %s14, 3
    %p193 = por %p191, %p192
    %p194 = scmp.ne.s32.totalorder %s186, %s189
    %p195 = scmp.eq.s32.totalorder %s14, 0
    %p196 = por %p194, %p195
    %p197 = scmp.ne.s32.totalorder %s186, %s189
    %p198 = scmp.eq.s32.totalorder %s19, 3
    %p199 = por %p197, %p198
    %p200 = scmp.ne.s32.totalorder %s189, %s190
    %p201 = scmp.eq.s32.totalorder %s19, 0
    %p202 = por %p200, %p201
    %p203 = scmp.ne.s32.totalorder %s189, %s190
    %p204 = scmp.eq.s32.totalorder %s20, 3
    %p205 = por %p203, %p204
    %p207 = scmp.ne.s32.totalorder %s190, %s206
    %p208 = scmp.eq.s32.totalorder %s20, 0
    %p209 = por %p207, %p208
    %p210 = scmp.le.s32.totalorder 1, %s14
    %p211 = scmp.lt.s32.totalorder %s14, 5
    %p212 = pnand %p210, %p211
    %p213 = pneg %p212
    // Predicated region
    $region9: #{wgan_generator_forward.12} parent=5 // pred_check
      _
    $region10: #{wgan_generator_forward.12} parent=5 // pred_check_branch
      %215 = sbr.rel (%p212) target = $region12
    $region11: #{wgan_generator_forward.12} parent=5 // pred_region
      %s216 = ssub.s32 %s14, 1
      // Predicated region
      $region13: #{wgan_generator_forward.12} parent=11 // pred_check
        %p217 = pneg %p61
      $region14: #{wgan_generator_forward.12} parent=11 // pred_check_branch
        %219 = sbr.rel (%p217) target = $region16
      $region15: #{wgan_generator_forward.12} parent=11 // pred_region
        _
      $region16: #{wgan_generator_forward.12} parent=11 // pred_fallthru
        _
      // Predicated region
      $region17: #{wgan_generator_forward.12} parent=11 // pred_check
        %p220 = pneg %p82
      $region18: #{wgan_generator_forward.12} parent=11 // pred_check_branch
        %222 = sbr.rel (%p220) target = $region20
      $region19: #{wgan_generator_forward.12} parent=11 // pred_region
        _
      $region20: #{wgan_generator_forward.12} parent=11 // pred_fallthru
        _
      // Predicated region
      $region21: #{wgan_generator_forward.12} parent=11 // pred_check
        %p223 = pneg %p103
      $region22: #{wgan_generator_forward.12} parent=11 // pred_check_branch
        %225 = sbr.rel (%p223) target = $region24
      $region23: #{wgan_generator_forward.12} parent=11 // pred_region
        _
      $region24: #{wgan_generator_forward.12} parent=11 // pred_fallthru
        _
      // Predicated region
      $region25: #{wgan_generator_forward.12} parent=11 // pred_check
        %p226 = pneg %p124
      $region26: #{wgan_generator_forward.12} parent=11 // pred_check_branch
        %228 = sbr.rel (%p226) target = $region28
      $region27: #{wgan_generator_forward.12} parent=11 // pred_region
        _
      $region28: #{wgan_generator_forward.12} parent=11 // pred_fallthru
        _
    $region12: #{wgan_generator_forward.12} parent=5 // pred_fallthru
      _
    %p229 = scmp.lt.s32.totalorder %s14, 4
    // Predicated region
    $region29: #{wgan_generator_forward.12} parent=5 // pred_check
      %p230 = pneg %p229
    $region30: #{wgan_generator_forward.12} parent=5 // pred_check_branch
      %232 = sbr.rel (%p230) target = $region32
    $region31: #{wgan_generator_forward.12} parent=5 // pred_region
      // Predicated region
      $region33: #{wgan_generator_forward.12} parent=31 // pred_check
        %p233 = pneg %p34
      $region34: #{wgan_generator_forward.12} parent=31 // pred_check_branch
        %235 = sbr.rel (%p233) target = $region36
      $region35: #{wgan_generator_forward.12} parent=31 // pred_region
        %s236 = smul.u32 64, %s14
        %p237 = scmp.lt.s32.totalorder %s236, 255
        %s238 = scalar_select %p237, %s236, 255
        %s239 = smul.addr %s238, 2
        %s240 = smul.addr %s239, 4
        %s241 = scalar_lea.vmem %s0, %s240
        %s242 = smul.u32 64, %s14
      $region36: #{wgan_generator_forward.12} parent=31 // pred_fallthru
        _
    $region32: #{wgan_generator_forward.12} parent=5 // pred_fallthru
      _
    %p243 = scmp.le.s32.totalorder 1, %s14
    %p244 = scmp.lt.s32.totalorder %s14, 5
    %p245 = pnand %p243, %p244
    %p246 = pneg %p245
    // Predicated region
    $region37: #{wgan_generator_forward.12} parent=5 // pred_check
      _
    $region38: #{wgan_generator_forward.12} parent=5 // pred_check_branch
      %248 = sbr.rel (%p245) target = $region40
    $region39: #{wgan_generator_forward.12} parent=5 // pred_region
      %s249 = ssub.s32 %s14, 1
      %s250 = smul.u32 64, %s19
      %p251 = scmp.lt.s32.totalorder %s250, 255
      %s252 = scalar_select %p251, %s250, 255
      %s253 = smul.addr %s252, 2
      %s254 = smul.addr %s253, 4
      %s255 = scalar_lea.vmem %s0, %s254
      %p256 = pneg %p40
      %p257 = pneg %p37
      %p258 = pneg %p61
      %p259 = pneg %p58
      %p260 = pneg %p82
      %p261 = pneg %p79
      %p262 = pneg %p103
      %p263 = pneg %p100
      %p264 = pneg %p124
      %p265 = pneg %p121
      %p266 = pneg %p150
      %p267 = pneg %p147
      %s268 = smul.u32 64, %s19
      %p269 = scmp.lt.s32.totalorder %s268, 255
      %s270 = scalar_select %p269, %s268, 255
      %s271 = smul.addr %s270, 4
      %s272 = scalar_lea.vmem %s5, %s271
      %p273 = pneg %p176
      %p274 = pneg %p173
      %p275 = scmp.lt.s32.totalorder %s19, 3
      %s276 = scalar_select %p275, %s19, 3
      %s277 = scalar_lea.vmem %s6, %s276
      %p278 = pneg %p202
      %p279 = pneg %p199
      %p280 = scmp.lt.s32.totalorder %s19, 3
      %s281 = scalar_select %p280, %s19, 3
      %s282 = scalar_lea.vmem %s7, %s281
      %s283 = smul.u32 64, %s19
      %p284 = scmp.lt.s32.totalorder %s283, 255
      %s285 = scalar_select %p284, %s283, 255
      %s286 = smul.addr %s285, 2
      %s287 = smul.addr %s286, 4
      %s288 = scalar_lea.vmem %s0, %s287
      %s289 = smul.u32 64, %s19
      %s290 = smul.u32 64, %s19
      %p291 = scmp.lt.s32.totalorder %s290, 255
      %s292 = scalar_select %p291, %s290, 255
      %s293 = smul.addr %s292, 4
      %s294 = scalar_lea.vmem %s5, %s293
      %s295 = smul.u32 64, %s19
      %p296 = scmp.lt.s32.totalorder %s19, 3
      %s297 = scalar_select %p296, %s19, 3
      %s298 = scalar_lea.vmem %s6, %s297
      %p299 = scmp.lt.s32.totalorder %s19, 3
      %s300 = scalar_select %p299, %s19, 3
      %s301 = scalar_lea.vmem %s7, %s300
      %v302 = vld [vmem:[%s288] sm:$0xff]
      %v303 = vld [vmem:[%s288 + $0x8] sm:$0xff]
      %v304 = vld [vmem:[%s288 + $0x10] sm:$0xff]
      %v305 = vld [vmem:[%s288 + $0x18] sm:$0xff]
      %v306 = vld [vmem:[%s288 + $0x20] sm:$0xff]
      %v307 = vld [vmem:[%s288 + $0x28] sm:$0xff]
      %v308 = vld [vmem:[%s288 + $0x30] sm:$0xff]
      %v309 = vld [vmem:[%s288 + $0x38] sm:$0xff]
      %v310 = vld [vmem:[%s288 + $0x40] sm:$0xff]
      %v311 = vld [vmem:[%s288 + $0x48] sm:$0xff]
      %v312 = vld [vmem:[%s288 + $0x50] sm:$0xff]
      %v313 = vld [vmem:[%s288 + $0x58] sm:$0xff]
      %v314 = vld [vmem:[%s288 + $0x60] sm:$0xff]
      %v315 = vld [vmem:[%s288 + $0x68] sm:$0xff]
      %v316 = vld [vmem:[%s288 + $0x70] sm:$0xff]
      %v317 = vld [vmem:[%s288 + $0x78] sm:$0xff]
      %v318 = vld [vmem:[%s288 + $0x80] sm:$0xff]
      %v319 = vld [vmem:[%s288 + $0x88] sm:$0xff]
      %v320 = vld [vmem:[%s288 + $0x90] sm:$0xff]
      %v321 = vld [vmem:[%s288 + $0x98] sm:$0xff]
      %v322 = vld [vmem:[%s288 + $0xa0] sm:$0xff]
      %v323 = vld [vmem:[%s288 + $0xa8] sm:$0xff]
      %v324 = vld [vmem:[%s288 + $0xb0] sm:$0xff]
      %v325 = vld [vmem:[%s288 + $0xb8] sm:$0xff]
      %v326 = vld [vmem:[%s288 + $0xc0] sm:$0xff]
      %v327 = vld [vmem:[%s288 + $0xc8] sm:$0xff]
      %v328 = vld [vmem:[%s288 + $0xd0] sm:$0xff]
      %v329 = vld [vmem:[%s288 + $0xd8] sm:$0xff]
      %v330 = vld [vmem:[%s288 + $0xe0] sm:$0xff]
      %v331 = vld [vmem:[%s288 + $0xe8] sm:$0xff]
      %v332 = vld [vmem:[%s288 + $0xf0] sm:$0xff]
      %v333 = vld [vmem:[%s288 + $0xf8] sm:$0xff]
      %v334 = vld [vmem:[%s288 + $0x100] sm:$0xff]
      %v335 = vld [vmem:[%s288 + $0x108] sm:$0xff]
      %v336 = vld [vmem:[%s288 + $0x110] sm:$0xff]
      %v337 = vld [vmem:[%s288 + $0x118] sm:$0xff]
      %v338 = vld [vmem:[%s288 + $0x120] sm:$0xff]
      %v339 = vld [vmem:[%s288 + $0x128] sm:$0xff]
      %v340 = vld [vmem:[%s288 + $0x130] sm:$0xff]
      %v341 = vld [vmem:[%s288 + $0x138] sm:$0xff]
      %v342 = vld [vmem:[%s288 + $0x140] sm:$0xff]
      %v343 = vld [vmem:[%s288 + $0x148] sm:$0xff]
      %v344 = vld [vmem:[%s288 + $0x150] sm:$0xff]
      %v345 = vld [vmem:[%s288 + $0x158] sm:$0xff]
      %v346 = vld [vmem:[%s288 + $0x160] sm:$0xff]
      %v347 = vld [vmem:[%s288 + $0x168] sm:$0xff]
      %v348 = vld [vmem:[%s288 + $0x170] sm:$0xff]
      %v349 = vld [vmem:[%s288 + $0x178] sm:$0xff]
      %v350 = vld [vmem:[%s288 + $0x180] sm:$0xff]
      %v351 = vld [vmem:[%s288 + $0x188] sm:$0xff]
      %v352 = vld [vmem:[%s288 + $0x190] sm:$0xff]
      %v353 = vld [vmem:[%s288 + $0x198] sm:$0xff]
      %v354 = vld [vmem:[%s288 + $0x1a0] sm:$0xff]
      %v355 = vld [vmem:[%s288 + $0x1a8] sm:$0xff]
      %v356 = vld [vmem:[%s288 + $0x1b0] sm:$0xff]
      %v357 = vld [vmem:[%s288 + $0x1b8] sm:$0xff]
      %v358 = vld [vmem:[%s288 + $0x1c0] sm:$0xff]
      %v359 = vld [vmem:[%s288 + $0x1c8] sm:$0xff]
      %v360 = vld [vmem:[%s288 + $0x1d0] sm:$0xff]
      %v361 = vld [vmem:[%s288 + $0x1d8] sm:$0xff]
      %v362 = vld [vmem:[%s288 + $0x1e0] sm:$0xff]
      %v363 = vld [vmem:[%s288 + $0x1e8] sm:$0xff]
      %v364 = vld [vmem:[%s288 + $0x1f0] sm:$0xff]
      %v365 = vld [vmem:[%s288 + $0x1f8] sm:$0xff]
      %v366 = vunpack.c.l.bf16 %v302
      %v367 = vunpack.c.h.bf16 %v302
      %v368 = vunpack.c.l.bf16 %v303
      %v369 = vunpack.c.h.bf16 %v303
      %v370 = vunpack.c.l.bf16 %v304
      %v371 = vunpack.c.h.bf16 %v304
      %v372 = vunpack.c.l.bf16 %v305
      %v373 = vunpack.c.h.bf16 %v305
      %v374 = vunpack.c.l.bf16 %v306
      %v375 = vunpack.c.h.bf16 %v306
      %v376 = vunpack.c.l.bf16 %v307
      %v377 = vunpack.c.h.bf16 %v307
      %v378 = vunpack.c.l.bf16 %v308
      %v379 = vunpack.c.h.bf16 %v308
      %v380 = vunpack.c.l.bf16 %v309
      %v381 = vunpack.c.h.bf16 %v309
      %v382 = vunpack.c.l.bf16 %v310
      %v383 = vunpack.c.h.bf16 %v310
      %v384 = vunpack.c.l.bf16 %v311
      %v385 = vunpack.c.h.bf16 %v311
      %v386 = vunpack.c.l.bf16 %v312
      %v387 = vunpack.c.h.bf16 %v312
      %v388 = vunpack.c.l.bf16 %v313
      %v389 = vunpack.c.h.bf16 %v313
      %v390 = vunpack.c.l.bf16 %v314
      %v391 = vunpack.c.h.bf16 %v314
      %v392 = vunpack.c.l.bf16 %v315
      %v393 = vunpack.c.h.bf16 %v315
      %v394 = vunpack.c.l.bf16 %v316
      %v395 = vunpack.c.h.bf16 %v316
      %v396 = vunpack.c.l.bf16 %v317
      %v397 = vunpack.c.h.bf16 %v317
      %v398 = vunpack.c.l.bf16 %v318
      %v399 = vunpack.c.h.bf16 %v318
      %v400 = vunpack.c.l.bf16 %v319
      %v401 = vunpack.c.h.bf16 %v319
      %v402 = vunpack.c.l.bf16 %v320
      %v403 = vunpack.c.h.bf16 %v320
      %v404 = vunpack.c.l.bf16 %v321
      %v405 = vunpack.c.h.bf16 %v321
      %v406 = vunpack.c.l.bf16 %v322
      %v407 = vunpack.c.h.bf16 %v322
      %v408 = vunpack.c.l.bf16 %v323
      %v409 = vunpack.c.h.bf16 %v323
      %v410 = vunpack.c.l.bf16 %v324
      %v411 = vunpack.c.h.bf16 %v324
      %v412 = vunpack.c.l.bf16 %v325
      %v413 = vunpack.c.h.bf16 %v325
      %v414 = vunpack.c.l.bf16 %v326
      %v415 = vunpack.c.h.bf16 %v326
      %v416 = vunpack.c.l.bf16 %v327
      %v417 = vunpack.c.h.bf16 %v327
      %v418 = vunpack.c.l.bf16 %v328
      %v419 = vunpack.c.h.bf16 %v328
      %v420 = vunpack.c.l.bf16 %v329
      %v421 = vunpack.c.h.bf16 %v329
      %v422 = vunpack.c.l.bf16 %v330
      %v423 = vunpack.c.h.bf16 %v330
      %v424 = vunpack.c.l.bf16 %v331
      %v425 = vunpack.c.h.bf16 %v331
      %v426 = vunpack.c.l.bf16 %v332
      %v427 = vunpack.c.h.bf16 %v332
      %v428 = vunpack.c.l.bf16 %v333
      %v429 = vunpack.c.h.bf16 %v333
      %v430 = vunpack.c.l.bf16 %v334
      %v431 = vunpack.c.h.bf16 %v334
      %v432 = vunpack.c.l.bf16 %v335
      %v433 = vunpack.c.h.bf16 %v335
      %v434 = vunpack.c.l.bf16 %v336
      %v435 = vunpack.c.h.bf16 %v336
      %v436 = vunpack.c.l.bf16 %v337
      %v437 = vunpack.c.h.bf16 %v337
      %v438 = vunpack.c.l.bf16 %v338
      %v439 = vunpack.c.h.bf16 %v338
      %v440 = vunpack.c.l.bf16 %v339
      %v441 = vunpack.c.h.bf16 %v339
      %v442 = vunpack.c.l.bf16 %v340
      %v443 = vunpack.c.h.bf16 %v340
      %v444 = vunpack.c.l.bf16 %v341
      %v445 = vunpack.c.h.bf16 %v341
      %v446 = vunpack.c.l.bf16 %v342
      %v447 = vunpack.c.h.bf16 %v342
      %v448 = vunpack.c.l.bf16 %v343
      %v449 = vunpack.c.h.bf16 %v343
      %v450 = vunpack.c.l.bf16 %v344
      %v451 = vunpack.c.h.bf16 %v344
      %v452 = vunpack.c.l.bf16 %v345
      %v453 = vunpack.c.h.bf16 %v345
      %v454 = vunpack.c.l.bf16 %v346
      %v455 = vunpack.c.h.bf16 %v346
      %v456 = vunpack.c.l.bf16 %v347
      %v457 = vunpack.c.h.bf16 %v347
      %v458 = vunpack.c.l.bf16 %v348
      %v459 = vunpack.c.h.bf16 %v348
      %v460 = vunpack.c.l.bf16 %v349
      %v461 = vunpack.c.h.bf16 %v349
      %v462 = vunpack.c.l.bf16 %v350
      %v463 = vunpack.c.h.bf16 %v350
      %v464 = vunpack.c.l.bf16 %v351
      %v465 = vunpack.c.h.bf16 %v351
      %v466 = vunpack.c.l.bf16 %v352
      %v467 = vunpack.c.h.bf16 %v352
      %v468 = vunpack.c.l.bf16 %v353
      %v469 = vunpack.c.h.bf16 %v353
      %v470 = vunpack.c.l.bf16 %v354
      %v471 = vunpack.c.h.bf16 %v354
      %v472 = vunpack.c.l.bf16 %v355
      %v473 = vunpack.c.h.bf16 %v355
      %v474 = vunpack.c.l.bf16 %v356
      %v475 = vunpack.c.h.bf16 %v356
      %v476 = vunpack.c.l.bf16 %v357
      %v477 = vunpack.c.h.bf16 %v357
      %v478 = vunpack.c.l.bf16 %v358
      %v479 = vunpack.c.h.bf16 %v358
      %v480 = vunpack.c.l.bf16 %v359
      %v481 = vunpack.c.h.bf16 %v359
      %v482 = vunpack.c.l.bf16 %v360
      %v483 = vunpack.c.h.bf16 %v360
      %v484 = vunpack.c.l.bf16 %v361
      %v485 = vunpack.c.h.bf16 %v361
      %v486 = vunpack.c.l.bf16 %v362
      %v487 = vunpack.c.h.bf16 %v362
      %v488 = vunpack.c.l.bf16 %v363
      %v489 = vunpack.c.h.bf16 %v363
      %v490 = vunpack.c.l.bf16 %v364
      %v491 = vunpack.c.h.bf16 %v364
      %v492 = vunpack.c.l.bf16 %v365
      %v493 = vunpack.c.h.bf16 %v365
      %v494 = vld [vmem:[%s2] sm:$0x3]
      %v496 = vperm.slane %v494, 0
      %v497 = vperm.slane %v494, 1
      %v500 = vmul.f32 %v366, %v496
      %v501 = vmul.f32 %v367, %v497
      %v502 = vmul.f32 %v368, %v496
      %v503 = vmul.f32 %v369, %v497
      %v504 = vmul.f32 %v370, %v496
      %v505 = vmul.f32 %v371, %v497
      %v506 = vmul.f32 %v372, %v496
      %v507 = vmul.f32 %v373, %v497
      %v508 = vmul.f32 %v374, %v496
      %v509 = vmul.f32 %v375, %v497
      %v510 = vmul.f32 %v376, %v496
      %v511 = vmul.f32 %v377, %v497
      %v512 = vmul.f32 %v378, %v496
      %v513 = vmul.f32 %v379, %v497
      %v514 = vmul.f32 %v380, %v496
      %v515 = vmul.f32 %v381, %v497
      %v516 = vmul.f32 %v382, %v496
      %v517 = vmul.f32 %v383, %v497
      %v518 = vmul.f32 %v384, %v496
      %v519 = vmul.f32 %v385, %v497
      %v520 = vmul.f32 %v386, %v496
      %v521 = vmul.f32 %v387, %v497
      %v522 = vmul.f32 %v388, %v496
      %v523 = vmul.f32 %v389, %v497
      %v524 = vmul.f32 %v390, %v496
      %v525 = vmul.f32 %v391, %v497
      %v526 = vmul.f32 %v392, %v496
      %v527 = vmul.f32 %v393, %v497
      %v528 = vmul.f32 %v394, %v496
      %v529 = vmul.f32 %v395, %v497
      %v530 = vmul.f32 %v396, %v496
      %v531 = vmul.f32 %v397, %v497
      %v532 = vmul.f32 %v398, %v496
      %v533 = vmul.f32 %v399, %v497
      %v534 = vmul.f32 %v400, %v496
      %v535 = vmul.f32 %v401, %v497
      %v536 = vmul.f32 %v402, %v496
      %v537 = vmul.f32 %v403, %v497
      %v538 = vmul.f32 %v404, %v496
      %v539 = vmul.f32 %v405, %v497
      %v540 = vmul.f32 %v406, %v496
      %v541 = vmul.f32 %v407, %v497
      %v542 = vmul.f32 %v408, %v496
      %v543 = vmul.f32 %v409, %v497
      %v544 = vmul.f32 %v410, %v496
      %v545 = vmul.f32 %v411, %v497
      %v546 = vmul.f32 %v412, %v496
      %v547 = vmul.f32 %v413, %v497
      %v548 = vmul.f32 %v414, %v496
      %v549 = vmul.f32 %v415, %v497
      %v550 = vmul.f32 %v416, %v496
      %v551 = vmul.f32 %v417, %v497
      %v552 = vmul.f32 %v418, %v496
      %v553 = vmul.f32 %v419, %v497
      %v554 = vmul.f32 %v420, %v496
      %v555 = vmul.f32 %v421, %v497
      %v556 = vmul.f32 %v422, %v496
      %v557 = vmul.f32 %v423, %v497
      %v558 = vmul.f32 %v424, %v496
      %v559 = vmul.f32 %v425, %v497
      %v560 = vmul.f32 %v426, %v496
      %v561 = vmul.f32 %v427, %v497
      %v562 = vmul.f32 %v428, %v496
      %v563 = vmul.f32 %v429, %v497
      %v564 = vmul.f32 %v430, %v496
      %v565 = vmul.f32 %v431, %v497
      %v566 = vmul.f32 %v432, %v496
      %v567 = vmul.f32 %v433, %v497
      %v568 = vmul.f32 %v434, %v496
      %v569 = vmul.f32 %v435, %v497
      %v570 = vmul.f32 %v436, %v496
      %v571 = vmul.f32 %v437, %v497
      %v572 = vmul.f32 %v438, %v496
      %v573 = vmul.f32 %v439, %v497
      %v574 = vmul.f32 %v440, %v496
      %v575 = vmul.f32 %v441, %v497
      %v576 = vmul.f32 %v442, %v496
      %v577 = vmul.f32 %v443, %v497
      %v578 = vmul.f32 %v444, %v496
      %v579 = vmul.f32 %v445, %v497
      %v580 = vmul.f32 %v446, %v496
      %v581 = vmul.f32 %v447, %v497
      %v582 = vmul.f32 %v448, %v496
      %v583 = vmul.f32 %v449, %v497
      %v584 = vmul.f32 %v450, %v496
      %v585 = vmul.f32 %v451, %v497
      %v586 = vmul.f32 %v452, %v496
      %v587 = vmul.f32 %v453, %v497
      %v588 = vmul.f32 %v454, %v496
      %v589 = vmul.f32 %v455, %v497
      %v590 = vmul.f32 %v456, %v496
      %v591 = vmul.f32 %v457, %v497
      %v592 = vmul.f32 %v458, %v496
      %v593 = vmul.f32 %v459, %v497
      %v594 = vmul.f32 %v460, %v496
      %v595 = vmul.f32 %v461, %v497
      %v596 = vmul.f32 %v462, %v496
      %v597 = vmul.f32 %v463, %v497
      %v598 = vmul.f32 %v464, %v496
      %v599 = vmul.f32 %v465, %v497
      %v600 = vmul.f32 %v466, %v496
      %v601 = vmul.f32 %v467, %v497
      %v602 = vmul.f32 %v468, %v496
      %v603 = vmul.f32 %v469, %v497
      %v604 = vmul.f32 %v470, %v496
      %v605 = vmul.f32 %v471, %v497
      %v606 = vmul.f32 %v472, %v496
      %v607 = vmul.f32 %v473, %v497
      %v608 = vmul.f32 %v474, %v496
      %v609 = vmul.f32 %v475, %v497
      %v610 = vmul.f32 %v476, %v496
      %v611 = vmul.f32 %v477, %v497
      %v612 = vmul.f32 %v478, %v496
      %v613 = vmul.f32 %v479, %v497
      %v614 = vmul.f32 %v480, %v496
      %v615 = vmul.f32 %v481, %v497
      %v616 = vmul.f32 %v482, %v496
      %v617 = vmul.f32 %v483, %v497
      %v618 = vmul.f32 %v484, %v496
      %v619 = vmul.f32 %v485, %v497
      %v620 = vmul.f32 %v486, %v496
      %v621 = vmul.f32 %v487, %v497
      %v622 = vmul.f32 %v488, %v496
      %v623 = vmul.f32 %v489, %v497
      %v624 = vmul.f32 %v490, %v496
      %v625 = vmul.f32 %v491, %v497
      %v626 = vmul.f32 %v492, %v496
      %v627 = vmul.f32 %v493, %v497
      %v628 = vld [vmem:[%s3] sm:$0x3]
      %v630 = vperm.slane %v628, 0
      %v631 = vperm.slane %v628, 1
      %v634 = vadd.f32 %v500, %v630
      %v635 = vadd.f32 %v501, %v631
      %v636 = vadd.f32 %v502, %v630
      %v637 = vadd.f32 %v503, %v631
      %v638 = vadd.f32 %v504, %v630
      %v639 = vadd.f32 %v505, %v631
      %v640 = vadd.f32 %v506, %v630
      %v641 = vadd.f32 %v507, %v631
      %v642 = vadd.f32 %v508, %v630
      %v643 = vadd.f32 %v509, %v631
      %v644 = vadd.f32 %v510, %v630
      %v645 = vadd.f32 %v511, %v631
      %v646 = vadd.f32 %v512, %v630
      %v647 = vadd.f32 %v513, %v631
      %v648 = vadd.f32 %v514, %v630
      %v649 = vadd.f32 %v515, %v631
      %v650 = vadd.f32 %v516, %v630
      %v651 = vadd.f32 %v517, %v631
      %v652 = vadd.f32 %v518, %v630
      %v653 = vadd.f32 %v519, %v631
      %v654 = vadd.f32 %v520, %v630
      %v655 = vadd.f32 %v521, %v631
      %v656 = vadd.f32 %v522, %v630
      %v657 = vadd.f32 %v523, %v631
      %v658 = vadd.f32 %v524, %v630
      %v659 = vadd.f32 %v525, %v631
      %v660 = vadd.f32 %v526, %v630
      %v661 = vadd.f32 %v527, %v631
      %v662 = vadd.f32 %v528, %v630
      %v663 = vadd.f32 %v529, %v631
      %v664 = vadd.f32 %v530, %v630
      %v665 = vadd.f32 %v531, %v631
      %v666 = vadd.f32 %v532, %v630
      %v667 = vadd.f32 %v533, %v631
      %v668 = vadd.f32 %v534, %v630
      %v669 = vadd.f32 %v535, %v631
      %v670 = vadd.f32 %v536, %v630
      %v671 = vadd.f32 %v537, %v631
      %v672 = vadd.f32 %v538, %v630
      %v673 = vadd.f32 %v539, %v631
      %v674 = vadd.f32 %v540, %v630
      %v675 = vadd.f32 %v541, %v631
      %v676 = vadd.f32 %v542, %v630
      %v677 = vadd.f32 %v543, %v631
      %v678 = vadd.f32 %v544, %v630
      %v679 = vadd.f32 %v545, %v631
      %v680 = vadd.f32 %v546, %v630
      %v681 = vadd.f32 %v547, %v631
      %v682 = vadd.f32 %v548, %v630
      %v683 = vadd.f32 %v549, %v631
      %v684 = vadd.f32 %v550, %v630
      %v685 = vadd.f32 %v551, %v631
      %v686 = vadd.f32 %v552, %v630
      %v687 = vadd.f32 %v553, %v631
      %v688 = vadd.f32 %v554, %v630
      %v689 = vadd.f32 %v555, %v631
      %v690 = vadd.f32 %v556, %v630
      %v691 = vadd.f32 %v557, %v631
      %v692 = vadd.f32 %v558, %v630
      %v693 = vadd.f32 %v559, %v631
      %v694 = vadd.f32 %v560, %v630
      %v695 = vadd.f32 %v561, %v631
      %v696 = vadd.f32 %v562, %v630
      %v697 = vadd.f32 %v563, %v631
      %v698 = vadd.f32 %v564, %v630
      %v699 = vadd.f32 %v565, %v631
      %v700 = vadd.f32 %v566, %v630
      %v701 = vadd.f32 %v567, %v631
      %v702 = vadd.f32 %v568, %v630
      %v703 = vadd.f32 %v569, %v631
      %v704 = vadd.f32 %v570, %v630
      %v705 = vadd.f32 %v571, %v631
      %v706 = vadd.f32 %v572, %v630
      %v707 = vadd.f32 %v573, %v631
      %v708 = vadd.f32 %v574, %v630
      %v709 = vadd.f32 %v575, %v631
      %v710 = vadd.f32 %v576, %v630
      %v711 = vadd.f32 %v577, %v631
      %v712 = vadd.f32 %v578, %v630
      %v713 = vadd.f32 %v579, %v631
      %v714 = vadd.f32 %v580, %v630
      %v715 = vadd.f32 %v581, %v631
      %v716 = vadd.f32 %v582, %v630
      %v717 = vadd.f32 %v583, %v631
      %v718 = vadd.f32 %v584, %v630
      %v719 = vadd.f32 %v585, %v631
      %v720 = vadd.f32 %v586, %v630
      %v721 = vadd.f32 %v587, %v631
      %v722 = vadd.f32 %v588, %v630
      %v723 = vadd.f32 %v589, %v631
      %v724 = vadd.f32 %v590, %v630
      %v725 = vadd.f32 %v591, %v631
      %v726 = vadd.f32 %v592, %v630
      %v727 = vadd.f32 %v593, %v631
      %v728 = vadd.f32 %v594, %v630
      %v729 = vadd.f32 %v595, %v631
      %v730 = vadd.f32 %v596, %v630
      %v731 = vadd.f32 %v597, %v631
      %v732 = vadd.f32 %v598, %v630
      %v733 = vadd.f32 %v599, %v631
      %v734 = vadd.f32 %v600, %v630
      %v735 = vadd.f32 %v601, %v631
      %v736 = vadd.f32 %v602, %v630
      %v737 = vadd.f32 %v603, %v631
      %v738 = vadd.f32 %v604, %v630
      %v739 = vadd.f32 %v605, %v631
      %v740 = vadd.f32 %v606, %v630
      %v741 = vadd.f32 %v607, %v631
      %v742 = vadd.f32 %v608, %v630
      %v743 = vadd.f32 %v609, %v631
      %v744 = vadd.f32 %v610, %v630
      %v745 = vadd.f32 %v611, %v631
      %v746 = vadd.f32 %v612, %v630
      %v747 = vadd.f32 %v613, %v631
      %v748 = vadd.f32 %v614, %v630
      %v749 = vadd.f32 %v615, %v631
      %v750 = vadd.f32 %v616, %v630
      %v751 = vadd.f32 %v617, %v631
      %v752 = vadd.f32 %v618, %v630
      %v753 = vadd.f32 %v619, %v631
      %v754 = vadd.f32 %v620, %v630
      %v755 = vadd.f32 %v621, %v631
      %v756 = vadd.f32 %v622, %v630
      %v757 = vadd.f32 %v623, %v631
      %v758 = vadd.f32 %v624, %v630
      %v759 = vadd.f32 %v625, %v631
      %v760 = vadd.f32 %v626, %v630
      %v761 = vadd.f32 %v627, %v631
      %vm762 = vcmp.ge.f32.partialorder %v634, 0.0
      %vm763 = vcmp.ge.f32.partialorder %v635, 0.0
      %vm764 = vcmp.ge.f32.partialorder %v636, 0.0
      %vm765 = vcmp.ge.f32.partialorder %v637, 0.0
      %vm766 = vcmp.ge.f32.partialorder %v638, 0.0
      %vm767 = vcmp.ge.f32.partialorder %v639, 0.0
      %vm768 = vcmp.ge.f32.partialorder %v640, 0.0
      %vm769 = vcmp.ge.f32.partialorder %v641, 0.0
      %vm770 = vcmp.ge.f32.partialorder %v642, 0.0
      %vm771 = vcmp.ge.f32.partialorder %v643, 0.0
      %vm772 = vcmp.ge.f32.partialorder %v644, 0.0
      %vm773 = vcmp.ge.f32.partialorder %v645, 0.0
      %vm774 = vcmp.ge.f32.partialorder %v646, 0.0
      %vm775 = vcmp.ge.f32.partialorder %v647, 0.0
      %vm776 = vcmp.ge.f32.partialorder %v648, 0.0
      %vm777 = vcmp.ge.f32.partialorder %v649, 0.0
      %vm778 = vcmp.ge.f32.partialorder %v650, 0.0
      %vm779 = vcmp.ge.f32.partialorder %v651, 0.0
      %vm780 = vcmp.ge.f32.partialorder %v652, 0.0
      %vm781 = vcmp.ge.f32.partialorder %v653, 0.0
      %vm782 = vcmp.ge.f32.partialorder %v654, 0.0
      %vm783 = vcmp.ge.f32.partialorder %v655, 0.0
      %vm784 = vcmp.ge.f32.partialorder %v656, 0.0
      %vm785 = vcmp.ge.f32.partialorder %v657, 0.0
      %vm786 = vcmp.ge.f32.partialorder %v658, 0.0
      %vm787 = vcmp.ge.f32.partialorder %v659, 0.0
      %vm788 = vcmp.ge.f32.partialorder %v660, 0.0
      %vm789 = vcmp.ge.f32.partialorder %v661, 0.0
      %vm790 = vcmp.ge.f32.partialorder %v662, 0.0
      %vm791 = vcmp.ge.f32.partialorder %v663, 0.0
      %vm792 = vcmp.ge.f32.partialorder %v664, 0.0
      %vm793 = vcmp.ge.f32.partialorder %v665, 0.0
      %vm794 = vcmp.ge.f32.partialorder %v666, 0.0
      %vm795 = vcmp.ge.f32.partialorder %v667, 0.0
      %vm796 = vcmp.ge.f32.partialorder %v668, 0.0
      %vm797 = vcmp.ge.f32.partialorder %v669, 0.0
      %vm798 = vcmp.ge.f32.partialorder %v670, 0.0
      %vm799 = vcmp.ge.f32.partialorder %v671, 0.0
      %vm800 = vcmp.ge.f32.partialorder %v672, 0.0
      %vm801 = vcmp.ge.f32.partialorder %v673, 0.0
      %vm802 = vcmp.ge.f32.partialorder %v674, 0.0
      %vm803 = vcmp.ge.f32.partialorder %v675, 0.0
      %vm804 = vcmp.ge.f32.partialorder %v676, 0.0
      %vm805 = vcmp.ge.f32.partialorder %v677, 0.0
      %vm806 = vcmp.ge.f32.partialorder %v678, 0.0
      %vm807 = vcmp.ge.f32.partialorder %v679, 0.0
      %vm808 = vcmp.ge.f32.partialorder %v680, 0.0
      %vm809 = vcmp.ge.f32.partialorder %v681, 0.0
      %vm810 = vcmp.ge.f32.partialorder %v682, 0.0
      %vm811 = vcmp.ge.f32.partialorder %v683, 0.0
      %vm812 = vcmp.ge.f32.partialorder %v684, 0.0
      %vm813 = vcmp.ge.f32.partialorder %v685, 0.0
      %vm814 = vcmp.ge.f32.partialorder %v686, 0.0
      %vm815 = vcmp.ge.f32.partialorder %v687, 0.0
      %vm816 = vcmp.ge.f32.partialorder %v688, 0.0
      %vm817 = vcmp.ge.f32.partialorder %v689, 0.0
      %vm818 = vcmp.ge.f32.partialorder %v690, 0.0
      %vm819 = vcmp.ge.f32.partialorder %v691, 0.0
      %vm820 = vcmp.ge.f32.partialorder %v692, 0.0
      %vm821 = vcmp.ge.f32.partialorder %v693, 0.0
      %vm822 = vcmp.ge.f32.partialorder %v694, 0.0
      %vm823 = vcmp.ge.f32.partialorder %v695, 0.0
      %vm824 = vcmp.ge.f32.partialorder %v696, 0.0
      %vm825 = vcmp.ge.f32.partialorder %v697, 0.0
      %vm826 = vcmp.ge.f32.partialorder %v698, 0.0
      %vm827 = vcmp.ge.f32.partialorder %v699, 0.0
      %vm828 = vcmp.ge.f32.partialorder %v700, 0.0
      %vm829 = vcmp.ge.f32.partialorder %v701, 0.0
      %vm830 = vcmp.ge.f32.partialorder %v702, 0.0
      %vm831 = vcmp.ge.f32.partialorder %v703, 0.0
      %vm832 = vcmp.ge.f32.partialorder %v704, 0.0
      %vm833 = vcmp.ge.f32.partialorder %v705, 0.0
      %vm834 = vcmp.ge.f32.partialorder %v706, 0.0
      %vm835 = vcmp.ge.f32.partialorder %v707, 0.0
      %vm836 = vcmp.ge.f32.partialorder %v708, 0.0
      %vm837 = vcmp.ge.f32.partialorder %v709, 0.0
      %vm838 = vcmp.ge.f32.partialorder %v710, 0.0
      %vm839 = vcmp.ge.f32.partialorder %v711, 0.0
      %vm840 = vcmp.ge.f32.partialorder %v712, 0.0
      %vm841 = vcmp.ge.f32.partialorder %v713, 0.0
      %vm842 = vcmp.ge.f32.partialorder %v714, 0.0
      %vm843 = vcmp.ge.f32.partialorder %v715, 0.0
      %vm844 = vcmp.ge.f32.partialorder %v716, 0.0
      %vm845 = vcmp.ge.f32.partialorder %v717, 0.0
      %vm846 = vcmp.ge.f32.partialorder %v718, 0.0
      %vm847 = vcmp.ge.f32.partialorder %v719, 0.0
      %vm848 = vcmp.ge.f32.partialorder %v720, 0.0
      %vm849 = vcmp.ge.f32.partialorder %v721, 0.0
      %vm850 = vcmp.ge.f32.partialorder %v722, 0.0
      %vm851 = vcmp.ge.f32.partialorder %v723, 0.0
      %vm852 = vcmp.ge.f32.partialorder %v724, 0.0
      %vm853 = vcmp.ge.f32.partialorder %v725, 0.0
      %vm854 = vcmp.ge.f32.partialorder %v726, 0.0
      %vm855 = vcmp.ge.f32.partialorder %v727, 0.0
      %vm856 = vcmp.ge.f32.partialorder %v728, 0.0
      %vm857 = vcmp.ge.f32.partialorder %v729, 0.0
      %vm858 = vcmp.ge.f32.partialorder %v730, 0.0
      %vm859 = vcmp.ge.f32.partialorder %v731, 0.0
      %vm860 = vcmp.ge.f32.partialorder %v732, 0.0
      %vm861 = vcmp.ge.f32.partialorder %v733, 0.0
      %vm862 = vcmp.ge.f32.partialorder %v734, 0.0
      %vm863 = vcmp.ge.f32.partialorder %v735, 0.0
      %vm864 = vcmp.ge.f32.partialorder %v736, 0.0
      %vm865 = vcmp.ge.f32.partialorder %v737, 0.0
      %vm866 = vcmp.ge.f32.partialorder %v738, 0.0
      %vm867 = vcmp.ge.f32.partialorder %v739, 0.0
      %vm868 = vcmp.ge.f32.partialorder %v740, 0.0
      %vm869 = vcmp.ge.f32.partialorder %v741, 0.0
      %vm870 = vcmp.ge.f32.partialorder %v742, 0.0
      %vm871 = vcmp.ge.f32.partialorder %v743, 0.0
      %vm872 = vcmp.ge.f32.partialorder %v744, 0.0
      %vm873 = vcmp.ge.f32.partialorder %v745, 0.0
      %vm874 = vcmp.ge.f32.partialorder %v746, 0.0
      %vm875 = vcmp.ge.f32.partialorder %v747, 0.0
      %vm876 = vcmp.ge.f32.partialorder %v748, 0.0
      %vm877 = vcmp.ge.f32.partialorder %v749, 0.0
      %vm878 = vcmp.ge.f32.partialorder %v750, 0.0
      %vm879 = vcmp.ge.f32.partialorder %v751, 0.0
      %vm880 = vcmp.ge.f32.partialorder %v752, 0.0
      %vm881 = vcmp.ge.f32.partialorder %v753, 0.0
      %vm882 = vcmp.ge.f32.partialorder %v754, 0.0
      %vm883 = vcmp.ge.f32.partialorder %v755, 0.0
      %vm884 = vcmp.ge.f32.partialorder %v756, 0.0
      %vm885 = vcmp.ge.f32.partialorder %v757, 0.0
      %vm886 = vcmp.ge.f32.partialorder %v758, 0.0
      %vm887 = vcmp.ge.f32.partialorder %v759, 0.0
      %vm888 = vcmp.ge.f32.partialorder %v760, 0.0
      %vm889 = vcmp.ge.f32.partialorder %v761, 0.0
      %v890 = vld [vmem:[%s4] sm:$0x3]
      %v892 = vperm.slane %v890, 0
      %v893 = vperm.slane %v890, 1
      %v896 = vmul.f32 %v892, %v634
      %v897 = vmul.f32 %v893, %v635
      %v898 = vmul.f32 %v892, %v636
      %v899 = vmul.f32 %v893, %v637
      %v900 = vmul.f32 %v892, %v638
      %v901 = vmul.f32 %v893, %v639
      %v902 = vmul.f32 %v892, %v640
      %v903 = vmul.f32 %v893, %v641
      %v904 = vmul.f32 %v892, %v642
      %v905 = vmul.f32 %v893, %v643
      %v906 = vmul.f32 %v892, %v644
      %v907 = vmul.f32 %v893, %v645
      %v908 = vmul.f32 %v892, %v646
      %v909 = vmul.f32 %v893, %v647
      %v910 = vmul.f32 %v892, %v648
      %v911 = vmul.f32 %v893, %v649
      %v912 = vmul.f32 %v892, %v650
      %v913 = vmul.f32 %v893, %v651
      %v914 = vmul.f32 %v892, %v652
      %v915 = vmul.f32 %v893, %v653
      %v916 = vmul.f32 %v892, %v654
      %v917 = vmul.f32 %v893, %v655
      %v918 = vmul.f32 %v892, %v656
      %v919 = vmul.f32 %v893, %v657
      %v920 = vmul.f32 %v892, %v658
      %v921 = vmul.f32 %v893, %v659
      %v922 = vmul.f32 %v892, %v660
      %v923 = vmul.f32 %v893, %v661
      %v924 = vmul.f32 %v892, %v662
      %v925 = vmul.f32 %v893, %v663
      %v926 = vmul.f32 %v892, %v664
      %v927 = vmul.f32 %v893, %v665
      %v928 = vmul.f32 %v892, %v666
      %v929 = vmul.f32 %v893, %v667
      %v930 = vmul.f32 %v892, %v668
      %v931 = vmul.f32 %v893, %v669
      %v932 = vmul.f32 %v892, %v670
      %v933 = vmul.f32 %v893, %v671
      %v934 = vmul.f32 %v892, %v672
      %v935 = vmul.f32 %v893, %v673
      %v936 = vmul.f32 %v892, %v674
      %v937 = vmul.f32 %v893, %v675
      %v938 = vmul.f32 %v892, %v676
      %v939 = vmul.f32 %v893, %v677
      %v940 = vmul.f32 %v892, %v678
      %v941 = vmul.f32 %v893, %v679
      %v942 = vmul.f32 %v892, %v680
      %v943 = vmul.f32 %v893, %v681
      %v944 = vmul.f32 %v892, %v682
      %v945 = vmul.f32 %v893, %v683
      %v946 = vmul.f32 %v892, %v684
      %v947 = vmul.f32 %v893, %v685
      %v948 = vmul.f32 %v892, %v686
      %v949 = vmul.f32 %v893, %v687
      %v950 = vmul.f32 %v892, %v688
      %v951 = vmul.f32 %v893, %v689
      %v952 = vmul.f32 %v892, %v690
      %v953 = vmul.f32 %v893, %v691
      %v954 = vmul.f32 %v892, %v692
      %v955 = vmul.f32 %v893, %v693
      %v956 = vmul.f32 %v892, %v694
      %v957 = vmul.f32 %v893, %v695
      %v958 = vmul.f32 %v892, %v696
      %v959 = vmul.f32 %v893, %v697
      %v960 = vmul.f32 %v892, %v698
      %v961 = vmul.f32 %v893, %v699
      %v962 = vmul.f32 %v892, %v700
      %v963 = vmul.f32 %v893, %v701
      %v964 = vmul.f32 %v892, %v702
      %v965 = vmul.f32 %v893, %v703
      %v966 = vmul.f32 %v892, %v704
      %v967 = vmul.f32 %v893, %v705
      %v968 = vmul.f32 %v892, %v706
      %v969 = vmul.f32 %v893, %v707
      %v970 = vmul.f32 %v892, %v708
      %v971 = vmul.f32 %v893, %v709
      %v972 = vmul.f32 %v892, %v710
      %v973 = vmul.f32 %v893, %v711
      %v974 = vmul.f32 %v892, %v712
      %v975 = vmul.f32 %v893, %v713
      %v976 = vmul.f32 %v892, %v714
      %v977 = vmul.f32 %v893, %v715
      %v978 = vmul.f32 %v892, %v716
      %v979 = vmul.f32 %v893, %v717
      %v980 = vmul.f32 %v892, %v718
      %v981 = vmul.f32 %v893, %v719
      %v982 = vmul.f32 %v892, %v720
      %v983 = vmul.f32 %v893, %v721
      %v984 = vmul.f32 %v892, %v722
      %v985 = vmul.f32 %v893, %v723
      %v986 = vmul.f32 %v892, %v724
      %v987 = vmul.f32 %v893, %v725
      %v988 = vmul.f32 %v892, %v726
      %v989 = vmul.f32 %v893, %v727
      %v990 = vmul.f32 %v892, %v728
      %v991 = vmul.f32 %v893, %v729
      %v992 = vmul.f32 %v892, %v730
      %v993 = vmul.f32 %v893, %v731
      %v994 = vmul.f32 %v892, %v732
      %v995 = vmul.f32 %v893, %v733
      %v996 = vmul.f32 %v892, %v734
      %v997 = vmul.f32 %v893, %v735
      %v998 = vmul.f32 %v892, %v736
      %v999 = vmul.f32 %v893, %v737
      %v1000 = vmul.f32 %v892, %v738
      %v1001 = vmul.f32 %v893, %v739
      %v1002 = vmul.f32 %v892, %v740
      %v1003 = vmul.f32 %v893, %v741
      %v1004 = vmul.f32 %v892, %v742
      %v1005 = vmul.f32 %v893, %v743
      %v1006 = vmul.f32 %v892, %v744
      %v1007 = vmul.f32 %v893, %v745
      %v1008 = vmul.f32 %v892, %v746
      %v1009 = vmul.f32 %v893, %v747
      %v1010 = vmul.f32 %v892, %v748
      %v1011 = vmul.f32 %v893, %v749
      %v1012 = vmul.f32 %v892, %v750
      %v1013 = vmul.f32 %v893, %v751
      %v1014 = vmul.f32 %v892, %v752
      %v1015 = vmul.f32 %v893, %v753
      %v1016 = vmul.f32 %v892, %v754
      %v1017 = vmul.f32 %v893, %v755
      %v1018 = vmul.f32 %v892, %v756
      %v1019 = vmul.f32 %v893, %v757
      %v1020 = vmul.f32 %v892, %v758
      %v1021 = vmul.f32 %v893, %v759
      %v1022 = vmul.f32 %v892, %v760
      %v1023 = vmul.f32 %v893, %v761
      %v1024 = vsel %vm762, %v634, %v896
      %v1025 = vsel %vm763, %v635, %v897
      %v1026 = vsel %vm764, %v636, %v898
      %v1027 = vsel %vm765, %v637, %v899
      %v1028 = vsel %vm766, %v638, %v900
      %v1029 = vsel %vm767, %v639, %v901
      %v1030 = vsel %vm768, %v640, %v902
      %v1031 = vsel %vm769, %v641, %v903
      %v1032 = vsel %vm770, %v642, %v904
      %v1033 = vsel %vm771, %v643, %v905
      %v1034 = vsel %vm772, %v644, %v906
      %v1035 = vsel %vm773, %v645, %v907
      %v1036 = vsel %vm774, %v646, %v908
      %v1037 = vsel %vm775, %v647, %v909
      %v1038 = vsel %vm776, %v648, %v910
      %v1039 = vsel %vm777, %v649, %v911
      %v1040 = vsel %vm778, %v650, %v912
      %v1041 = vsel %vm779, %v651, %v913
      %v1042 = vsel %vm780, %v652, %v914
      %v1043 = vsel %vm781, %v653, %v915
      %v1044 = vsel %vm782, %v654, %v916
      %v1045 = vsel %vm783, %v655, %v917
      %v1046 = vsel %vm784, %v656, %v918
      %v1047 = vsel %vm785, %v657, %v919
      %v1048 = vsel %vm786, %v658, %v920
      %v1049 = vsel %vm787, %v659, %v921
      %v1050 = vsel %vm788, %v660, %v922
      %v1051 = vsel %vm789, %v661, %v923
      %v1052 = vsel %vm790, %v662, %v924
      %v1053 = vsel %vm791, %v663, %v925
      %v1054 = vsel %vm792, %v664, %v926
      %v1055 = vsel %vm793, %v665, %v927
      %v1056 = vsel %vm794, %v666, %v928
      %v1057 = vsel %vm795, %v667, %v929
      %v1058 = vsel %vm796, %v668, %v930
      %v1059 = vsel %vm797, %v669, %v931
      %v1060 = vsel %vm798, %v670, %v932
      %v1061 = vsel %vm799, %v671, %v933
      %v1062 = vsel %vm800, %v672, %v934
      %v1063 = vsel %vm801, %v673, %v935
      %v1064 = vsel %vm802, %v674, %v936
      %v1065 = vsel %vm803, %v675, %v937
      %v1066 = vsel %vm804, %v676, %v938
      %v1067 = vsel %vm805, %v677, %v939
      %v1068 = vsel %vm806, %v678, %v940
      %v1069 = vsel %vm807, %v679, %v941
      %v1070 = vsel %vm808, %v680, %v942
      %v1071 = vsel %vm809, %v681, %v943
      %v1072 = vsel %vm810, %v682, %v944
      %v1073 = vsel %vm811, %v683, %v945
      %v1074 = vsel %vm812, %v684, %v946
      %v1075 = vsel %vm813, %v685, %v947
      %v1076 = vsel %vm814, %v686, %v948
      %v1077 = vsel %vm815, %v687, %v949
      %v1078 = vsel %vm816, %v688, %v950
      %v1079 = vsel %vm817, %v689, %v951
      %v1080 = vsel %vm818, %v690, %v952
      %v1081 = vsel %vm819, %v691, %v953
      %v1082 = vsel %vm820, %v692, %v954
      %v1083 = vsel %vm821, %v693, %v955
      %v1084 = vsel %vm822, %v694, %v956
      %v1085 = vsel %vm823, %v695, %v957
      %v1086 = vsel %vm824, %v696, %v958
      %v1087 = vsel %vm825, %v697, %v959
      %v1088 = vsel %vm826, %v698, %v960
      %v1089 = vsel %vm827, %v699, %v961
      %v1090 = vsel %vm828, %v700, %v962
      %v1091 = vsel %vm829, %v701, %v963
      %v1092 = vsel %vm830, %v702, %v964
      %v1093 = vsel %vm831, %v703, %v965
      %v1094 = vsel %vm832, %v704, %v966
      %v1095 = vsel %vm833, %v705, %v967
      %v1096 = vsel %vm834, %v706, %v968
      %v1097 = vsel %vm835, %v707, %v969
      %v1098 = vsel %vm836, %v708, %v970
      %v1099 = vsel %vm837, %v709, %v971
      %v1100 = vsel %vm838, %v710, %v972
      %v1101 = vsel %vm839, %v711, %v973
      %v1102 = vsel %vm840, %v712, %v974
      %v1103 = vsel %vm841, %v713, %v975
      %v1104 = vsel %vm842, %v714, %v976
      %v1105 = vsel %vm843, %v715, %v977
      %v1106 = vsel %vm844, %v716, %v978
      %v1107 = vsel %vm845, %v717, %v979
      %v1108 = vsel %vm846, %v718, %v980
      %v1109 = vsel %vm847, %v719, %v981
      %v1110 = vsel %vm848, %v720, %v982
      %v1111 = vsel %vm849, %v721, %v983
      %v1112 = vsel %vm850, %v722, %v984
      %v1113 = vsel %vm851, %v723, %v985
      %v1114 = vsel %vm852, %v724, %v986
      %v1115 = vsel %vm853, %v725, %v987
      %v1116 = vsel %vm854, %v726, %v988
      %v1117 = vsel %vm855, %v727, %v989
      %v1118 = vsel %vm856, %v728, %v990
      %v1119 = vsel %vm857, %v729, %v991
      %v1120 = vsel %vm858, %v730, %v992
      %v1121 = vsel %vm859, %v731, %v993
      %v1122 = vsel %vm860, %v732, %v994
      %v1123 = vsel %vm861, %v733, %v995
      %v1124 = vsel %vm862, %v734, %v996
      %v1125 = vsel %vm863, %v735, %v997
      %v1126 = vsel %vm864, %v736, %v998
      %v1127 = vsel %vm865, %v737, %v999
      %v1128 = vsel %vm866, %v738, %v1000
      %v1129 = vsel %vm867, %v739, %v1001
      %v1130 = vsel %vm868, %v740, %v1002
      %v1131 = vsel %vm869, %v741, %v1003
      %v1132 = vsel %vm870, %v742, %v1004
      %v1133 = vsel %vm871, %v743, %v1005
      %v1134 = vsel %vm872, %v744, %v1006
      %v1135 = vsel %vm873, %v745, %v1007
      %v1136 = vsel %vm874, %v746, %v1008
      %v1137 = vsel %vm875, %v747, %v1009
      %v1138 = vsel %vm876, %v748, %v1010
      %v1139 = vsel %vm877, %v749, %v1011
      %v1140 = vsel %vm878, %v750, %v1012
      %v1141 = vsel %vm879, %v751, %v1013
      %v1142 = vsel %vm880, %v752, %v1014
      %v1143 = vsel %vm881, %v753, %v1015
      %v1144 = vsel %vm882, %v754, %v1016
      %v1145 = vsel %vm883, %v755, %v1017
      %v1146 = vsel %vm884, %v756, %v1018
      %v1147 = vsel %vm885, %v757, %v1019
      %v1148 = vsel %vm886, %v758, %v1020
      %v1149 = vsel %vm887, %v759, %v1021
      %v1150 = vsel %vm888, %v760, %v1022
      %v1151 = vsel %vm889, %v761, %v1023
      %v1152 = vpack.c.bf16 %v1026, %v1024
      %v1153 = vpack.c.bf16 %v1027, %v1025
      %v1154 = vpack.c.bf16 %v1030, %v1028
      %v1155 = vpack.c.bf16 %v1031, %v1029
      %v1156 = vpack.c.bf16 %v1034, %v1032
      %v1157 = vpack.c.bf16 %v1035, %v1033
      %v1158 = vpack.c.bf16 %v1038, %v1036
      %v1159 = vpack.c.bf16 %v1039, %v1037
      %v1160 = vpack.c.bf16 %v1042, %v1040
      %v1161 = vpack.c.bf16 %v1043, %v1041
      %v1162 = vpack.c.bf16 %v1046, %v1044
      %v1163 = vpack.c.bf16 %v1047, %v1045
      %v1164 = vpack.c.bf16 %v1050, %v1048
      %v1165 = vpack.c.bf16 %v1051, %v1049
      %v1166 = vpack.c.bf16 %v1054, %v1052
      %v1167 = vpack.c.bf16 %v1055, %v1053
      %v1168 = vpack.c.bf16 %v1058, %v1056
      %v1169 = vpack.c.bf16 %v1059, %v1057
      %v1170 = vpack.c.bf16 %v1062, %v1060
      %v1171 = vpack.c.bf16 %v1063, %v1061
      %v1172 = vpack.c.bf16 %v1066, %v1064
      %v1173 = vpack.c.bf16 %v1067, %v1065
      %v1174 = vpack.c.bf16 %v1070, %v1068
      %v1175 = vpack.c.bf16 %v1071, %v1069
      %v1176 = vpack.c.bf16 %v1074, %v1072
      %v1177 = vpack.c.bf16 %v1075, %v1073
      %v1178 = vpack.c.bf16 %v1078, %v1076
      %v1179 = vpack.c.bf16 %v1079, %v1077
      %v1180 = vpack.c.bf16 %v1082, %v1080
      %v1181 = vpack.c.bf16 %v1083, %v1081
      %v1182 = vpack.c.bf16 %v1086, %v1084
      %v1183 = vpack.c.bf16 %v1087, %v1085
      %v1184 = vpack.c.bf16 %v1090, %v1088
      %v1185 = vpack.c.bf16 %v1091, %v1089
      %v1186 = vpack.c.bf16 %v1094, %v1092
      %v1187 = vpack.c.bf16 %v1095, %v1093
      %v1188 = vpack.c.bf16 %v1098, %v1096
      %v1189 = vpack.c.bf16 %v1099, %v1097
      %v1190 = vpack.c.bf16 %v1102, %v1100
      %v1191 = vpack.c.bf16 %v1103, %v1101
      %v1192 = vpack.c.bf16 %v1106, %v1104
      %v1193 = vpack.c.bf16 %v1107, %v1105
      %v1194 = vpack.c.bf16 %v1110, %v1108
      %v1195 = vpack.c.bf16 %v1111, %v1109
      %v1196 = vpack.c.bf16 %v1114, %v1112
      %v1197 = vpack.c.bf16 %v1115, %v1113
      %v1198 = vpack.c.bf16 %v1118, %v1116
      %v1199 = vpack.c.bf16 %v1119, %v1117
      %v1200 = vpack.c.bf16 %v1122, %v1120
      %v1201 = vpack.c.bf16 %v1123, %v1121
      %v1202 = vpack.c.bf16 %v1126, %v1124
      %v1203 = vpack.c.bf16 %v1127, %v1125
      %v1204 = vpack.c.bf16 %v1130, %v1128
      %v1205 = vpack.c.bf16 %v1131, %v1129
      %v1206 = vpack.c.bf16 %v1134, %v1132
      %v1207 = vpack.c.bf16 %v1135, %v1133
      %v1208 = vpack.c.bf16 %v1138, %v1136
      %v1209 = vpack.c.bf16 %v1139, %v1137
      %v1210 = vpack.c.bf16 %v1142, %v1140
      %v1211 = vpack.c.bf16 %v1143, %v1141
      %v1212 = vpack.c.bf16 %v1146, %v1144
      %v1213 = vpack.c.bf16 %v1147, %v1145
      %v1214 = vpack.c.bf16 %v1150, %v1148
      %v1215 = vpack.c.bf16 %v1151, %v1149
      %v1216 = vld [vmem:[%s1] sm:$0xf]
      %v1217 = vld [vmem:[%s1 + $0x4] sm:$0xf]
      %v1218 = vld [vmem:[%s1 + $0x8] sm:$0xf]
      %v1219 = vld [vmem:[%s1 + $0xc] sm:$0xf]
      %v1220 = vld [vmem:[%s1 + $0x10] sm:$0xf]
      %v1221 = vld [vmem:[%s1 + $0x14] sm:$0xf]
      %v1222 = vld [vmem:[%s1 + $0x18] sm:$0xf]
      %v1223 = vld [vmem:[%s1 + $0x1c] sm:$0xf]
      %v1224 = vld [vmem:[%s1 + $0x20] sm:$0xf]
      %v1225 = vld [vmem:[%s1 + $0x24] sm:$0xf]
      %v1226 = vld [vmem:[%s1 + $0x28] sm:$0xf]
      %v1227 = vld [vmem:[%s1 + $0x2c] sm:$0xf]
      %v1228 = vld [vmem:[%s1 + $0x30] sm:$0xf]
      %v1229 = vld [vmem:[%s1 + $0x34] sm:$0xf]
      %v1230 = vld [vmem:[%s1 + $0x38] sm:$0xf]
      %v1231 = vld [vmem:[%s1 + $0x3c] sm:$0xf]
      %v1232 = vld [vmem:[%s1 + $0x40] sm:$0xf]
      %v1233 = vld [vmem:[%s1 + $0x44] sm:$0xf]
      %v1234 = vld [vmem:[%s1 + $0x48] sm:$0xf]
      %v1235 = vld [vmem:[%s1 + $0x4c] sm:$0xf]
      %v1236 = vld [vmem:[%s1 + $0x50] sm:$0xf]
      %v1237 = vld [vmem:[%s1 + $0x54] sm:$0xf]
      %v1238 = vld [vmem:[%s1 + $0x58] sm:$0xf]
      %v1239 = vld [vmem:[%s1 + $0x5c] sm:$0xf]
      %v1240 = vld [vmem:[%s1 + $0x60] sm:$0xf]
      %v1241 = vld [vmem:[%s1 + $0x64] sm:$0xf]
      %v1242 = vld [vmem:[%s1 + $0x68] sm:$0xf]
      %v1243 = vld [vmem:[%s1 + $0x6c] sm:$0xf]
      %v1244 = vld [vmem:[%s1 + $0x70] sm:$0xf]
      %v1245 = vld [vmem:[%s1 + $0x74] sm:$0xf]
      %v1246 = vld [vmem:[%s1 + $0x78] sm:$0xf]
      %v1247 = vld [vmem:[%s1 + $0x7c] sm:$0xf]
      %v1280 = vunpack.c.l.b16 %v1216
      %v1281 = vunpack.c.l.b16 %v1217
      %v1282 = vunpack.c.l.b16 %v1218
      %v1283 = vunpack.c.l.b16 %v1219
      %v1284 = vunpack.c.l.b16 %v1220
      %v1285 = vunpack.c.l.b16 %v1221
      %v1286 = vunpack.c.l.b16 %v1222
      %v1287 = vunpack.c.l.b16 %v1223
      %v1288 = vunpack.c.l.b16 %v1224
      %v1289 = vunpack.c.l.b16 %v1225
      %v1290 = vunpack.c.l.b16 %v1226
      %v1291 = vunpack.c.l.b16 %v1227
      %v1292 = vunpack.c.l.b16 %v1228
      %v1293 = vunpack.c.l.b16 %v1229
      %v1294 = vunpack.c.l.b16 %v1230
      %v1295 = vunpack.c.l.b16 %v1231
      %v1296 = vunpack.c.l.b16 %v1232
      %v1297 = vunpack.c.l.b16 %v1233
      %v1298 = vunpack.c.l.b16 %v1234
      %v1299 = vunpack.c.l.b16 %v1235
      %v1300 = vunpack.c.l.b16 %v1236
      %v1301 = vunpack.c.l.b16 %v1237
      %v1302 = vunpack.c.l.b16 %v1238
      %v1303 = vunpack.c.l.b16 %v1239
      %v1304 = vunpack.c.l.b16 %v1240
      %v1305 = vunpack.c.l.b16 %v1241
      %v1306 = vunpack.c.l.b16 %v1242
      %v1307 = vunpack.c.l.b16 %v1243
      %v1308 = vunpack.c.l.b16 %v1244
      %v1309 = vunpack.c.l.b16 %v1245
      %v1310 = vunpack.c.l.b16 %v1246
      %v1311 = vunpack.c.l.b16 %v1247
      %v1312 = vpack.c.b16 %v1281, %v1280
      %v1313 = vpack.c.b16 %v1283, %v1282
      %v1314 = vpack.c.b16 %v1285, %v1284
      %v1315 = vpack.c.b16 %v1287, %v1286
      %v1316 = vpack.c.b16 %v1289, %v1288
      %v1317 = vpack.c.b16 %v1291, %v1290
      %v1318 = vpack.c.b16 %v1293, %v1292
      %v1319 = vpack.c.b16 %v1295, %v1294
      %v1320 = vpack.c.b16 %v1297, %v1296
      %v1321 = vpack.c.b16 %v1299, %v1298
      %v1322 = vpack.c.b16 %v1301, %v1300
      %v1323 = vpack.c.b16 %v1303, %v1302
      %v1324 = vpack.c.b16 %v1305, %v1304
      %v1325 = vpack.c.b16 %v1307, %v1306
      %v1326 = vpack.c.b16 %v1309, %v1308
      %v1327 = vpack.c.b16 %v1311, %v1310
      %1344 = vmatpush.bf16.msra.mxu0 %v1319
      %1345 = vmatpush.bf16.msra.mxu0 %v1318
      %1346 = vmatpush.bf16.msra.mxu0 %v1317
      %1347 = vmatpush.bf16.msra.mxu0 %v1316
      %1348 = vmatpush.bf16.msra.mxu0 %v1315
      %1349 = vmatpush.bf16.msra.mxu0 %v1314
      %1350 = vmatpush.bf16.msra.mxu0 %v1313
      %1351 = vmatpush.bf16.msra.mxu0 %v1312
      %1352 = vmatmul.bf16.gmra.mxu0 %v1152
      %v1353 = vpop.f32.mrf.mxu0
      %v1354 = vadd.f32 0.0, %v1353
      %v1355 = vpop.f32.mrf.mxu0
      %v1356 = vadd.f32 0.0, %v1355
      %1357 = vmatmul.bf16.gmra.mxu0 %v1154
      %v1358 = vpop.f32.mrf.mxu0
      %v1359 = vadd.f32 0.0, %v1358
      %v1360 = vpop.f32.mrf.mxu0
      %v1361 = vadd.f32 0.0, %v1360
      %1362 = vmatmul.bf16.gmra.mxu0 %v1156
      %v1363 = vpop.f32.mrf.mxu0
      %v1364 = vadd.f32 0.0, %v1363
      %v1365 = vpop.f32.mrf.mxu0
      %v1366 = vadd.f32 0.0, %v1365
      %1367 = vmatmul.bf16.gmra.mxu0 %v1158
      %v1368 = vpop.f32.mrf.mxu0
      %v1369 = vadd.f32 0.0, %v1368
      %v1370 = vpop.f32.mrf.mxu0
      %v1371 = vadd.f32 0.0, %v1370
      %1372 = vmatmul.bf16.gmra.mxu0 %v1160
      %v1373 = vpop.f32.mrf.mxu0
      %v1374 = vadd.f32 0.0, %v1373
      %v1375 = vpop.f32.mrf.mxu0
      %v1376 = vadd.f32 0.0, %v1375
      %1377 = vmatmul.bf16.gmra.mxu0 %v1162
      %v1378 = vpop.f32.mrf.mxu0
      %v1379 = vadd.f32 0.0, %v1378
      %v1380 = vpop.f32.mrf.mxu0
      %v1381 = vadd.f32 0.0, %v1380
      %1382 = vmatmul.bf16.gmra.mxu0 %v1164
      %v1383 = vpop.f32.mrf.mxu0
      %v1384 = vadd.f32 0.0, %v1383
      %v1385 = vpop.f32.mrf.mxu0
      %v1386 = vadd.f32 0.0, %v1385
      %1387 = vmatmul.bf16.gmra.mxu0 %v1166
      %v1388 = vpop.f32.mrf.mxu0
      %v1389 = vadd.f32 0.0, %v1388
      %v1390 = vpop.f32.mrf.mxu0
      %v1391 = vadd.f32 0.0, %v1390
      %1392 = vmatmul.bf16.gmra.mxu0 %v1168
      %v1393 = vpop.f32.mrf.mxu0
      %v1394 = vadd.f32 0.0, %v1393
      %v1395 = vpop.f32.mrf.mxu0
      %v1396 = vadd.f32 0.0, %v1395
      %1397 = vmatmul.bf16.gmra.mxu0 %v1170
      %v1398 = vpop.f32.mrf.mxu0
      %v1399 = vadd.f32 0.0, %v1398
      %v1400 = vpop.f32.mrf.mxu0
      %v1401 = vadd.f32 0.0, %v1400
      %1402 = vmatmul.bf16.gmra.mxu0 %v1172
      %v1403 = vpop.f32.mrf.mxu0
      %v1404 = vadd.f32 0.0, %v1403
      %v1405 = vpop.f32.mrf.mxu0
      %v1406 = vadd.f32 0.0, %v1405
      %1407 = vmatmul.bf16.gmra.mxu0 %v1174
      %v1408 = vpop.f32.mrf.mxu0
      %v1409 = vadd.f32 0.0, %v1408
      %v1410 = vpop.f32.mrf.mxu0
      %v1411 = vadd.f32 0.0, %v1410
      %1412 = vmatmul.bf16.gmra.mxu0 %v1176
      %v1413 = vpop.f32.mrf.mxu0
      %v1414 = vadd.f32 0.0, %v1413
      %v1415 = vpop.f32.mrf.mxu0
      %v1416 = vadd.f32 0.0, %v1415
      %1417 = vmatmul.bf16.gmra.mxu0 %v1178
      %v1418 = vpop.f32.mrf.mxu0
      %v1419 = vadd.f32 0.0, %v1418
      %v1420 = vpop.f32.mrf.mxu0
      %v1421 = vadd.f32 0.0, %v1420
      %1422 = vmatmul.bf16.gmra.mxu0 %v1180
      %v1423 = vpop.f32.mrf.mxu0
      %v1424 = vadd.f32 0.0, %v1423
      %v1425 = vpop.f32.mrf.mxu0
      %v1426 = vadd.f32 0.0, %v1425
      %1427 = vmatmul.bf16.gmra.mxu0 %v1182
      %v1428 = vpop.f32.mrf.mxu0
      %v1429 = vadd.f32 0.0, %v1428
      %v1430 = vpop.f32.mrf.mxu0
      %v1431 = vadd.f32 0.0, %v1430
      %1432 = vmatmul.bf16.gmra.mxu0 %v1184
      %v1433 = vpop.f32.mrf.mxu0
      %v1434 = vadd.f32 0.0, %v1433
      %v1435 = vpop.f32.mrf.mxu0
      %v1436 = vadd.f32 0.0, %v1435
      %1437 = vmatmul.bf16.gmra.mxu0 %v1186
      %v1438 = vpop.f32.mrf.mxu0
      %v1439 = vadd.f32 0.0, %v1438
      %v1440 = vpop.f32.mrf.mxu0
      %v1441 = vadd.f32 0.0, %v1440
      %1442 = vmatmul.bf16.gmra.mxu0 %v1188
      %v1443 = vpop.f32.mrf.mxu0
      %v1444 = vadd.f32 0.0, %v1443
      %v1445 = vpop.f32.mrf.mxu0
      %v1446 = vadd.f32 0.0, %v1445
      %1447 = vmatmul.bf16.gmra.mxu0 %v1190
      %v1448 = vpop.f32.mrf.mxu0
      %v1449 = vadd.f32 0.0, %v1448
      %v1450 = vpop.f32.mrf.mxu0
      %v1451 = vadd.f32 0.0, %v1450
      %1452 = vmatmul.bf16.gmra.mxu0 %v1192
      %v1453 = vpop.f32.mrf.mxu0
      %v1454 = vadd.f32 0.0, %v1453
      %v1455 = vpop.f32.mrf.mxu0
      %v1456 = vadd.f32 0.0, %v1455
      %1457 = vmatmul.bf16.gmra.mxu0 %v1194
      %v1458 = vpop.f32.mrf.mxu0
      %v1459 = vadd.f32 0.0, %v1458
      %v1460 = vpop.f32.mrf.mxu0
      %v1461 = vadd.f32 0.0, %v1460
      %1462 = vmatmul.bf16.gmra.mxu0 %v1196
      %v1463 = vpop.f32.mrf.mxu0
      %v1464 = vadd.f32 0.0, %v1463
      %v1465 = vpop.f32.mrf.mxu0
      %v1466 = vadd.f32 0.0, %v1465
      %1467 = vmatmul.bf16.gmra.mxu0 %v1198
      %v1468 = vpop.f32.mrf.mxu0
      %v1469 = vadd.f32 0.0, %v1468
      %v1470 = vpop.f32.mrf.mxu0
      %v1471 = vadd.f32 0.0, %v1470
      %1472 = vmatmul.bf16.gmra.mxu0 %v1200
      %v1473 = vpop.f32.mrf.mxu0
      %v1474 = vadd.f32 0.0, %v1473
      %v1475 = vpop.f32.mrf.mxu0
      %v1476 = vadd.f32 0.0, %v1475
      %1477 = vmatmul.bf16.gmra.mxu0 %v1202
      %v1478 = vpop.f32.mrf.mxu0
      %v1479 = vadd.f32 0.0, %v1478
      %v1480 = vpop.f32.mrf.mxu0
      %v1481 = vadd.f32 0.0, %v1480
      %1482 = vmatmul.bf16.gmra.mxu0 %v1204
      %v1483 = vpop.f32.mrf.mxu0
      %v1484 = vadd.f32 0.0, %v1483
      %v1485 = vpop.f32.mrf.mxu0
      %v1486 = vadd.f32 0.0, %v1485
      %1487 = vmatmul.bf16.gmra.mxu0 %v1206
      %v1488 = vpop.f32.mrf.mxu0
      %v1489 = vadd.f32 0.0, %v1488
      %v1490 = vpop.f32.mrf.mxu0
      %v1491 = vadd.f32 0.0, %v1490
      %1492 = vmatmul.bf16.gmra.mxu0 %v1208
      %v1493 = vpop.f32.mrf.mxu0
      %v1494 = vadd.f32 0.0, %v1493
      %v1495 = vpop.f32.mrf.mxu0
      %v1496 = vadd.f32 0.0, %v1495
      %1497 = vmatmul.bf16.gmra.mxu0 %v1210
      %v1498 = vpop.f32.mrf.mxu0
      %v1499 = vadd.f32 0.0, %v1498
      %v1500 = vpop.f32.mrf.mxu0
      %v1501 = vadd.f32 0.0, %v1500
      %1502 = vmatmul.bf16.gmra.mxu0 %v1212
      %v1503 = vpop.f32.mrf.mxu0
      %v1504 = vadd.f32 0.0, %v1503
      %v1505 = vpop.f32.mrf.mxu0
      %v1506 = vadd.f32 0.0, %v1505
      %1507 = vmatmul.bf16.gmra.mxu0 %v1214
      %v1508 = vpop.f32.mrf.mxu0
      %v1509 = vadd.f32 0.0, %v1508
      %v1510 = vpop.f32.mrf.mxu0
      %v1511 = vadd.f32 0.0, %v1510
      %1512 = vdwg.mxu0
      %1513 = vmatpush.bf16.msra.mxu0 %v1327
      %1514 = vmatpush.bf16.msra.mxu0 %v1326
      %1515 = vmatpush.bf16.msra.mxu0 %v1325
      %1516 = vmatpush.bf16.msra.mxu0 %v1324
      %1517 = vmatpush.bf16.msra.mxu0 %v1323
      %1518 = vmatpush.bf16.msra.mxu0 %v1322
      %1519 = vmatpush.bf16.msra.mxu0 %v1321
      %1520 = vmatpush.bf16.msra.mxu0 %v1320
      %1521 = vmatmul.bf16.gmra.mxu0 %v1153
      %v1522 = vpop.f32.mrf.mxu0
      %v1523 = vadd.f32 %v1354, %v1522
      %v1524 = vpop.f32.mrf.mxu0
      %v1525 = vadd.f32 %v1356, %v1524
      %1526 = vmatmul.bf16.gmra.mxu0 %v1155
      %v1527 = vpop.f32.mrf.mxu0
      %v1528 = vadd.f32 %v1359, %v1527
      %v1529 = vpop.f32.mrf.mxu0
      %v1530 = vadd.f32 %v1361, %v1529
      %1531 = vmatmul.bf16.gmra.mxu0 %v1157
      %v1532 = vpop.f32.mrf.mxu0
      %v1533 = vadd.f32 %v1364, %v1532
      %v1534 = vpop.f32.mrf.mxu0
      %v1535 = vadd.f32 %v1366, %v1534
      %1536 = vmatmul.bf16.gmra.mxu0 %v1159
      %v1537 = vpop.f32.mrf.mxu0
      %v1538 = vadd.f32 %v1369, %v1537
      %v1539 = vpop.f32.mrf.mxu0
      %v1540 = vadd.f32 %v1371, %v1539
      %1541 = vmatmul.bf16.gmra.mxu0 %v1161
      %v1542 = vpop.f32.mrf.mxu0
      %v1543 = vadd.f32 %v1374, %v1542
      %v1544 = vpop.f32.mrf.mxu0
      %v1545 = vadd.f32 %v1376, %v1544
      %1546 = vmatmul.bf16.gmra.mxu0 %v1163
      %v1547 = vpop.f32.mrf.mxu0
      %v1548 = vadd.f32 %v1379, %v1547
      %v1549 = vpop.f32.mrf.mxu0
      %v1550 = vadd.f32 %v1381, %v1549
      %1551 = vmatmul.bf16.gmra.mxu0 %v1165
      %v1552 = vpop.f32.mrf.mxu0
      %v1553 = vadd.f32 %v1384, %v1552
      %v1554 = vpop.f32.mrf.mxu0
      %v1555 = vadd.f32 %v1386, %v1554
      %1556 = vmatmul.bf16.gmra.mxu0 %v1167
      %v1557 = vpop.f32.mrf.mxu0
      %v1558 = vadd.f32 %v1389, %v1557
      %v1559 = vpop.f32.mrf.mxu0
      %v1560 = vadd.f32 %v1391, %v1559
      %1561 = vmatmul.bf16.gmra.mxu0 %v1169
      %v1562 = vpop.f32.mrf.mxu0
      %v1563 = vadd.f32 %v1394, %v1562
      %v1564 = vpop.f32.mrf.mxu0
      %v1565 = vadd.f32 %v1396, %v1564
      %1566 = vmatmul.bf16.gmra.mxu0 %v1171
      %v1567 = vpop.f32.mrf.mxu0
      %v1568 = vadd.f32 %v1399, %v1567
      %v1569 = vpop.f32.mrf.mxu0
      %v1570 = vadd.f32 %v1401, %v1569
      %1571 = vmatmul.bf16.gmra.mxu0 %v1173
      %v1572 = vpop.f32.mrf.mxu0
      %v1573 = vadd.f32 %v1404, %v1572
      %v1574 = vpop.f32.mrf.mxu0
      %v1575 = vadd.f32 %v1406, %v1574
      %1576 = vmatmul.bf16.gmra.mxu0 %v1175
      %v1577 = vpop.f32.mrf.mxu0
      %v1578 = vadd.f32 %v1409, %v1577
      %v1579 = vpop.f32.mrf.mxu0
      %v1580 = vadd.f32 %v1411, %v1579
      %1581 = vmatmul.bf16.gmra.mxu0 %v1177
      %v1582 = vpop.f32.mrf.mxu0
      %v1583 = vadd.f32 %v1414, %v1582
      %v1584 = vpop.f32.mrf.mxu0
      %v1585 = vadd.f32 %v1416, %v1584
      %1586 = vmatmul.bf16.gmra.mxu0 %v1179
      %v1587 = vpop.f32.mrf.mxu0
      %v1588 = vadd.f32 %v1419, %v1587
      %v1589 = vpop.f32.mrf.mxu0
      %v1590 = vadd.f32 %v1421, %v1589
      %1591 = vmatmul.bf16.gmra.mxu0 %v1181
      %v1592 = vpop.f32.mrf.mxu0
      %v1593 = vadd.f32 %v1424, %v1592
      %v1594 = vpop.f32.mrf.mxu0
      %v1595 = vadd.f32 %v1426, %v1594
      %1596 = vmatmul.bf16.gmra.mxu0 %v1183
      %v1597 = vpop.f32.mrf.mxu0
      %v1598 = vadd.f32 %v1429, %v1597
      %v1599 = vpop.f32.mrf.mxu0
      %v1600 = vadd.f32 %v1431, %v1599
      %1601 = vmatmul.bf16.gmra.mxu0 %v1185
      %v1602 = vpop.f32.mrf.mxu0
      %v1603 = vadd.f32 %v1434, %v1602
      %v1604 = vpop.f32.mrf.mxu0
      %v1605 = vadd.f32 %v1436, %v1604
      %1606 = vmatmul.bf16.gmra.mxu0 %v1187
      %v1607 = vpop.f32.mrf.mxu0
      %v1608 = vadd.f32 %v1439, %v1607
      %v1609 = vpop.f32.mrf.mxu0
      %v1610 = vadd.f32 %v1441, %v1609
      %1611 = vmatmul.bf16.gmra.mxu0 %v1189
      %v1612 = vpop.f32.mrf.mxu0
      %v1613 = vadd.f32 %v1444, %v1612
      %v1614 = vpop.f32.mrf.mxu0
      %v1615 = vadd.f32 %v1446, %v1614
      %1616 = vmatmul.bf16.gmra.mxu0 %v1191
      %v1617 = vpop.f32.mrf.mxu0
      %v1618 = vadd.f32 %v1449, %v1617
      %v1619 = vpop.f32.mrf.mxu0
      %v1620 = vadd.f32 %v1451, %v1619
      %1621 = vmatmul.bf16.gmra.mxu0 %v1193
      %v1622 = vpop.f32.mrf.mxu0
      %v1623 = vadd.f32 %v1454, %v1622
      %v1624 = vpop.f32.mrf.mxu0
      %v1625 = vadd.f32 %v1456, %v1624
      %1626 = vmatmul.bf16.gmra.mxu0 %v1195
      %v1627 = vpop.f32.mrf.mxu0
      %v1628 = vadd.f32 %v1459, %v1627
      %v1629 = vpop.f32.mrf.mxu0
      %v1630 = vadd.f32 %v1461, %v1629
      %1631 = vmatmul.bf16.gmra.mxu0 %v1197
      %v1632 = vpop.f32.mrf.mxu0
      %v1633 = vadd.f32 %v1464, %v1632
      %v1634 = vpop.f32.mrf.mxu0
      %v1635 = vadd.f32 %v1466, %v1634
      %1636 = vmatmul.bf16.gmra.mxu0 %v1199
      %v1637 = vpop.f32.mrf.mxu0
      %v1638 = vadd.f32 %v1469, %v1637
      %v1639 = vpop.f32.mrf.mxu0
      %v1640 = vadd.f32 %v1471, %v1639
      %1641 = vmatmul.bf16.gmra.mxu0 %v1201
      %v1642 = vpop.f32.mrf.mxu0
      %v1643 = vadd.f32 %v1474, %v1642
      %v1644 = vpop.f32.mrf.mxu0
      %v1645 = vadd.f32 %v1476, %v1644
      %1646 = vmatmul.bf16.gmra.mxu0 %v1203
      %v1647 = vpop.f32.mrf.mxu0
      %v1648 = vadd.f32 %v1479, %v1647
      %v1649 = vpop.f32.mrf.mxu0
      %v1650 = vadd.f32 %v1481, %v1649
      %1651 = vmatmul.bf16.gmra.mxu0 %v1205
      %v1652 = vpop.f32.mrf.mxu0
      %v1653 = vadd.f32 %v1484, %v1652
      %v1654 = vpop.f32.mrf.mxu0
      %v1655 = vadd.f32 %v1486, %v1654
      %1656 = vmatmul.bf16.gmra.mxu0 %v1207
      %v1657 = vpop.f32.mrf.mxu0
      %v1658 = vadd.f32 %v1489, %v1657
      %v1659 = vpop.f32.mrf.mxu0
      %v1660 = vadd.f32 %v1491, %v1659
      %1661 = vmatmul.bf16.gmra.mxu0 %v1209
      %v1662 = vpop.f32.mrf.mxu0
      %v1663 = vadd.f32 %v1494, %v1662
      %v1664 = vpop.f32.mrf.mxu0
      %v1665 = vadd.f32 %v1496, %v1664
      %1666 = vmatmul.bf16.gmra.mxu0 %v1211
      %v1667 = vpop.f32.mrf.mxu0
      %v1668 = vadd.f32 %v1499, %v1667
      %v1669 = vpop.f32.mrf.mxu0
      %v1670 = vadd.f32 %v1501, %v1669
      %1671 = vmatmul.bf16.gmra.mxu0 %v1213
      %v1672 = vpop.f32.mrf.mxu0
      %v1673 = vadd.f32 %v1504, %v1672
      %v1674 = vpop.f32.mrf.mxu0
      %v1675 = vadd.f32 %v1506, %v1674
      %1676 = vmatmul.bf16.gmra.mxu0 %v1215
      %v1677 = vpop.f32.mrf.mxu0
      %v1678 = vadd.f32 %v1509, %v1677
      %v1679 = vpop.f32.mrf.mxu0
      %v1680 = vadd.f32 %v1511, %v1679
      %1681 = vdwg.mxu0
      %v1682 = vpack.c.bf16 %v1523, %v1523
      %v1683 = vpack.c.bf16 %v1525, %v1525
      %v1684 = vpack.c.bf16 %v1528, %v1528
      %v1685 = vpack.c.bf16 %v1530, %v1530
      %v1686 = vpack.c.bf16 %v1533, %v1533
      %v1687 = vpack.c.bf16 %v1535, %v1535
      %v1688 = vpack.c.bf16 %v1538, %v1538
      %v1689 = vpack.c.bf16 %v1540, %v1540
      %v1690 = vpack.c.bf16 %v1543, %v1543
      %v1691 = vpack.c.bf16 %v1545, %v1545
      %v1692 = vpack.c.bf16 %v1548, %v1548
      %v1693 = vpack.c.bf16 %v1550, %v1550
      %v1694 = vpack.c.bf16 %v1553, %v1553
      %v1695 = vpack.c.bf16 %v1555, %v1555
      %v1696 = vpack.c.bf16 %v1558, %v1558
      %v1697 = vpack.c.bf16 %v1560, %v1560
      %v1698 = vpack.c.bf16 %v1563, %v1563
      %v1699 = vpack.c.bf16 %v1565, %v1565
      %v1700 = vpack.c.bf16 %v1568, %v1568
      %v1701 = vpack.c.bf16 %v1570, %v1570
      %v1702 = vpack.c.bf16 %v1573, %v1573
      %v1703 = vpack.c.bf16 %v1575, %v1575
      %v1704 = vpack.c.bf16 %v1578, %v1578
      %v1705 = vpack.c.bf16 %v1580, %v1580
      %v1706 = vpack.c.bf16 %v1583, %v1583
      %v1707 = vpack.c.bf16 %v1585, %v1585
      %v1708 = vpack.c.bf16 %v1588, %v1588
      %v1709 = vpack.c.bf16 %v1590, %v1590
      %v1710 = vpack.c.bf16 %v1593, %v1593
      %v1711 = vpack.c.bf16 %v1595, %v1595
      %v1712 = vpack.c.bf16 %v1598, %v1598
      %v1713 = vpack.c.bf16 %v1600, %v1600
      %v1714 = vpack.c.bf16 %v1603, %v1603
      %v1715 = vpack.c.bf16 %v1605, %v1605
      %v1716 = vpack.c.bf16 %v1608, %v1608
      %v1717 = vpack.c.bf16 %v1610, %v1610
      %v1718 = vpack.c.bf16 %v1613, %v1613
      %v1719 = vpack.c.bf16 %v1615, %v1615
      %v1720 = vpack.c.bf16 %v1618, %v1618
      %v1721 = vpack.c.bf16 %v1620, %v1620
      %v1722 = vpack.c.bf16 %v1623, %v1623
      %v1723 = vpack.c.bf16 %v1625, %v1625
      %v1724 = vpack.c.bf16 %v1628, %v1628
      %v1725 = vpack.c.bf16 %v1630, %v1630
      %v1726 = vpack.c.bf16 %v1633, %v1633
      %v1727 = vpack.c.bf16 %v1635, %v1635
      %v1728 = vpack.c.bf16 %v1638, %v1638
      %v1729 = vpack.c.bf16 %v1640, %v1640
      %v1730 = vpack.c.bf16 %v1643, %v1643
      %v1731 = vpack.c.bf16 %v1645, %v1645
      %v1732 = vpack.c.bf16 %v1648, %v1648
      %v1733 = vpack.c.bf16 %v1650, %v1650
      %v1734 = vpack.c.bf16 %v1653, %v1653
      %v1735 = vpack.c.bf16 %v1655, %v1655
      %v1736 = vpack.c.bf16 %v1658, %v1658
      %v1737 = vpack.c.bf16 %v1660, %v1660
      %v1738 = vpack.c.bf16 %v1663, %v1663
      %v1739 = vpack.c.bf16 %v1665, %v1665
      %v1740 = vpack.c.bf16 %v1668, %v1668
      %v1741 = vpack.c.bf16 %v1670, %v1670
      %v1742 = vpack.c.bf16 %v1673, %v1673
      %v1743 = vpack.c.bf16 %v1675, %v1675
      %v1744 = vpack.c.bf16 %v1678, %v1678
      %v1745 = vpack.c.bf16 %v1680, %v1680
      %1746 = vst [vmem:[%s294] sm:$0xf] %v1682
      %1747 = vst [vmem:[%s294 + $0x4] sm:$0xf] %v1683
      %1748 = vst [vmem:[%s294 + $0x8] sm:$0xf] %v1684
      %1749 = vst [vmem:[%s294 + $0xc] sm:$0xf] %v1685
      %1750 = vst [vmem:[%s294 + $0x10] sm:$0xf] %v1686
      %1751 = vst [vmem:[%s294 + $0x14] sm:$0xf] %v1687
      %1752 = vst [vmem:[%s294 + $0x18] sm:$0xf] %v1688
      %1753 = vst [vmem:[%s294 + $0x1c] sm:$0xf] %v1689
      %1754 = vst [vmem:[%s294 + $0x20] sm:$0xf] %v1690
      %1755 = vst [vmem:[%s294 + $0x24] sm:$0xf] %v1691
      %1756 = vst [vmem:[%s294 + $0x28] sm:$0xf] %v1692
      %1757 = vst [vmem:[%s294 + $0x2c] sm:$0xf] %v1693
      %1758 = vst [vmem:[%s294 + $0x30] sm:$0xf] %v1694
      %1759 = vst [vmem:[%s294 + $0x34] sm:$0xf] %v1695
      %1760 = vst [vmem:[%s294 + $0x38] sm:$0xf] %v1696
      %1761 = vst [vmem:[%s294 + $0x3c] sm:$0xf] %v1697
      %1762 = vst [vmem:[%s294 + $0x40] sm:$0xf] %v1698
      %1763 = vst [vmem:[%s294 + $0x44] sm:$0xf] %v1699
      %1764 = vst [vmem:[%s294 + $0x48] sm:$0xf] %v1700
      %1765 = vst [vmem:[%s294 + $0x4c] sm:$0xf] %v1701
      %1766 = vst [vmem:[%s294 + $0x50] sm:$0xf] %v1702
      %1767 = vst [vmem:[%s294 + $0x54] sm:$0xf] %v1703
      %1768 = vst [vmem:[%s294 + $0x58] sm:$0xf] %v1704
      %1769 = vst [vmem:[%s294 + $0x5c] sm:$0xf] %v1705
      %1770 = vst [vmem:[%s294 + $0x60] sm:$0xf] %v1706
      %1771 = vst [vmem:[%s294 + $0x64] sm:$0xf] %v1707
      %1772 = vst [vmem:[%s294 + $0x68] sm:$0xf] %v1708
      %1773 = vst [vmem:[%s294 + $0x6c] sm:$0xf] %v1709
      %1774 = vst [vmem:[%s294 + $0x70] sm:$0xf] %v1710
      %1775 = vst [vmem:[%s294 + $0x74] sm:$0xf] %v1711
      %1776 = vst [vmem:[%s294 + $0x78] sm:$0xf] %v1712
      %1777 = vst [vmem:[%s294 + $0x7c] sm:$0xf] %v1713
      %1778 = vst [vmem:[%s294 + $0x80] sm:$0xf] %v1714
      %1779 = vst [vmem:[%s294 + $0x84] sm:$0xf] %v1715
      %1780 = vst [vmem:[%s294 + $0x88] sm:$0xf] %v1716
      %1781 = vst [vmem:[%s294 + $0x8c] sm:$0xf] %v1717
      %1782 = vst [vmem:[%s294 + $0x90] sm:$0xf] %v1718
      %1783 = vst [vmem:[%s294 + $0x94] sm:$0xf] %v1719
      %1784 = vst [vmem:[%s294 + $0x98] sm:$0xf] %v1720
      %1785 = vst [vmem:[%s294 + $0x9c] sm:$0xf] %v1721
      %1786 = vst [vmem:[%s294 + $0xa0] sm:$0xf] %v1722
      %1787 = vst [vmem:[%s294 + $0xa4] sm:$0xf] %v1723
      %1788 = vst [vmem:[%s294 + $0xa8] sm:$0xf] %v1724
      %1789 = vst [vmem:[%s294 + $0xac] sm:$0xf] %v1725
      %1790 = vst [vmem:[%s294 + $0xb0] sm:$0xf] %v1726
      %1791 = vst [vmem:[%s294 + $0xb4] sm:$0xf] %v1727
      %1792 = vst [vmem:[%s294 + $0xb8] sm:$0xf] %v1728
      %1793 = vst [vmem:[%s294 + $0xbc] sm:$0xf] %v1729
      %1794 = vst [vmem:[%s294 + $0xc0] sm:$0xf] %v1730
      %1795 = vst [vmem:[%s294 + $0xc4] sm:$0xf] %v1731
      %1796 = vst [vmem:[%s294 + $0xc8] sm:$0xf] %v1732
      %1797 = vst [vmem:[%s294 + $0xcc] sm:$0xf] %v1733
      %1798 = vst [vmem:[%s294 + $0xd0] sm:$0xf] %v1734
      %1799 = vst [vmem:[%s294 + $0xd4] sm:$0xf] %v1735
      %1800 = vst [vmem:[%s294 + $0xd8] sm:$0xf] %v1736
      %1801 = vst [vmem:[%s294 + $0xdc] sm:$0xf] %v1737
      %1802 = vst [vmem:[%s294 + $0xe0] sm:$0xf] %v1738
      %1803 = vst [vmem:[%s294 + $0xe4] sm:$0xf] %v1739
      %1804 = vst [vmem:[%s294 + $0xe8] sm:$0xf] %v1740
      %1805 = vst [vmem:[%s294 + $0xec] sm:$0xf] %v1741
      %1806 = vst [vmem:[%s294 + $0xf0] sm:$0xf] %v1742
      %1807 = vst [vmem:[%s294 + $0xf4] sm:$0xf] %v1743
      %1808 = vst [vmem:[%s294 + $0xf8] sm:$0xf] %v1744
      %1809 = vst [vmem:[%s294 + $0xfc] sm:$0xf] %v1745
      %v1810 = vadd.f32 %v1523, %v1525
      %v1811 = vadd.f32 %v1810, %v1528
      %v1812 = vadd.f32 %v1811, %v1530
      %v1813 = vadd.f32 %v1812, %v1533
      %v1814 = vadd.f32 %v1813, %v1535
      %v1815 = vadd.f32 %v1814, %v1538
      %v1816 = vadd.f32 %v1815, %v1540
      %v1817 = vadd.f32 %v1816, %v1543
      %v1818 = vadd.f32 %v1817, %v1545
      %v1819 = vadd.f32 %v1818, %v1548
      %v1820 = vadd.f32 %v1819, %v1550
      %v1821 = vadd.f32 %v1820, %v1553
      %v1822 = vadd.f32 %v1821, %v1555
      %v1823 = vadd.f32 %v1822, %v1558
      %v1824 = vadd.f32 %v1823, %v1560
      %v1825 = vadd.f32 %v1824, %v1563
      %v1826 = vadd.f32 %v1825, %v1565
      %v1827 = vadd.f32 %v1826, %v1568
      %v1828 = vadd.f32 %v1827, %v1570
      %v1829 = vadd.f32 %v1828, %v1573
      %v1830 = vadd.f32 %v1829, %v1575
      %v1831 = vadd.f32 %v1830, %v1578
      %v1832 = vadd.f32 %v1831, %v1580
      %v1833 = vadd.f32 %v1832, %v1583
      %v1834 = vadd.f32 %v1833, %v1585
      %v1835 = vadd.f32 %v1834, %v1588
      %v1836 = vadd.f32 %v1835, %v1590
      %v1837 = vadd.f32 %v1836, %v1593
      %v1838 = vadd.f32 %v1837, %v1595
      %v1839 = vadd.f32 %v1838, %v1598
      %v1840 = vadd.f32 %v1839, %v1600
      %v1841 = vadd.f32 %v1840, %v1603
      %v1842 = vadd.f32 %v1841, %v1605
      %v1843 = vadd.f32 %v1842, %v1608
      %v1844 = vadd.f32 %v1843, %v1610
      %v1845 = vadd.f32 %v1844, %v1613
      %v1846 = vadd.f32 %v1845, %v1615
      %v1847 = vadd.f32 %v1846, %v1618
      %v1848 = vadd.f32 %v1847, %v1620
      %v1849 = vadd.f32 %v1848, %v1623
      %v1850 = vadd.f32 %v1849, %v1625
      %v1851 = vadd.f32 %v1850, %v1628
      %v1852 = vadd.f32 %v1851, %v1630
      %v1853 = vadd.f32 %v1852, %v1633
      %v1854 = vadd.f32 %v1853, %v1635
      %v1855 = vadd.f32 %v1854, %v1638
      %v1856 = vadd.f32 %v1855, %v1640
      %v1857 = vadd.f32 %v1856, %v1643
      %v1858 = vadd.f32 %v1857, %v1645
      %v1859 = vadd.f32 %v1858, %v1648
      %v1860 = vadd.f32 %v1859, %v1650
      %v1861 = vadd.f32 %v1860, %v1653
      %v1862 = vadd.f32 %v1861, %v1655
      %v1863 = vadd.f32 %v1862, %v1658
      %v1864 = vadd.f32 %v1863, %v1660
      %v1865 = vadd.f32 %v1864, %v1663
      %v1866 = vadd.f32 %v1865, %v1665
      %v1867 = vadd.f32 %v1866, %v1668
      %v1868 = vadd.f32 %v1867, %v1670
      %v1869 = vadd.f32 %v1868, %v1673
      %v1870 = vadd.f32 %v1869, %v1675
      %v1871 = vadd.f32 %v1870, %v1678
      %v1872 = vadd.f32 %v1871, %v1680
      %v1873 = vrot.slane %v1872, 4
      %v1874 = vadd.f32 %v1872, %v1873
      %v1875 = vrot.slane %v1874, 2
      %v1876 = vadd.f32 %v1874, %v1875
      %v1877 = vrot.slane %v1876, 1
      %v1878 = vadd.f32 %v1876, %v1877
      %1879 = vst [vmem:[%s298] sm:$0x1] %v1878
      %v1880 = vmul.f32 %v1523, %v1523
      %v1881 = vmul.f32 %v1525, %v1525
      %v1882 = vmul.f32 %v1528, %v1528
      %v1883 = vmul.f32 %v1530, %v1530
      %v1884 = vmul.f32 %v1533, %v1533
      %v1885 = vmul.f32 %v1535, %v1535
      %v1886 = vmul.f32 %v1538, %v1538
      %v1887 = vmul.f32 %v1540, %v1540
      %v1888 = vmul.f32 %v1543, %v1543
      %v1889 = vmul.f32 %v1545, %v1545
      %v1890 = vmul.f32 %v1548, %v1548
      %v1891 = vmul.f32 %v1550, %v1550
      %v1892 = vmul.f32 %v1553, %v1553
      %v1893 = vmul.f32 %v1555, %v1555
      %v1894 = vmul.f32 %v1558, %v1558
      %v1895 = vmul.f32 %v1560, %v1560
      %v1896 = vmul.f32 %v1563, %v1563
      %v1897 = vmul.f32 %v1565, %v1565
      %v1898 = vmul.f32 %v1568, %v1568
      %v1899 = vmul.f32 %v1570, %v1570
      %v1900 = vmul.f32 %v1573, %v1573
      %v1901 = vmul.f32 %v1575, %v1575
      %v1902 = vmul.f32 %v1578, %v1578
      %v1903 = vmul.f32 %v1580, %v1580
      %v1904 = vmul.f32 %v1583, %v1583
      %v1905 = vmul.f32 %v1585, %v1585
      %v1906 = vmul.f32 %v1588, %v1588
      %v1907 = vmul.f32 %v1590, %v1590
      %v1908 = vmul.f32 %v1593, %v1593
      %v1909 = vmul.f32 %v1595, %v1595
      %v1910 = vmul.f32 %v1598, %v1598
      %v1911 = vmul.f32 %v1600, %v1600
      %v1912 = vmul.f32 %v1603, %v1603
      %v1913 = vmul.f32 %v1605, %v1605
      %v1914 = vmul.f32 %v1608, %v1608
      %v1915 = vmul.f32 %v1610, %v1610
      %v1916 = vmul.f32 %v1613, %v1613
      %v1917 = vmul.f32 %v1615, %v1615
      %v1918 = vmul.f32 %v1618, %v1618
      %v1919 = vmul.f32 %v1620, %v1620
      %v1920 = vmul.f32 %v1623, %v1623
      %v1921 = vmul.f32 %v1625, %v1625
      %v1922 = vmul.f32 %v1628, %v1628
      %v1923 = vmul.f32 %v1630, %v1630
      %v1924 = vmul.f32 %v1633, %v1633
      %v1925 = vmul.f32 %v1635, %v1635
      %v1926 = vmul.f32 %v1638, %v1638
      %v1927 = vmul.f32 %v1640, %v1640
      %v1928 = vmul.f32 %v1643, %v1643
      %v1929 = vmul.f32 %v1645, %v1645
      %v1930 = vmul.f32 %v1648, %v1648
      %v1931 = vmul.f32 %v1650, %v1650
      %v1932 = vmul.f32 %v1653, %v1653
      %v1933 = vmul.f32 %v1655, %v1655
      %v1934 = vmul.f32 %v1658, %v1658
      %v1935 = vmul.f32 %v1660, %v1660
      %v1936 = vmul.f32 %v1663, %v1663
      %v1937 = vmul.f32 %v1665, %v1665
      %v1938 = vmul.f32 %v1668, %v1668
      %v1939 = vmul.f32 %v1670, %v1670
      %v1940 = vmul.f32 %v1673, %v1673
      %v1941 = vmul.f32 %v1675, %v1675
      %v1942 = vmul.f32 %v1678, %v1678
      %v1943 = vmul.f32 %v1680, %v1680
      %v1944 = vadd.f32 %v1880, %v1881
      %v1945 = vadd.f32 %v1944, %v1882
      %v1946 = vadd.f32 %v1945, %v1883
      %v1947 = vadd.f32 %v1946, %v1884
      %v1948 = vadd.f32 %v1947, %v1885
      %v1949 = vadd.f32 %v1948, %v1886
      %v1950 = vadd.f32 %v1949, %v1887
      %v1951 = vadd.f32 %v1950, %v1888
      %v1952 = vadd.f32 %v1951, %v1889
      %v1953 = vadd.f32 %v1952, %v1890
      %v1954 = vadd.f32 %v1953, %v1891
      %v1955 = vadd.f32 %v1954, %v1892
      %v1956 = vadd.f32 %v1955, %v1893
      %v1957 = vadd.f32 %v1956, %v1894
      %v1958 = vadd.f32 %v1957, %v1895
      %v1959 = vadd.f32 %v1958, %v1896
      %v1960 = vadd.f32 %v1959, %v1897
      %v1961 = vadd.f32 %v1960, %v1898
      %v1962 = vadd.f32 %v1961, %v1899
      %v1963 = vadd.f32 %v1962, %v1900
      %v1964 = vadd.f32 %v1963, %v1901
      %v1965 = vadd.f32 %v1964, %v1902
      %v1966 = vadd.f32 %v1965, %v1903
      %v1967 = vadd.f32 %v1966, %v1904
      %v1968 = vadd.f32 %v1967, %v1905
      %v1969 = vadd.f32 %v1968, %v1906
      %v1970 = vadd.f32 %v1969, %v1907
      %v1971 = vadd.f32 %v1970, %v1908
      %v1972 = vadd.f32 %v1971, %v1909
      %v1973 = vadd.f32 %v1972, %v1910
      %v1974 = vadd.f32 %v1973, %v1911
      %v1975 = vadd.f32 %v1974, %v1912
      %v1976 = vadd.f32 %v1975, %v1913
      %v1977 = vadd.f32 %v1976, %v1914
      %v1978 = vadd.f32 %v1977, %v1915
      %v1979 = vadd.f32 %v1978, %v1916
      %v1980 = vadd.f32 %v1979, %v1917
      %v1981 = vadd.f32 %v1980, %v1918
      %v1982 = vadd.f32 %v1981, %v1919
      %v1983 = vadd.f32 %v1982, %v1920
      %v1984 = vadd.f32 %v1983, %v1921
      %v1985 = vadd.f32 %v1984, %v1922
      %v1986 = vadd.f32 %v1985, %v1923
      %v1987 = vadd.f32 %v1986, %v1924
      %v1988 = vadd.f32 %v1987, %v1925
      %v1989 = vadd.f32 %v1988, %v1926
      %v1990 = vadd.f32 %v1989, %v1927
      %v1991 = vadd.f32 %v1990, %v1928
      %v1992 = vadd.f32 %v1991, %v1929
      %v1993 = vadd.f32 %v1992, %v1930
      %v1994 = vadd.f32 %v1993, %v1931
      %v1995 = vadd.f32 %v1994, %v1932
      %v1996 = vadd.f32 %v1995, %v1933
      %v1997 = vadd.f32 %v1996, %v1934
      %v1998 = vadd.f32 %v1997, %v1935
      %v1999 = vadd.f32 %v1998, %v1936
      %v2000 = vadd.f32 %v1999, %v1937
      %v2001 = vadd.f32 %v2000, %v1938
      %v2002 = vadd.f32 %v2001, %v1939
      %v2003 = vadd.f32 %v2002, %v1940
      %v2004 = vadd.f32 %v2003, %v1941
      %v2005 = vadd.f32 %v2004, %v1942
      %v2006 = vadd.f32 %v2005, %v1943
      %v2007 = vrot.slane %v2006, 4
      %v2008 = vadd.f32 %v2006, %v2007
      %v2009 = vrot.slane %v2008, 2
      %v2010 = vadd.f32 %v2008, %v2009
      %v2011 = vrot.slane %v2010, 1
      %v2012 = vadd.f32 %v2010, %v2011
      %2013 = vst [vmem:[%s301] sm:$0x1] %v2012
      %s2014 = smul.u32 64, %s19
      %p2015 = scmp.lt.s32.totalorder %s2014, 255
      %s2016 = scalar_select %p2015, %s2014, 255
      %s2017 = smul.addr %s2016, 4
      %s2018 = scalar_lea.vmem %s5, %s2017
      %p2019 = scmp.lt.s32.totalorder %s19, 3
      %s2020 = scalar_select %p2019, %s19, 3
      %s2021 = scalar_lea.vmem %s6, %s2020
      %p2022 = scmp.lt.s32.totalorder %s19, 3
      %s2023 = scalar_select %p2022, %s19, 3
      %s2024 = scalar_lea.vmem %s7, %s2023
      // Predicated region
      $region41: #{wgan_generator_forward.12} parent=39 // pred_check
        %p2025 = pneg %p147
      $region42: #{wgan_generator_forward.12} parent=39 // pred_check_branch
        %2027 = sbr.rel (%p2025) target = $region44
      $region43: #{wgan_generator_forward.12} parent=39 // pred_region
        %s2028 = smul.u32 64, %s19
      $region44: #{wgan_generator_forward.12} parent=39 // pred_fallthru
        _
      // Predicated region
      $region45: #{wgan_generator_forward.12} parent=39 // pred_check
        %p2029 = pneg %p173
      $region46: #{wgan_generator_forward.12} parent=39 // pred_check_branch
        %2031 = sbr.rel (%p2029) target = $region48
      $region47: #{wgan_generator_forward.12} parent=39 // pred_region
        _
      $region48: #{wgan_generator_forward.12} parent=39 // pred_fallthru
        _
      // Predicated region
      $region49: #{wgan_generator_forward.12} parent=39 // pred_check
        %p2032 = pneg %p199
      $region50: #{wgan_generator_forward.12} parent=39 // pred_check_branch
        %2034 = sbr.rel (%p2032) target = $region52
      $region51: #{wgan_generator_forward.12} parent=39 // pred_region
        _
      $region52: #{wgan_generator_forward.12} parent=39 // pred_fallthru
        _
    $region40: #{wgan_generator_forward.12} parent=5 // pred_fallthru
      _
    %p2035 = scmp.le.s32.totalorder 2, %s14
    // Predicated region
    $region53: #{wgan_generator_forward.12} parent=5 // pred_check
      %p2036 = pneg %p2035
    $region54: #{wgan_generator_forward.12} parent=5 // pred_check_branch
      %2038 = sbr.rel (%p2036) target = $region56
    $region55: #{wgan_generator_forward.12} parent=5 // pred_region
      %s2039 = ssub.s32 %s14, 2
      // Predicated region
      $region57: #{wgan_generator_forward.12} parent=55 // pred_check
        %p2040 = pneg %p153
      $region58: #{wgan_generator_forward.12} parent=55 // pred_check_branch
        %2042 = sbr.rel (%p2040) target = $region60
      $region59: #{wgan_generator_forward.12} parent=55 // pred_region
        %s2043 = smul.u32 64, %s20
        %p2044 = scmp.lt.s32.totalorder %s2043, 255
        %s2045 = scalar_select %p2044, %s2043, 255
        %s2046 = smul.addr %s2045, 4
        %s2047 = scalar_lea.vmem %s5, %s2046
      $region60: #{wgan_generator_forward.12} parent=55 // pred_fallthru
        _
      // Predicated region
      $region61: #{wgan_generator_forward.12} parent=55 // pred_check
        %p2048 = pneg %p179
      $region62: #{wgan_generator_forward.12} parent=55 // pred_check_branch
        %2050 = sbr.rel (%p2048) target = $region64
      $region63: #{wgan_generator_forward.12} parent=55 // pred_region
        %p2051 = scmp.lt.s32.totalorder %s20, 3
        %s2052 = scalar_select %p2051, %s20, 3
        %s2053 = scalar_lea.vmem %s6, %s2052
      $region64: #{wgan_generator_forward.12} parent=55 // pred_fallthru
        _
      // Predicated region
      $region65: #{wgan_generator_forward.12} parent=55 // pred_check
        %p2054 = pneg %p205
      $region66: #{wgan_generator_forward.12} parent=55 // pred_check_branch
        %2056 = sbr.rel (%p2054) target = $region68
      $region67: #{wgan_generator_forward.12} parent=55 // pred_region
        %p2057 = scmp.lt.s32.totalorder %s20, 3
        %s2058 = scalar_select %p2057, %s20, 3
        %s2059 = scalar_lea.vmem %s7, %s2058
      $region68: #{wgan_generator_forward.12} parent=55 // pred_fallthru
        _
    $region56: #{wgan_generator_forward.12} parent=5 // pred_fallthru
      _
  $region6: #{wgan_generator_forward.12} parent=0 // loop_footer
    %s18 = sadd.s32 1, %s14
  $region7: #{wgan_generator_forward.12} parent=0 // loop_footer_branch
    %13 = sbr.rel target = $region3
  $region8: #{wgan_generator_forward.12} parent=0 // loop_exit
    _

// kernel: wgan_generator_forward.13
$region0: #{wgan_generator_forward.13}
  #allocation0 [shape = 'u32[]', space=smem, size = 0x4, offset = 0x4, fixed_abs, tag = 'smem constant byte address 0x4 - core index']
  #allocation1 [shape = 'u32[72,128]{1,0:T(1,128)}', space=vmem, size = 0x9000, scoped, tag = 'internal scratch']
  %s0 = inlined_call_operand.vmem [shape: bf16[8192,128], index: 0, kind: input, shape index: {}]
  %s1 = inlined_call_operand.vmem [shape: bf16[128,128], index: 1, kind: input, shape index: {}]
  %s2 = inlined_call_operand.vmem [shape: f32[1,128], index: 2, kind: input, shape index: {}]
  %s3 = inlined_call_operand.vmem [shape: f32[1,128], index: 3, kind: input, shape index: {}]
  %s4 = inlined_call_operand.vmem [shape: f32[1,128], index: 4, kind: input, shape index: {}]
  %s5 = inlined_call_operand.vmem [shape: f32[8192,128], index: 5, kind: output, shape index: {0}]
  %s6 = inlined_call_operand.hbm [shape: f32[16,1,128], index: 6, kind: output, shape index: {1}]
  %s7 = inlined_call_operand.hbm [shape: f32[16,1,128], index: 7, kind: output, shape index: {2}]
  %8 = xla_tuple %s5, %s6, %s7
  %s9 = sld [smem:[#allocation0]]
  $region69: #{wgan_generator_forward.13} parent=0
    _
  %s11 = ssub.s32 1, %s9
  %s12 = scalar_select 0, %s11, %s9
  $region1: #{wgan_generator_forward.13} parent=0
    #allocation2 [shape = 'u8[1024]{0}', space=vmem, size = 0x400, scoped, tag = 'output window, operand 1']
    #allocation3 [shape = 's32[2]{0}', space=sflag, size = 0x8, scoped, tag = 'scoped memory for wgan_generator_forward.13']
    #allocation4 [shape = 'u8[1024]{0}', space=vmem, size = 0x400, scoped, tag = 'output window, operand 2']
    #allocation5 [shape = 's32[2]{0}', space=sflag, size = 0x8, scoped, tag = 'scoped memory for wgan_generator_forward.13']
    %13 = vsyncpa [#allocation3], 0
    %s14 = scalar_lea.sflag [#allocation3], 1
    %15 = vsyncpa %s14, 0
    %16 = vsyncpa [#allocation5], 0
    %s17 = scalar_lea.sflag [#allocation5], 1
    %18 = vsyncpa %s17, 0
    loop: start=0, step=1, limit=18
    $region2: #{wgan_generator_forward.13} parent=1 // loop_pre_header
      _
    $region3: #{wgan_generator_forward.13} parent=1 // loop_header
      %s20 = sphi 0, %s24
      %p21 = scmp.ge.s32.totalorder %s20, 18
      %s30 = sphi 0, %s32
      %s33 = sphi 0, %s30
      %s34 = sphi 0, %s33
      %s50 = sphi 0, %s34
      %s54 = sphi 0, %s54
      %s56 = sphi 0, %s54
      %s57 = sphi 0, %s56
      %s71 = sphi 0, %s57
      %s75 = sphi 0, %s75
      %s77 = sphi 0, %s75
      %s78 = sphi 0, %s77
      %s92 = sphi 0, %s78
      %s96 = sphi 0, %s96
      %s98 = sphi 0, %s96
      %s99 = sphi 0, %s98
      %s113 = sphi 0, %s99
      %s117 = sphi 0, %s117
      %s119 = sphi 0, %s117
      %s120 = sphi 0, %s119
      %s134 = sphi 0, %s120
      %s140 = sphi 0, %s142
      %s143 = sphi 0, %s140
      %s144 = sphi 0, %s143
      %s160 = sphi 0, %s144
      %s166 = sphi 0, %s168
      %s169 = sphi 0, %s166
      %s170 = sphi 0, %s169
      %s186 = sphi 0, %s170
      %s192 = sphi 0, %s194
      %s195 = sphi 0, %s192
      %s196 = sphi 0, %s195
      %s212 = sphi 0, %s196
    $region4: #{wgan_generator_forward.13} parent=1 // loop_header_branch
      %23 = sbr.rel (%p21) target = $region8
    $region5: #{wgan_generator_forward.13} parent=1 // loop_body
      %s25 = ssub.s32 %s20, 1
      %s26 = ssub.s32 %s20, 2
      %s27 = sadd.s32 %s20, 1
      %s28 = ssub.s32 %s20, %s27
      %p29 = scmp.eq.s32.totalorder %s28, 0
      %s31 = sadd.s32 %s30, 1
      %s32 = scalar_select %p29, %s30, %s31
      %p35 = pneg %p29
      %p36 = scmp.eq.s32.totalorder %s20, 15
      %p37 = por %p35, %p36
      %p38 = scmp.ne.s32.totalorder %s30, %s33
      %p39 = scmp.eq.s32.totalorder %s20, 0
      %p40 = por %p38, %p39
      %p41 = scmp.ne.s32.totalorder %s30, %s33
      %p42 = scmp.eq.s32.totalorder %s25, 15
      %p43 = por %p41, %p42
      %p44 = scmp.ne.s32.totalorder %s33, %s34
      %p45 = scmp.eq.s32.totalorder %s25, 0
      %p46 = por %p44, %p45
      %p47 = scmp.ne.s32.totalorder %s33, %s34
      %p48 = scmp.eq.s32.totalorder %s26, 15
      %p49 = por %p47, %p48
      %p51 = scmp.ne.s32.totalorder %s34, %s50
      %p52 = scmp.eq.s32.totalorder %s26, 0
      %p53 = por %p51, %p52
      %s55 = sadd.s32 %s54, 1
      %p58 = scmp.eq.s32.totalorder %s20, 15
      %p59 = scmp.ne.s32.totalorder %s54, %s56
      %p60 = scmp.eq.s32.totalorder %s20, 0
      %p61 = por %p59, %p60
      %p62 = scmp.ne.s32.totalorder %s54, %s56
      %p63 = scmp.eq.s32.totalorder %s25, 15
      %p64 = por %p62, %p63
      %p65 = scmp.ne.s32.totalorder %s56, %s57
      %p66 = scmp.eq.s32.totalorder %s25, 0
      %p67 = por %p65, %p66
      %p68 = scmp.ne.s32.totalorder %s56, %s57
      %p69 = scmp.eq.s32.totalorder %s26, 15
      %p70 = por %p68, %p69
      %p72 = scmp.ne.s32.totalorder %s57, %s71
      %p73 = scmp.eq.s32.totalorder %s26, 0
      %p74 = por %p72, %p73
      %s76 = sadd.s32 %s75, 1
      %p79 = scmp.eq.s32.totalorder %s20, 15
      %p80 = scmp.ne.s32.totalorder %s75, %s77
      %p81 = scmp.eq.s32.totalorder %s20, 0
      %p82 = por %p80, %p81
      %p83 = scmp.ne.s32.totalorder %s75, %s77
      %p84 = scmp.eq.s32.totalorder %s25, 15
      %p85 = por %p83, %p84
      %p86 = scmp.ne.s32.totalorder %s77, %s78
      %p87 = scmp.eq.s32.totalorder %s25, 0
      %p88 = por %p86, %p87
      %p89 = scmp.ne.s32.totalorder %s77, %s78
      %p90 = scmp.eq.s32.totalorder %s26, 15
      %p91 = por %p89, %p90
      %p93 = scmp.ne.s32.totalorder %s78, %s92
      %p94 = scmp.eq.s32.totalorder %s26, 0
      %p95 = por %p93, %p94
      %s97 = sadd.s32 %s96, 1
      %p100 = scmp.eq.s32.totalorder %s20, 15
      %p101 = scmp.ne.s32.totalorder %s96, %s98
      %p102 = scmp.eq.s32.totalorder %s20, 0
      %p103 = por %p101, %p102
      %p104 = scmp.ne.s32.totalorder %s96, %s98
      %p105 = scmp.eq.s32.totalorder %s25, 15
      %p106 = por %p104, %p105
      %p107 = scmp.ne.s32.totalorder %s98, %s99
      %p108 = scmp.eq.s32.totalorder %s25, 0
      %p109 = por %p107, %p108
      %p110 = scmp.ne.s32.totalorder %s98, %s99
      %p111 = scmp.eq.s32.totalorder %s26, 15
      %p112 = por %p110, %p111
      %p114 = scmp.ne.s32.totalorder %s99, %s113
      %p115 = scmp.eq.s32.totalorder %s26, 0
      %p116 = por %p114, %p115
      %s118 = sadd.s32 %s117, 1
      %p121 = scmp.eq.s32.totalorder %s20, 15
      %p122 = scmp.ne.s32.totalorder %s117, %s119
      %p123 = scmp.eq.s32.totalorder %s20, 0
      %p124 = por %p122, %p123
      %p125 = scmp.ne.s32.totalorder %s117, %s119
      %p126 = scmp.eq.s32.totalorder %s25, 15
      %p127 = por %p125, %p126
      %p128 = scmp.ne.s32.totalorder %s119, %s120
      %p129 = scmp.eq.s32.totalorder %s25, 0
      %p130 = por %p128, %p129
      %p131 = scmp.ne.s32.totalorder %s119, %s120
      %p132 = scmp.eq.s32.totalorder %s26, 15
      %p133 = por %p131, %p132
      %p135 = scmp.ne.s32.totalorder %s120, %s134
      %p136 = scmp.eq.s32.totalorder %s26, 0
      %p137 = por %p135, %p136
      %s138 = ssub.s32 %s20, %s27
      %p139 = scmp.eq.s32.totalorder %s138, 0
      %s141 = sadd.s32 %s140, 1
      %s142 = scalar_select %p139, %s140, %s141
      %p145 = pneg %p139
      %p146 = scmp.eq.s32.totalorder %s20, 15
      %p147 = por %p145, %p146
      %p148 = scmp.ne.s32.totalorder %s140, %s143
      %p149 = scmp.eq.s32.totalorder %s20, 0
      %p150 = por %p148, %p149
      %p151 = scmp.ne.s32.totalorder %s140, %s143
      %p152 = scmp.eq.s32.totalorder %s25, 15
      %p153 = por %p151, %p152
      %p154 = scmp.ne.s32.totalorder %s143, %s144
      %p155 = scmp.eq.s32.totalorder %s25, 0
      %p156 = por %p154, %p155
      %p157 = scmp.ne.s32.totalorder %s143, %s144
      %p158 = scmp.eq.s32.totalorder %s26, 15
      %p159 = por %p157, %p158
      %p161 = scmp.ne.s32.totalorder %s144, %s160
      %p162 = scmp.eq.s32.totalorder %s26, 0
      %p163 = por %p161, %p162
      %s164 = ssub.s32 %s20, %s27
      %p165 = scmp.eq.s32.totalorder %s164, 0
      %s167 = sadd.s32 %s166, 1
      %s168 = scalar_select %p165, %s166, %s167
      %p171 = pneg %p165
      %p172 = scmp.eq.s32.totalorder %s20, 15
      %p173 = por %p171, %p172
      %p174 = scmp.ne.s32.totalorder %s166, %s169
      %p175 = scmp.eq.s32.totalorder %s20, 0
      %p176 = por %p174, %p175
      %p177 = scmp.ne.s32.totalorder %s166, %s169
      %p178 = scmp.eq.s32.totalorder %s25, 15
      %p179 = por %p177, %p178
      %p180 = scmp.ne.s32.totalorder %s169, %s170
      %p181 = scmp.eq.s32.totalorder %s25, 0
      %p182 = por %p180, %p181
      %p183 = scmp.ne.s32.totalorder %s169, %s170
      %p184 = scmp.eq.s32.totalorder %s26, 15
      %p185 = por %p183, %p184
      %p187 = scmp.ne.s32.totalorder %s170, %s186
      %p188 = scmp.eq.s32.totalorder %s26, 0
      %p189 = por %p187, %p188
      %s190 = ssub.s32 %s20, %s27
      %p191 = scmp.eq.s32.totalorder %s190, 0
      %s193 = sadd.s32 %s192, 1
      %s194 = scalar_select %p191, %s192, %s193
      %p197 = pneg %p191
      %p198 = scmp.eq.s32.totalorder %s20, 15
      %p199 = por %p197, %p198
      %p200 = scmp.ne.s32.totalorder %s192, %s195
      %p201 = scmp.eq.s32.totalorder %s20, 0
      %p202 = por %p200, %p201
      %p203 = scmp.ne.s32.totalorder %s192, %s195
      %p204 = scmp.eq.s32.totalorder %s25, 15
      %p205 = por %p203, %p204
      %p206 = scmp.ne.s32.totalorder %s195, %s196
      %p207 = scmp.eq.s32.totalorder %s25, 0
      %p208 = por %p206, %p207
      %p209 = scmp.ne.s32.totalorder %s195, %s196
      %p210 = scmp.eq.s32.totalorder %s26, 15
      %p211 = por %p209, %p210
      %p213 = scmp.ne.s32.totalorder %s196, %s212
      %p214 = scmp.eq.s32.totalorder %s26, 0
      %p215 = por %p213, %p214
      %p216 = scmp.le.s32.totalorder 1, %s20
      %p217 = scmp.lt.s32.totalorder %s20, 17
      %p218 = pnand %p216, %p217
      %p219 = pneg %p218
      // Predicated region
      $region9: #{wgan_generator_forward.13} parent=5 // pred_check
        _
      $region10: #{wgan_generator_forward.13} parent=5 // pred_check_branch
        %221 = sbr.rel (%p218) target = $region12
      $region11: #{wgan_generator_forward.13} parent=5 // pred_region
        %s222 = ssub.s32 %s20, 1
        // Predicated region
        $region13: #{wgan_generator_forward.13} parent=11 // pred_check
          %p223 = pneg %p67
        $region14: #{wgan_generator_forward.13} parent=11 // pred_check_branch
          %225 = sbr.rel (%p223) target = $region16
        $region15: #{wgan_generator_forward.13} parent=11 // pred_region
          _
        $region16: #{wgan_generator_forward.13} parent=11 // pred_fallthru
          _
        // Predicated region
        $region17: #{wgan_generator_forward.13} parent=11 // pred_check
          %p226 = pneg %p88
        $region18: #{wgan_generator_forward.13} parent=11 // pred_check_branch
          %228 = sbr.rel (%p226) target = $region20
        $region19: #{wgan_generator_forward.13} parent=11 // pred_region
          _
        $region20: #{wgan_generator_forward.13} parent=11 // pred_fallthru
          _
        // Predicated region
        $region21: #{wgan_generator_forward.13} parent=11 // pred_check
          %p229 = pneg %p109
        $region22: #{wgan_generator_forward.13} parent=11 // pred_check_branch
          %231 = sbr.rel (%p229) target = $region24
        $region23: #{wgan_generator_forward.13} parent=11 // pred_region
          _
        $region24: #{wgan_generator_forward.13} parent=11 // pred_fallthru
          _
        // Predicated region
        $region25: #{wgan_generator_forward.13} parent=11 // pred_check
          %p232 = pneg %p130
        $region26: #{wgan_generator_forward.13} parent=11 // pred_check_branch
          %234 = sbr.rel (%p232) target = $region28
        $region27: #{wgan_generator_forward.13} parent=11 // pred_region
          _
        $region28: #{wgan_generator_forward.13} parent=11 // pred_fallthru
          _
      $region12: #{wgan_generator_forward.13} parent=5 // pred_fallthru
        _
      %p235 = scmp.lt.s32.totalorder %s20, 16
      // Predicated region
      $region29: #{wgan_generator_forward.13} parent=5 // pred_check
        %p236 = pneg %p235
      $region30: #{wgan_generator_forward.13} parent=5 // pred_check_branch
        %238 = sbr.rel (%p236) target = $region32
      $region31: #{wgan_generator_forward.13} parent=5 // pred_region
        // Predicated region
        $region33: #{wgan_generator_forward.13} parent=31 // pred_check
          %p239 = pneg %p40
        $region34: #{wgan_generator_forward.13} parent=31 // pred_check_branch
          %241 = sbr.rel (%p239) target = $region36
        $region35: #{wgan_generator_forward.13} parent=31 // pred_region
          %s242 = smul.u32 64, %s20
          %p243 = scmp.lt.s32.totalorder %s242, 1023
          %s244 = scalar_select %p243, %s242, 1023
          %s245 = smul.addr %s244, 4
          %s246 = scalar_lea.vmem %s0, %s245
          %s247 = smul.u32 64, %s20
        $region36: #{wgan_generator_forward.13} parent=31 // pred_fallthru
          _
      $region32: #{wgan_generator_forward.13} parent=5 // pred_fallthru
        _
      %p248 = scmp.le.s32.totalorder 1, %s20
      %p249 = scmp.lt.s32.totalorder %s20, 17
      %p250 = pnand %p248, %p249
      %p251 = pneg %p250
      // Predicated region
      $region37: #{wgan_generator_forward.13} parent=5 // pred_check
        _
      $region38: #{wgan_generator_forward.13} parent=5 // pred_check_branch
        %253 = sbr.rel (%p250) target = $region40
      $region39: #{wgan_generator_forward.13} parent=5 // pred_region
        %s254 = ssub.s32 %s20, 1
        %s255 = smul.u32 64, %s25
        %p256 = scmp.lt.s32.totalorder %s255, 1023
        %s257 = scalar_select %p256, %s255, 1023
        %s258 = smul.addr %s257, 4
        %s259 = scalar_lea.vmem %s0, %s258
        %p260 = pneg %p46
        %p261 = pneg %p43
        %p262 = pneg %p67
        %p263 = pneg %p64
        %p264 = pneg %p88
        %p265 = pneg %p85
        %p266 = pneg %p109
        %p267 = pneg %p106
        %p268 = pneg %p130
        %p269 = pneg %p127
        %p270 = pneg %p156
        %p271 = pneg %p153
        %s272 = smul.u32 64, %s25
        %p273 = scmp.lt.s32.totalorder %s272, 1023
        %s274 = scalar_select %p273, %s272, 1023
        %s275 = smul.addr %s274, 8
        %s276 = scalar_lea.vmem %s5, %s275
        %p277 = pneg %p182
        %p278 = pneg %p179
        %s279 = sand.u32 %s169, 1
        %s280 = scalar_lea.sflag [#allocation3], %s279
        %s281 = sand.u32 %s169, 1
        %s282 = scalar_lea.vmem [#allocation2], %s281
        %p283 = pneg %p208
        %p284 = pneg %p205
        %s285 = sand.u32 %s195, 1
        %s286 = scalar_lea.sflag [#allocation5], %s285
        %s287 = sand.u32 %s195, 1
        %s288 = scalar_lea.vmem [#allocation4], %s287
        %s289 = smul.u32 64, %s25
        %p290 = scmp.lt.s32.totalorder %s289, 1023
        %s291 = scalar_select %p290, %s289, 1023
        %s292 = smul.addr %s291, 4
        %s293 = scalar_lea.vmem %s0, %s292
        %s294 = smul.u32 64, %s25
        %s295 = smul.u32 64, %s25
        %p296 = scmp.lt.s32.totalorder %s295, 1023
        %s297 = scalar_select %p296, %s295, 1023
        %s298 = smul.addr %s297, 8
        %s299 = scalar_lea.vmem %s5, %s298
        %s300 = smul.u32 64, %s25
        %v301 = vld [vmem:[%s293] sm:$0xf]
        %v302 = vld [vmem:[%s293 + $0x4] sm:$0xf]
        %v303 = vld [vmem:[%s293 + $0x8] sm:$0xf]
        %v304 = vld [vmem:[%s293 + $0xc] sm:$0xf]
        %v305 = vld [vmem:[%s293 + $0x10] sm:$0xf]
        %v306 = vld [vmem:[%s293 + $0x14] sm:$0xf]
        %v307 = vld [vmem:[%s293 + $0x18] sm:$0xf]
        %v308 = vld [vmem:[%s293 + $0x1c] sm:$0xf]
        %v309 = vld [vmem:[%s293 + $0x20] sm:$0xf]
        %v310 = vld [vmem:[%s293 + $0x24] sm:$0xf]
        %v311 = vld [vmem:[%s293 + $0x28] sm:$0xf]
        %v312 = vld [vmem:[%s293 + $0x2c] sm:$0xf]
        %v313 = vld [vmem:[%s293 + $0x30] sm:$0xf]
        %v314 = vld [vmem:[%s293 + $0x34] sm:$0xf]
        %v315 = vld [vmem:[%s293 + $0x38] sm:$0xf]
        %v316 = vld [vmem:[%s293 + $0x3c] sm:$0xf]
        %v317 = vld [vmem:[%s293 + $0x40] sm:$0xf]
        %v318 = vld [vmem:[%s293 + $0x44] sm:$0xf]
        %v319 = vld [vmem:[%s293 + $0x48] sm:$0xf]
        %v320 = vld [vmem:[%s293 + $0x4c] sm:$0xf]
        %v321 = vld [vmem:[%s293 + $0x50] sm:$0xf]
        %v322 = vld [vmem:[%s293 + $0x54] sm:$0xf]
        %v323 = vld [vmem:[%s293 + $0x58] sm:$0xf]
        %v324 = vld [vmem:[%s293 + $0x5c] sm:$0xf]
        %v325 = vld [vmem:[%s293 + $0x60] sm:$0xf]
        %v326 = vld [vmem:[%s293 + $0x64] sm:$0xf]
        %v327 = vld [vmem:[%s293 + $0x68] sm:$0xf]
        %v328 = vld [vmem:[%s293 + $0x6c] sm:$0xf]
        %v329 = vld [vmem:[%s293 + $0x70] sm:$0xf]
        %v330 = vld [vmem:[%s293 + $0x74] sm:$0xf]
        %v331 = vld [vmem:[%s293 + $0x78] sm:$0xf]
        %v332 = vld [vmem:[%s293 + $0x7c] sm:$0xf]
        %v333 = vld [vmem:[%s293 + $0x80] sm:$0xf]
        %v334 = vld [vmem:[%s293 + $0x84] sm:$0xf]
        %v335 = vld [vmem:[%s293 + $0x88] sm:$0xf]
        %v336 = vld [vmem:[%s293 + $0x8c] sm:$0xf]
        %v337 = vld [vmem:[%s293 + $0x90] sm:$0xf]
        %v338 = vld [vmem:[%s293 + $0x94] sm:$0xf]
        %v339 = vld [vmem:[%s293 + $0x98] sm:$0xf]
        %v340 = vld [vmem:[%s293 + $0x9c] sm:$0xf]
        %v341 = vld [vmem:[%s293 + $0xa0] sm:$0xf]
        %v342 = vld [vmem:[%s293 + $0xa4] sm:$0xf]
        %v343 = vld [vmem:[%s293 + $0xa8] sm:$0xf]
        %v344 = vld [vmem:[%s293 + $0xac] sm:$0xf]
        %v345 = vld [vmem:[%s293 + $0xb0] sm:$0xf]
        %v346 = vld [vmem:[%s293 + $0xb4] sm:$0xf]
        %v347 = vld [vmem:[%s293 + $0xb8] sm:$0xf]
        %v348 = vld [vmem:[%s293 + $0xbc] sm:$0xf]
        %v349 = vld [vmem:[%s293 + $0xc0] sm:$0xf]
        %v350 = vld [vmem:[%s293 + $0xc4] sm:$0xf]
        %v351 = vld [vmem:[%s293 + $0xc8] sm:$0xf]
        %v352 = vld [vmem:[%s293 + $0xcc] sm:$0xf]
        %v353 = vld [vmem:[%s293 + $0xd0] sm:$0xf]
        %v354 = vld [vmem:[%s293 + $0xd4] sm:$0xf]
        %v355 = vld [vmem:[%s293 + $0xd8] sm:$0xf]
        %v356 = vld [vmem:[%s293 + $0xdc] sm:$0xf]
        %v357 = vld [vmem:[%s293 + $0xe0] sm:$0xf]
        %v358 = vld [vmem:[%s293 + $0xe4] sm:$0xf]
        %v359 = vld [vmem:[%s293 + $0xe8] sm:$0xf]
        %v360 = vld [vmem:[%s293 + $0xec] sm:$0xf]
        %v361 = vld [vmem:[%s293 + $0xf0] sm:$0xf]
        %v362 = vld [vmem:[%s293 + $0xf4] sm:$0xf]
        %v363 = vld [vmem:[%s293 + $0xf8] sm:$0xf]
        %v364 = vld [vmem:[%s293 + $0xfc] sm:$0xf]
        %v365 = vunpack.c.l.bf16 %v301
        %v366 = vunpack.c.l.bf16 %v302
        %v367 = vunpack.c.l.bf16 %v303
        %v368 = vunpack.c.l.bf16 %v304
        %v369 = vunpack.c.l.bf16 %v305
        %v370 = vunpack.c.l.bf16 %v306
        %v371 = vunpack.c.l.bf16 %v307
        %v372 = vunpack.c.l.bf16 %v308
        %v373 = vunpack.c.l.bf16 %v309
        %v374 = vunpack.c.l.bf16 %v310
        %v375 = vunpack.c.l.bf16 %v311
        %v376 = vunpack.c.l.bf16 %v312
        %v377 = vunpack.c.l.bf16 %v313
        %v378 = vunpack.c.l.bf16 %v314
        %v379 = vunpack.c.l.bf16 %v315
        %v380 = vunpack.c.l.bf16 %v316
        %v381 = vunpack.c.l.bf16 %v317
        %v382 = vunpack.c.l.bf16 %v318
        %v383 = vunpack.c.l.bf16 %v319
        %v384 = vunpack.c.l.bf16 %v320
        %v385 = vunpack.c.l.bf16 %v321
        %v386 = vunpack.c.l.bf16 %v322
        %v387 = vunpack.c.l.bf16 %v323
        %v388 = vunpack.c.l.bf16 %v324
        %v389 = vunpack.c.l.bf16 %v325
        %v390 = vunpack.c.l.bf16 %v326
        %v391 = vunpack.c.l.bf16 %v327
        %v392 = vunpack.c.l.bf16 %v328
        %v393 = vunpack.c.l.bf16 %v329
        %v394 = vunpack.c.l.bf16 %v330
        %v395 = vunpack.c.l.bf16 %v331
        %v396 = vunpack.c.l.bf16 %v332
        %v397 = vunpack.c.l.bf16 %v333
        %v398 = vunpack.c.l.bf16 %v334
        %v399 = vunpack.c.l.bf16 %v335
        %v400 = vunpack.c.l.bf16 %v336
        %v401 = vunpack.c.l.bf16 %v337
        %v402 = vunpack.c.l.bf16 %v338
        %v403 = vunpack.c.l.bf16 %v339
        %v404 = vunpack.c.l.bf16 %v340
        %v405 = vunpack.c.l.bf16 %v341
        %v406 = vunpack.c.l.bf16 %v342
        %v407 = vunpack.c.l.bf16 %v343
        %v408 = vunpack.c.l.bf16 %v344
        %v409 = vunpack.c.l.bf16 %v345
        %v410 = vunpack.c.l.bf16 %v346
        %v411 = vunpack.c.l.bf16 %v347
        %v412 = vunpack.c.l.bf16 %v348
        %v413 = vunpack.c.l.bf16 %v349
        %v414 = vunpack.c.l.bf16 %v350
        %v415 = vunpack.c.l.bf16 %v351
        %v416 = vunpack.c.l.bf16 %v352
        %v417 = vunpack.c.l.bf16 %v353
        %v418 = vunpack.c.l.bf16 %v354
        %v419 = vunpack.c.l.bf16 %v355
        %v420 = vunpack.c.l.bf16 %v356
        %v421 = vunpack.c.l.bf16 %v357
        %v422 = vunpack.c.l.bf16 %v358
        %v423 = vunpack.c.l.bf16 %v359
        %v424 = vunpack.c.l.bf16 %v360
        %v425 = vunpack.c.l.bf16 %v361
        %v426 = vunpack.c.l.bf16 %v362
        %v427 = vunpack.c.l.bf16 %v363
        %v428 = vunpack.c.l.bf16 %v364
        %v429 = vld [vmem:[%s2] sm:$0x1]
        %v431 = vperm.slane %v429, 0
        %v433 = vmul.f32 %v365, %v431
        %v434 = vmul.f32 %v366, %v431
        %v435 = vmul.f32 %v367, %v431
        %v436 = vmul.f32 %v368, %v431
        %v437 = vmul.f32 %v369, %v431
        %v438 = vmul.f32 %v370, %v431
        %v439 = vmul.f32 %v371, %v431
        %v440 = vmul.f32 %v372, %v431
        %v441 = vmul.f32 %v373, %v431
        %v442 = vmul.f32 %v374, %v431
        %v443 = vmul.f32 %v375, %v431
        %v444 = vmul.f32 %v376, %v431
        %v445 = vmul.f32 %v377, %v431
        %v446 = vmul.f32 %v378, %v431
        %v447 = vmul.f32 %v379, %v431
        %v448 = vmul.f32 %v380, %v431
        %v449 = vmul.f32 %v381, %v431
        %v450 = vmul.f32 %v382, %v431
        %v451 = vmul.f32 %v383, %v431
        %v452 = vmul.f32 %v384, %v431
        %v453 = vmul.f32 %v385, %v431
        %v454 = vmul.f32 %v386, %v431
        %v455 = vmul.f32 %v387, %v431
        %v456 = vmul.f32 %v388, %v431
        %v457 = vmul.f32 %v389, %v431
        %v458 = vmul.f32 %v390, %v431
        %v459 = vmul.f32 %v391, %v431
        %v460 = vmul.f32 %v392, %v431
        %v461 = vmul.f32 %v393, %v431
        %v462 = vmul.f32 %v394, %v431
        %v463 = vmul.f32 %v395, %v431
        %v464 = vmul.f32 %v396, %v431
        %v465 = vmul.f32 %v397, %v431
        %v466 = vmul.f32 %v398, %v431
        %v467 = vmul.f32 %v399, %v431
        %v468 = vmul.f32 %v400, %v431
        %v469 = vmul.f32 %v401, %v431
        %v470 = vmul.f32 %v402, %v431
        %v471 = vmul.f32 %v403, %v431
        %v472 = vmul.f32 %v404, %v431
        %v473 = vmul.f32 %v405, %v431
        %v474 = vmul.f32 %v406, %v431
        %v475 = vmul.f32 %v407, %v431
        %v476 = vmul.f32 %v408, %v431
        %v477 = vmul.f32 %v409, %v431
        %v478 = vmul.f32 %v410, %v431
        %v479 = vmul.f32 %v411, %v431
        %v480 = vmul.f32 %v412, %v431
        %v481 = vmul.f32 %v413, %v431
        %v482 = vmul.f32 %v414, %v431
        %v483 = vmul.f32 %v415, %v431
        %v484 = vmul.f32 %v416, %v431
        %v485 = vmul.f32 %v417, %v431
        %v486 = vmul.f32 %v418, %v431
        %v487 = vmul.f32 %v419, %v431
        %v488 = vmul.f32 %v420, %v431
        %v489 = vmul.f32 %v421, %v431
        %v490 = vmul.f32 %v422, %v431
        %v491 = vmul.f32 %v423, %v431
        %v492 = vmul.f32 %v424, %v431
        %v493 = vmul.f32 %v425, %v431
        %v494 = vmul.f32 %v426, %v431
        %v495 = vmul.f32 %v427, %v431
        %v496 = vmul.f32 %v428, %v431
        %v497 = vld [vmem:[%s3] sm:$0x1]
        %v499 = vperm.slane %v497, 0
        %v501 = vadd.f32 %v433, %v499
        %v502 = vadd.f32 %v434, %v499
        %v503 = vadd.f32 %v435, %v499
        %v504 = vadd.f32 %v436, %v499
        %v505 = vadd.f32 %v437, %v499
        %v506 = vadd.f32 %v438, %v499
        %v507 = vadd.f32 %v439, %v499
        %v508 = vadd.f32 %v440, %v499
        %v509 = vadd.f32 %v441, %v499
        %v510 = vadd.f32 %v442, %v499
        %v511 = vadd.f32 %v443, %v499
        %v512 = vadd.f32 %v444, %v499
        %v513 = vadd.f32 %v445, %v499
        %v514 = vadd.f32 %v446, %v499
        %v515 = vadd.f32 %v447, %v499
        %v516 = vadd.f32 %v448, %v499
        %v517 = vadd.f32 %v449, %v499
        %v518 = vadd.f32 %v450, %v499
        %v519 = vadd.f32 %v451, %v499
        %v520 = vadd.f32 %v452, %v499
        %v521 = vadd.f32 %v453, %v499
        %v522 = vadd.f32 %v454, %v499
        %v523 = vadd.f32 %v455, %v499
        %v524 = vadd.f32 %v456, %v499
        %v525 = vadd.f32 %v457, %v499
        %v526 = vadd.f32 %v458, %v499
        %v527 = vadd.f32 %v459, %v499
        %v528 = vadd.f32 %v460, %v499
        %v529 = vadd.f32 %v461, %v499
        %v530 = vadd.f32 %v462, %v499
        %v531 = vadd.f32 %v463, %v499
        %v532 = vadd.f32 %v464, %v499
        %v533 = vadd.f32 %v465, %v499
        %v534 = vadd.f32 %v466, %v499
        %v535 = vadd.f32 %v467, %v499
        %v536 = vadd.f32 %v468, %v499
        %v537 = vadd.f32 %v469, %v499
        %v538 = vadd.f32 %v470, %v499
        %v539 = vadd.f32 %v471, %v499
        %v540 = vadd.f32 %v472, %v499
        %v541 = vadd.f32 %v473, %v499
        %v542 = vadd.f32 %v474, %v499
        %v543 = vadd.f32 %v475, %v499
        %v544 = vadd.f32 %v476, %v499
        %v545 = vadd.f32 %v477, %v499
        %v546 = vadd.f32 %v478, %v499
        %v547 = vadd.f32 %v479, %v499
        %v548 = vadd.f32 %v480, %v499
        %v549 = vadd.f32 %v481, %v499
        %v550 = vadd.f32 %v482, %v499
        %v551 = vadd.f32 %v483, %v499
        %v552 = vadd.f32 %v484, %v499
        %v553 = vadd.f32 %v485, %v499
        %v554 = vadd.f32 %v486, %v499
        %v555 = vadd.f32 %v487, %v499
        %v556 = vadd.f32 %v488, %v499
        %v557 = vadd.f32 %v489, %v499
        %v558 = vadd.f32 %v490, %v499
        %v559 = vadd.f32 %v491, %v499
        %v560 = vadd.f32 %v492, %v499
        %v561 = vadd.f32 %v493, %v499
        %v562 = vadd.f32 %v494, %v499
        %v563 = vadd.f32 %v495, %v499
        %v564 = vadd.f32 %v496, %v499
        %vm565 = vcmp.ge.f32.partialorder %v501, 0.0
        %vm566 = vcmp.ge.f32.partialorder %v502, 0.0
        %vm567 = vcmp.ge.f32.partialorder %v503, 0.0
        %vm568 = vcmp.ge.f32.partialorder %v504, 0.0
        %vm569 = vcmp.ge.f32.partialorder %v505, 0.0
        %vm570 = vcmp.ge.f32.partialorder %v506, 0.0
        %vm571 = vcmp.ge.f32.partialorder %v507, 0.0
        %vm572 = vcmp.ge.f32.partialorder %v508, 0.0
        %vm573 = vcmp.ge.f32.partialorder %v509, 0.0
        %vm574 = vcmp.ge.f32.partialorder %v510, 0.0
        %vm575 = vcmp.ge.f32.partialorder %v511, 0.0
        %vm576 = vcmp.ge.f32.partialorder %v512, 0.0
        %vm577 = vcmp.ge.f32.partialorder %v513, 0.0
        %vm578 = vcmp.ge.f32.partialorder %v514, 0.0
        %vm579 = vcmp.ge.f32.partialorder %v515, 0.0
        %vm580 = vcmp.ge.f32.partialorder %v516, 0.0
        %vm581 = vcmp.ge.f32.partialorder %v517, 0.0
        %vm582 = vcmp.ge.f32.partialorder %v518, 0.0
        %vm583 = vcmp.ge.f32.partialorder %v519, 0.0
        %vm584 = vcmp.ge.f32.partialorder %v520, 0.0
        %vm585 = vcmp.ge.f32.partialorder %v521, 0.0
        %vm586 = vcmp.ge.f32.partialorder %v522, 0.0
        %vm587 = vcmp.ge.f32.partialorder %v523, 0.0
        %vm588 = vcmp.ge.f32.partialorder %v524, 0.0
        %vm589 = vcmp.ge.f32.partialorder %v525, 0.0
        %vm590 = vcmp.ge.f32.partialorder %v526, 0.0
        %vm591 = vcmp.ge.f32.partialorder %v527, 0.0
        %vm592 = vcmp.ge.f32.partialorder %v528, 0.0
        %vm593 = vcmp.ge.f32.partialorder %v529, 0.0
        %vm594 = vcmp.ge.f32.partialorder %v530, 0.0
        %vm595 = vcmp.ge.f32.partialorder %v531, 0.0
        %vm596 = vcmp.ge.f32.partialorder %v532, 0.0
        %vm597 = vcmp.ge.f32.partialorder %v533, 0.0
        %vm598 = vcmp.ge.f32.partialorder %v534, 0.0
        %vm599 = vcmp.ge.f32.partialorder %v535, 0.0
        %vm600 = vcmp.ge.f32.partialorder %v536, 0.0
        %vm601 = vcmp.ge.f32.partialorder %v537, 0.0
        %vm602 = vcmp.ge.f32.partialorder %v538, 0.0
        %vm603 = vcmp.ge.f32.partialorder %v539, 0.0
        %vm604 = vcmp.ge.f32.partialorder %v540, 0.0
        %vm605 = vcmp.ge.f32.partialorder %v541, 0.0
        %vm606 = vcmp.ge.f32.partialorder %v542, 0.0
        %vm607 = vcmp.ge.f32.partialorder %v543, 0.0
        %vm608 = vcmp.ge.f32.partialorder %v544, 0.0
        %vm609 = vcmp.ge.f32.partialorder %v545, 0.0
        %vm610 = vcmp.ge.f32.partialorder %v546, 0.0
        %vm611 = vcmp.ge.f32.partialorder %v547, 0.0
        %vm612 = vcmp.ge.f32.partialorder %v548, 0.0
        %vm613 = vcmp.ge.f32.partialorder %v549, 0.0
        %vm614 = vcmp.ge.f32.partialorder %v550, 0.0
        %vm615 = vcmp.ge.f32.partialorder %v551, 0.0
        %vm616 = vcmp.ge.f32.partialorder %v552, 0.0
        %vm617 = vcmp.ge.f32.partialorder %v553, 0.0
        %vm618 = vcmp.ge.f32.partialorder %v554, 0.0
        %vm619 = vcmp.ge.f32.partialorder %v555, 0.0
        %vm620 = vcmp.ge.f32.partialorder %v556, 0.0
        %vm621 = vcmp.ge.f32.partialorder %v557, 0.0
        %vm622 = vcmp.ge.f32.partialorder %v558, 0.0
        %vm623 = vcmp.ge.f32.partialorder %v559, 0.0
        %vm624 = vcmp.ge.f32.partialorder %v560, 0.0
        %vm625 = vcmp.ge.f32.partialorder %v561, 0.0
        %vm626 = vcmp.ge.f32.partialorder %v562, 0.0
        %vm627 = vcmp.ge.f32.partialorder %v563, 0.0
        %vm628 = vcmp.ge.f32.partialorder %v564, 0.0
        %v629 = vld [vmem:[%s4] sm:$0x1]
        %v631 = vperm.slane %v629, 0
        %v633 = vmul.f32 %v631, %v501
        %v634 = vmul.f32 %v631, %v502
        %v635 = vmul.f32 %v631, %v503
        %v636 = vmul.f32 %v631, %v504
        %v637 = vmul.f32 %v631, %v505
        %v638 = vmul.f32 %v631, %v506
        %v639 = vmul.f32 %v631, %v507
        %v640 = vmul.f32 %v631, %v508
        %v641 = vmul.f32 %v631, %v509
        %v642 = vmul.f32 %v631, %v510
        %v643 = vmul.f32 %v631, %v511
        %v644 = vmul.f32 %v631, %v512
        %v645 = vmul.f32 %v631, %v513
        %v646 = vmul.f32 %v631, %v514
        %v647 = vmul.f32 %v631, %v515
        %v648 = vmul.f32 %v631, %v516
        %v649 = vmul.f32 %v631, %v517
        %v650 = vmul.f32 %v631, %v518
        %v651 = vmul.f32 %v631, %v519
        %v652 = vmul.f32 %v631, %v520
        %v653 = vmul.f32 %v631, %v521
        %v654 = vmul.f32 %v631, %v522
        %v655 = vmul.f32 %v631, %v523
        %v656 = vmul.f32 %v631, %v524
        %v657 = vmul.f32 %v631, %v525
        %v658 = vmul.f32 %v631, %v526
        %v659 = vmul.f32 %v631, %v527
        %v660 = vmul.f32 %v631, %v528
        %v661 = vmul.f32 %v631, %v529
        %v662 = vmul.f32 %v631, %v530
        %v663 = vmul.f32 %v631, %v531
        %v664 = vmul.f32 %v631, %v532
        %v665 = vmul.f32 %v631, %v533
        %v666 = vmul.f32 %v631, %v534
        %v667 = vmul.f32 %v631, %v535
        %v668 = vmul.f32 %v631, %v536
        %v669 = vmul.f32 %v631, %v537
        %v670 = vmul.f32 %v631, %v538
        %v671 = vmul.f32 %v631, %v539
        %v672 = vmul.f32 %v631, %v540
        %v673 = vmul.f32 %v631, %v541
        %v674 = vmul.f32 %v631, %v542
        %v675 = vmul.f32 %v631, %v543
        %v676 = vmul.f32 %v631, %v544
        %v677 = vmul.f32 %v631, %v545
        %v678 = vmul.f32 %v631, %v546
        %v679 = vmul.f32 %v631, %v547
        %v680 = vmul.f32 %v631, %v548
        %v681 = vmul.f32 %v631, %v549
        %v682 = vmul.f32 %v631, %v550
        %v683 = vmul.f32 %v631, %v551
        %v684 = vmul.f32 %v631, %v552
        %v685 = vmul.f32 %v631, %v553
        %v686 = vmul.f32 %v631, %v554
        %v687 = vmul.f32 %v631, %v555
        %v688 = vmul.f32 %v631, %v556
        %v689 = vmul.f32 %v631, %v557
        %v690 = vmul.f32 %v631, %v558
        %v691 = vmul.f32 %v631, %v559
        %v692 = vmul.f32 %v631, %v560
        %v693 = vmul.f32 %v631, %v561
        %v694 = vmul.f32 %v631, %v562
        %v695 = vmul.f32 %v631, %v563
        %v696 = vmul.f32 %v631, %v564
        %v697 = vsel %vm565, %v501, %v633
        %v698 = vsel %vm566, %v502, %v634
        %v699 = vsel %vm567, %v503, %v635
        %v700 = vsel %vm568, %v504, %v636
        %v701 = vsel %vm569, %v505, %v637
        %v702 = vsel %vm570, %v506, %v638
        %v703 = vsel %vm571, %v507, %v639
        %v704 = vsel %vm572, %v508, %v640
        %v705 = vsel %vm573, %v509, %v641
        %v706 = vsel %vm574, %v510, %v642
        %v707 = vsel %vm575, %v511, %v643
        %v708 = vsel %vm576, %v512, %v644
        %v709 = vsel %vm577, %v513, %v645
        %v710 = vsel %vm578, %v514, %v646
        %v711 = vsel %vm579, %v515, %v647
        %v712 = vsel %vm580, %v516, %v648
        %v713 = vsel %vm581, %v517, %v649
        %v714 = vsel %vm582, %v518, %v650
        %v715 = vsel %vm583, %v519, %v651
        %v716 = vsel %vm584, %v520, %v652
        %v717 = vsel %vm585, %v521, %v653
        %v718 = vsel %vm586, %v522, %v654
        %v719 = vsel %vm587, %v523, %v655
        %v720 = vsel %vm588, %v524, %v656
        %v721 = vsel %vm589, %v525, %v657
        %v722 = vsel %vm590, %v526, %v658
        %v723 = vsel %vm591, %v527, %v659
        %v724 = vsel %vm592, %v528, %v660
        %v725 = vsel %vm593, %v529, %v661
        %v726 = vsel %vm594, %v530, %v662
        %v727 = vsel %vm595, %v531, %v663
        %v728 = vsel %vm596, %v532, %v664
        %v729 = vsel %vm597, %v533, %v665
        %v730 = vsel %vm598, %v534, %v666
        %v731 = vsel %vm599, %v535, %v667
        %v732 = vsel %vm600, %v536, %v668
        %v733 = vsel %vm601, %v537, %v669
        %v734 = vsel %vm602, %v538, %v670
        %v735 = vsel %vm603, %v539, %v671
        %v736 = vsel %vm604, %v540, %v672
        %v737 = vsel %vm605, %v541, %v673
        %v738 = vsel %vm606, %v542, %v674
        %v739 = vsel %vm607, %v543, %v675
        %v740 = vsel %vm608, %v544, %v676
        %v741 = vsel %vm609, %v545, %v677
        %v742 = vsel %vm610, %v546, %v678
        %v743 = vsel %vm611, %v547, %v679
        %v744 = vsel %vm612, %v548, %v680
        %v745 = vsel %vm613, %v549, %v681
        %v746 = vsel %vm614, %v550, %v682
        %v747 = vsel %vm615, %v551, %v683
        %v748 = vsel %vm616, %v552, %v684
        %v749 = vsel %vm617, %v553, %v685
        %v750 = vsel %vm618, %v554, %v686
        %v751 = vsel %vm619, %v555, %v687
        %v752 = vsel %vm620, %v556, %v688
        %v753 = vsel %vm621, %v557, %v689
        %v754 = vsel %vm622, %v558, %v690
        %v755 = vsel %vm623, %v559, %v691
        %v756 = vsel %vm624, %v560, %v692
        %v757 = vsel %vm625, %v561, %v693
        %v758 = vsel %vm626, %v562, %v694
        %v759 = vsel %vm627, %v563, %v695
        %v760 = vsel %vm628, %v564, %v696
        %v761 = vpack.c.bf16 %v698, %v697
        %v762 = vpack.c.bf16 %v700, %v699
        %v763 = vpack.c.bf16 %v702, %v701
        %v764 = vpack.c.bf16 %v704, %v703
        %v765 = vpack.c.bf16 %v706, %v705
        %v766 = vpack.c.bf16 %v708, %v707
        %v767 = vpack.c.bf16 %v710, %v709
        %v768 = vpack.c.bf16 %v712, %v711
        %v769 = vpack.c.bf16 %v714, %v713
        %v770 = vpack.c.bf16 %v716, %v715
        %v771 = vpack.c.bf16 %v718, %v717
        %v772 = vpack.c.bf16 %v720, %v719
        %v773 = vpack.c.bf16 %v722, %v721
        %v774 = vpack.c.bf16 %v724, %v723
        %v775 = vpack.c.bf16 %v726, %v725
        %v776 = vpack.c.bf16 %v728, %v727
        %v777 = vpack.c.bf16 %v730, %v729
        %v778 = vpack.c.bf16 %v732, %v731
        %v779 = vpack.c.bf16 %v734, %v733
        %v780 = vpack.c.bf16 %v736, %v735
        %v781 = vpack.c.bf16 %v738, %v737
        %v782 = vpack.c.bf16 %v740, %v739
        %v783 = vpack.c.bf16 %v742, %v741
        %v784 = vpack.c.bf16 %v744, %v743
        %v785 = vpack.c.bf16 %v746, %v745
        %v786 = vpack.c.bf16 %v748, %v747
        %v787 = vpack.c.bf16 %v750, %v749
        %v788 = vpack.c.bf16 %v752, %v751
        %v789 = vpack.c.bf16 %v754, %v753
        %v790 = vpack.c.bf16 %v756, %v755
        %v791 = vpack.c.bf16 %v758, %v757
        %v792 = vpack.c.bf16 %v760, %v759
        %v793 = vld [vmem:[%s1] sm:$0xf]
        %v794 = vld [vmem:[%s1 + $0x4] sm:$0xf]
        %v795 = vld [vmem:[%s1 + $0x8] sm:$0xf]
        %v796 = vld [vmem:[%s1 + $0xc] sm:$0xf]
        %v797 = vld [vmem:[%s1 + $0x10] sm:$0xf]
        %v798 = vld [vmem:[%s1 + $0x14] sm:$0xf]
        %v799 = vld [vmem:[%s1 + $0x18] sm:$0xf]
        %v800 = vld [vmem:[%s1 + $0x1c] sm:$0xf]
        %v801 = vld [vmem:[%s1 + $0x20] sm:$0xf]
        %v802 = vld [vmem:[%s1 + $0x24] sm:$0xf]
        %v803 = vld [vmem:[%s1 + $0x28] sm:$0xf]
        %v804 = vld [vmem:[%s1 + $0x2c] sm:$0xf]
        %v805 = vld [vmem:[%s1 + $0x30] sm:$0xf]
        %v806 = vld [vmem:[%s1 + $0x34] sm:$0xf]
        %v807 = vld [vmem:[%s1 + $0x38] sm:$0xf]
        %v808 = vld [vmem:[%s1 + $0x3c] sm:$0xf]
        %v825 = vunpack.c.l.b16 %v793
        %v826 = vunpack.c.l.b16 %v794
        %v827 = vunpack.c.l.b16 %v795
        %v828 = vunpack.c.l.b16 %v796
        %v829 = vunpack.c.l.b16 %v797
        %v830 = vunpack.c.l.b16 %v798
        %v831 = vunpack.c.l.b16 %v799
        %v832 = vunpack.c.l.b16 %v800
        %v833 = vunpack.c.l.b16 %v801
        %v834 = vunpack.c.l.b16 %v802
        %v835 = vunpack.c.l.b16 %v803
        %v836 = vunpack.c.l.b16 %v804
        %v837 = vunpack.c.l.b16 %v805
        %v838 = vunpack.c.l.b16 %v806
        %v839 = vunpack.c.l.b16 %v807
        %v840 = vunpack.c.l.b16 %v808
        %v841 = vpack.c.b16 %v826, %v825
        %v842 = vpack.c.b16 %v828, %v827
        %v843 = vpack.c.b16 %v830, %v829
        %v844 = vpack.c.b16 %v832, %v831
        %v845 = vpack.c.b16 %v834, %v833
        %v846 = vpack.c.b16 %v836, %v835
        %v847 = vpack.c.b16 %v838, %v837
        %v848 = vpack.c.b16 %v840, %v839
        %857 = vmatpush.bf16.msra.mxu0 %v848
        %858 = vmatpush.bf16.msra.mxu0 %v847
        %859 = vmatpush.bf16.msra.mxu0 %v846
        %860 = vmatpush.bf16.msra.mxu0 %v845
        %861 = vmatpush.bf16.msra.mxu0 %v844
        %862 = vmatpush.bf16.msra.mxu0 %v843
        %863 = vmatpush.bf16.msra.mxu0 %v842
        %864 = vmatpush.bf16.msra.mxu0 %v841
        %865 = vmatmul.bf16.gmra.mxu0 %v761
        %v866 = vpop.f32.mrf.mxu0
        %v867 = vadd.f32 0.0, %v866
        %v868 = vpop.f32.mrf.mxu0
        %v869 = vadd.f32 0.0, %v868
        %870 = vmatmul.bf16.gmra.mxu0 %v762
        %v871 = vpop.f32.mrf.mxu0
        %v872 = vadd.f32 0.0, %v871
        %v873 = vpop.f32.mrf.mxu0
        %v874 = vadd.f32 0.0, %v873
        %875 = vmatmul.bf16.gmra.mxu0 %v763
        %v876 = vpop.f32.mrf.mxu0
        %v877 = vadd.f32 0.0, %v876
        %v878 = vpop.f32.mrf.mxu0
        %v879 = vadd.f32 0.0, %v878
        %880 = vmatmul.bf16.gmra.mxu0 %v764
        %v881 = vpop.f32.mrf.mxu0
        %v882 = vadd.f32 0.0, %v881
        %v883 = vpop.f32.mrf.mxu0
        %v884 = vadd.f32 0.0, %v883
        %885 = vmatmul.bf16.gmra.mxu0 %v765
        %v886 = vpop.f32.mrf.mxu0
        %v887 = vadd.f32 0.0, %v886
        %v888 = vpop.f32.mrf.mxu0
        %v889 = vadd.f32 0.0, %v888
        %890 = vmatmul.bf16.gmra.mxu0 %v766
        %v891 = vpop.f32.mrf.mxu0
        %v892 = vadd.f32 0.0, %v891
        %v893 = vpop.f32.mrf.mxu0
        %v894 = vadd.f32 0.0, %v893
        %895 = vmatmul.bf16.gmra.mxu0 %v767
        %v896 = vpop.f32.mrf.mxu0
        %v897 = vadd.f32 0.0, %v896
        %v898 = vpop.f32.mrf.mxu0
        %v899 = vadd.f32 0.0, %v898
        %900 = vmatmul.bf16.gmra.mxu0 %v768
        %v901 = vpop.f32.mrf.mxu0
        %v902 = vadd.f32 0.0, %v901
        %v903 = vpop.f32.mrf.mxu0
        %v904 = vadd.f32 0.0, %v903
        %905 = vmatmul.bf16.gmra.mxu0 %v769
        %v906 = vpop.f32.mrf.mxu0
        %v907 = vadd.f32 0.0, %v906
        %v908 = vpop.f32.mrf.mxu0
        %v909 = vadd.f32 0.0, %v908
        %910 = vmatmul.bf16.gmra.mxu0 %v770
        %v911 = vpop.f32.mrf.mxu0
        %v912 = vadd.f32 0.0, %v911
        %v913 = vpop.f32.mrf.mxu0
        %v914 = vadd.f32 0.0, %v913
        %915 = vmatmul.bf16.gmra.mxu0 %v771
        %v916 = vpop.f32.mrf.mxu0
        %v917 = vadd.f32 0.0, %v916
        %v918 = vpop.f32.mrf.mxu0
        %v919 = vadd.f32 0.0, %v918
        %920 = vmatmul.bf16.gmra.mxu0 %v772
        %v921 = vpop.f32.mrf.mxu0
        %v922 = vadd.f32 0.0, %v921
        %v923 = vpop.f32.mrf.mxu0
        %v924 = vadd.f32 0.0, %v923
        %925 = vmatmul.bf16.gmra.mxu0 %v773
        %v926 = vpop.f32.mrf.mxu0
        %v927 = vadd.f32 0.0, %v926
        %v928 = vpop.f32.mrf.mxu0
        %v929 = vadd.f32 0.0, %v928
        %930 = vmatmul.bf16.gmra.mxu0 %v774
        %v931 = vpop.f32.mrf.mxu0
        %v932 = vadd.f32 0.0, %v931
        %v933 = vpop.f32.mrf.mxu0
        %v934 = vadd.f32 0.0, %v933
        %935 = vmatmul.bf16.gmra.mxu0 %v775
        %v936 = vpop.f32.mrf.mxu0
        %v937 = vadd.f32 0.0, %v936
        %v938 = vpop.f32.mrf.mxu0
        %v939 = vadd.f32 0.0, %v938
        %940 = vmatmul.bf16.gmra.mxu0 %v776
        %v941 = vpop.f32.mrf.mxu0
        %v942 = vadd.f32 0.0, %v941
        %v943 = vpop.f32.mrf.mxu0
        %v944 = vadd.f32 0.0, %v943
        %945 = vmatmul.bf16.gmra.mxu0 %v777
        %v946 = vpop.f32.mrf.mxu0
        %v947 = vadd.f32 0.0, %v946
        %v948 = vpop.f32.mrf.mxu0
        %v949 = vadd.f32 0.0, %v948
        %950 = vmatmul.bf16.gmra.mxu0 %v778
        %v951 = vpop.f32.mrf.mxu0
        %v952 = vadd.f32 0.0, %v951
        %v953 = vpop.f32.mrf.mxu0
        %v954 = vadd.f32 0.0, %v953
        %955 = vmatmul.bf16.gmra.mxu0 %v779
        %v956 = vpop.f32.mrf.mxu0
        %v957 = vadd.f32 0.0, %v956
        %v958 = vpop.f32.mrf.mxu0
        %v959 = vadd.f32 0.0, %v958
        %960 = vmatmul.bf16.gmra.mxu0 %v780
        %v961 = vpop.f32.mrf.mxu0
        %v962 = vadd.f32 0.0, %v961
        %v963 = vpop.f32.mrf.mxu0
        %v964 = vadd.f32 0.0, %v963
        %965 = vmatmul.bf16.gmra.mxu0 %v781
        %v966 = vpop.f32.mrf.mxu0
        %v967 = vadd.f32 0.0, %v966
        %v968 = vpop.f32.mrf.mxu0
        %v969 = vadd.f32 0.0, %v968
        %970 = vmatmul.bf16.gmra.mxu0 %v782
        %v971 = vpop.f32.mrf.mxu0
        %v972 = vadd.f32 0.0, %v971
        %v973 = vpop.f32.mrf.mxu0
        %v974 = vadd.f32 0.0, %v973
        %975 = vmatmul.bf16.gmra.mxu0 %v783
        %v976 = vpop.f32.mrf.mxu0
        %v977 = vadd.f32 0.0, %v976
        %v978 = vpop.f32.mrf.mxu0
        %v979 = vadd.f32 0.0, %v978
        %980 = vmatmul.bf16.gmra.mxu0 %v784
        %v981 = vpop.f32.mrf.mxu0
        %v982 = vadd.f32 0.0, %v981
        %v983 = vpop.f32.mrf.mxu0
        %v984 = vadd.f32 0.0, %v983
        %985 = vmatmul.bf16.gmra.mxu0 %v785
        %v986 = vpop.f32.mrf.mxu0
        %v987 = vadd.f32 0.0, %v986
        %v988 = vpop.f32.mrf.mxu0
        %v989 = vadd.f32 0.0, %v988
        %990 = vmatmul.bf16.gmra.mxu0 %v786
        %v991 = vpop.f32.mrf.mxu0
        %v992 = vadd.f32 0.0, %v991
        %v993 = vpop.f32.mrf.mxu0
        %v994 = vadd.f32 0.0, %v993
        %995 = vmatmul.bf16.gmra.mxu0 %v787
        %v996 = vpop.f32.mrf.mxu0
        %v997 = vadd.f32 0.0, %v996
        %v998 = vpop.f32.mrf.mxu0
        %v999 = vadd.f32 0.0, %v998
        %1000 = vmatmul.bf16.gmra.mxu0 %v788
        %v1001 = vpop.f32.mrf.mxu0
        %v1002 = vadd.f32 0.0, %v1001
        %v1003 = vpop.f32.mrf.mxu0
        %v1004 = vadd.f32 0.0, %v1003
        %1005 = vmatmul.bf16.gmra.mxu0 %v789
        %v1006 = vpop.f32.mrf.mxu0
        %v1007 = vadd.f32 0.0, %v1006
        %v1008 = vpop.f32.mrf.mxu0
        %v1009 = vadd.f32 0.0, %v1008
        %1010 = vmatmul.bf16.gmra.mxu0 %v790
        %v1011 = vpop.f32.mrf.mxu0
        %v1012 = vadd.f32 0.0, %v1011
        %v1013 = vpop.f32.mrf.mxu0
        %v1014 = vadd.f32 0.0, %v1013
        %1015 = vmatmul.bf16.gmra.mxu0 %v791
        %v1016 = vpop.f32.mrf.mxu0
        %v1017 = vadd.f32 0.0, %v1016
        %v1018 = vpop.f32.mrf.mxu0
        %v1019 = vadd.f32 0.0, %v1018
        %1020 = vmatmul.bf16.gmra.mxu0 %v792
        %v1021 = vpop.f32.mrf.mxu0
        %v1022 = vadd.f32 0.0, %v1021
        %v1023 = vpop.f32.mrf.mxu0
        %v1024 = vadd.f32 0.0, %v1023
        %1025 = vdwg.mxu0
        %v1026 = vtanh.pop %v867
        %v1027 = vtanh.pop %v869
        %v1028 = vtanh.pop %v872
        %v1029 = vtanh.pop %v874
        %v1030 = vtanh.pop %v877
        %v1031 = vtanh.pop %v879
        %v1032 = vtanh.pop %v882
        %v1033 = vtanh.pop %v884
        %v1034 = vtanh.pop %v887
        %v1035 = vtanh.pop %v889
        %v1036 = vtanh.pop %v892
        %v1037 = vtanh.pop %v894
        %v1038 = vtanh.pop %v897
        %v1039 = vtanh.pop %v899
        %v1040 = vtanh.pop %v902
        %v1041 = vtanh.pop %v904
        %v1042 = vtanh.pop %v907
        %v1043 = vtanh.pop %v909
        %v1044 = vtanh.pop %v912
        %v1045 = vtanh.pop %v914
        %v1046 = vtanh.pop %v917
        %v1047 = vtanh.pop %v919
        %v1048 = vtanh.pop %v922
        %v1049 = vtanh.pop %v924
        %v1050 = vtanh.pop %v927
        %v1051 = vtanh.pop %v929
        %v1052 = vtanh.pop %v932
        %v1053 = vtanh.pop %v934
        %v1054 = vtanh.pop %v937
        %v1055 = vtanh.pop %v939
        %v1056 = vtanh.pop %v942
        %v1057 = vtanh.pop %v944
        %v1058 = vtanh.pop %v947
        %v1059 = vtanh.pop %v949
        %v1060 = vtanh.pop %v952
        %v1061 = vtanh.pop %v954
        %v1062 = vtanh.pop %v957
        %v1063 = vtanh.pop %v959
        %v1064 = vtanh.pop %v962
        %v1065 = vtanh.pop %v964
        %v1066 = vtanh.pop %v967
        %v1067 = vtanh.pop %v969
        %v1068 = vtanh.pop %v972
        %v1069 = vtanh.pop %v974
        %v1070 = vtanh.pop %v977
        %v1071 = vtanh.pop %v979
        %v1072 = vtanh.pop %v982
        %v1073 = vtanh.pop %v984
        %v1074 = vtanh.pop %v987
        %v1075 = vtanh.pop %v989
        %v1076 = vtanh.pop %v992
        %v1077 = vtanh.pop %v994
        %v1078 = vtanh.pop %v997
        %v1079 = vtanh.pop %v999
        %v1080 = vtanh.pop %v1002
        %v1081 = vtanh.pop %v1004
        %v1082 = vtanh.pop %v1007
        %v1083 = vtanh.pop %v1009
        %v1084 = vtanh.pop %v1012
        %v1085 = vtanh.pop %v1014
        %v1086 = vtanh.pop %v1017
        %v1087 = vtanh.pop %v1019
        %v1088 = vtanh.pop %v1022
        %v1089 = vtanh.pop %v1024
        %1090 = vst [vmem:[%s299] sm:$0xff] %v1026
        %1091 = vst [vmem:[%s299 + $0x8] sm:$0xff] %v1027
        %1092 = vst [vmem:[%s299 + $0x10] sm:$0xff] %v1028
        %1093 = vst [vmem:[%s299 + $0x18] sm:$0xff] %v1029
        %1094 = vst [vmem:[%s299 + $0x20] sm:$0xff] %v1030
        %1095 = vst [vmem:[%s299 + $0x28] sm:$0xff] %v1031
        %1096 = vst [vmem:[%s299 + $0x30] sm:$0xff] %v1032
        %1097 = vst [vmem:[%s299 + $0x38] sm:$0xff] %v1033
        %1098 = vst [vmem:[%s299 + $0x40] sm:$0xff] %v1034
        %1099 = vst [vmem:[%s299 + $0x48] sm:$0xff] %v1035
        %1100 = vst [vmem:[%s299 + $0x50] sm:$0xff] %v1036
        %1101 = vst [vmem:[%s299 + $0x58] sm:$0xff] %v1037
        %1102 = vst [vmem:[%s299 + $0x60] sm:$0xff] %v1038
        %1103 = vst [vmem:[%s299 + $0x68] sm:$0xff] %v1039
        %1104 = vst [vmem:[%s299 + $0x70] sm:$0xff] %v1040
        %1105 = vst [vmem:[%s299 + $0x78] sm:$0xff] %v1041
        %1106 = vst [vmem:[%s299 + $0x80] sm:$0xff] %v1042
        %1107 = vst [vmem:[%s299 + $0x88] sm:$0xff] %v1043
        %1108 = vst [vmem:[%s299 + $0x90] sm:$0xff] %v1044
        %1109 = vst [vmem:[%s299 + $0x98] sm:$0xff] %v1045
        %1110 = vst [vmem:[%s299 + $0xa0] sm:$0xff] %v1046
        %1111 = vst [vmem:[%s299 + $0xa8] sm:$0xff] %v1047
        %1112 = vst [vmem:[%s299 + $0xb0] sm:$0xff] %v1048
        %1113 = vst [vmem:[%s299 + $0xb8] sm:$0xff] %v1049
        %1114 = vst [vmem:[%s299 + $0xc0] sm:$0xff] %v1050
        %1115 = vst [vmem:[%s299 + $0xc8] sm:$0xff] %v1051
        %1116 = vst [vmem:[%s299 + $0xd0] sm:$0xff] %v1052
        %1117 = vst [vmem:[%s299 + $0xd8] sm:$0xff] %v1053
        %1118 = vst [vmem:[%s299 + $0xe0] sm:$0xff] %v1054
        %1119 = vst [vmem:[%s299 + $0xe8] sm:$0xff] %v1055
        %1120 = vst [vmem:[%s299 + $0xf0] sm:$0xff] %v1056
        %1121 = vst [vmem:[%s299 + $0xf8] sm:$0xff] %v1057
        %1122 = vst [vmem:[%s299 + $0x100] sm:$0xff] %v1058
        %1123 = vst [vmem:[%s299 + $0x108] sm:$0xff] %v1059
        %1124 = vst [vmem:[%s299 + $0x110] sm:$0xff] %v1060
        %1125 = vst [vmem:[%s299 + $0x118] sm:$0xff] %v1061
        %1126 = vst [vmem:[%s299 + $0x120] sm:$0xff] %v1062
        %1127 = vst [vmem:[%s299 + $0x128] sm:$0xff] %v1063
        %1128 = vst [vmem:[%s299 + $0x130] sm:$0xff] %v1064
        %1129 = vst [vmem:[%s299 + $0x138] sm:$0xff] %v1065
        %1130 = vst [vmem:[%s299 + $0x140] sm:$0xff] %v1066
        %1131 = vst [vmem:[%s299 + $0x148] sm:$0xff] %v1067
        %1132 = vst [vmem:[%s299 + $0x150] sm:$0xff] %v1068
        %1133 = vst [vmem:[%s299 + $0x158] sm:$0xff] %v1069
        %1134 = vst [vmem:[%s299 + $0x160] sm:$0xff] %v1070
        %1135 = vst [vmem:[%s299 + $0x168] sm:$0xff] %v1071
        %1136 = vst [vmem:[%s299 + $0x170] sm:$0xff] %v1072
        %1137 = vst [vmem:[%s299 + $0x178] sm:$0xff] %v1073
        %1138 = vst [vmem:[%s299 + $0x180] sm:$0xff] %v1074
        %1139 = vst [vmem:[%s299 + $0x188] sm:$0xff] %v1075
        %1140 = vst [vmem:[%s299 + $0x190] sm:$0xff] %v1076
        %1141 = vst [vmem:[%s299 + $0x198] sm:$0xff] %v1077
        %1142 = vst [vmem:[%s299 + $0x1a0] sm:$0xff] %v1078
        %1143 = vst [vmem:[%s299 + $0x1a8] sm:$0xff] %v1079
        %1144 = vst [vmem:[%s299 + $0x1b0] sm:$0xff] %v1080
        %1145 = vst [vmem:[%s299 + $0x1b8] sm:$0xff] %v1081
        %1146 = vst [vmem:[%s299 + $0x1c0] sm:$0xff] %v1082
        %1147 = vst [vmem:[%s299 + $0x1c8] sm:$0xff] %v1083
        %1148 = vst [vmem:[%s299 + $0x1d0] sm:$0xff] %v1084
        %1149 = vst [vmem:[%s299 + $0x1d8] sm:$0xff] %v1085
        %1150 = vst [vmem:[%s299 + $0x1e0] sm:$0xff] %v1086
        %1151 = vst [vmem:[%s299 + $0x1e8] sm:$0xff] %v1087
        %1152 = vst [vmem:[%s299 + $0x1f0] sm:$0xff] %v1088
        %1153 = vst [vmem:[%s299 + $0x1f8] sm:$0xff] %v1089
        %v1154 = vadd.f32 %v1026, %v1027
        %v1155 = vadd.f32 %v1154, %v1028
        %v1156 = vadd.f32 %v1155, %v1029
        %v1157 = vadd.f32 %v1156, %v1030
        %v1158 = vadd.f32 %v1157, %v1031
        %v1159 = vadd.f32 %v1158, %v1032
        %v1160 = vadd.f32 %v1159, %v1033
        %v1161 = vadd.f32 %v1160, %v1034
        %v1162 = vadd.f32 %v1161, %v1035
        %v1163 = vadd.f32 %v1162, %v1036
        %v1164 = vadd.f32 %v1163, %v1037
        %v1165 = vadd.f32 %v1164, %v1038
        %v1166 = vadd.f32 %v1165, %v1039
        %v1167 = vadd.f32 %v1166, %v1040
        %v1168 = vadd.f32 %v1167, %v1041
        %v1169 = vadd.f32 %v1168, %v1042
        %v1170 = vadd.f32 %v1169, %v1043
        %v1171 = vadd.f32 %v1170, %v1044
        %v1172 = vadd.f32 %v1171, %v1045
        %v1173 = vadd.f32 %v1172, %v1046
        %v1174 = vadd.f32 %v1173, %v1047
        %v1175 = vadd.f32 %v1174, %v1048
        %v1176 = vadd.f32 %v1175, %v1049
        %v1177 = vadd.f32 %v1176, %v1050
        %v1178 = vadd.f32 %v1177, %v1051
        %v1179 = vadd.f32 %v1178, %v1052
        %v1180 = vadd.f32 %v1179, %v1053
        %v1181 = vadd.f32 %v1180, %v1054
        %v1182 = vadd.f32 %v1181, %v1055
        %v1183 = vadd.f32 %v1182, %v1056
        %v1184 = vadd.f32 %v1183, %v1057
        %v1185 = vadd.f32 %v1184, %v1058
        %v1186 = vadd.f32 %v1185, %v1059
        %v1187 = vadd.f32 %v1186, %v1060
        %v1188 = vadd.f32 %v1187, %v1061
        %v1189 = vadd.f32 %v1188, %v1062
        %v1190 = vadd.f32 %v1189, %v1063
        %v1191 = vadd.f32 %v1190, %v1064
        %v1192 = vadd.f32 %v1191, %v1065
        %v1193 = vadd.f32 %v1192, %v1066
        %v1194 = vadd.f32 %v1193, %v1067
        %v1195 = vadd.f32 %v1194, %v1068
        %v1196 = vadd.f32 %v1195, %v1069
        %v1197 = vadd.f32 %v1196, %v1070
        %v1198 = vadd.f32 %v1197, %v1071
        %v1199 = vadd.f32 %v1198, %v1072
        %v1200 = vadd.f32 %v1199, %v1073
        %v1201 = vadd.f32 %v1200, %v1074
        %v1202 = vadd.f32 %v1201, %v1075
        %v1203 = vadd.f32 %v1202, %v1076
        %v1204 = vadd.f32 %v1203, %v1077
        %v1205 = vadd.f32 %v1204, %v1078
        %v1206 = vadd.f32 %v1205, %v1079
        %v1207 = vadd.f32 %v1206, %v1080
        %v1208 = vadd.f32 %v1207, %v1081
        %v1209 = vadd.f32 %v1208, %v1082
        %v1210 = vadd.f32 %v1209, %v1083
        %v1211 = vadd.f32 %v1210, %v1084
        %v1212 = vadd.f32 %v1211, %v1085
        %v1213 = vadd.f32 %v1212, %v1086
        %v1214 = vadd.f32 %v1213, %v1087
        %v1215 = vadd.f32 %v1214, %v1088
        %v1216 = vadd.f32 %v1215, %v1089
        %v1217 = vrot.slane %v1216, 4
        %v1218 = vadd.f32 %v1216, %v1217
        %v1219 = vrot.slane %v1218, 2
        %v1220 = vadd.f32 %v1218, %v1219
        %v1221 = vrot.slane %v1220, 1
        %v1222 = vadd.f32 %v1220, %v1221
        %1223 = vst [vmem:[%s282] sm:$0x1] %v1222
        %v1224 = vmul.f32 %v1026, %v1026
        %v1225 = vmul.f32 %v1027, %v1027
        %v1226 = vmul.f32 %v1028, %v1028
        %v1227 = vmul.f32 %v1029, %v1029
        %v1228 = vmul.f32 %v1030, %v1030
        %v1229 = vmul.f32 %v1031, %v1031
        %v1230 = vmul.f32 %v1032, %v1032
        %v1231 = vmul.f32 %v1033, %v1033
        %v1232 = vmul.f32 %v1034, %v1034
        %v1233 = vmul.f32 %v1035, %v1035
        %v1234 = vmul.f32 %v1036, %v1036
        %v1235 = vmul.f32 %v1037, %v1037
        %v1236 = vmul.f32 %v1038, %v1038
        %v1237 = vmul.f32 %v1039, %v1039
        %v1238 = vmul.f32 %v1040, %v1040
        %v1239 = vmul.f32 %v1041, %v1041
        %v1240 = vmul.f32 %v1042, %v1042
        %v1241 = vmul.f32 %v1043, %v1043
        %v1242 = vmul.f32 %v1044, %v1044
        %v1243 = vmul.f32 %v1045, %v1045
        %v1244 = vmul.f32 %v1046, %v1046
        %v1245 = vmul.f32 %v1047, %v1047
        %v1246 = vmul.f32 %v1048, %v1048
        %v1247 = vmul.f32 %v1049, %v1049
        %v1248 = vmul.f32 %v1050, %v1050
        %v1249 = vmul.f32 %v1051, %v1051
        %v1250 = vmul.f32 %v1052, %v1052
        %v1251 = vmul.f32 %v1053, %v1053
        %v1252 = vmul.f32 %v1054, %v1054
        %v1253 = vmul.f32 %v1055, %v1055
        %v1254 = vmul.f32 %v1056, %v1056
        %v1255 = vmul.f32 %v1057, %v1057
        %v1256 = vmul.f32 %v1058, %v1058
        %v1257 = vmul.f32 %v1059, %v1059
        %v1258 = vmul.f32 %v1060, %v1060
        %v1259 = vmul.f32 %v1061, %v1061
        %v1260 = vmul.f32 %v1062, %v1062
        %v1261 = vmul.f32 %v1063, %v1063
        %v1262 = vmul.f32 %v1064, %v1064
        %v1263 = vmul.f32 %v1065, %v1065
        %v1264 = vmul.f32 %v1066, %v1066
        %v1265 = vmul.f32 %v1067, %v1067
        %v1266 = vmul.f32 %v1068, %v1068
        %v1267 = vmul.f32 %v1069, %v1069
        %v1268 = vmul.f32 %v1070, %v1070
        %v1269 = vmul.f32 %v1071, %v1071
        %v1270 = vmul.f32 %v1072, %v1072
        %v1271 = vmul.f32 %v1073, %v1073
        %v1272 = vmul.f32 %v1074, %v1074
        %v1273 = vmul.f32 %v1075, %v1075
        %v1274 = vmul.f32 %v1076, %v1076
        %v1275 = vmul.f32 %v1077, %v1077
        %v1276 = vmul.f32 %v1078, %v1078
        %v1277 = vmul.f32 %v1079, %v1079
        %v1278 = vmul.f32 %v1080, %v1080
        %v1279 = vmul.f32 %v1081, %v1081
        %v1280 = vmul.f32 %v1082, %v1082
        %v1281 = vmul.f32 %v1083, %v1083
        %v1282 = vmul.f32 %v1084, %v1084
        %v1283 = vmul.f32 %v1085, %v1085
        %v1284 = vmul.f32 %v1086, %v1086
        %v1285 = vmul.f32 %v1087, %v1087
        %v1286 = vmul.f32 %v1088, %v1088
        %v1287 = vmul.f32 %v1089, %v1089
        %v1288 = vadd.f32 %v1224, %v1225
        %v1289 = vadd.f32 %v1288, %v1226
        %v1290 = vadd.f32 %v1289, %v1227
        %v1291 = vadd.f32 %v1290, %v1228
        %v1292 = vadd.f32 %v1291, %v1229
        %v1293 = vadd.f32 %v1292, %v1230
        %v1294 = vadd.f32 %v1293, %v1231
        %v1295 = vadd.f32 %v1294, %v1232
        %v1296 = vadd.f32 %v1295, %v1233
        %v1297 = vadd.f32 %v1296, %v1234
        %v1298 = vadd.f32 %v1297, %v1235
        %v1299 = vadd.f32 %v1298, %v1236
        %v1300 = vadd.f32 %v1299, %v1237
        %v1301 = vadd.f32 %v1300, %v1238
        %v1302 = vadd.f32 %v1301, %v1239
        %v1303 = vadd.f32 %v1302, %v1240
        %v1304 = vadd.f32 %v1303, %v1241
        %v1305 = vadd.f32 %v1304, %v1242
        %v1306 = vadd.f32 %v1305, %v1243
        %v1307 = vadd.f32 %v1306, %v1244
        %v1308 = vadd.f32 %v1307, %v1245
        %v1309 = vadd.f32 %v1308, %v1246
        %v1310 = vadd.f32 %v1309, %v1247
        %v1311 = vadd.f32 %v1310, %v1248
        %v1312 = vadd.f32 %v1311, %v1249
        %v1313 = vadd.f32 %v1312, %v1250
        %v1314 = vadd.f32 %v1313, %v1251
        %v1315 = vadd.f32 %v1314, %v1252
        %v1316 = vadd.f32 %v1315, %v1253
        %v1317 = vadd.f32 %v1316, %v1254
        %v1318 = vadd.f32 %v1317, %v1255
        %v1319 = vadd.f32 %v1318, %v1256
        %v1320 = vadd.f32 %v1319, %v1257
        %v1321 = vadd.f32 %v1320, %v1258
        %v1322 = vadd.f32 %v1321, %v1259
        %v1323 = vadd.f32 %v1322, %v1260
        %v1324 = vadd.f32 %v1323, %v1261
        %v1325 = vadd.f32 %v1324, %v1262
        %v1326 = vadd.f32 %v1325, %v1263
        %v1327 = vadd.f32 %v1326, %v1264
        %v1328 = vadd.f32 %v1327, %v1265
        %v1329 = vadd.f32 %v1328, %v1266
        %v1330 = vadd.f32 %v1329, %v1267
        %v1331 = vadd.f32 %v1330, %v1268
        %v1332 = vadd.f32 %v1331, %v1269
        %v1333 = vadd.f32 %v1332, %v1270
        %v1334 = vadd.f32 %v1333, %v1271
        %v1335 = vadd.f32 %v1334, %v1272
        %v1336 = vadd.f32 %v1335, %v1273
        %v1337 = vadd.f32 %v1336, %v1274
        %v1338 = vadd.f32 %v1337, %v1275
        %v1339 = vadd.f32 %v1338, %v1276
        %v1340 = vadd.f32 %v1339, %v1277
        %v1341 = vadd.f32 %v1340, %v1278
        %v1342 = vadd.f32 %v1341, %v1279
        %v1343 = vadd.f32 %v1342, %v1280
        %v1344 = vadd.f32 %v1343, %v1281
        %v1345 = vadd.f32 %v1344, %v1282
        %v1346 = vadd.f32 %v1345, %v1283
        %v1347 = vadd.f32 %v1346, %v1284
        %v1348 = vadd.f32 %v1347, %v1285
        %v1349 = vadd.f32 %v1348, %v1286
        %v1350 = vadd.f32 %v1349, %v1287
        %v1351 = vrot.slane %v1350, 4
        %v1352 = vadd.f32 %v1350, %v1351
        %v1353 = vrot.slane %v1352, 2
        %v1354 = vadd.f32 %v1352, %v1353
        %v1355 = vrot.slane %v1354, 1
        %v1356 = vadd.f32 %v1354, %v1355
        %1357 = vst [vmem:[%s288] sm:$0x1] %v1356
        %s1358 = smul.u32 64, %s25
        %p1359 = scmp.lt.s32.totalorder %s1358, 1023
        %s1360 = scalar_select %p1359, %s1358, 1023
        %s1361 = smul.addr %s1360, 8
        %s1362 = scalar_lea.vmem %s5, %s1361
        %s1363 = sand.u32 %s169, 1
        %s1364 = scalar_lea.sflag [#allocation3], %s1363
        %s1365 = sand.u32 %s169, 1
        %s1366 = scalar_lea.vmem [#allocation2], %s1365
        %s1367 = sand.u32 %s195, 1
        %s1368 = scalar_lea.sflag [#allocation5], %s1367
        %s1369 = sand.u32 %s195, 1
        %s1370 = scalar_lea.vmem [#allocation4], %s1369
        // Predicated region
        $region41: #{wgan_generator_forward.13} parent=39 // pred_check
          %p1371 = pneg %p153
        $region42: #{wgan_generator_forward.13} parent=39 // pred_check_branch
          %1373 = sbr.rel (%p1371) target = $region44
        $region43: #{wgan_generator_forward.13} parent=39 // pred_region
          %s1374 = smul.u32 64, %s25
        $region44: #{wgan_generator_forward.13} parent=39 // pred_fallthru
          _
        // Predicated region
        $region45: #{wgan_generator_forward.13} parent=39 // pred_check
          %p1375 = pneg %p179
        $region46: #{wgan_generator_forward.13} parent=39 // pred_check_branch
          %1377 = sbr.rel (%p1375) target = $region48
        $region47: #{wgan_generator_forward.13} parent=39 // pred_region
          %1379 = vsyncadd %s1364, 0
          %s1380 = scalar_lea.hbm %s6, %s25
          %s1382 = sshll.u32 %s1366, 4
          %s1383 = int_to_ptr.vmem [resolvable:$true] %s1382
          %s1384 = sshll.u32 %s1380, 4
          %s1385 = int_to_ptr.hbm [resolvable:$true] %s1384
          %1387 = dma.vmem_to_hbm [thread:$0]  %s1383, 16, %s1385, %s1364
        $region48: #{wgan_generator_forward.13} parent=39 // pred_fallthru
          _
        // Predicated region
        $region49: #{wgan_generator_forward.13} parent=39 // pred_check
          %p1388 = pneg %p205
        $region50: #{wgan_generator_forward.13} parent=39 // pred_check_branch
          %1390 = sbr.rel (%p1388) target = $region52
        $region51: #{wgan_generator_forward.13} parent=39 // pred_region
          %1392 = vsyncadd %s1368, 0
          %s1393 = scalar_lea.hbm %s7, %s25
          %s1395 = sshll.u32 %s1370, 4
          %s1396 = int_to_ptr.vmem [resolvable:$true] %s1395
          %s1397 = sshll.u32 %s1393, 4
          %s1398 = int_to_ptr.hbm [resolvable:$true] %s1397
          %1400 = dma.vmem_to_hbm [thread:$0]  %s1396, 16, %s1398, %s1368
        $region52: #{wgan_generator_forward.13} parent=39 // pred_fallthru
          _
      $region40: #{wgan_generator_forward.13} parent=5 // pred_fallthru
        _
      %p1401 = scmp.le.s32.totalorder 2, %s20
      // Predicated region
      $region53: #{wgan_generator_forward.13} parent=5 // pred_check
        %p1402 = pneg %p1401
      $region54: #{wgan_generator_forward.13} parent=5 // pred_check_branch
        %1404 = sbr.rel (%p1402) target = $region56
      $region55: #{wgan_generator_forward.13} parent=5 // pred_region
        %s1405 = ssub.s32 %s20, 2
        // Predicated region
        $region57: #{wgan_generator_forward.13} parent=55 // pred_check
          %p1406 = pneg %p159
        $region58: #{wgan_generator_forward.13} parent=55 // pred_check_branch
          %1408 = sbr.rel (%p1406) target = $region60
        $region59: #{wgan_generator_forward.13} parent=55 // pred_region
          %s1409 = smul.u32 64, %s26
          %p1410 = scmp.lt.s32.totalorder %s1409, 1023
          %s1411 = scalar_select %p1410, %s1409, 1023
          %s1412 = smul.addr %s1411, 8
          %s1413 = scalar_lea.vmem %s5, %s1412
        $region60: #{wgan_generator_forward.13} parent=55 // pred_fallthru
          _
        // Predicated region
        $region61: #{wgan_generator_forward.13} parent=55 // pred_check
          %p1414 = pneg %p185
        $region62: #{wgan_generator_forward.13} parent=55 // pred_check_branch
          %1416 = sbr.rel (%p1414) target = $region64
        $region63: #{wgan_generator_forward.13} parent=55 // pred_region
          %s1417 = sand.u32 %s170, 1
          %s1418 = scalar_lea.sflag [#allocation3], %s1417
          %s1419 = sand.u32 %s170, 1
          %s1420 = scalar_lea.vmem [#allocation2], %s1419
          %1422 = dma.done %s1418, 16
        $region64: #{wgan_generator_forward.13} parent=55 // pred_fallthru
          _
        // Predicated region
        $region65: #{wgan_generator_forward.13} parent=55 // pred_check
          %p1423 = pneg %p211
        $region66: #{wgan_generator_forward.13} parent=55 // pred_check_branch
          %1425 = sbr.rel (%p1423) target = $region68
        $region67: #{wgan_generator_forward.13} parent=55 // pred_region
          %s1426 = sand.u32 %s196, 1
          %s1427 = scalar_lea.sflag [#allocation5], %s1426
          %s1428 = sand.u32 %s196, 1
          %s1429 = scalar_lea.vmem [#allocation4], %s1428
          %1431 = dma.done %s1427, 16
        $region68: #{wgan_generator_forward.13} parent=55 // pred_fallthru
          _
      $region56: #{wgan_generator_forward.13} parent=5 // pred_fallthru
        _
    $region6: #{wgan_generator_forward.13} parent=1 // loop_footer
      %s24 = sadd.s32 1, %s20
    $region7: #{wgan_generator_forward.13} parent=1 // loop_footer_branch
      %19 = sbr.rel target = $region3
    $region8: #{wgan_generator_forward.13} parent=1 // loop_exit
      _
    %1432 = vsyncpa [#allocation3], 1
    %s1433 = scalar_lea.sflag [#allocation3], 1
    %1434 = vsyncpa %s1433, 1
    %1435 = vsyncpa [#allocation5], 1
    %s1436 = scalar_lea.sflag [#allocation5], 1
    %1437 = vsyncpa %s1436, 1

</llo_original>
